<compile_context>
chip_gen: v6e
topology: v6e:2x2x1
jax: 0.10.0
libtpu: 0.0.40
codegen_flags: <defaults>
</compile_context>

<pallas_src>
import math
import functools

import jax
import jax.numpy as jnp
from jax.experimental import pallas as pl
from jax.experimental.pallas import tpu as pltpu


MIDDLE_DIM = 24                      # hard-coded in dba_attention.__init__
_LN_EPS = 1e-5


def _round_up(x, m):
    return ((x + m - 1) // m) * m


def _vmem_limit_bytes():
    # v5e/v6e: 128 MiB physical VMEM -> ~96 MiB scoped budget; v7x: 64 MiB -> ~48 MiB.
    try:
        cap = int(pltpu.get_tpu_info().vmem_capacity_bytes)
    except Exception:
        cap = 64 * 1024 * 1024
    return min((cap * 3) // 4, 100 * 1024 * 1024)


_VMEM_LIMIT = _vmem_limit_bytes()
_MAX_ROW_TILE = 2048 if _VMEM_LIMIT > 64 * 1024 * 1024 else 1024


def _cparams(n_parallel):
    return pltpu.CompilerParams(
        dimension_semantics=("parallel",) * n_parallel,
        vmem_limit_bytes=_VMEM_LIMIT)


def _gelu(x):
    # exact (erf) gelu, matching torch.nn.functional.gelu default
    return 0.5 * x * (1.0 + jax.lax.erf(x * (1.0 / math.sqrt(2.0))))


def _layernorm(x, g, b, eps=_LN_EPS):
    mean = jnp.mean(x, axis=-1, keepdims=True)
    var = jnp.mean(jnp.square(x - mean), axis=-1, keepdims=True)
    return (x - mean) * jax.lax.rsqrt(var + eps) * g + b


def _softmax_last(x):
    # exact softmax (no approximate reciprocal) - these tensors are tiny.
    m = jnp.max(x, axis=-1, keepdims=True)
    e = jnp.exp(x - m)
    return e / jnp.sum(e, axis=-1, keepdims=True)


def _row_tile(n, max_tile):
    t = max_tile
    while t >= 8:
        if n % t == 0:
            return t
        t //= 2
    return n                          # block == full dim, always legal


# -------------------- fused projection weight layouts (128-lane aligned) --------------------

def _wx_layout(d_model, n_heads, proj_len):
    """Fused x-projection [pv | q_len | pk]; each segment starts on a 128-lane boundary."""
    hp = n_heads * proj_len
    ql_off = _round_up(d_model, 128)
    pk_off = ql_off + _round_up(hp, 128)
    width = pk_off + _round_up(MIDDLE_DIM, 128)
    return ql_off, pk_off, width


def _wpc_layout(d_model):
    """Fused pc-projection [v | q | k]; each segment starts on a 128-lane boundary."""
    q_off = _round_up(d_model, 128)
    k_off = q_off + _round_up(MIDDLE_DIM, 128)
    width = k_off + _round_up(MIDDLE_DIM, 128)
    return q_off, k_off, width


# ----------------------- dba_attention stage kernel (per batch) -----------------------------
# Outputs per batch:
#   pc (P, D)      : stage-1 summary tokens (the next layer's px)
#   p  (S, H*P)    : per-head softmax(q_len) expansion weights
#   M  (H*P, D)    : per-head LN(attn) @ W_o rows, so that src2 = p @ M + b_o

def _dba_stage_kernel(x_ref, px_ref, bias_ref,
                      w_x_ref, b_x_ref, w_pq_ref, b_pq_ref,
                      w_pc_ref, b_pc_ref, ln_a_g_ref, ln_a_b_ref, w_o_ref,
                      pc_ref, p_ref, m_ref, attn_acc,
                      *, n_heads, proj_len, scaling, ql_off, pk_off, q_off, k_off):
    f32, bf16 = jnp.float32, jnp.bfloat16
    H, P, MD = n_heads, proj_len, MIDDLE_DIM
    S, D = x_ref.shape
    hd, hdv = MD // H, D // H
    # contraction on the last dim of both operands == a @ b.T without a transpose
    contract_last = (((1,), (1,)), ((), ()))

    bias = bias_ref[...]                                     # (1, S) f32; 0 keep / -1e30 pad

    # fused projections from x: [pv | q_len | pk]  (one wide, lane-aligned MXU matmul)
    proj_x = jnp.dot(x_ref[...], w_x_ref[...], preferred_element_type=f32) + b_x_ref[...]
    pv = proj_x[:, :D].astype(bf16)                          # (S, D)
    pk = proj_x[:, pk_off:pk_off + MD].astype(bf16)          # (S, MD)

    pq = (jnp.dot(px_ref[...], w_pq_ref[...], preferred_element_type=f32)
          + b_pq_ref[...]) * scaling                         # (P, MD), pscaling fused
    pq = pq.astype(bf16)

    # ---- stage 1: attend over the sequence -> proj_len summary tokens pc ----
    # head widths (<=24) are tiny; padding them to 128 lanes would only inflate the
    # contraction, so per-head slices stay unpadded.
    for h in range(H):
        logits = jax.lax.dot_general(pq[:, h * hd:(h + 1) * hd],
                                     pk[:, h * hd:(h + 1) * hd],
                                     contract_last, preferred_element_type=f32)   # (P, S)
        w = _softmax_last(logits + bias)
        pc_h = jnp.dot(w.astype(bf16), pv[:, h * hdv:(h + 1) * hdv],
                       preferred_element_type=f32)                                # (P, hdv)
        pc_ref[:, h * hdv:(h + 1) * hdv] = pc_h.astype(pc_ref.dtype)

    pc = pc_ref[...]                                         # (P, D) bf16

    # ---- stage 2: attention among the proj_len tokens ----
    proj_pc = jnp.dot(pc, w_pc_ref[...], preferred_element_type=f32) + b_pc_ref[...]
    v = proj_pc[:, :D].astype(bf16)
    q = (proj_pc[:, q_off:q_off + MD] * scaling).astype(bf16)
    k = proj_pc[:, k_off:k_off + MD].astype(bf16)
    for h in range(H):
        aw = _softmax_last(jax.lax.dot_general(q[:, h * hd:(h + 1) * hd],
                                               k[:, h * hd:(h + 1) * hd],
                                               contract_last,
                                               preferred_element_type=f32))       # (P, P)
        attn_acc[:, h * hdv:(h + 1) * hdv] = jnp.dot(
            aw.astype(bf16), v[:, h * hdv:(h + 1) * hdv], preferred_element_type=f32)
    attn = _layernorm(attn_acc[...], ln_a_g_ref[...], ln_a_b_ref[...]).astype(bf16)

    # ---- fold out_proj into the per-head expansion matrix M ----
    # src2[s] = sum_h softmax(q_len_h)[s] @ (attn_h @ W_o[h rows]) = p[s] @ M
    for h in range(H):
        m_ref[h * P:(h + 1) * P, :] = jnp.dot(
            attn[:, h * hdv:(h + 1) * hdv], w_o_ref[h * hdv:(h + 1) * hdv, :],
            preferred_element_type=f32).astype(m_ref.dtype)

    # ---- per-head softmax of the q_len expansion logits ----
    for h in range(H):
        ql_h = proj_x[:, ql_off + h * P: ql_off + (h + 1) * P]                    # (S, P)
        p_ref[:, h * P:(h + 1) * P] = _softmax_last(ql_h).astype(p_ref.dtype)


def dba_stage(lp, x, px, bias, *, n_heads, proj_len):
    B, S, D = x.shape
    P, HP = proj_len, n_heads * proj_len
    ql_off, pk_off, wx = _wx_layout(D, n_heads, proj_len)
    q_off, k_off, wpc = _wpc_layout(D)
    # matches torch: head_dim = middle_dim // nhead; scaling == pscaling == head_dim**-0.5
    scaling = float(MIDDLE_DIM // n_heads) ** (-0.5)
    kern = functools.partial(_dba_stage_kernel, n_heads=n_heads, proj_len=P,
                             scaling=scaling, ql_off=ql_off, pk_off=pk_off,
                             q_off=q_off, k_off=k_off)

    if px.ndim == 2:
        # shared (P, D) parameter (layer 0): one resident block, no per-batch copies
        px_spec = pl.BlockSpec((P, D), lambda b: (0, 0))
    else:
        px_spec = pl.BlockSpec((None, P, D), lambda b: (b, 0, 0))

    def wspec(r, c):
        return pl.BlockSpec((r, c), lambda b: (0, 0))

    pc, p, m = pl.pallas_call(
        kern,
        out_shape=(jax.ShapeDtypeStruct((B, P, D), jnp.bfloat16),
                   jax.ShapeDtypeStruct((B, S, HP), jnp.bfloat16),
                   jax.ShapeDtypeStruct((B, HP, D), jnp.bfloat16)),
        grid=(B,),
        in_specs=[
            pl.BlockSpec((None, S, D), lambda b: (b, 0, 0)),     # x (bf16)
            px_spec,                                             # px / previous pc
            pl.BlockSpec((None, 1, S), lambda b: (b, 0, 0)),     # additive key-padding bias
            wspec(D, wx), wspec(1, wx),                          # fused [pv|q_len|pk]
            wspec(D, MIDDLE_DIM), wspec(1, MIDDLE_DIM),          # pq_proj
            wspec(D, wpc), wspec(1, wpc),                        # fused [v|q|k]
            wspec(1, D), wspec(1, D),                            # self_attn_layer_norm1
            wspec(D, D),                                         # out_proj weight
        ],
        out_specs=(pl.BlockSpec((None, P, D), lambda b: (b, 0, 0)),
                   pl.BlockSpec((None, S, HP), lambda b: (b, 0, 0)),
                   pl.BlockSpec((None, HP, D), lambda b: (b, 0, 0))),
        scratch_shapes=[pltpu.VMEM((P, D), jnp.float32)],
        compiler_params=_cparams(1),
    )(x, px, bias,
      lp["w_x"], lp["b_x"], lp["w_pq"], lp["b_pq"], lp["w_pc"], lp["b_pc"],
      lp["ln_a_g"], lp["ln_a_b"], lp["w_o"])
    return pc, p, m


# --------------- fused row-tiled tail: expansion + out_proj + LN1 + FFN + LN2 ---------------

def _dba_tail_kernel(x_ref, p_ref, m_ref, b_o_ref, ln1_g_ref, ln1_b_ref,
                     w1_ref, b1_ref, w2_ref, b2_ref, ln2_g_ref, ln2_b_ref, o_ref):
    f32, bf16 = jnp.float32, jnp.bfloat16
    # q_len expansion + out_proj in a single lane-dense matmul against M
    src2 = jnp.dot(p_ref[...], m_ref[...], preferred_element_type=f32) + b_o_ref[...]
    src = _layernorm(x_ref[...].astype(f32) + src2, ln1_g_ref[...], ln1_b_ref[...])
    h = jnp.dot(src.astype(bf16), w1_ref[...], preferred_element_type=f32) + b1_ref[...]
    ff = jnp.dot(_gelu(h).astype(bf16), w2_ref[...], preferred_element_type=f32) + b2_ref[...]
    o_ref[...] = _layernorm(src + ff, ln2_g_ref[...], ln2_b_ref[...]).astype(o_ref.dtype)


def dba_tail(lp, x, p, m, *, row_tile):
    B, S, D = x.shape
    HP = p.shape[-1]
    dff = lp["w_ff1"].shape[1]
    tm = row_tile

    def wspec(r, c):
        return pl.BlockSpec((r, c), lambda b, s: (0, 0))

    return pl.pallas_call(
        _dba_tail_kernel,
        out_shape=jax.ShapeDtypeStruct((B, S, D), jnp.bfloat16),
        grid=(B, S // tm),
        in_specs=[
            pl.BlockSpec((None, tm, D), lambda b, s: (b, s, 0)),   # residual rows
            pl.BlockSpec((None, tm, HP), lambda b, s: (b, s, 0)),  # softmax(q_len) rows
            pl.BlockSpec((None, HP, D), lambda b, s: (b, 0, 0)),   # expansion matrix M
            wspec(1, D),                                           # out_proj bias
            wspec(1, D), wspec(1, D),                              # norm1
            wspec(D, dff), wspec(1, dff),                          # linear1
            wspec(dff, D), wspec(1, D),                            # linear2
            wspec(1, D), wspec(1, D),                              # norm2
        ],
        out_specs=pl.BlockSpec((None, tm, D), lambda b, s: (b, s, 0)),
        compiler_params=_cparams(2),
    )(x, p, m, lp["b_o"], lp["ln1_g"], lp["ln1_b"],
      lp["w_ff1"], lp["b_ff1"], lp["w_ff2"], lp["b_ff2"], lp["ln2_g"], lp["ln2_b"])


# ----------------------- input / output projections -----------------------------------------

def _in_proj_kernel(x_ref, pe_ref, w_ref, b_ref, o_ref, *, scale):
    y = jnp.dot(x_ref[...].astype(jnp.bfloat16), w_ref[...],
                preferred_element_type=jnp.float32) + b_ref[...]
    o_ref[...] = (y * scale + pe_ref[...]).astype(o_ref.dtype)


def input_projection(X, pe_s, w, b, *, scale):
    B, S, F = X.shape
    D = w.shape[1]
    kern = functools.partial(_in_proj_kernel, scale=scale)
    return pl.pallas_call(
        kern,
        out_shape=jax.ShapeDtypeStruct((B, S, D), jnp.bfloat16),
        grid=(B,),
        in_specs=[
            pl.BlockSpec((None, S, F), lambda b: (b, 0, 0)),
            pl.BlockSpec((S, D), lambda b: (0, 0)),
            pl.BlockSpec((F, D), lambda b: (0, 0)),
            pl.BlockSpec((1, D), lambda b: (0, 0)),
        ],
        out_specs=pl.BlockSpec((None, S, D), lambda b: (b, 0, 0)),
        compiler_params=_cparams(1),
    )(X, pe_s, w, b)


def _out_proj_kernel(x_ref, w_ref, b_ref, o_ref):
    g = _gelu(x_ref[...].astype(jnp.float32))
    o_ref[...] = jnp.dot(g.astype(jnp.bfloat16), w_ref[...],
                         preferred_element_type=jnp.float32) + b_ref[...]


def output_projection(x, w_pad, b_pad, feat_dim):
    B, S, D = x.shape
    f_pad = w_pad.shape[1]
    n = B * S
    tm = _row_tile(n, _MAX_ROW_TILE)
    out = pl.pallas_call(
        _out_proj_kernel,
        out_shape=jax.ShapeDtypeStruct((n, f_pad), jnp.float32),
        grid=(n // tm,),
        in_specs=[
            pl.BlockSpec((tm, D), lambda i: (i, 0)),
            pl.BlockSpec((D, f_pad), lambda i: (0, 0)),
            pl.BlockSpec((1, f_pad), lambda i: (0, 0)),
        ],
        out_specs=pl.BlockSpec((tm, f_pad), lambda i: (i, 0)),
        compiler_params=_cparams(1),
    )(x.reshape(n, D), w_pad, b_pad)
    # kernel stores a 128-lane-dense slab; slice to feat_dim in XLA.
    return out[:, :feat_dim].reshape(B, S, feat_dim)


# ----------------------------- model forward (glue) -----------------------------------------

def ts_transformer_forward(params, X, padding_masks, *, d_model, n_heads, proj_len):
    """X: (B, S, feat_dim) f32; padding_masks: (B, S) bool, True = keep."""
    B, S, F = X.shape
    D, H, P = d_model, n_heads, proj_len

    # additive key-padding bias: 0 where keep, -1e30 where padded
    bias = jnp.where(padding_masks, 0.0, -1e30).astype(jnp.float32).reshape(B, 1, S)
    pe_s = params["pe"][:S]

    x = input_projection(X, pe_s, params["w_in"], params["b_in"], scale=math.sqrt(D))
    px = params["px"]                                   # (P, D), shared across batch (layer 0)
    row_tile = _row_tile(S, _MAX_ROW_TILE)

    for lp in params["layers"]:
        pc, p, m = dba_stage(lp, x, px, bias, n_heads=H, proj_len=P)
        x = dba_tail(lp, x, p, m, row_tile=row_tile)
        px = pc                                         # (B, P, D) bf16 feeds the next layer

    # output = output_layer(dropout(gelu(x)))  (dropout = identity)
    return output_projection(x, params["w_out"], params["b_out"], F)


# ----------------------------- parameter initialisation -------------------------------------

def _lin_init(key, din, dout):
    k1, k2 = jax.random.split(key)
    bound = 1.0 / math.sqrt(din)
    w = jax.random.uniform(k1, (din, dout), jnp.float32, -bound, bound)
    b = jax.random.uniform(k2, (dout,), jnp.float32, -bound, bound)
    return w, b


def init_params(key, feat_dim, max_len, d_model, n_heads, num_layers,
                dim_feedforward, proj_len):
    D = d_model
    HP = n_heads * proj_len
    bf16 = jnp.bfloat16
    counter = [0]

    def nk():
        counter[0] += 1
        return jax.random.fold_in(key, counter[0])

    params = {}
    w_in, b_in = _lin_init(nk(), feat_dim, D)
    params["w_in"] = w_in.astype(bf16)
    params["b_in"] = b_in.reshape(1, D)

    # output projection zero-padded to a 128-lane-dense store
    f_pad = _round_up(feat_dim, 128)
    w_out, b_out = _lin_init(nk(), D, feat_dim)
    params["w_out"] = jnp.zeros((D, f_pad), jnp.float32).at[:, :feat_dim].set(w_out).astype(bf16)
    params["b_out"] = jnp.zeros((1, f_pad), jnp.float32).at[:, :feat_dim].set(b_out.reshape(1, -1))

    params["px"] = (jax.random.normal(nk(), (proj_len, D), jnp.float32)
                    * (D ** -0.5)).astype(bf16)

    # fixed sinusoidal positional encoding (max_len, d_model)
    pos = jnp.arange(max_len, dtype=jnp.float32)[:, None]
    div = jnp.exp(jnp.arange(0, D, 2, dtype=jnp.float32) * (-math.log(10000.0) / D))
    pe = jnp.zeros((max_len, D), jnp.float32)
    pe = pe.at[:, 0::2].set(jnp.sin(pos * div))
    pe = pe.at[:, 1::2].set(jnp.cos(pos * div))
    params["pe"] = pe

    ql_off, pk_off, wx = _wx_layout(D, n_heads, proj_len)
    q_off, k_off, wpc = _wpc_layout(D)

    layers = []
    for _ in range(num_layers):
        lp = {}
        w_pq, b_pq = _lin_init(nk(), D, MIDDLE_DIM)
        w_q, b_q = _lin_init(nk(), D, MIDDLE_DIM)
        w_ql, b_ql = _lin_init(nk(), D, HP)
        w_pk, b_pk = _lin_init(nk(), D, MIDDLE_DIM)
        w_pv, b_pv = _lin_init(nk(), D, D)
        w_k, b_k = _lin_init(nk(), D, MIDDLE_DIM)
        w_v, b_v = _lin_init(nk(), D, D)
        w_o, b_o = _lin_init(nk(), D, D)
        w_ff1, b_ff1 = _lin_init(nk(), D, dim_feedforward)
        w_ff2, b_ff2 = _lin_init(nk(), dim_feedforward, D)

        # fused, 128-lane aligned x-projection [pv | q_len | pk]
        w_x = jnp.zeros((D, wx), jnp.float32)
        w_x = w_x.at[:, :D].set(w_pv).at[:, ql_off:ql_off + HP].set(w_ql)
        w_x = w_x.at[:, pk_off:pk_off + MIDDLE_DIM].set(w_pk)
        b_x = jnp.zeros((1, wx), jnp.float32)
        b_x = b_x.at[:, :D].set(b_pv.reshape(1, -1))
        b_x = b_x.at[:, ql_off:ql_off + HP].set(b_ql.reshape(1, -1))
        b_x = b_x.at[:, pk_off:pk_off + MIDDLE_DIM].set(b_pk.reshape(1, -1))

        # fused, 128-lane aligned pc-projection [v | q | k]
        w_pc = jnp.zeros((D, wpc), jnp.float32)
        w_pc = w_pc.at[:, :D].set(w_v).at[:, q_off:q_off + MIDDLE_DIM].set(w_q)
        w_pc = w_pc.at[:, k_off:k_off + MIDDLE_DIM].set(w_k)
        b_pc = jnp.zeros((1, wpc), jnp.float32)
        b_pc = b_pc.at[:, :D].set(b_v.reshape(1, -1))
        b_pc = b_pc.at[:, q_off:q_off + MIDDLE_DIM].set(b_q.reshape(1, -1))
        b_pc = b_pc.at[:, k_off:k_off + MIDDLE_DIM].set(b_k.reshape(1, -1))

        lp["w_x"] = w_x.astype(bf16)
        lp["b_x"] = b_x
        lp["w_pq"] = w_pq.astype(bf16)
        lp["b_pq"] = b_pq.reshape(1, -1)
        lp["w_pc"] = w_pc.astype(bf16)
        lp["b_pc"] = b_pc
        lp["w_o"] = w_o.astype(bf16)
        lp["b_o"] = b_o.reshape(1, D)
        lp["w_ff1"] = w_ff1.astype(bf16)
        lp["b_ff1"] = b_ff1.reshape(1, dim_feedforward)
        lp["w_ff2"] = w_ff2.astype(bf16)
        lp["b_ff2"] = b_ff2.reshape(1, D)
        lp["ln_a_g"] = jnp.ones((1, D), jnp.float32)
        lp["ln_a_b"] = jnp.zeros((1, D), jnp.float32)
        lp["ln1_g"] = jnp.ones((1, D), jnp.float32)
        lp["ln1_b"] = jnp.zeros((1, D), jnp.float32)
        lp["ln2_g"] = jnp.ones((1, D), jnp.float32)
        lp["ln2_b"] = jnp.zeros((1, D), jnp.float32)
        layers.append(lp)
    params["layers"] = layers
    return params


# ----------------------------------- main ----------------------------------------------------

if __name__ == "__main__":
    batch = 2
    seq_len = 8
    feat_dim = 4
    d_model = 32
    n_heads = 4          # MIDDLE_DIM (24) and d_model (32) both divisible by 4
    num_layers = 2
    dim_feedforward = 64
    proj_len = 16        # fixed in TSTransformerEncoder.__init__
    max_len = 64

    key = jax.random.PRNGKey(0)
    params = init_params(key, feat_dim, max_len, d_model, n_heads,
                         num_layers, dim_feedforward, proj_len)

    kx, _ = jax.random.split(jax.random.fold_in(key, 12345))
    X = jax.random.normal(kx, (batch, seq_len, feat_dim), jnp.float32)
    # padding_masks: True = keep. Batch 0 fully valid, batch 1 has 2 padded steps.
    padding_masks = jnp.array(
        [[True] * seq_len,
         [True] * (seq_len - 2) + [False] * 2],
        dtype=bool)

    fwd = jax.jit(functools.partial(ts_transformer_forward,
                                    d_model=d_model, n_heads=n_heads,
                                    proj_len=proj_len))
    out = fwd(params, X, padding_masks)
    out = jax.block_until_ready(out)
    assert out.shape == (batch, seq_len, feat_dim)
    assert bool(jnp.all(jnp.isfinite(out)))
    print("KERNEL_OK")
</pallas_src>

<mosaic_0001>
module attributes {stable_mosaic.version = 11 : i64} {
  func.func @_in_proj_kernel(%arg0: i32, %arg1: memref<1x8x4xf32, #tpu.memory_space<vmem>>, %arg2: memref<8x32xf32, #tpu.memory_space<vmem>>, %arg3: memref<4x32xbf16, #tpu.memory_space<vmem>>, %arg4: memref<1x32xf32, #tpu.memory_space<vmem>>, %arg5: memref<1x8x32xbf16, #tpu.memory_space<vmem>>) attributes {dimension_semantics = [#tpu.dimension_semantics<parallel>], iteration_bounds = array<i64: 2>, scalar_prefetch = 0 : i64, scratch_operands = 0 : i64, tpu.core_type = #tpu.core_type<tc>, window_params = [{transform_indices = @transform_0, window_bounds = array<i64: 1, 8, 4>}, {pipeline_mode = #tpu.pipeline_mode<synchronous>, transform_indices = @transform_1, window_bounds = array<i64: 8, 32>}, {pipeline_mode = #tpu.pipeline_mode<synchronous>, transform_indices = @transform_2, window_bounds = array<i64: 4, 32>}, {pipeline_mode = #tpu.pipeline_mode<synchronous>, transform_indices = @transform_3, window_bounds = array<i64: 1, 32>}, {transform_indices = @transform_4, window_bounds = array<i64: 1, 8, 32>}]} {
    %c0 = arith.constant 0 : index
    %c0_0 = arith.constant 0 : index
    %c0_1 = arith.constant 0 : index
    %0 = vector.load %arg1[%c0, %c0_0, %c0_1] : memref<1x8x4xf32, #tpu.memory_space<vmem>>, vector<1x8x4xf32>
    %1 = vector.shape_cast %0 : vector<1x8x4xf32> to vector<8x4xf32>
    %2 = arith.truncf %1 : vector<8x4xf32> to vector<8x4xbf16>
    %c0_2 = arith.constant 0 : index
    %c0_3 = arith.constant 0 : index
    %3 = vector.load %arg3[%c0_2, %c0_3] : memref<4x32xbf16, #tpu.memory_space<vmem>>, vector<4x32xbf16>
    %cst = arith.constant dense<0.000000e+00> : vector<8x32xf32>
    %4 = tpu.matmul %2, %3, %cst {dimension_numbers = #tpu.dot_dimension_numbers<[1], [0], [0], [1], [0, 0, 1, 1], [], []>} : vector<8x4xbf16>, vector<4x32xbf16>, vector<8x32xf32> -> vector<8x32xf32>
    %c0_4 = arith.constant 0 : index
    %c0_5 = arith.constant 0 : index
    %5 = vector.load %arg4[%c0_4, %c0_5] : memref<1x32xf32, #tpu.memory_space<vmem>>, vector<1x32xf32>
    %6 = vector.broadcast %5 : vector<1x32xf32> to vector<8x32xf32>
    %7 = arith.addf %4, %6 : vector<8x32xf32>
    %cst_6 = arith.constant 5.65685415 : f32
    %8 = vector.broadcast %cst_6 : f32 to vector<8x32xf32>
    %9 = arith.mulf %7, %8 : vector<8x32xf32>
    %c0_7 = arith.constant 0 : index
    %c0_8 = arith.constant 0 : index
    %10 = vector.load %arg2[%c0_7, %c0_8] : memref<8x32xf32, #tpu.memory_space<vmem>>, vector<8x32xf32>
    %11 = arith.addf %9, %10 : vector<8x32xf32>
    %12 = arith.truncf %11 : vector<8x32xf32> to vector<8x32xbf16>
    %c0_9 = arith.constant 0 : index
    %c0_10 = arith.constant 0 : index
    %c0_11 = arith.constant 0 : index
    %13 = vector.load %arg5[%c0_9, %c0_10, %c0_11] : memref<1x8x32xbf16, #tpu.memory_space<vmem>>, vector<1x8x32xbf16>
    %14 = vector.shape_cast %13 : vector<1x8x32xbf16> to vector<8x32xbf16>
    %15 = vector.shape_cast %12 : vector<8x32xbf16> to vector<1x8x32xbf16>
    tpu.vector_store %arg5[%c0_9, %c0_10, %c0_11], %15 {strides = array<i32>} : memref<1x8x32xbf16, #tpu.memory_space<vmem>>, vector<1x8x32xbf16>,
    return
  }
  func.func @transform_0(%arg0: i32) -> (i32, i32, i32) {
    %c0_i32 = arith.constant 0 : i32
    %c0_i32_0 = arith.constant 0 : i32
    %c0_i32_1 = arith.constant 0 : i32
    return %arg0, %c0_i32, %c0_i32_0 : i32, i32, i32
  }
  func.func @transform_1(%arg0: i32) -> (i32, i32) {
    %c0_i32 = arith.constant 0 : i32
    %c0_i32_0 = arith.constant 0 : i32
    %c0_i32_1 = arith.constant 0 : i32
    return %c0_i32, %c0_i32_0 : i32, i32
  }
  func.func @transform_2(%arg0: i32) -> (i32, i32) {
    %c0_i32 = arith.constant 0 : i32
    %c0_i32_0 = arith.constant 0 : i32
    %c0_i32_1 = arith.constant 0 : i32
    return %c0_i32, %c0_i32_0 : i32, i32
  }
  func.func @transform_3(%arg0: i32) -> (i32, i32) {
    %c0_i32 = arith.constant 0 : i32
    %c0_i32_0 = arith.constant 0 : i32
    %c0_i32_1 = arith.constant 0 : i32
    return %c0_i32, %c0_i32_0 : i32, i32
  }
  func.func @transform_4(%arg0: i32) -> (i32, i32, i32) {
    %c0_i32 = arith.constant 0 : i32
    %c0_i32_0 = arith.constant 0 : i32
    %c0_i32_1 = arith.constant 0 : i32
    return %arg0, %c0_i32, %c0_i32_0 : i32, i32, i32
  }
}

module attributes {stable_mosaic.version = 11 : i64} {
  func.func @_dba_stage_kernel(%arg0: i32, %arg1: memref<1x8x32xbf16, #tpu.memory_space<vmem>>, %arg2: memref<16x32xbf16, #tpu.memory_space<vmem>>, %arg3: memref<1x1x8xf32, #tpu.memory_space<vmem>>, %arg4: memref<32x384xbf16, #tpu.memory_space<vmem>>, %arg5: memref<1x384xf32, #tpu.memory_space<vmem>>, %arg6: memref<32x24xbf16, #tpu.memory_space<vmem>>, %arg7: memref<1x24xf32, #tpu.memory_space<vmem>>, %arg8: memref<32x384xbf16, #tpu.memory_space<vmem>>, %arg9: memref<1x384xf32, #tpu.memory_space<vmem>>, %arg10: memref<1x32xf32, #tpu.memory_space<vmem>>, %arg11: memref<1x32xf32, #tpu.memory_space<vmem>>, %arg12: memref<32x32xbf16, #tpu.memory_space<vmem>>, %arg13: memref<1x16x32xbf16, #tpu.memory_space<vmem>>, %arg14: memref<1x8x64xbf16, #tpu.memory_space<vmem>>, %arg15: memref<1x64x32xbf16, #tpu.memory_space<vmem>>, %arg16: memref<16x32xf32, #tpu.memory_space<vmem>>) attributes {dimension_semantics = [#tpu.dimension_semantics<parallel>], iteration_bounds = array<i64: 2>, scalar_prefetch = 0 : i64, scratch_operands = 1 : i64, tpu.core_type = #tpu.core_type<tc>, window_params = [{transform_indices = @transform_0, window_bounds = array<i64: 1, 8, 32>}, {pipeline_mode = #tpu.pipeline_mode<synchronous>, transform_indices = @transform_1, window_bounds = array<i64: 16, 32>}, {transform_indices = @transform_2, window_bounds = array<i64: 1, 1, 8>}, {pipeline_mode = #tpu.pipeline_mode<synchronous>, transform_indices = @transform_3, window_bounds = array<i64: 32, 384>}, {pipeline_mode = #tpu.pipeline_mode<synchronous>, transform_indices = @transform_4, window_bounds = array<i64: 1, 384>}, {pipeline_mode = #tpu.pipeline_mode<synchronous>, transform_indices = @transform_5, window_bounds = array<i64: 32, 24>}, {pipeline_mode = #tpu.pipeline_mode<synchronous>, transform_indices = @transform_6, window_bounds = array<i64: 1, 24>}, {pipeline_mode = #tpu.pipeline_mode<synchronous>, transform_indices = @transform_7, window_bounds = array<i64: 32, 384>}, {pipeline_mode = #tpu.pipeline_mode<synchronous>, transform_indices = @transform_8, window_bounds = array<i64: 1, 384>}, {pipeline_mode = #tpu.pipeline_mode<synchronous>, transform_indices = @transform_9, window_bounds = array<i64: 1, 32>}, {pipeline_mode = #tpu.pipeline_mode<synchronous>, transform_indices = @transform_10, window_bounds = array<i64: 1, 32>}, {pipeline_mode = #tpu.pipeline_mode<synchronous>, transform_indices = @transform_11, window_bounds = array<i64: 32, 32>}, {transform_indices = @transform_12, window_bounds = array<i64: 1, 16, 32>}, {transform_indices = @transform_13, window_bounds = array<i64: 1, 8, 64>}, {transform_indices = @transform_14, window_bounds = array<i64: 1, 64, 32>}]} {
    %c0 = arith.constant 0 : index
    %c0_0 = arith.constant 0 : index
    %c0_1 = arith.constant 0 : index
    %0 = vector.load %arg3[%c0, %c0_0, %c0_1] : memref<1x1x8xf32, #tpu.memory_space<vmem>>, vector<1x1x8xf32>
    %1 = vector.shape_cast %0 : vector<1x1x8xf32> to vector<1x8xf32>
    %c0_2 = arith.constant 0 : index
    %c0_3 = arith.constant 0 : index
    %c0_4 = arith.constant 0 : index
    %2 = vector.load %arg1[%c0_2, %c0_3, %c0_4] : memref<1x8x32xbf16, #tpu.memory_space<vmem>>, vector<1x8x32xbf16>
    %3 = vector.shape_cast %2 : vector<1x8x32xbf16> to vector<8x32xbf16>
    %c0_5 = arith.constant 0 : index
    %c0_6 = arith.constant 0 : index
    %4 = vector.load %arg4[%c0_5, %c0_6] : memref<32x384xbf16, #tpu.memory_space<vmem>>, vector<32x384xbf16>
    %cst = arith.constant dense<0.000000e+00> : vector<8x384xf32>
    %5 = tpu.matmul %3, %4, %cst {dimension_numbers = #tpu.dot_dimension_numbers<[1], [0], [0], [1], [0, 0, 1, 1], [], []>} : vector<8x32xbf16>, vector<32x384xbf16>, vector<8x384xf32> -> vector<8x384xf32>
    %c0_7 = arith.constant 0 : index
    %c0_8 = arith.constant 0 : index
    %6 = vector.load %arg5[%c0_7, %c0_8] : memref<1x384xf32, #tpu.memory_space<vmem>>, vector<1x384xf32>
    %7 = vector.broadcast %6 : vector<1x384xf32> to vector<8x384xf32>
    %8 = arith.addf %5, %7 : vector<8x384xf32>
    %9 = vector.extract_strided_slice %8 {offsets = [0, 0], sizes = [8, 32], strides = [1, 1]} : vector<8x384xf32> to vector<8x32xf32>
    %10 = arith.truncf %9 : vector<8x32xf32> to vector<8x32xbf16>
    %11 = vector.extract_strided_slice %8 {offsets = [0, 256], sizes = [8, 24], strides = [1, 1]} : vector<8x384xf32> to vector<8x24xf32>
    %12 = arith.truncf %11 : vector<8x24xf32> to vector<8x24xbf16>
    %c0_9 = arith.constant 0 : index
    %c0_10 = arith.constant 0 : index
    %13 = vector.load %arg2[%c0_9, %c0_10] : memref<16x32xbf16, #tpu.memory_space<vmem>>, vector<16x32xbf16>
    %c0_11 = arith.constant 0 : index
    %c0_12 = arith.constant 0 : index
    %14 = vector.load %arg6[%c0_11, %c0_12] : memref<32x24xbf16, #tpu.memory_space<vmem>>, vector<32x24xbf16>
    %cst_13 = arith.constant dense<0.000000e+00> : vector<16x24xf32>
    %15 = tpu.matmul %13, %14, %cst_13 {dimension_numbers = #tpu.dot_dimension_numbers<[1], [0], [0], [1], [0, 0, 1, 1], [], []>} : vector<16x32xbf16>, vector<32x24xbf16>, vector<16x24xf32> -> vector<16x24xf32>
    %c0_14 = arith.constant 0 : index
    %c0_15 = arith.constant 0 : index
    %16 = vector.load %arg7[%c0_14, %c0_15] : memref<1x24xf32, #tpu.memory_space<vmem>>, vector<1x24xf32>
    %17 = vector.broadcast %16 : vector<1x24xf32> to vector<16x24xf32>
    %18 = arith.addf %15, %17 : vector<16x24xf32>
    %cst_16 = arith.constant 0.408248305 : f32
    %19 = vector.broadcast %cst_16 : f32 to vector<16x24xf32>
    %20 = arith.mulf %18, %19 : vector<16x24xf32>
    %21 = arith.truncf %20 : vector<16x24xf32> to vector<16x24xbf16>
    %22 = vector.extract_strided_slice %21 {offsets = [0, 0], sizes = [16, 6], strides = [1, 1]} : vector<16x24xbf16> to vector<16x6xbf16>
    %23 = vector.extract_strided_slice %12 {offsets = [0, 0], sizes = [8, 6], strides = [1, 1]} : vector<8x24xbf16> to vector<8x6xbf16>
    %cst_17 = arith.constant dense<0.000000e+00> : vector<16x8xf32>
    %24 = tpu.matmul %22, %23, %cst_17 {dimension_numbers = #tpu.dot_dimension_numbers<[1], [1], [0], [0], [0, 0, 1, 0], [], []>} : vector<16x6xbf16>, vector<8x6xbf16>, vector<16x8xf32> -> vector<16x8xf32>
    %25 = vector.broadcast %1 : vector<1x8xf32> to vector<16x8xf32>
    %26 = arith.addf %24, %25 : vector<16x8xf32>
    %cst_18 = arith.constant dense<0xFF800000> : vector<16xf32>
    %27 = vector.multi_reduction <maximumf>, %26, %cst_18 [1] : vector<16x8xf32> to vector<16xf32>
    %28 = vector.shape_cast %27 : vector<16xf32> to vector<16x1xf32>
    %29 = vector.broadcast %28 : vector<16x1xf32> to vector<16x8xf32>
    %30 = arith.subf %26, %29 : vector<16x8xf32>
    %31 = math.exp %30 : vector<16x8xf32>
    %cst_19 = arith.constant dense<0.000000e+00> : vector<16xf32>
    %32 = vector.multi_reduction <add>, %31, %cst_19 [1] : vector<16x8xf32> to vector<16xf32>
    %33 = vector.shape_cast %32 : vector<16xf32> to vector<16x1xf32>
    %34 = vector.broadcast %33 : vector<16x1xf32> to vector<16x8xf32>
    %35 = arith.divf %31, %34 : vector<16x8xf32>
    %36 = arith.truncf %35 : vector<16x8xf32> to vector<16x8xbf16>
    %37 = vector.extract_strided_slice %10 {offsets = [0, 0], sizes = [8, 8], strides = [1, 1]} : vector<8x32xbf16> to vector<8x8xbf16>
    %cst_20 = arith.constant dense<0.000000e+00> : vector<16x8xf32>
    %38 = tpu.matmul %36, %37, %cst_20 {dimension_numbers = #tpu.dot_dimension_numbers<[1], [0], [0], [1], [0, 0, 1, 1], [], []>} : vector<16x8xbf16>, vector<8x8xbf16>, vector<16x8xf32> -> vector<16x8xf32>
    %39 = arith.truncf %38 : vector<16x8xf32> to vector<16x8xbf16>
    %c0_21 = arith.constant 0 : index
    %c0_22 = arith.constant 0 : index
    %c0_23 = arith.constant 0 : index
    %40 = vector.load %arg13[%c0_21, %c0_22, %c0_23] : memref<1x16x32xbf16, #tpu.memory_space<vmem>>, vector<1x16x8xbf16>
    %41 = vector.shape_cast %40 : vector<1x16x8xbf16> to vector<16x8xbf16>
    %42 = vector.shape_cast %39 : vector<16x8xbf16> to vector<1x16x8xbf16>
    tpu.vector_store %arg13[%c0_21, %c0_22, %c0_23], %42 {strides = array<i32>} : memref<1x16x32xbf16, #tpu.memory_space<vmem>>, vector<1x16x8xbf16>,
    %43 = vector.extract_strided_slice %21 {offsets = [0, 6], sizes = [16, 6], strides = [1, 1]} : vector<16x24xbf16> to vector<16x6xbf16>
    %44 = vector.extract_strided_slice %12 {offsets = [0, 6], sizes = [8, 6], strides = [1, 1]} : vector<8x24xbf16> to vector<8x6xbf16>
    %cst_24 = arith.constant dense<0.000000e+00> : vector<16x8xf32>
    %45 = tpu.matmul %43, %44, %cst_24 {dimension_numbers = #tpu.dot_dimension_numbers<[1], [1], [0], [0], [0, 0, 1, 0], [], []>} : vector<16x6xbf16>, vector<8x6xbf16>, vector<16x8xf32> -> vector<16x8xf32>
    %46 = vector.broadcast %1 : vector<1x8xf32> to vector<16x8xf32>
    %47 = arith.addf %45, %46 : vector<16x8xf32>
    %cst_25 = arith.constant dense<0xFF800000> : vector<16xf32>
    %48 = vector.multi_reduction <maximumf>, %47, %cst_25 [1] : vector<16x8xf32> to vector<16xf32>
    %49 = vector.shape_cast %48 : vector<16xf32> to vector<16x1xf32>
    %50 = vector.broadcast %49 : vector<16x1xf32> to vector<16x8xf32>
    %51 = arith.subf %47, %50 : vector<16x8xf32>
    %52 = math.exp %51 : vector<16x8xf32>
    %cst_26 = arith.constant dense<0.000000e+00> : vector<16xf32>
    %53 = vector.multi_reduction <add>, %52, %cst_26 [1] : vector<16x8xf32> to vector<16xf32>
    %54 = vector.shape_cast %53 : vector<16xf32> to vector<16x1xf32>
    %55 = vector.broadcast %54 : vector<16x1xf32> to vector<16x8xf32>
    %56 = arith.divf %52, %55 : vector<16x8xf32>
    %57 = arith.truncf %56 : vector<16x8xf32> to vector<16x8xbf16>
    %58 = vector.extract_strided_slice %10 {offsets = [0, 8], sizes = [8, 8], strides = [1, 1]} : vector<8x32xbf16> to vector<8x8xbf16>
    %cst_27 = arith.constant dense<0.000000e+00> : vector<16x8xf32>
    %59 = tpu.matmul %57, %58, %cst_27 {dimension_numbers = #tpu.dot_dimension_numbers<[1], [0], [0], [1], [0, 0, 1, 1], [], []>} : vector<16x8xbf16>, vector<8x8xbf16>, vector<16x8xf32> -> vector<16x8xf32>
    %60 = arith.truncf %59 : vector<16x8xf32> to vector<16x8xbf16>
    %c0_28 = arith.constant 0 : index
    %c0_29 = arith.constant 0 : index
    %c8 = arith.constant 8 : index
    %61 = vector.load %arg13[%c0_28, %c0_29, %c8] : memref<1x16x32xbf16, #tpu.memory_space<vmem>>, vector<1x16x8xbf16>
    %62 = vector.shape_cast %61 : vector<1x16x8xbf16> to vector<16x8xbf16>
    %63 = vector.shape_cast %60 : vector<16x8xbf16> to vector<1x16x8xbf16>
    tpu.vector_store %arg13[%c0_28, %c0_29, %c8], %63 {strides = array<i32>} : memref<1x16x32xbf16, #tpu.memory_space<vmem>>, vector<1x16x8xbf16>,
    %64 = vector.extract_strided_slice %21 {offsets = [0, 12], sizes = [16, 6], strides = [1, 1]} : vector<16x24xbf16> to vector<16x6xbf16>
    %65 = vector.extract_strided_slice %12 {offsets = [0, 12], sizes = [8, 6], strides = [1, 1]} : vector<8x24xbf16> to vector<8x6xbf16>
    %cst_30 = arith.constant dense<0.000000e+00> : vector<16x8xf32>
    %66 = tpu.matmul %64, %65, %cst_30 {dimension_numbers = #tpu.dot_dimension_numbers<[1], [1], [0], [0], [0, 0, 1, 0], [], []>} : vector<16x6xbf16>, vector<8x6xbf16>, vector<16x8xf32> -> vector<16x8xf32>
    %67 = vector.broadcast %1 : vector<1x8xf32> to vector<16x8xf32>
    %68 = arith.addf %66, %67 : vector<16x8xf32>
    %cst_31 = arith.constant dense<0xFF800000> : vector<16xf32>
    %69 = vector.multi_reduction <maximumf>, %68, %cst_31 [1] : vector<16x8xf32> to vector<16xf32>
    %70 = vector.shape_cast %69 : vector<16xf32> to vector<16x1xf32>
    %71 = vector.broadcast %70 : vector<16x1xf32> to vector<16x8xf32>
    %72 = arith.subf %68, %71 : vector<16x8xf32>
    %73 = math.exp %72 : vector<16x8xf32>
    %cst_32 = arith.constant dense<0.000000e+00> : vector<16xf32>
    %74 = vector.multi_reduction <add>, %73, %cst_32 [1] : vector<16x8xf32> to vector<16xf32>
    %75 = vector.shape_cast %74 : vector<16xf32> to vector<16x1xf32>
    %76 = vector.broadcast %75 : vector<16x1xf32> to vector<16x8xf32>
    %77 = arith.divf %73, %76 : vector<16x8xf32>
    %78 = arith.truncf %77 : vector<16x8xf32> to vector<16x8xbf16>
    %79 = vector.extract_strided_slice %10 {offsets = [0, 16], sizes = [8, 8], strides = [1, 1]} : vector<8x32xbf16> to vector<8x8xbf16>
    %cst_33 = arith.constant dense<0.000000e+00> : vector<16x8xf32>
    %80 = tpu.matmul %78, %79, %cst_33 {dimension_numbers = #tpu.dot_dimension_numbers<[1], [0], [0], [1], [0, 0, 1, 1], [], []>} : vector<16x8xbf16>, vector<8x8xbf16>, vector<16x8xf32> -> vector<16x8xf32>
    %81 = arith.truncf %80 : vector<16x8xf32> to vector<16x8xbf16>
    %c0_34 = arith.constant 0 : index
    %c0_35 = arith.constant 0 : index
    %c16 = arith.constant 16 : index
    %82 = vector.load %arg13[%c0_34, %c0_35, %c16] : memref<1x16x32xbf16, #tpu.memory_space<vmem>>, vector<1x16x8xbf16>
    %83 = vector.shape_cast %82 : vector<1x16x8xbf16> to vector<16x8xbf16>
    %84 = vector.shape_cast %81 : vector<16x8xbf16> to vector<1x16x8xbf16>
    tpu.vector_store %arg13[%c0_34, %c0_35, %c16], %84 {strides = array<i32>} : memref<1x16x32xbf16, #tpu.memory_space<vmem>>, vector<1x16x8xbf16>,
    %85 = vector.extract_strided_slice %21 {offsets = [0, 18], sizes = [16, 6], strides = [1, 1]} : vector<16x24xbf16> to vector<16x6xbf16>
    %86 = vector.extract_strided_slice %12 {offsets = [0, 18], sizes = [8, 6], strides = [1, 1]} : vector<8x24xbf16> to vector<8x6xbf16>
    %cst_36 = arith.constant dense<0.000000e+00> : vector<16x8xf32>
    %87 = tpu.matmul %85, %86, %cst_36 {dimension_numbers = #tpu.dot_dimension_numbers<[1], [1], [0], [0], [0, 0, 1, 0], [], []>} : vector<16x6xbf16>, vector<8x6xbf16>, vector<16x8xf32> -> vector<16x8xf32>
    %88 = vector.broadcast %1 : vector<1x8xf32> to vector<16x8xf32>
    %89 = arith.addf %87, %88 : vector<16x8xf32>
    %cst_37 = arith.constant dense<0xFF800000> : vector<16xf32>
    %90 = vector.multi_reduction <maximumf>, %89, %cst_37 [1] : vector<16x8xf32> to vector<16xf32>
    %91 = vector.shape_cast %90 : vector<16xf32> to vector<16x1xf32>
    %92 = vector.broadcast %91 : vector<16x1xf32> to vector<16x8xf32>
    %93 = arith.subf %89, %92 : vector<16x8xf32>
    %94 = math.exp %93 : vector<16x8xf32>
    %cst_38 = arith.constant dense<0.000000e+00> : vector<16xf32>
    %95 = vector.multi_reduction <add>, %94, %cst_38 [1] : vector<16x8xf32> to vector<16xf32>
    %96 = vector.shape_cast %95 : vector<16xf32> to vector<16x1xf32>
    %97 = vector.broadcast %96 : vector<16x1xf32> to vector<16x8xf32>
    %98 = arith.divf %94, %97 : vector<16x8xf32>
    %99 = arith.truncf %98 : vector<16x8xf32> to vector<16x8xbf16>
    %100 = vector.extract_strided_slice %10 {offsets = [0, 24], sizes = [8, 8], strides = [1, 1]} : vector<8x32xbf16> to vector<8x8xbf16>
    %cst_39 = arith.constant dense<0.000000e+00> : vector<16x8xf32>
    %101 = tpu.matmul %99, %100, %cst_39 {dimension_numbers = #tpu.dot_dimension_numbers<[1], [0], [0], [1], [0, 0, 1, 1], [], []>} : vector<16x8xbf16>, vector<8x8xbf16>, vector<16x8xf32> -> vector<16x8xf32>
    %102 = arith.truncf %101 : vector<16x8xf32> to vector<16x8xbf16>
    %c0_40 = arith.constant 0 : index
    %c0_41 = arith.constant 0 : index
    %c24 = arith.constant 24 : index
    %103 = vector.load %arg13[%c0_40, %c0_41, %c24] : memref<1x16x32xbf16, #tpu.memory_space<vmem>>, vector<1x16x8xbf16>
    %104 = vector.shape_cast %103 : vector<1x16x8xbf16> to vector<16x8xbf16>
    %105 = vector.shape_cast %102 : vector<16x8xbf16> to vector<1x16x8xbf16>
    tpu.vector_store %arg13[%c0_40, %c0_41, %c24], %105 {strides = array<i32>} : memref<1x16x32xbf16, #tpu.memory_space<vmem>>, vector<1x16x8xbf16>,
    %c0_42 = arith.constant 0 : index
    %c0_43 = arith.constant 0 : index
    %c0_44 = arith.constant 0 : index
    %106 = vector.load %arg13[%c0_42, %c0_43, %c0_44] : memref<1x16x32xbf16, #tpu.memory_space<vmem>>, vector<1x16x32xbf16>
    %107 = vector.shape_cast %106 : vector<1x16x32xbf16> to vector<16x32xbf16>
    %c0_45 = arith.constant 0 : index
    %c0_46 = arith.constant 0 : index
    %108 = vector.load %arg8[%c0_45, %c0_46] : memref<32x384xbf16, #tpu.memory_space<vmem>>, vector<32x384xbf16>
    %cst_47 = arith.constant dense<0.000000e+00> : vector<16x384xf32>
    %109 = tpu.matmul %107, %108, %cst_47 {dimension_numbers = #tpu.dot_dimension_numbers<[1], [0], [0], [1], [0, 0, 1, 1], [], []>} : vector<16x32xbf16>, vector<32x384xbf16>, vector<16x384xf32> -> vector<16x384xf32>
    %c0_48 = arith.constant 0 : index
    %c0_49 = arith.constant 0 : index
    %110 = vector.load %arg9[%c0_48, %c0_49] : memref<1x384xf32, #tpu.memory_space<vmem>>, vector<1x384xf32>
    %111 = vector.broadcast %110 : vector<1x384xf32> to vector<16x384xf32>
    %112 = arith.addf %109, %111 : vector<16x384xf32>
    %113 = vector.extract_strided_slice %112 {offsets = [0, 0], sizes = [16, 32], strides = [1, 1]} : vector<16x384xf32> to vector<16x32xf32>
    %114 = arith.truncf %113 : vector<16x32xf32> to vector<16x32xbf16>
    %115 = vector.extract_strided_slice %112 {offsets = [0, 128], sizes = [16, 24], strides = [1, 1]} : vector<16x384xf32> to vector<16x24xf32>
    %cst_50 = arith.constant 0.408248305 : f32
    %116 = vector.broadcast %cst_50 : f32 to vector<16x24xf32>
    %117 = arith.mulf %115, %116 : vector<16x24xf32>
    %118 = arith.truncf %117 : vector<16x24xf32> to vector<16x24xbf16>
    %119 = vector.extract_strided_slice %112 {offsets = [0, 256], sizes = [16, 24], strides = [1, 1]} : vector<16x384xf32> to vector<16x24xf32>
    %120 = arith.truncf %119 : vector<16x24xf32> to vector<16x24xbf16>
    %121 = vector.extract_strided_slice %118 {offsets = [0, 0], sizes = [16, 6], strides = [1, 1]} : vector<16x24xbf16> to vector<16x6xbf16>
    %122 = vector.extract_strided_slice %120 {offsets = [0, 0], sizes = [16, 6], strides = [1, 1]} : vector<16x24xbf16> to vector<16x6xbf16>
    %cst_51 = arith.constant dense<0.000000e+00> : vector<16x16xf32>
    %123 = tpu.matmul %121, %122, %cst_51 {dimension_numbers = #tpu.dot_dimension_numbers<[1], [1], [0], [0], [0, 0, 1, 0], [], []>} : vector<16x6xbf16>, vector<16x6xbf16>, vector<16x16xf32> -> vector<16x16xf32>
    %cst_52 = arith.constant dense<0xFF800000> : vector<16xf32>
    %124 = vector.multi_reduction <maximumf>, %123, %cst_52 [1] : vector<16x16xf32> to vector<16xf32>
    %125 = vector.shape_cast %124 : vector<16xf32> to vector<16x1xf32>
    %126 = vector.broadcast %125 : vector<16x1xf32> to vector<16x16xf32>
    %127 = arith.subf %123, %126 : vector<16x16xf32>
    %128 = math.exp %127 : vector<16x16xf32>
    %cst_53 = arith.constant dense<0.000000e+00> : vector<16xf32>
    %129 = vector.multi_reduction <add>, %128, %cst_53 [1] : vector<16x16xf32> to vector<16xf32>
    %130 = vector.shape_cast %129 : vector<16xf32> to vector<16x1xf32>
    %131 = vector.broadcast %130 : vector<16x1xf32> to vector<16x16xf32>
    %132 = arith.divf %128, %131 : vector<16x16xf32>
    %133 = arith.truncf %132 : vector<16x16xf32> to vector<16x16xbf16>
    %134 = vector.extract_strided_slice %114 {offsets = [0, 0], sizes = [16, 8], strides = [1, 1]} : vector<16x32xbf16> to vector<16x8xbf16>
    %cst_54 = arith.constant dense<0.000000e+00> : vector<16x8xf32>
    %135 = tpu.matmul %133, %134, %cst_54 {dimension_numbers = #tpu.dot_dimension_numbers<[1], [0], [0], [1], [0, 0, 1, 1], [], []>} : vector<16x16xbf16>, vector<16x8xbf16>, vector<16x8xf32> -> vector<16x8xf32>
    %c0_55 = arith.constant 0 : index
    %c0_56 = arith.constant 0 : index
    %136 = vector.load %arg16[%c0_55, %c0_56] : memref<16x32xf32, #tpu.memory_space<vmem>>, vector<16x8xf32>
    tpu.vector_store %arg16[%c0_55, %c0_56], %135 {strides = array<i32>} : memref<16x32xf32, #tpu.memory_space<vmem>>, vector<16x8xf32>,
    %137 = vector.extract_strided_slice %118 {offsets = [0, 6], sizes = [16, 6], strides = [1, 1]} : vector<16x24xbf16> to vector<16x6xbf16>
    %138 = vector.extract_strided_slice %120 {offsets = [0, 6], sizes = [16, 6], strides = [1, 1]} : vector<16x24xbf16> to vector<16x6xbf16>
    %cst_57 = arith.constant dense<0.000000e+00> : vector<16x16xf32>
    %139 = tpu.matmul %137, %138, %cst_57 {dimension_numbers = #tpu.dot_dimension_numbers<[1], [1], [0], [0], [0, 0, 1, 0], [], []>} : vector<16x6xbf16>, vector<16x6xbf16>, vector<16x16xf32> -> vector<16x16xf32>
    %cst_58 = arith.constant dense<0xFF800000> : vector<16xf32>
    %140 = vector.multi_reduction <maximumf>, %139, %cst_58 [1] : vector<16x16xf32> to vector<16xf32>
    %141 = vector.shape_cast %140 : vector<16xf32> to vector<16x1xf32>
    %142 = vector.broadcast %141 : vector<16x1xf32> to vector<16x16xf32>
    %143 = arith.subf %139, %142 : vector<16x16xf32>
    %144 = math.exp %143 : vector<16x16xf32>
    %cst_59 = arith.constant dense<0.000000e+00> : vector<16xf32>
    %145 = vector.multi_reduction <add>, %144, %cst_59 [1] : vector<16x16xf32> to vector<16xf32>
    %146 = vector.shape_cast %145 : vector<16xf32> to vector<16x1xf32>
    %147 = vector.broadcast %146 : vector<16x1xf32> to vector<16x16xf32>
    %148 = arith.divf %144, %147 : vector<16x16xf32>
    %149 = arith.truncf %148 : vector<16x16xf32> to vector<16x16xbf16>
    %150 = vector.extract_strided_slice %114 {offsets = [0, 8], sizes = [16, 8], strides = [1, 1]} : vector<16x32xbf16> to vector<16x8xbf16>
    %cst_60 = arith.constant dense<0.000000e+00> : vector<16x8xf32>
    %151 = tpu.matmul %149, %150, %cst_60 {dimension_numbers = #tpu.dot_dimension_numbers<[1], [0], [0], [1], [0, 0, 1, 1], [], []>} : vector<16x16xbf16>, vector<16x8xbf16>, vector<16x8xf32> -> vector<16x8xf32>
    %c0_61 = arith.constant 0 : index
    %c8_62 = arith.constant 8 : index
    %152 = vector.load %arg16[%c0_61, %c8_62] : memref<16x32xf32, #tpu.memory_space<vmem>>, vector<16x8xf32>
    tpu.vector_store %arg16[%c0_61, %c8_62], %151 {strides = array<i32>} : memref<16x32xf32, #tpu.memory_space<vmem>>, vector<16x8xf32>,
    %153 = vector.extract_strided_slice %118 {offsets = [0, 12], sizes = [16, 6], strides = [1, 1]} : vector<16x24xbf16> to vector<16x6xbf16>
    %154 = vector.extract_strided_slice %120 {offsets = [0, 12], sizes = [16, 6], strides = [1, 1]} : vector<16x24xbf16> to vector<16x6xbf16>
    %cst_63 = arith.constant dense<0.000000e+00> : vector<16x16xf32>
    %155 = tpu.matmul %153, %154, %cst_63 {dimension_numbers = #tpu.dot_dimension_numbers<[1], [1], [0], [0], [0, 0, 1, 0], [], []>} : vector<16x6xbf16>, vector<16x6xbf16>, vector<16x16xf32> -> vector<16x16xf32>
    %cst_64 = arith.constant dense<0xFF800000> : vector<16xf32>
    %156 = vector.multi_reduction <maximumf>, %155, %cst_64 [1] : vector<16x16xf32> to vector<16xf32>
    %157 = vector.shape_cast %156 : vector<16xf32> to vector<16x1xf32>
    %158 = vector.broadcast %157 : vector<16x1xf32> to vector<16x16xf32>
    %159 = arith.subf %155, %158 : vector<16x16xf32>
    %160 = math.exp %159 : vector<16x16xf32>
    %cst_65 = arith.constant dense<0.000000e+00> : vector<16xf32>
    %161 = vector.multi_reduction <add>, %160, %cst_65 [1] : vector<16x16xf32> to vector<16xf32>
    %162 = vector.shape_cast %161 : vector<16xf32> to vector<16x1xf32>
    %163 = vector.broadcast %162 : vector<16x1xf32> to vector<16x16xf32>
    %164 = arith.divf %160, %163 : vector<16x16xf32>
    %165 = arith.truncf %164 : vector<16x16xf32> to vector<16x16xbf16>
    %166 = vector.extract_strided_slice %114 {offsets = [0, 16], sizes = [16, 8], strides = [1, 1]} : vector<16x32xbf16> to vector<16x8xbf16>
    %cst_66 = arith.constant dense<0.000000e+00> : vector<16x8xf32>
    %167 = tpu.matmul %165, %166, %cst_66 {dimension_numbers = #tpu.dot_dimension_numbers<[1], [0], [0], [1], [0, 0, 1, 1], [], []>} : vector<16x16xbf16>, vector<16x8xbf16>, vector<16x8xf32> -> vector<16x8xf32>
    %c0_67 = arith.constant 0 : index
    %c16_68 = arith.constant 16 : index
    %168 = vector.load %arg16[%c0_67, %c16_68] : memref<16x32xf32, #tpu.memory_space<vmem>>, vector<16x8xf32>
    tpu.vector_store %arg16[%c0_67, %c16_68], %167 {strides = array<i32>} : memref<16x32xf32, #tpu.memory_space<vmem>>, vector<16x8xf32>,
    %169 = vector.extract_strided_slice %118 {offsets = [0, 18], sizes = [16, 6], strides = [1, 1]} : vector<16x24xbf16> to vector<16x6xbf16>
    %170 = vector.extract_strided_slice %120 {offsets = [0, 18], sizes = [16, 6], strides = [1, 1]} : vector<16x24xbf16> to vector<16x6xbf16>
    %cst_69 = arith.constant dense<0.000000e+00> : vector<16x16xf32>
    %171 = tpu.matmul %169, %170, %cst_69 {dimension_numbers = #tpu.dot_dimension_numbers<[1], [1], [0], [0], [0, 0, 1, 0], [], []>} : vector<16x6xbf16>, vector<16x6xbf16>, vector<16x16xf32> -> vector<16x16xf32>
    %cst_70 = arith.constant dense<0xFF800000> : vector<16xf32>
    %172 = vector.multi_reduction <maximumf>, %171, %cst_70 [1] : vector<16x16xf32> to vector<16xf32>
    %173 = vector.shape_cast %172 : vector<16xf32> to vector<16x1xf32>
    %174 = vector.broadcast %173 : vector<16x1xf32> to vector<16x16xf32>
    %175 = arith.subf %171, %174 : vector<16x16xf32>
    %176 = math.exp %175 : vector<16x16xf32>
    %cst_71 = arith.constant dense<0.000000e+00> : vector<16xf32>
    %177 = vector.multi_reduction <add>, %176, %cst_71 [1] : vector<16x16xf32> to vector<16xf32>
    %178 = vector.shape_cast %177 : vector<16xf32> to vector<16x1xf32>
    %179 = vector.broadcast %178 : vector<16x1xf32> to vector<16x16xf32>
    %180 = arith.divf %176, %179 : vector<16x16xf32>
    %181 = arith.truncf %180 : vector<16x16xf32> to vector<16x16xbf16>
    %182 = vector.extract_strided_slice %114 {offsets = [0, 24], sizes = [16, 8], strides = [1, 1]} : vector<16x32xbf16> to vector<16x8xbf16>
    %cst_72 = arith.constant dense<0.000000e+00> : vector<16x8xf32>
    %183 = tpu.matmul %181, %182, %cst_72 {dimension_numbers = #tpu.dot_dimension_numbers<[1], [0], [0], [1], [0, 0, 1, 1], [], []>} : vector<16x16xbf16>, vector<16x8xbf16>, vector<16x8xf32> -> vector<16x8xf32>
    %c0_73 = arith.constant 0 : index
    %c24_74 = arith.constant 24 : index
    %184 = vector.load %arg16[%c0_73, %c24_74] : memref<16x32xf32, #tpu.memory_space<vmem>>, vector<16x8xf32>
    tpu.vector_store %arg16[%c0_73, %c24_74], %183 {strides = array<i32>} : memref<16x32xf32, #tpu.memory_space<vmem>>, vector<16x8xf32>,
    %c0_75 = arith.constant 0 : index
    %c0_76 = arith.constant 0 : index
    %185 = vector.load %arg16[%c0_75, %c0_76] : memref<16x32xf32, #tpu.memory_space<vmem>>, vector<16x32xf32>
    %c0_77 = arith.constant 0 : index
    %c0_78 = arith.constant 0 : index
    %186 = vector.load %arg10[%c0_77, %c0_78] : memref<1x32xf32, #tpu.memory_space<vmem>>, vector<1x32xf32>
    %c0_79 = arith.constant 0 : index
    %c0_80 = arith.constant 0 : index
    %187 = vector.load %arg11[%c0_79, %c0_80] : memref<1x32xf32, #tpu.memory_space<vmem>>, vector<1x32xf32>
    %cst_81 = arith.constant dense<0.000000e+00> : vector<16xf32>
    %188 = vector.multi_reduction <add>, %185, %cst_81 [1] : vector<16x32xf32> to vector<16xf32>
    %189 = vector.shape_cast %188 : vector<16xf32> to vector<16x1xf32>
    %cst_82 = arith.constant 3.200000e+01 : f32
    %190 = vector.broadcast %cst_82 : f32 to vector<16x1xf32>
    %191 = arith.divf %189, %190 : vector<16x1xf32>
    %192 = vector.broadcast %191 : vector<16x1xf32> to vector<16x32xf32>
    %193 = arith.subf %185, %192 : vector<16x32xf32>
    %194 = arith.mulf %193, %193 : vector<16x32xf32>
    %cst_83 = arith.constant dense<0.000000e+00> : vector<16xf32>
    %195 = vector.multi_reduction <add>, %194, %cst_83 [1] : vector<16x32xf32> to vector<16xf32>
    %196 = vector.shape_cast %195 : vector<16xf32> to vector<16x1xf32>
    %cst_84 = arith.constant 3.200000e+01 : f32
    %197 = vector.broadcast %cst_84 : f32 to vector<16x1xf32>
    %198 = arith.divf %196, %197 : vector<16x1xf32>
    %199 = vector.broadcast %191 : vector<16x1xf32> to vector<16x32xf32>
    %200 = arith.subf %185, %199 : vector<16x32xf32>
    %cst_85 = arith.constant 9.99999974E-6 : f32
    %201 = vector.broadcast %cst_85 : f32 to vector<16x1xf32>
    %202 = arith.addf %198, %201 : vector<16x1xf32>
    %203 = math.rsqrt %202 : vector<16x1xf32>
    %204 = vector.broadcast %203 : vector<16x1xf32> to vector<16x32xf32>
    %205 = arith.mulf %200, %204 : vector<16x32xf32>
    %206 = vector.broadcast %186 : vector<1x32xf32> to vector<16x32xf32>
    %207 = arith.mulf %205, %206 : vector<16x32xf32>
    %208 = vector.broadcast %187 : vector<1x32xf32> to vector<16x32xf32>
    %209 = arith.addf %207, %208 : vector<16x32xf32>
    %210 = arith.truncf %209 : vector<16x32xf32> to vector<16x32xbf16>
    %211 = vector.extract_strided_slice %210 {offsets = [0, 0], sizes = [16, 8], strides = [1, 1]} : vector<16x32xbf16> to vector<16x8xbf16>
    %c0_86 = arith.constant 0 : index
    %c0_87 = arith.constant 0 : index
    %212 = vector.load %arg12[%c0_86, %c0_87] : memref<32x32xbf16, #tpu.memory_space<vmem>>, vector<8x32xbf16>
    %cst_88 = arith.constant dense<0.000000e+00> : vector<16x32xf32>
    %213 = tpu.matmul %211, %212, %cst_88 {dimension_numbers = #tpu.dot_dimension_numbers<[1], [0], [0], [1], [0, 0, 1, 1], [], []>} : vector<16x8xbf16>, vector<8x32xbf16>, vector<16x32xf32> -> vector<16x32xf32>
    %214 = arith.truncf %213 : vector<16x32xf32> to vector<16x32xbf16>
    %c0_89 = arith.constant 0 : index
    %c0_90 = arith.constant 0 : index
    %c0_91 = arith.constant 0 : index
    %215 = vector.load %arg15[%c0_89, %c0_90, %c0_91] : memref<1x64x32xbf16, #tpu.memory_space<vmem>>, vector<1x16x32xbf16>
    %216 = vector.shape_cast %215 : vector<1x16x32xbf16> to vector<16x32xbf16>
    %217 = vector.shape_cast %214 : vector<16x32xbf16> to vector<1x16x32xbf16>
    tpu.vector_store %arg15[%c0_89, %c0_90, %c0_91], %217 {strides = array<i32>} : memref<1x64x32xbf16, #tpu.memory_space<vmem>>, vector<1x16x32xbf16>,
    %218 = vector.extract_strided_slice %210 {offsets = [0, 8], sizes = [16, 8], strides = [1, 1]} : vector<16x32xbf16> to vector<16x8xbf16>
    %c8_92 = arith.constant 8 : index
    %c0_93 = arith.constant 0 : index
    %219 = vector.load %arg12[%c8_92, %c0_93] : memref<32x32xbf16, #tpu.memory_space<vmem>>, vector<8x32xbf16>
    %cst_94 = arith.constant dense<0.000000e+00> : vector<16x32xf32>
    %220 = tpu.matmul %218, %219, %cst_94 {dimension_numbers = #tpu.dot_dimension_numbers<[1], [0], [0], [1], [0, 0, 1, 1], [], []>} : vector<16x8xbf16>, vector<8x32xbf16>, vector<16x32xf32> -> vector<16x32xf32>
    %221 = arith.truncf %220 : vector<16x32xf32> to vector<16x32xbf16>
    %c0_95 = arith.constant 0 : index
    %c16_96 = arith.constant 16 : index
    %c0_97 = arith.constant 0 : index
    %222 = vector.load %arg15[%c0_95, %c16_96, %c0_97] : memref<1x64x32xbf16, #tpu.memory_space<vmem>>, vector<1x16x32xbf16>
    %223 = vector.shape_cast %222 : vector<1x16x32xbf16> to vector<16x32xbf16>
    %224 = vector.shape_cast %221 : vector<16x32xbf16> to vector<1x16x32xbf16>
    tpu.vector_store %arg15[%c0_95, %c16_96, %c0_97], %224 {strides = array<i32>} : memref<1x64x32xbf16, #tpu.memory_space<vmem>>, vector<1x16x32xbf16>,
    %225 = vector.extract_strided_slice %210 {offsets = [0, 16], sizes = [16, 8], strides = [1, 1]} : vector<16x32xbf16> to vector<16x8xbf16>
    %c16_98 = arith.constant 16 : index
    %c0_99 = arith.constant 0 : index
    %226 = vector.load %arg12[%c16_98, %c0_99] : memref<32x32xbf16, #tpu.memory_space<vmem>>, vector<8x32xbf16>
    %cst_100 = arith.constant dense<0.000000e+00> : vector<16x32xf32>
    %227 = tpu.matmul %225, %226, %cst_100 {dimension_numbers = #tpu.dot_dimension_numbers<[1], [0], [0], [1], [0, 0, 1, 1], [], []>} : vector<16x8xbf16>, vector<8x32xbf16>, vector<16x32xf32> -> vector<16x32xf32>
    %228 = arith.truncf %227 : vector<16x32xf32> to vector<16x32xbf16>
    %c0_101 = arith.constant 0 : index
    %c32 = arith.constant 32 : index
    %c0_102 = arith.constant 0 : index
    %229 = vector.load %arg15[%c0_101, %c32, %c0_102] : memref<1x64x32xbf16, #tpu.memory_space<vmem>>, vector<1x16x32xbf16>
    %230 = vector.shape_cast %229 : vector<1x16x32xbf16> to vector<16x32xbf16>
    %231 = vector.shape_cast %228 : vector<16x32xbf16> to vector<1x16x32xbf16>
    tpu.vector_store %arg15[%c0_101, %c32, %c0_102], %231 {strides = array<i32>} : memref<1x64x32xbf16, #tpu.memory_space<vmem>>, vector<1x16x32xbf16>,
    %232 = vector.extract_strided_slice %210 {offsets = [0, 24], sizes = [16, 8], strides = [1, 1]} : vector<16x32xbf16> to vector<16x8xbf16>
    %c24_103 = arith.constant 24 : index
    %c0_104 = arith.constant 0 : index
    %233 = vector.load %arg12[%c24_103, %c0_104] : memref<32x32xbf16, #tpu.memory_space<vmem>>, vector<8x32xbf16>
    %cst_105 = arith.constant dense<0.000000e+00> : vector<16x32xf32>
    %234 = tpu.matmul %232, %233, %cst_105 {dimension_numbers = #tpu.dot_dimension_numbers<[1], [0], [0], [1], [0, 0, 1, 1], [], []>} : vector<16x8xbf16>, vector<8x32xbf16>, vector<16x32xf32> -> vector<16x32xf32>
    %235 = arith.truncf %234 : vector<16x32xf32> to vector<16x32xbf16>
    %c0_106 = arith.constant 0 : index
    %c48 = arith.constant 48 : index
    %c0_107 = arith.constant 0 : index
    %236 = vector.load %arg15[%c0_106, %c48, %c0_107] : memref<1x64x32xbf16, #tpu.memory_space<vmem>>, vector<1x16x32xbf16>
    %237 = vector.shape_cast %236 : vector<1x16x32xbf16> to vector<16x32xbf16>
    %238 = vector.shape_cast %235 : vector<16x32xbf16> to vector<1x16x32xbf16>
    tpu.vector_store %arg15[%c0_106, %c48, %c0_107], %238 {strides = array<i32>} : memref<1x64x32xbf16, #tpu.memory_space<vmem>>, vector<1x16x32xbf16>,
    %239 = vector.extract_strided_slice %8 {offsets = [0, 128], sizes = [8, 16], strides = [1, 1]} : vector<8x384xf32> to vector<8x16xf32>
    %cst_108 = arith.constant dense<0xFF800000> : vector<8xf32>
    %240 = vector.multi_reduction <maximumf>, %239, %cst_108 [1] : vector<8x16xf32> to vector<8xf32>
    %241 = vector.shape_cast %240 : vector<8xf32> to vector<8x1xf32>
    %242 = vector.broadcast %241 : vector<8x1xf32> to vector<8x16xf32>
    %243 = arith.subf %239, %242 : vector<8x16xf32>
    %244 = math.exp %243 : vector<8x16xf32>
    %cst_109 = arith.constant dense<0.000000e+00> : vector<8xf32>
    %245 = vector.multi_reduction <add>, %244, %cst_109 [1] : vector<8x16xf32> to vector<8xf32>
    %246 = vector.shape_cast %245 : vector<8xf32> to vector<8x1xf32>
    %247 = vector.broadcast %246 : vector<8x1xf32> to vector<8x16xf32>
    %248 = arith.divf %244, %247 : vector<8x16xf32>
    %249 = arith.truncf %248 : vector<8x16xf32> to vector<8x16xbf16>
    %c0_110 = arith.constant 0 : index
    %c0_111 = arith.constant 0 : index
    %c0_112 = arith.constant 0 : index
    %250 = vector.load %arg14[%c0_110, %c0_111, %c0_112] : memref<1x8x64xbf16, #tpu.memory_space<vmem>>, vector<1x8x16xbf16>
    %251 = vector.shape_cast %250 : vector<1x8x16xbf16> to vector<8x16xbf16>
    %252 = vector.shape_cast %249 : vector<8x16xbf16> to vector<1x8x16xbf16>
    tpu.vector_store %arg14[%c0_110, %c0_111, %c0_112], %252 {strides = array<i32>} : memref<1x8x64xbf16, #tpu.memory_space<vmem>>, vector<1x8x16xbf16>,
    %253 = vector.extract_strided_slice %8 {offsets = [0, 144], sizes = [8, 16], strides = [1, 1]} : vector<8x384xf32> to vector<8x16xf32>
    %cst_113 = arith.constant dense<0xFF800000> : vector<8xf32>
    %254 = vector.multi_reduction <maximumf>, %253, %cst_113 [1] : vector<8x16xf32> to vector<8xf32>
    %255 = vector.shape_cast %254 : vector<8xf32> to vector<8x1xf32>
    %256 = vector.broadcast %255 : vector<8x1xf32> to vector<8x16xf32>
    %257 = arith.subf %253, %256 : vector<8x16xf32>
    %258 = math.exp %257 : vector<8x16xf32>
    %cst_114 = arith.constant dense<0.000000e+00> : vector<8xf32>
    %259 = vector.multi_reduction <add>, %258, %cst_114 [1] : vector<8x16xf32> to vector<8xf32>
    %260 = vector.shape_cast %259 : vector<8xf32> to vector<8x1xf32>
    %261 = vector.broadcast %260 : vector<8x1xf32> to vector<8x16xf32>
    %262 = arith.divf %258, %261 : vector<8x16xf32>
    %263 = arith.truncf %262 : vector<8x16xf32> to vector<8x16xbf16>
    %c0_115 = arith.constant 0 : index
    %c0_116 = arith.constant 0 : index
    %c16_117 = arith.constant 16 : index
    %264 = vector.load %arg14[%c0_115, %c0_116, %c16_117] : memref<1x8x64xbf16, #tpu.memory_space<vmem>>, vector<1x8x16xbf16>
    %265 = vector.shape_cast %264 : vector<1x8x16xbf16> to vector<8x16xbf16>
    %266 = vector.shape_cast %263 : vector<8x16xbf16> to vector<1x8x16xbf16>
    tpu.vector_store %arg14[%c0_115, %c0_116, %c16_117], %266 {strides = array<i32>} : memref<1x8x64xbf16, #tpu.memory_space<vmem>>, vector<1x8x16xbf16>,
    %267 = vector.extract_strided_slice %8 {offsets = [0, 160], sizes = [8, 16], strides = [1, 1]} : vector<8x384xf32> to vector<8x16xf32>
    %cst_118 = arith.constant dense<0xFF800000> : vector<8xf32>
    %268 = vector.multi_reduction <maximumf>, %267, %cst_118 [1] : vector<8x16xf32> to vector<8xf32>
    %269 = vector.shape_cast %268 : vector<8xf32> to vector<8x1xf32>
    %270 = vector.broadcast %269 : vector<8x1xf32> to vector<8x16xf32>
    %271 = arith.subf %267, %270 : vector<8x16xf32>
    %272 = math.exp %271 : vector<8x16xf32>
    %cst_119 = arith.constant dense<0.000000e+00> : vector<8xf32>
    %273 = vector.multi_reduction <add>, %272, %cst_119 [1] : vector<8x16xf32> to vector<8xf32>
    %274 = vector.shape_cast %273 : vector<8xf32> to vector<8x1xf32>
    %275 = vector.broadcast %274 : vector<8x1xf32> to vector<8x16xf32>
    %276 = arith.divf %272, %275 : vector<8x16xf32>
    %277 = arith.truncf %276 : vector<8x16xf32> to vector<8x16xbf16>
    %c0_120 = arith.constant 0 : index
    %c0_121 = arith.constant 0 : index
    %c32_122 = arith.constant 32 : index
    %278 = vector.load %arg14[%c0_120, %c0_121, %c32_122] : memref<1x8x64xbf16, #tpu.memory_space<vmem>>, vector<1x8x16xbf16>
    %279 = vector.shape_cast %278 : vector<1x8x16xbf16> to vector<8x16xbf16>
    %280 = vector.shape_cast %277 : vector<8x16xbf16> to vector<1x8x16xbf16>
    tpu.vector_store %arg14[%c0_120, %c0_121, %c32_122], %280 {strides = array<i32>} : memref<1x8x64xbf16, #tpu.memory_space<vmem>>, vector<1x8x16xbf16>,
    %281 = vector.extract_strided_slice %8 {offsets = [0, 176], sizes = [8, 16], strides = [1, 1]} : vector<8x384xf32> to vector<8x16xf32>
    %cst_123 = arith.constant dense<0xFF800000> : vector<8xf32>
    %282 = vector.multi_reduction <maximumf>, %281, %cst_123 [1] : vector<8x16xf32> to vector<8xf32>
    %283 = vector.shape_cast %282 : vector<8xf32> to vector<8x1xf32>
    %284 = vector.broadcast %283 : vector<8x1xf32> to vector<8x16xf32>
    %285 = arith.subf %281, %284 : vector<8x16xf32>
    %286 = math.exp %285 : vector<8x16xf32>
    %cst_124 = arith.constant dense<0.000000e+00> : vector<8xf32>
    %287 = vector.multi_reduction <add>, %286, %cst_124 [1] : vector<8x16xf32> to vector<8xf32>
    %288 = vector.shape_cast %287 : vector<8xf32> to vector<8x1xf32>
    %289 = vector.broadcast %288 : vector<8x1xf32> to vector<8x16xf32>
    %290 = arith.divf %286, %289 : vector<8x16xf32>
    %291 = arith.truncf %290 : vector<8x16xf32> to vector<8x16xbf16>
    %c0_125 = arith.constant 0 : index
    %c0_126 = arith.constant 0 : index
    %c48_127 = arith.constant 48 : index
    %292 = vector.load %arg14[%c0_125, %c0_126, %c48_127] : memref<1x8x64xbf16, #tpu.memory_space<vmem>>, vector<1x8x16xbf16>
    %293 = vector.shape_cast %292 : vector<1x8x16xbf16> to vector<8x16xbf16>
    %294 = vector.shape_cast %291 : vector<8x16xbf16> to vector<1x8x16xbf16>
    tpu.vector_store %arg14[%c0_125, %c0_126, %c48_127], %294 {strides = array<i32>} : memref<1x8x64xbf16, #tpu.memory_space<vmem>>, vector<1x8x16xbf16>,
    return
  }
  func.func @transform_0(%arg0: i32) -> (i32, i32, i32) {
    %c0_i32 = arith.constant 0 : i32
    %c0_i32_0 = arith.constant 0 : i32
    %c0_i32_1 = arith.constant 0 : i32
    return %arg0, %c0_i32, %c0_i32_0 : i32, i32, i32
  }
  func.func @transform_1(%arg0: i32) -> (i32, i32) {
    %c0_i32 = arith.constant 0 : i32
    %c0_i32_0 = arith.constant 0 : i32
    %c0_i32_1 = arith.constant 0 : i32
    return %c0_i32, %c0_i32_0 : i32, i32
  }
  func.func @transform_2(%arg0: i32) -> (i32, i32, i32) {
    %c0_i32 = arith.constant 0 : i32
    %c0_i32_0 = arith.constant 0 : i32
    %c0_i32_1 = arith.constant 0 : i32
    return %arg0, %c0_i32, %c0_i32_0 : i32, i32, i32
  }
  func.func @transform_3(%arg0: i32) -> (i32, i32) {
    %c0_i32 = arith.constant 0 : i32
    %c0_i32_0 = arith.constant 0 : i32
    %c0_i32_1 = arith.constant 0 : i32
    return %c0_i32, %c0_i32_0 : i32, i32
  }
  func.func @transform_4(%arg0: i32) -> (i32, i32) {
    %c0_i32 = arith.constant 0 : i32
    %c0_i32_0 = arith.constant 0 : i32
    %c0_i32_1 = arith.constant 0 : i32
    return %c0_i32, %c0_i32_0 : i32, i32
  }
  func.func @transform_5(%arg0: i32) -> (i32, i32) {
    %c0_i32 = arith.constant 0 : i32
    %c0_i32_0 = arith.constant 0 : i32
    %c0_i32_1 = arith.constant 0 : i32
    return %c0_i32, %c0_i32_0 : i32, i32
  }
  func.func @transform_6(%arg0: i32) -> (i32, i32) {
    %c0_i32 = arith.constant 0 : i32
    %c0_i32_0 = arith.constant 0 : i32
    %c0_i32_1 = arith.constant 0 : i32
    return %c0_i32, %c0_i32_0 : i32, i32
  }
  func.func @transform_7(%arg0: i32) -> (i32, i32) {
    %c0_i32 = arith.constant 0 : i32
    %c0_i32_0 = arith.constant 0 : i32
    %c0_i32_1 = arith.constant 0 : i32
    return %c0_i32, %c0_i32_0 : i32, i32
  }
  func.func @transform_8(%arg0: i32) -> (i32, i32) {
    %c0_i32 = arith.constant 0 : i32
    %c0_i32_0 = arith.constant 0 : i32
    %c0_i32_1 = arith.constant 0 : i32
    return %c0_i32, %c0_i32_0 : i32, i32
  }
  func.func @transform_9(%arg0: i32) -> (i32, i32) {
    %c0_i32 = arith.constant 0 : i32
    %c0_i32_0 = arith.constant 0 : i32
    %c0_i32_1 = arith.constant 0 : i32
    return %c0_i32, %c0_i32_0 : i32, i32
  }
  func.func @transform_10(%arg0: i32) -> (i32, i32) {
    %c0_i32 = arith.constant 0 : i32
    %c0_i32_0 = arith.constant 0 : i32
    %c0_i32_1 = arith.constant 0 : i32
    return %c0_i32, %c0_i32_0 : i32, i32
  }
  func.func @transform_11(%arg0: i32) -> (i32, i32) {
    %c0_i32 = arith.constant 0 : i32
    %c0_i32_0 = arith.constant 0 : i32
    %c0_i32_1 = arith.constant 0 : i32
    return %c0_i32, %c0_i32_0 : i32, i32
  }
  func.func @transform_12(%arg0: i32) -> (i32, i32, i32) {
    %c0_i32 = arith.constant 0 : i32
    %c0_i32_0 = arith.constant 0 : i32
    %c0_i32_1 = arith.constant 0 : i32
    return %arg0, %c0_i32, %c0_i32_0 : i32, i32, i32
  }
  func.func @transform_13(%arg0: i32) -> (i32, i32, i32) {
    %c0_i32 = arith.constant 0 : i32
    %c0_i32_0 = arith.constant 0 : i32
    %c0_i32_1 = arith.constant 0 : i32
    return %arg0, %c0_i32, %c0_i32_0 : i32, i32, i32
  }
  func.func @transform_14(%arg0: i32) -> (i32, i32, i32) {
    %c0_i32 = arith.constant 0 : i32
    %c0_i32_0 = arith.constant 0 : i32
    %c0_i32_1 = arith.constant 0 : i32
    return %arg0, %c0_i32, %c0_i32_0 : i32, i32, i32
  }
}

module attributes {stable_mosaic.version = 11 : i64} {
  func.func @_dba_tail_kernel(%arg0: i32, %arg1: i32, %arg2: memref<1x8x32xbf16, #tpu.memory_space<vmem>>, %arg3: memref<1x8x64xbf16, #tpu.memory_space<vmem>>, %arg4: memref<1x64x32xbf16, #tpu.memory_space<vmem>>, %arg5: memref<1x32xf32, #tpu.memory_space<vmem>>, %arg6: memref<1x32xf32, #tpu.memory_space<vmem>>, %arg7: memref<1x32xf32, #tpu.memory_space<vmem>>, %arg8: memref<32x64xbf16, #tpu.memory_space<vmem>>, %arg9: memref<1x64xf32, #tpu.memory_space<vmem>>, %arg10: memref<64x32xbf16, #tpu.memory_space<vmem>>, %arg11: memref<1x32xf32, #tpu.memory_space<vmem>>, %arg12: memref<1x32xf32, #tpu.memory_space<vmem>>, %arg13: memref<1x32xf32, #tpu.memory_space<vmem>>, %arg14: memref<1x8x32xbf16, #tpu.memory_space<vmem>>) attributes {dimension_semantics = [#tpu.dimension_semantics<parallel>, #tpu.dimension_semantics<parallel>], iteration_bounds = array<i64: 2, 1>, scalar_prefetch = 0 : i64, scratch_operands = 0 : i64, tpu.core_type = #tpu.core_type<tc>, window_params = [{transform_indices = @transform_0, window_bounds = array<i64: 1, 8, 32>}, {transform_indices = @transform_1, window_bounds = array<i64: 1, 8, 64>}, {transform_indices = @transform_2, window_bounds = array<i64: 1, 64, 32>}, {pipeline_mode = #tpu.pipeline_mode<synchronous>, transform_indices = @transform_3, window_bounds = array<i64: 1, 32>}, {pipeline_mode = #tpu.pipeline_mode<synchronous>, transform_indices = @transform_4, window_bounds = array<i64: 1, 32>}, {pipeline_mode = #tpu.pipeline_mode<synchronous>, transform_indices = @transform_5, window_bounds = array<i64: 1, 32>}, {pipeline_mode = #tpu.pipeline_mode<synchronous>, transform_indices = @transform_6, window_bounds = array<i64: 32, 64>}, {pipeline_mode = #tpu.pipeline_mode<synchronous>, transform_indices = @transform_7, window_bounds = array<i64: 1, 64>}, {pipeline_mode = #tpu.pipeline_mode<synchronous>, transform_indices = @transform_8, window_bounds = array<i64: 64, 32>}, {pipeline_mode = #tpu.pipeline_mode<synchronous>, transform_indices = @transform_9, window_bounds = array<i64: 1, 32>}, {pipeline_mode = #tpu.pipeline_mode<synchronous>, transform_indices = @transform_10, window_bounds = array<i64: 1, 32>}, {pipeline_mode = #tpu.pipeline_mode<synchronous>, transform_indices = @transform_11, window_bounds = array<i64: 1, 32>}, {transform_indices = @transform_12, window_bounds = array<i64: 1, 8, 32>}]} {
    %c0 = arith.constant 0 : index
    %c0_0 = arith.constant 0 : index
    %c0_1 = arith.constant 0 : index
    %0 = vector.load %arg3[%c0, %c0_0, %c0_1] : memref<1x8x64xbf16, #tpu.memory_space<vmem>>, vector<1x8x64xbf16>
    %1 = vector.shape_cast %0 : vector<1x8x64xbf16> to vector<8x64xbf16>
    %c0_2 = arith.constant 0 : index
    %c0_3 = arith.constant 0 : index
    %c0_4 = arith.constant 0 : index
    %2 = vector.load %arg4[%c0_2, %c0_3, %c0_4] : memref<1x64x32xbf16, #tpu.memory_space<vmem>>, vector<1x64x32xbf16>
    %3 = vector.shape_cast %2 : vector<1x64x32xbf16> to vector<64x32xbf16>
    %cst = arith.constant dense<0.000000e+00> : vector<8x32xf32>
    %4 = tpu.matmul %1, %3, %cst {dimension_numbers = #tpu.dot_dimension_numbers<[1], [0], [0], [1], [0, 0, 1, 1], [], []>} : vector<8x64xbf16>, vector<64x32xbf16>, vector<8x32xf32> -> vector<8x32xf32>
    %c0_5 = arith.constant 0 : index
    %c0_6 = arith.constant 0 : index
    %5 = vector.load %arg5[%c0_5, %c0_6] : memref<1x32xf32, #tpu.memory_space<vmem>>, vector<1x32xf32>
    %6 = vector.broadcast %5 : vector<1x32xf32> to vector<8x32xf32>
    %7 = arith.addf %4, %6 : vector<8x32xf32>
    %c0_7 = arith.constant 0 : index
    %c0_8 = arith.constant 0 : index
    %c0_9 = arith.constant 0 : index
    %8 = vector.load %arg2[%c0_7, %c0_8, %c0_9] : memref<1x8x32xbf16, #tpu.memory_space<vmem>>, vector<1x8x32xbf16>
    %9 = vector.shape_cast %8 : vector<1x8x32xbf16> to vector<8x32xbf16>
    %10 = arith.extf %9 : vector<8x32xbf16> to vector<8x32xf32>
    %11 = arith.addf %10, %7 : vector<8x32xf32>
    %c0_10 = arith.constant 0 : index
    %c0_11 = arith.constant 0 : index
    %12 = vector.load %arg6[%c0_10, %c0_11] : memref<1x32xf32, #tpu.memory_space<vmem>>, vector<1x32xf32>
    %c0_12 = arith.constant 0 : index
    %c0_13 = arith.constant 0 : index
    %13 = vector.load %arg7[%c0_12, %c0_13] : memref<1x32xf32, #tpu.memory_space<vmem>>, vector<1x32xf32>
    %cst_14 = arith.constant dense<0.000000e+00> : vector<8xf32>
    %14 = vector.multi_reduction <add>, %11, %cst_14 [1] : vector<8x32xf32> to vector<8xf32>
    %15 = vector.shape_cast %14 : vector<8xf32> to vector<8x1xf32>
    %cst_15 = arith.constant 3.200000e+01 : f32
    %16 = vector.broadcast %cst_15 : f32 to vector<8x1xf32>
    %17 = arith.divf %15, %16 : vector<8x1xf32>
    %18 = vector.broadcast %17 : vector<8x1xf32> to vector<8x32xf32>
    %19 = arith.subf %11, %18 : vector<8x32xf32>
    %20 = arith.mulf %19, %19 : vector<8x32xf32>
    %cst_16 = arith.constant dense<0.000000e+00> : vector<8xf32>
    %21 = vector.multi_reduction <add>, %20, %cst_16 [1] : vector<8x32xf32> to vector<8xf32>
    %22 = vector.shape_cast %21 : vector<8xf32> to vector<8x1xf32>
    %cst_17 = arith.constant 3.200000e+01 : f32
    %23 = vector.broadcast %cst_17 : f32 to vector<8x1xf32>
    %24 = arith.divf %22, %23 : vector<8x1xf32>
    %25 = vector.broadcast %17 : vector<8x1xf32> to vector<8x32xf32>
    %26 = arith.subf %11, %25 : vector<8x32xf32>
    %cst_18 = arith.constant 9.99999974E-6 : f32
    %27 = vector.broadcast %cst_18 : f32 to vector<8x1xf32>
    %28 = arith.addf %24, %27 : vector<8x1xf32>
    %29 = math.rsqrt %28 : vector<8x1xf32>
    %30 = vector.broadcast %29 : vector<8x1xf32> to vector<8x32xf32>
    %31 = arith.mulf %26, %30 : vector<8x32xf32>
    %32 = vector.broadcast %12 : vector<1x32xf32> to vector<8x32xf32>
    %33 = arith.mulf %31, %32 : vector<8x32xf32>
    %34 = vector.broadcast %13 : vector<1x32xf32> to vector<8x32xf32>
    %35 = arith.addf %33, %34 : vector<8x32xf32>
    %36 = arith.truncf %35 : vector<8x32xf32> to vector<8x32xbf16>
    %c0_19 = arith.constant 0 : index
    %c0_20 = arith.constant 0 : index
    %37 = vector.load %arg8[%c0_19, %c0_20] : memref<32x64xbf16, #tpu.memory_space<vmem>>, vector<32x64xbf16>
    %cst_21 = arith.constant dense<0.000000e+00> : vector<8x64xf32>
    %38 = tpu.matmul %36, %37, %cst_21 {dimension_numbers = #tpu.dot_dimension_numbers<[1], [0], [0], [1], [0, 0, 1, 1], [], []>} : vector<8x32xbf16>, vector<32x64xbf16>, vector<8x64xf32> -> vector<8x64xf32>
    %c0_22 = arith.constant 0 : index
    %c0_23 = arith.constant 0 : index
    %39 = vector.load %arg9[%c0_22, %c0_23] : memref<1x64xf32, #tpu.memory_space<vmem>>, vector<1x64xf32>
    %40 = vector.broadcast %39 : vector<1x64xf32> to vector<8x64xf32>
    %41 = arith.addf %38, %40 : vector<8x64xf32>
    %cst_24 = arith.constant 5.000000e-01 : f32
    %42 = vector.broadcast %cst_24 : f32 to vector<8x64xf32>
    %43 = arith.mulf %42, %41 : vector<8x64xf32>
    %cst_25 = arith.constant 0.707106769 : f32
    %44 = vector.broadcast %cst_25 : f32 to vector<8x64xf32>
    %45 = arith.mulf %41, %44 : vector<8x64xf32>
    %46 = math.erf %45 : vector<8x64xf32>
    %cst_26 = arith.constant 1.000000e+00 : f32
    %47 = vector.broadcast %cst_26 : f32 to vector<8x64xf32>
    %48 = arith.addf %47, %46 : vector<8x64xf32>
    %49 = arith.mulf %43, %48 : vector<8x64xf32>
    %50 = arith.truncf %49 : vector<8x64xf32> to vector<8x64xbf16>
    %c0_27 = arith.constant 0 : index
    %c0_28 = arith.constant 0 : index
    %51 = vector.load %arg10[%c0_27, %c0_28] : memref<64x32xbf16, #tpu.memory_space<vmem>>, vector<64x32xbf16>
    %cst_29 = arith.constant dense<0.000000e+00> : vector<8x32xf32>
    %52 = tpu.matmul %50, %51, %cst_29 {dimension_numbers = #tpu.dot_dimension_numbers<[1], [0], [0], [1], [0, 0, 1, 1], [], []>} : vector<8x64xbf16>, vector<64x32xbf16>, vector<8x32xf32> -> vector<8x32xf32>
    %c0_30 = arith.constant 0 : index
    %c0_31 = arith.constant 0 : index
    %53 = vector.load %arg11[%c0_30, %c0_31] : memref<1x32xf32, #tpu.memory_space<vmem>>, vector<1x32xf32>
    %54 = vector.broadcast %53 : vector<1x32xf32> to vector<8x32xf32>
    %55 = arith.addf %52, %54 : vector<8x32xf32>
    %56 = arith.addf %35, %55 : vector<8x32xf32>
    %c0_32 = arith.constant 0 : index
    %c0_33 = arith.constant 0 : index
    %57 = vector.load %arg12[%c0_32, %c0_33] : memref<1x32xf32, #tpu.memory_space<vmem>>, vector<1x32xf32>
    %c0_34 = arith.constant 0 : index
    %c0_35 = arith.constant 0 : index
    %58 = vector.load %arg13[%c0_34, %c0_35] : memref<1x32xf32, #tpu.memory_space<vmem>>, vector<1x32xf32>
    %cst_36 = arith.constant dense<0.000000e+00> : vector<8xf32>
    %59 = vector.multi_reduction <add>, %56, %cst_36 [1] : vector<8x32xf32> to vector<8xf32>
    %60 = vector.shape_cast %59 : vector<8xf32> to vector<8x1xf32>
    %cst_37 = arith.constant 3.200000e+01 : f32
    %61 = vector.broadcast %cst_37 : f32 to vector<8x1xf32>
    %62 = arith.divf %60, %61 : vector<8x1xf32>
    %63 = vector.broadcast %62 : vector<8x1xf32> to vector<8x32xf32>
    %64 = arith.subf %56, %63 : vector<8x32xf32>
    %65 = arith.mulf %64, %64 : vector<8x32xf32>
    %cst_38 = arith.constant dense<0.000000e+00> : vector<8xf32>
    %66 = vector.multi_reduction <add>, %65, %cst_38 [1] : vector<8x32xf32> to vector<8xf32>
    %67 = vector.shape_cast %66 : vector<8xf32> to vector<8x1xf32>
    %cst_39 = arith.constant 3.200000e+01 : f32
    %68 = vector.broadcast %cst_39 : f32 to vector<8x1xf32>
    %69 = arith.divf %67, %68 : vector<8x1xf32>
    %70 = vector.broadcast %62 : vector<8x1xf32> to vector<8x32xf32>
    %71 = arith.subf %56, %70 : vector<8x32xf32>
    %cst_40 = arith.constant 9.99999974E-6 : f32
    %72 = vector.broadcast %cst_40 : f32 to vector<8x1xf32>
    %73 = arith.addf %69, %72 : vector<8x1xf32>
    %74 = math.rsqrt %73 : vector<8x1xf32>
    %75 = vector.broadcast %74 : vector<8x1xf32> to vector<8x32xf32>
    %76 = arith.mulf %71, %75 : vector<8x32xf32>
    %77 = vector.broadcast %57 : vector<1x32xf32> to vector<8x32xf32>
    %78 = arith.mulf %76, %77 : vector<8x32xf32>
    %79 = vector.broadcast %58 : vector<1x32xf32> to vector<8x32xf32>
    %80 = arith.addf %78, %79 : vector<8x32xf32>
    %81 = arith.truncf %80 : vector<8x32xf32> to vector<8x32xbf16>
    %c0_41 = arith.constant 0 : index
    %c0_42 = arith.constant 0 : index
    %c0_43 = arith.constant 0 : index
    %82 = vector.load %arg14[%c0_41, %c0_42, %c0_43] : memref<1x8x32xbf16, #tpu.memory_space<vmem>>, vector<1x8x32xbf16>
    %83 = vector.shape_cast %82 : vector<1x8x32xbf16> to vector<8x32xbf16>
    %84 = vector.shape_cast %81 : vector<8x32xbf16> to vector<1x8x32xbf16>
    tpu.vector_store %arg14[%c0_41, %c0_42, %c0_43], %84 {strides = array<i32>} : memref<1x8x32xbf16, #tpu.memory_space<vmem>>, vector<1x8x32xbf16>,
    return
  }
  func.func @transform_0(%arg0: i32, %arg1: i32) -> (i32, i32, i32) {
    %c0_i32 = arith.constant 0 : i32
    %c0_i32_0 = arith.constant 0 : i32
    return %arg0, %arg1, %c0_i32 : i32, i32, i32
  }
  func.func @transform_1(%arg0: i32, %arg1: i32) -> (i32, i32, i32) {
    %c0_i32 = arith.constant 0 : i32
    %c0_i32_0 = arith.constant 0 : i32
    return %arg0, %arg1, %c0_i32 : i32, i32, i32
  }
  func.func @transform_2(%arg0: i32, %arg1: i32) -> (i32, i32, i32) {
    %c0_i32 = arith.constant 0 : i32
    %c0_i32_0 = arith.constant 0 : i32
    %c0_i32_1 = arith.constant 0 : i32
    return %arg0, %c0_i32, %c0_i32_0 : i32, i32, i32
  }
  func.func @transform_3(%arg0: i32, %arg1: i32) -> (i32, i32) {
    %c0_i32 = arith.constant 0 : i32
    %c0_i32_0 = arith.constant 0 : i32
    %c0_i32_1 = arith.constant 0 : i32
    return %c0_i32, %c0_i32_0 : i32, i32
  }
  func.func @transform_4(%arg0: i32, %arg1: i32) -> (i32, i32) {
    %c0_i32 = arith.constant 0 : i32
    %c0_i32_0 = arith.constant 0 : i32
    %c0_i32_1 = arith.constant 0 : i32
    return %c0_i32, %c0_i32_0 : i32, i32
  }
  func.func @transform_5(%arg0: i32, %arg1: i32) -> (i32, i32) {
    %c0_i32 = arith.constant 0 : i32
    %c0_i32_0 = arith.constant 0 : i32
    %c0_i32_1 = arith.constant 0 : i32
    return %c0_i32, %c0_i32_0 : i32, i32
  }
  func.func @transform_6(%arg0: i32, %arg1: i32) -> (i32, i32) {
    %c0_i32 = arith.constant 0 : i32
    %c0_i32_0 = arith.constant 0 : i32
    %c0_i32_1 = arith.constant 0 : i32
    return %c0_i32, %c0_i32_0 : i32, i32
  }
  func.func @transform_7(%arg0: i32, %arg1: i32) -> (i32, i32) {
    %c0_i32 = arith.constant 0 : i32
    %c0_i32_0 = arith.constant 0 : i32
    %c0_i32_1 = arith.constant 0 : i32
    return %c0_i32, %c0_i32_0 : i32, i32
  }
  func.func @transform_8(%arg0: i32, %arg1: i32) -> (i32, i32) {
    %c0_i32 = arith.constant 0 : i32
    %c0_i32_0 = arith.constant 0 : i32
    %c0_i32_1 = arith.constant 0 : i32
    return %c0_i32, %c0_i32_0 : i32, i32
  }
  func.func @transform_9(%arg0: i32, %arg1: i32) -> (i32, i32) {
    %c0_i32 = arith.constant 0 : i32
    %c0_i32_0 = arith.constant 0 : i32
    %c0_i32_1 = arith.constant 0 : i32
    return %c0_i32, %c0_i32_0 : i32, i32
  }
  func.func @transform_10(%arg0: i32, %arg1: i32) -> (i32, i32) {
    %c0_i32 = arith.constant 0 : i32
    %c0_i32_0 = arith.constant 0 : i32
    %c0_i32_1 = arith.constant 0 : i32
    return %c0_i32, %c0_i32_0 : i32, i32
  }
  func.func @transform_11(%arg0: i32, %arg1: i32) -> (i32, i32) {
    %c0_i32 = arith.constant 0 : i32
    %c0_i32_0 = arith.constant 0 : i32
    %c0_i32_1 = arith.constant 0 : i32
    return %c0_i32, %c0_i32_0 : i32, i32
  }
  func.func @transform_12(%arg0: i32, %arg1: i32) -> (i32, i32, i32) {
    %c0_i32 = arith.constant 0 : i32
    %c0_i32_0 = arith.constant 0 : i32
    return %arg0, %arg1, %c0_i32 : i32, i32, i32
  }
}

module attributes {stable_mosaic.version = 11 : i64} {
  func.func @_dba_stage_kernel(%arg0: i32, %arg1: memref<1x8x32xbf16, #tpu.memory_space<vmem>>, %arg2: memref<1x16x32xbf16, #tpu.memory_space<vmem>>, %arg3: memref<1x1x8xf32, #tpu.memory_space<vmem>>, %arg4: memref<32x384xbf16, #tpu.memory_space<vmem>>, %arg5: memref<1x384xf32, #tpu.memory_space<vmem>>, %arg6: memref<32x24xbf16, #tpu.memory_space<vmem>>, %arg7: memref<1x24xf32, #tpu.memory_space<vmem>>, %arg8: memref<32x384xbf16, #tpu.memory_space<vmem>>, %arg9: memref<1x384xf32, #tpu.memory_space<vmem>>, %arg10: memref<1x32xf32, #tpu.memory_space<vmem>>, %arg11: memref<1x32xf32, #tpu.memory_space<vmem>>, %arg12: memref<32x32xbf16, #tpu.memory_space<vmem>>, %arg13: memref<1x16x32xbf16, #tpu.memory_space<vmem>>, %arg14: memref<1x8x64xbf16, #tpu.memory_space<vmem>>, %arg15: memref<1x64x32xbf16, #tpu.memory_space<vmem>>, %arg16: memref<16x32xf32, #tpu.memory_space<vmem>>) attributes {dimension_semantics = [#tpu.dimension_semantics<parallel>], iteration_bounds = array<i64: 2>, scalar_prefetch = 0 : i64, scratch_operands = 1 : i64, tpu.core_type = #tpu.core_type<tc>, window_params = [{transform_indices = @transform_0, window_bounds = array<i64: 1, 8, 32>}, {transform_indices = @transform_1, window_bounds = array<i64: 1, 16, 32>}, {transform_indices = @transform_2, window_bounds = array<i64: 1, 1, 8>}, {pipeline_mode = #tpu.pipeline_mode<synchronous>, transform_indices = @transform_3, window_bounds = array<i64: 32, 384>}, {pipeline_mode = #tpu.pipeline_mode<synchronous>, transform_indices = @transform_4, window_bounds = array<i64: 1, 384>}, {pipeline_mode = #tpu.pipeline_mode<synchronous>, transform_indices = @transform_5, window_bounds = array<i64: 32, 24>}, {pipeline_mode = #tpu.pipeline_mode<synchronous>, transform_indices = @transform_6, window_bounds = array<i64: 1, 24>}, {pipeline_mode = #tpu.pipeline_mode<synchronous>, transform_indices = @transform_7, window_bounds = array<i64: 32, 384>}, {pipeline_mode = #tpu.pipeline_mode<synchronous>, transform_indices = @transform_8, window_bounds = array<i64: 1, 384>}, {pipeline_mode = #tpu.pipeline_mode<synchronous>, transform_indices = @transform_9, window_bounds = array<i64: 1, 32>}, {pipeline_mode = #tpu.pipeline_mode<synchronous>, transform_indices = @transform_10, window_bounds = array<i64: 1, 32>}, {pipeline_mode = #tpu.pipeline_mode<synchronous>, transform_indices = @transform_11, window_bounds = array<i64: 32, 32>}, {transform_indices = @transform_12, window_bounds = array<i64: 1, 16, 32>}, {transform_indices = @transform_13, window_bounds = array<i64: 1, 8, 64>}, {transform_indices = @transform_14, window_bounds = array<i64: 1, 64, 32>}]} {
    %c0 = arith.constant 0 : index
    %c0_0 = arith.constant 0 : index
    %c0_1 = arith.constant 0 : index
    %0 = vector.load %arg3[%c0, %c0_0, %c0_1] : memref<1x1x8xf32, #tpu.memory_space<vmem>>, vector<1x1x8xf32>
    %1 = vector.shape_cast %0 : vector<1x1x8xf32> to vector<1x8xf32>
    %c0_2 = arith.constant 0 : index
    %c0_3 = arith.constant 0 : index
    %c0_4 = arith.constant 0 : index
    %2 = vector.load %arg1[%c0_2, %c0_3, %c0_4] : memref<1x8x32xbf16, #tpu.memory_space<vmem>>, vector<1x8x32xbf16>
    %3 = vector.shape_cast %2 : vector<1x8x32xbf16> to vector<8x32xbf16>
    %c0_5 = arith.constant 0 : index
    %c0_6 = arith.constant 0 : index
    %4 = vector.load %arg4[%c0_5, %c0_6] : memref<32x384xbf16, #tpu.memory_space<vmem>>, vector<32x384xbf16>
    %cst = arith.constant dense<0.000000e+00> : vector<8x384xf32>
    %5 = tpu.matmul %3, %4, %cst {dimension_numbers = #tpu.dot_dimension_numbers<[1], [0], [0], [1], [0, 0, 1, 1], [], []>} : vector<8x32xbf16>, vector<32x384xbf16>, vector<8x384xf32> -> vector<8x384xf32>
    %c0_7 = arith.constant 0 : index
    %c0_8 = arith.constant 0 : index
    %6 = vector.load %arg5[%c0_7, %c0_8] : memref<1x384xf32, #tpu.memory_space<vmem>>, vector<1x384xf32>
    %7 = vector.broadcast %6 : vector<1x384xf32> to vector<8x384xf32>
    %8 = arith.addf %5, %7 : vector<8x384xf32>
    %9 = vector.extract_strided_slice %8 {offsets = [0, 0], sizes = [8, 32], strides = [1, 1]} : vector<8x384xf32> to vector<8x32xf32>
    %10 = arith.truncf %9 : vector<8x32xf32> to vector<8x32xbf16>
    %11 = vector.extract_strided_slice %8 {offsets = [0, 256], sizes = [8, 24], strides = [1, 1]} : vector<8x384xf32> to vector<8x24xf32>
    %12 = arith.truncf %11 : vector<8x24xf32> to vector<8x24xbf16>
    %c0_9 = arith.constant 0 : index
    %c0_10 = arith.constant 0 : index
    %c0_11 = arith.constant 0 : index
    %13 = vector.load %arg2[%c0_9, %c0_10, %c0_11] : memref<1x16x32xbf16, #tpu.memory_space<vmem>>, vector<1x16x32xbf16>
    %14 = vector.shape_cast %13 : vector<1x16x32xbf16> to vector<16x32xbf16>
    %c0_12 = arith.constant 0 : index
    %c0_13 = arith.constant 0 : index
    %15 = vector.load %arg6[%c0_12, %c0_13] : memref<32x24xbf16, #tpu.memory_space<vmem>>, vector<32x24xbf16>
    %cst_14 = arith.constant dense<0.000000e+00> : vector<16x24xf32>
    %16 = tpu.matmul %14, %15, %cst_14 {dimension_numbers = #tpu.dot_dimension_numbers<[1], [0], [0], [1], [0, 0, 1, 1], [], []>} : vector<16x32xbf16>, vector<32x24xbf16>, vector<16x24xf32> -> vector<16x24xf32>
    %c0_15 = arith.constant 0 : index
    %c0_16 = arith.constant 0 : index
    %17 = vector.load %arg7[%c0_15, %c0_16] : memref<1x24xf32, #tpu.memory_space<vmem>>, vector<1x24xf32>
    %18 = vector.broadcast %17 : vector<1x24xf32> to vector<16x24xf32>
    %19 = arith.addf %16, %18 : vector<16x24xf32>
    %cst_17 = arith.constant 0.408248305 : f32
    %20 = vector.broadcast %cst_17 : f32 to vector<16x24xf32>
    %21 = arith.mulf %19, %20 : vector<16x24xf32>
    %22 = arith.truncf %21 : vector<16x24xf32> to vector<16x24xbf16>
    %23 = vector.extract_strided_slice %22 {offsets = [0, 0], sizes = [16, 6], strides = [1, 1]} : vector<16x24xbf16> to vector<16x6xbf16>
    %24 = vector.extract_strided_slice %12 {offsets = [0, 0], sizes = [8, 6], strides = [1, 1]} : vector<8x24xbf16> to vector<8x6xbf16>
    %cst_18 = arith.constant dense<0.000000e+00> : vector<16x8xf32>
    %25 = tpu.matmul %23, %24, %cst_18 {dimension_numbers = #tpu.dot_dimension_numbers<[1], [1], [0], [0], [0, 0, 1, 0], [], []>} : vector<16x6xbf16>, vector<8x6xbf16>, vector<16x8xf32> -> vector<16x8xf32>
    %26 = vector.broadcast %1 : vector<1x8xf32> to vector<16x8xf32>
    %27 = arith.addf %25, %26 : vector<16x8xf32>
    %cst_19 = arith.constant dense<0xFF800000> : vector<16xf32>
    %28 = vector.multi_reduction <maximumf>, %27, %cst_19 [1] : vector<16x8xf32> to vector<16xf32>
    %29 = vector.shape_cast %28 : vector<16xf32> to vector<16x1xf32>
    %30 = vector.broadcast %29 : vector<16x1xf32> to vector<16x8xf32>
    %31 = arith.subf %27, %30 : vector<16x8xf32>
    %32 = math.exp %31 : vector<16x8xf32>
    %cst_20 = arith.constant dense<0.000000e+00> : vector<16xf32>
    %33 = vector.multi_reduction <add>, %32, %cst_20 [1] : vector<16x8xf32> to vector<16xf32>
    %34 = vector.shape_cast %33 : vector<16xf32> to vector<16x1xf32>
    %35 = vector.broadcast %34 : vector<16x1xf32> to vector<16x8xf32>
    %36 = arith.divf %32, %35 : vector<16x8xf32>
    %37 = arith.truncf %36 : vector<16x8xf32> to vector<16x8xbf16>
    %38 = vector.extract_strided_slice %10 {offsets = [0, 0], sizes = [8, 8], strides = [1, 1]} : vector<8x32xbf16> to vector<8x8xbf16>
    %cst_21 = arith.constant dense<0.000000e+00> : vector<16x8xf32>
    %39 = tpu.matmul %37, %38, %cst_21 {dimension_numbers = #tpu.dot_dimension_numbers<[1], [0], [0], [1], [0, 0, 1, 1], [], []>} : vector<16x8xbf16>, vector<8x8xbf16>, vector<16x8xf32> -> vector<16x8xf32>
    %40 = arith.truncf %39 : vector<16x8xf32> to vector<16x8xbf16>
    %c0_22 = arith.constant 0 : index
    %c0_23 = arith.constant 0 : index
    %c0_24 = arith.constant 0 : index
    %41 = vector.load %arg13[%c0_22, %c0_23, %c0_24] : memref<1x16x32xbf16, #tpu.memory_space<vmem>>, vector<1x16x8xbf16>
    %42 = vector.shape_cast %41 : vector<1x16x8xbf16> to vector<16x8xbf16>
    %43 = vector.shape_cast %40 : vector<16x8xbf16> to vector<1x16x8xbf16>
    tpu.vector_store %arg13[%c0_22, %c0_23, %c0_24], %43 {strides = array<i32>} : memref<1x16x32xbf16, #tpu.memory_space<vmem>>, vector<1x16x8xbf16>,
    %44 = vector.extract_strided_slice %22 {offsets = [0, 6], sizes = [16, 6], strides = [1, 1]} : vector<16x24xbf16> to vector<16x6xbf16>
    %45 = vector.extract_strided_slice %12 {offsets = [0, 6], sizes = [8, 6], strides = [1, 1]} : vector<8x24xbf16> to vector<8x6xbf16>
    %cst_25 = arith.constant dense<0.000000e+00> : vector<16x8xf32>
    %46 = tpu.matmul %44, %45, %cst_25 {dimension_numbers = #tpu.dot_dimension_numbers<[1], [1], [0], [0], [0, 0, 1, 0], [], []>} : vector<16x6xbf16>, vector<8x6xbf16>, vector<16x8xf32> -> vector<16x8xf32>
    %47 = vector.broadcast %1 : vector<1x8xf32> to vector<16x8xf32>
    %48 = arith.addf %46, %47 : vector<16x8xf32>
    %cst_26 = arith.constant dense<0xFF800000> : vector<16xf32>
    %49 = vector.multi_reduction <maximumf>, %48, %cst_26 [1] : vector<16x8xf32> to vector<16xf32>
    %50 = vector.shape_cast %49 : vector<16xf32> to vector<16x1xf32>
    %51 = vector.broadcast %50 : vector<16x1xf32> to vector<16x8xf32>
    %52 = arith.subf %48, %51 : vector<16x8xf32>
    %53 = math.exp %52 : vector<16x8xf32>
    %cst_27 = arith.constant dense<0.000000e+00> : vector<16xf32>
    %54 = vector.multi_reduction <add>, %53, %cst_27 [1] : vector<16x8xf32> to vector<16xf32>
    %55 = vector.shape_cast %54 : vector<16xf32> to vector<16x1xf32>
    %56 = vector.broadcast %55 : vector<16x1xf32> to vector<16x8xf32>
    %57 = arith.divf %53, %56 : vector<16x8xf32>
    %58 = arith.truncf %57 : vector<16x8xf32> to vector<16x8xbf16>
    %59 = vector.extract_strided_slice %10 {offsets = [0, 8], sizes = [8, 8], strides = [1, 1]} : vector<8x32xbf16> to vector<8x8xbf16>
    %cst_28 = arith.constant dense<0.000000e+00> : vector<16x8xf32>
    %60 = tpu.matmul %58, %59, %cst_28 {dimension_numbers = #tpu.dot_dimension_numbers<[1], [0], [0], [1], [0, 0, 1, 1], [], []>} : vector<16x8xbf16>, vector<8x8xbf16>, vector<16x8xf32> -> vector<16x8xf32>
    %61 = arith.truncf %60 : vector<16x8xf32> to vector<16x8xbf16>
    %c0_29 = arith.constant 0 : index
    %c0_30 = arith.constant 0 : index
    %c8 = arith.constant 8 : index
    %62 = vector.load %arg13[%c0_29, %c0_30, %c8] : memref<1x16x32xbf16, #tpu.memory_space<vmem>>, vector<1x16x8xbf16>
    %63 = vector.shape_cast %62 : vector<1x16x8xbf16> to vector<16x8xbf16>
    %64 = vector.shape_cast %61 : vector<16x8xbf16> to vector<1x16x8xbf16>
    tpu.vector_store %arg13[%c0_29, %c0_30, %c8], %64 {strides = array<i32>} : memref<1x16x32xbf16, #tpu.memory_space<vmem>>, vector<1x16x8xbf16>,
    %65 = vector.extract_strided_slice %22 {offsets = [0, 12], sizes = [16, 6], strides = [1, 1]} : vector<16x24xbf16> to vector<16x6xbf16>
    %66 = vector.extract_strided_slice %12 {offsets = [0, 12], sizes = [8, 6], strides = [1, 1]} : vector<8x24xbf16> to vector<8x6xbf16>
    %cst_31 = arith.constant dense<0.000000e+00> : vector<16x8xf32>
    %67 = tpu.matmul %65, %66, %cst_31 {dimension_numbers = #tpu.dot_dimension_numbers<[1], [1], [0], [0], [0, 0, 1, 0], [], []>} : vector<16x6xbf16>, vector<8x6xbf16>, vector<16x8xf32> -> vector<16x8xf32>
    %68 = vector.broadcast %1 : vector<1x8xf32> to vector<16x8xf32>
    %69 = arith.addf %67, %68 : vector<16x8xf32>
    %cst_32 = arith.constant dense<0xFF800000> : vector<16xf32>
    %70 = vector.multi_reduction <maximumf>, %69, %cst_32 [1] : vector<16x8xf32> to vector<16xf32>
    %71 = vector.shape_cast %70 : vector<16xf32> to vector<16x1xf32>
    %72 = vector.broadcast %71 : vector<16x1xf32> to vector<16x8xf32>
    %73 = arith.subf %69, %72 : vector<16x8xf32>
    %74 = math.exp %73 : vector<16x8xf32>
    %cst_33 = arith.constant dense<0.000000e+00> : vector<16xf32>
    %75 = vector.multi_reduction <add>, %74, %cst_33 [1] : vector<16x8xf32> to vector<16xf32>
    %76 = vector.shape_cast %75 : vector<16xf32> to vector<16x1xf32>
    %77 = vector.broadcast %76 : vector<16x1xf32> to vector<16x8xf32>
    %78 = arith.divf %74, %77 : vector<16x8xf32>
    %79 = arith.truncf %78 : vector<16x8xf32> to vector<16x8xbf16>
    %80 = vector.extract_strided_slice %10 {offsets = [0, 16], sizes = [8, 8], strides = [1, 1]} : vector<8x32xbf16> to vector<8x8xbf16>
    %cst_34 = arith.constant dense<0.000000e+00> : vector<16x8xf32>
    %81 = tpu.matmul %79, %80, %cst_34 {dimension_numbers = #tpu.dot_dimension_numbers<[1], [0], [0], [1], [0, 0, 1, 1], [], []>} : vector<16x8xbf16>, vector<8x8xbf16>, vector<16x8xf32> -> vector<16x8xf32>
    %82 = arith.truncf %81 : vector<16x8xf32> to vector<16x8xbf16>
    %c0_35 = arith.constant 0 : index
    %c0_36 = arith.constant 0 : index
    %c16 = arith.constant 16 : index
    %83 = vector.load %arg13[%c0_35, %c0_36, %c16] : memref<1x16x32xbf16, #tpu.memory_space<vmem>>, vector<1x16x8xbf16>
    %84 = vector.shape_cast %83 : vector<1x16x8xbf16> to vector<16x8xbf16>
    %85 = vector.shape_cast %82 : vector<16x8xbf16> to vector<1x16x8xbf16>
    tpu.vector_store %arg13[%c0_35, %c0_36, %c16], %85 {strides = array<i32>} : memref<1x16x32xbf16, #tpu.memory_space<vmem>>, vector<1x16x8xbf16>,
    %86 = vector.extract_strided_slice %22 {offsets = [0, 18], sizes = [16, 6], strides = [1, 1]} : vector<16x24xbf16> to vector<16x6xbf16>
    %87 = vector.extract_strided_slice %12 {offsets = [0, 18], sizes = [8, 6], strides = [1, 1]} : vector<8x24xbf16> to vector<8x6xbf16>
    %cst_37 = arith.constant dense<0.000000e+00> : vector<16x8xf32>
    %88 = tpu.matmul %86, %87, %cst_37 {dimension_numbers = #tpu.dot_dimension_numbers<[1], [1], [0], [0], [0, 0, 1, 0], [], []>} : vector<16x6xbf16>, vector<8x6xbf16>, vector<16x8xf32> -> vector<16x8xf32>
    %89 = vector.broadcast %1 : vector<1x8xf32> to vector<16x8xf32>
    %90 = arith.addf %88, %89 : vector<16x8xf32>
    %cst_38 = arith.constant dense<0xFF800000> : vector<16xf32>
    %91 = vector.multi_reduction <maximumf>, %90, %cst_38 [1] : vector<16x8xf32> to vector<16xf32>
    %92 = vector.shape_cast %91 : vector<16xf32> to vector<16x1xf32>
    %93 = vector.broadcast %92 : vector<16x1xf32> to vector<16x8xf32>
    %94 = arith.subf %90, %93 : vector<16x8xf32>
    %95 = math.exp %94 : vector<16x8xf32>
    %cst_39 = arith.constant dense<0.000000e+00> : vector<16xf32>
    %96 = vector.multi_reduction <add>, %95, %cst_39 [1] : vector<16x8xf32> to vector<16xf32>
    %97 = vector.shape_cast %96 : vector<16xf32> to vector<16x1xf32>
    %98 = vector.broadcast %97 : vector<16x1xf32> to vector<16x8xf32>
    %99 = arith.divf %95, %98 : vector<16x8xf32>
    %100 = arith.truncf %99 : vector<16x8xf32> to vector<16x8xbf16>
    %101 = vector.extract_strided_slice %10 {offsets = [0, 24], sizes = [8, 8], strides = [1, 1]} : vector<8x32xbf16> to vector<8x8xbf16>
    %cst_40 = arith.constant dense<0.000000e+00> : vector<16x8xf32>
    %102 = tpu.matmul %100, %101, %cst_40 {dimension_numbers = #tpu.dot_dimension_numbers<[1], [0], [0], [1], [0, 0, 1, 1], [], []>} : vector<16x8xbf16>, vector<8x8xbf16>, vector<16x8xf32> -> vector<16x8xf32>
    %103 = arith.truncf %102 : vector<16x8xf32> to vector<16x8xbf16>
    %c0_41 = arith.constant 0 : index
    %c0_42 = arith.constant 0 : index
    %c24 = arith.constant 24 : index
    %104 = vector.load %arg13[%c0_41, %c0_42, %c24] : memref<1x16x32xbf16, #tpu.memory_space<vmem>>, vector<1x16x8xbf16>
    %105 = vector.shape_cast %104 : vector<1x16x8xbf16> to vector<16x8xbf16>
    %106 = vector.shape_cast %103 : vector<16x8xbf16> to vector<1x16x8xbf16>
    tpu.vector_store %arg13[%c0_41, %c0_42, %c24], %106 {strides = array<i32>} : memref<1x16x32xbf16, #tpu.memory_space<vmem>>, vector<1x16x8xbf16>,
    %c0_43 = arith.constant 0 : index
    %c0_44 = arith.constant 0 : index
    %c0_45 = arith.constant 0 : index
    %107 = vector.load %arg13[%c0_43, %c0_44, %c0_45] : memref<1x16x32xbf16, #tpu.memory_space<vmem>>, vector<1x16x32xbf16>
    %108 = vector.shape_cast %107 : vector<1x16x32xbf16> to vector<16x32xbf16>
    %c0_46 = arith.constant 0 : index
    %c0_47 = arith.constant 0 : index
    %109 = vector.load %arg8[%c0_46, %c0_47] : memref<32x384xbf16, #tpu.memory_space<vmem>>, vector<32x384xbf16>
    %cst_48 = arith.constant dense<0.000000e+00> : vector<16x384xf32>
    %110 = tpu.matmul %108, %109, %cst_48 {dimension_numbers = #tpu.dot_dimension_numbers<[1], [0], [0], [1], [0, 0, 1, 1], [], []>} : vector<16x32xbf16>, vector<32x384xbf16>, vector<16x384xf32> -> vector<16x384xf32>
    %c0_49 = arith.constant 0 : index
    %c0_50 = arith.constant 0 : index
    %111 = vector.load %arg9[%c0_49, %c0_50] : memref<1x384xf32, #tpu.memory_space<vmem>>, vector<1x384xf32>
    %112 = vector.broadcast %111 : vector<1x384xf32> to vector<16x384xf32>
    %113 = arith.addf %110, %112 : vector<16x384xf32>
    %114 = vector.extract_strided_slice %113 {offsets = [0, 0], sizes = [16, 32], strides = [1, 1]} : vector<16x384xf32> to vector<16x32xf32>
    %115 = arith.truncf %114 : vector<16x32xf32> to vector<16x32xbf16>
    %116 = vector.extract_strided_slice %113 {offsets = [0, 128], sizes = [16, 24], strides = [1, 1]} : vector<16x384xf32> to vector<16x24xf32>
    %cst_51 = arith.constant 0.408248305 : f32
    %117 = vector.broadcast %cst_51 : f32 to vector<16x24xf32>
    %118 = arith.mulf %116, %117 : vector<16x24xf32>
    %119 = arith.truncf %118 : vector<16x24xf32> to vector<16x24xbf16>
    %120 = vector.extract_strided_slice %113 {offsets = [0, 256], sizes = [16, 24], strides = [1, 1]} : vector<16x384xf32> to vector<16x24xf32>
    %121 = arith.truncf %120 : vector<16x24xf32> to vector<16x24xbf16>
    %122 = vector.extract_strided_slice %119 {offsets = [0, 0], sizes = [16, 6], strides = [1, 1]} : vector<16x24xbf16> to vector<16x6xbf16>
    %123 = vector.extract_strided_slice %121 {offsets = [0, 0], sizes = [16, 6], strides = [1, 1]} : vector<16x24xbf16> to vector<16x6xbf16>
    %cst_52 = arith.constant dense<0.000000e+00> : vector<16x16xf32>
    %124 = tpu.matmul %122, %123, %cst_52 {dimension_numbers = #tpu.dot_dimension_numbers<[1], [1], [0], [0], [0, 0, 1, 0], [], []>} : vector<16x6xbf16>, vector<16x6xbf16>, vector<16x16xf32> -> vector<16x16xf32>
    %cst_53 = arith.constant dense<0xFF800000> : vector<16xf32>
    %125 = vector.multi_reduction <maximumf>, %124, %cst_53 [1] : vector<16x16xf32> to vector<16xf32>
    %126 = vector.shape_cast %125 : vector<16xf32> to vector<16x1xf32>
    %127 = vector.broadcast %126 : vector<16x1xf32> to vector<16x16xf32>
    %128 = arith.subf %124, %127 : vector<16x16xf32>
    %129 = math.exp %128 : vector<16x16xf32>
    %cst_54 = arith.constant dense<0.000000e+00> : vector<16xf32>
    %130 = vector.multi_reduction <add>, %129, %cst_54 [1] : vector<16x16xf32> to vector<16xf32>
    %131 = vector.shape_cast %130 : vector<16xf32> to vector<16x1xf32>
    %132 = vector.broadcast %131 : vector<16x1xf32> to vector<16x16xf32>
    %133 = arith.divf %129, %132 : vector<16x16xf32>
    %134 = arith.truncf %133 : vector<16x16xf32> to vector<16x16xbf16>
    %135 = vector.extract_strided_slice %115 {offsets = [0, 0], sizes = [16, 8], strides = [1, 1]} : vector<16x32xbf16> to vector<16x8xbf16>
    %cst_55 = arith.constant dense<0.000000e+00> : vector<16x8xf32>
    %136 = tpu.matmul %134, %135, %cst_55 {dimension_numbers = #tpu.dot_dimension_numbers<[1], [0], [0], [1], [0, 0, 1, 1], [], []>} : vector<16x16xbf16>, vector<16x8xbf16>, vector<16x8xf32> -> vector<16x8xf32>
    %c0_56 = arith.constant 0 : index
    %c0_57 = arith.constant 0 : index
    %137 = vector.load %arg16[%c0_56, %c0_57] : memref<16x32xf32, #tpu.memory_space<vmem>>, vector<16x8xf32>
    tpu.vector_store %arg16[%c0_56, %c0_57], %136 {strides = array<i32>} : memref<16x32xf32, #tpu.memory_space<vmem>>, vector<16x8xf32>,
    %138 = vector.extract_strided_slice %119 {offsets = [0, 6], sizes = [16, 6], strides = [1, 1]} : vector<16x24xbf16> to vector<16x6xbf16>
    %139 = vector.extract_strided_slice %121 {offsets = [0, 6], sizes = [16, 6], strides = [1, 1]} : vector<16x24xbf16> to vector<16x6xbf16>
    %cst_58 = arith.constant dense<0.000000e+00> : vector<16x16xf32>
    %140 = tpu.matmul %138, %139, %cst_58 {dimension_numbers = #tpu.dot_dimension_numbers<[1], [1], [0], [0], [0, 0, 1, 0], [], []>} : vector<16x6xbf16>, vector<16x6xbf16>, vector<16x16xf32> -> vector<16x16xf32>
    %cst_59 = arith.constant dense<0xFF800000> : vector<16xf32>
    %141 = vector.multi_reduction <maximumf>, %140, %cst_59 [1] : vector<16x16xf32> to vector<16xf32>
    %142 = vector.shape_cast %141 : vector<16xf32> to vector<16x1xf32>
    %143 = vector.broadcast %142 : vector<16x1xf32> to vector<16x16xf32>
    %144 = arith.subf %140, %143 : vector<16x16xf32>
    %145 = math.exp %144 : vector<16x16xf32>
    %cst_60 = arith.constant dense<0.000000e+00> : vector<16xf32>
    %146 = vector.multi_reduction <add>, %145, %cst_60 [1] : vector<16x16xf32> to vector<16xf32>
    %147 = vector.shape_cast %146 : vector<16xf32> to vector<16x1xf32>
    %148 = vector.broadcast %147 : vector<16x1xf32> to vector<16x16xf32>
    %149 = arith.divf %145, %148 : vector<16x16xf32>
    %150 = arith.truncf %149 : vector<16x16xf32> to vector<16x16xbf16>
    %151 = vector.extract_strided_slice %115 {offsets = [0, 8], sizes = [16, 8], strides = [1, 1]} : vector<16x32xbf16> to vector<16x8xbf16>
    %cst_61 = arith.constant dense<0.000000e+00> : vector<16x8xf32>
    %152 = tpu.matmul %150, %151, %cst_61 {dimension_numbers = #tpu.dot_dimension_numbers<[1], [0], [0], [1], [0, 0, 1, 1], [], []>} : vector<16x16xbf16>, vector<16x8xbf16>, vector<16x8xf32> -> vector<16x8xf32>
    %c0_62 = arith.constant 0 : index
    %c8_63 = arith.constant 8 : index
    %153 = vector.load %arg16[%c0_62, %c8_63] : memref<16x32xf32, #tpu.memory_space<vmem>>, vector<16x8xf32>
    tpu.vector_store %arg16[%c0_62, %c8_63], %152 {strides = array<i32>} : memref<16x32xf32, #tpu.memory_space<vmem>>, vector<16x8xf32>,
    %154 = vector.extract_strided_slice %119 {offsets = [0, 12], sizes = [16, 6], strides = [1, 1]} : vector<16x24xbf16> to vector<16x6xbf16>
    %155 = vector.extract_strided_slice %121 {offsets = [0, 12], sizes = [16, 6], strides = [1, 1]} : vector<16x24xbf16> to vector<16x6xbf16>
    %cst_64 = arith.constant dense<0.000000e+00> : vector<16x16xf32>
    %156 = tpu.matmul %154, %155, %cst_64 {dimension_numbers = #tpu.dot_dimension_numbers<[1], [1], [0], [0], [0, 0, 1, 0], [], []>} : vector<16x6xbf16>, vector<16x6xbf16>, vector<16x16xf32> -> vector<16x16xf32>
    %cst_65 = arith.constant dense<0xFF800000> : vector<16xf32>
    %157 = vector.multi_reduction <maximumf>, %156, %cst_65 [1] : vector<16x16xf32> to vector<16xf32>
    %158 = vector.shape_cast %157 : vector<16xf32> to vector<16x1xf32>
    %159 = vector.broadcast %158 : vector<16x1xf32> to vector<16x16xf32>
    %160 = arith.subf %156, %159 : vector<16x16xf32>
    %161 = math.exp %160 : vector<16x16xf32>
    %cst_66 = arith.constant dense<0.000000e+00> : vector<16xf32>
    %162 = vector.multi_reduction <add>, %161, %cst_66 [1] : vector<16x16xf32> to vector<16xf32>
    %163 = vector.shape_cast %162 : vector<16xf32> to vector<16x1xf32>
    %164 = vector.broadcast %163 : vector<16x1xf32> to vector<16x16xf32>
    %165 = arith.divf %161, %164 : vector<16x16xf32>
    %166 = arith.truncf %165 : vector<16x16xf32> to vector<16x16xbf16>
    %167 = vector.extract_strided_slice %115 {offsets = [0, 16], sizes = [16, 8], strides = [1, 1]} : vector<16x32xbf16> to vector<16x8xbf16>
    %cst_67 = arith.constant dense<0.000000e+00> : vector<16x8xf32>
    %168 = tpu.matmul %166, %167, %cst_67 {dimension_numbers = #tpu.dot_dimension_numbers<[1], [0], [0], [1], [0, 0, 1, 1], [], []>} : vector<16x16xbf16>, vector<16x8xbf16>, vector<16x8xf32> -> vector<16x8xf32>
    %c0_68 = arith.constant 0 : index
    %c16_69 = arith.constant 16 : index
    %169 = vector.load %arg16[%c0_68, %c16_69] : memref<16x32xf32, #tpu.memory_space<vmem>>, vector<16x8xf32>
    tpu.vector_store %arg16[%c0_68, %c16_69], %168 {strides = array<i32>} : memref<16x32xf32, #tpu.memory_space<vmem>>, vector<16x8xf32>,
    %170 = vector.extract_strided_slice %119 {offsets = [0, 18], sizes = [16, 6], strides = [1, 1]} : vector<16x24xbf16> to vector<16x6xbf16>
    %171 = vector.extract_strided_slice %121 {offsets = [0, 18], sizes = [16, 6], strides = [1, 1]} : vector<16x24xbf16> to vector<16x6xbf16>
    %cst_70 = arith.constant dense<0.000000e+00> : vector<16x16xf32>
    %172 = tpu.matmul %170, %171, %cst_70 {dimension_numbers = #tpu.dot_dimension_numbers<[1], [1], [0], [0], [0, 0, 1, 0], [], []>} : vector<16x6xbf16>, vector<16x6xbf16>, vector<16x16xf32> -> vector<16x16xf32>
    %cst_71 = arith.constant dense<0xFF800000> : vector<16xf32>
    %173 = vector.multi_reduction <maximumf>, %172, %cst_71 [1] : vector<16x16xf32> to vector<16xf32>
    %174 = vector.shape_cast %173 : vector<16xf32> to vector<16x1xf32>
    %175 = vector.broadcast %174 : vector<16x1xf32> to vector<16x16xf32>
    %176 = arith.subf %172, %175 : vector<16x16xf32>
    %177 = math.exp %176 : vector<16x16xf32>
    %cst_72 = arith.constant dense<0.000000e+00> : vector<16xf32>
    %178 = vector.multi_reduction <add>, %177, %cst_72 [1] : vector<16x16xf32> to vector<16xf32>
    %179 = vector.shape_cast %178 : vector<16xf32> to vector<16x1xf32>
    %180 = vector.broadcast %179 : vector<16x1xf32> to vector<16x16xf32>
    %181 = arith.divf %177, %180 : vector<16x16xf32>
    %182 = arith.truncf %181 : vector<16x16xf32> to vector<16x16xbf16>
    %183 = vector.extract_strided_slice %115 {offsets = [0, 24], sizes = [16, 8], strides = [1, 1]} : vector<16x32xbf16> to vector<16x8xbf16>
    %cst_73 = arith.constant dense<0.000000e+00> : vector<16x8xf32>
    %184 = tpu.matmul %182, %183, %cst_73 {dimension_numbers = #tpu.dot_dimension_numbers<[1], [0], [0], [1], [0, 0, 1, 1], [], []>} : vector<16x16xbf16>, vector<16x8xbf16>, vector<16x8xf32> -> vector<16x8xf32>
    %c0_74 = arith.constant 0 : index
    %c24_75 = arith.constant 24 : index
    %185 = vector.load %arg16[%c0_74, %c24_75] : memref<16x32xf32, #tpu.memory_space<vmem>>, vector<16x8xf32>
    tpu.vector_store %arg16[%c0_74, %c24_75], %184 {strides = array<i32>} : memref<16x32xf32, #tpu.memory_space<vmem>>, vector<16x8xf32>,
    %c0_76 = arith.constant 0 : index
    %c0_77 = arith.constant 0 : index
    %186 = vector.load %arg16[%c0_76, %c0_77] : memref<16x32xf32, #tpu.memory_space<vmem>>, vector<16x32xf32>
    %c0_78 = arith.constant 0 : index
    %c0_79 = arith.constant 0 : index
    %187 = vector.load %arg10[%c0_78, %c0_79] : memref<1x32xf32, #tpu.memory_space<vmem>>, vector<1x32xf32>
    %c0_80 = arith.constant 0 : index
    %c0_81 = arith.constant 0 : index
    %188 = vector.load %arg11[%c0_80, %c0_81] : memref<1x32xf32, #tpu.memory_space<vmem>>, vector<1x32xf32>
    %cst_82 = arith.constant dense<0.000000e+00> : vector<16xf32>
    %189 = vector.multi_reduction <add>, %186, %cst_82 [1] : vector<16x32xf32> to vector<16xf32>
    %190 = vector.shape_cast %189 : vector<16xf32> to vector<16x1xf32>
    %cst_83 = arith.constant 3.200000e+01 : f32
    %191 = vector.broadcast %cst_83 : f32 to vector<16x1xf32>
    %192 = arith.divf %190, %191 : vector<16x1xf32>
    %193 = vector.broadcast %192 : vector<16x1xf32> to vector<16x32xf32>
    %194 = arith.subf %186, %193 : vector<16x32xf32>
    %195 = arith.mulf %194, %194 : vector<16x32xf32>
    %cst_84 = arith.constant dense<0.000000e+00> : vector<16xf32>
    %196 = vector.multi_reduction <add>, %195, %cst_84 [1] : vector<16x32xf32> to vector<16xf32>
    %197 = vector.shape_cast %196 : vector<16xf32> to vector<16x1xf32>
    %cst_85 = arith.constant 3.200000e+01 : f32
    %198 = vector.broadcast %cst_85 : f32 to vector<16x1xf32>
    %199 = arith.divf %197, %198 : vector<16x1xf32>
    %200 = vector.broadcast %192 : vector<16x1xf32> to vector<16x32xf32>
    %201 = arith.subf %186, %200 : vector<16x32xf32>
    %cst_86 = arith.constant 9.99999974E-6 : f32
    %202 = vector.broadcast %cst_86 : f32 to vector<16x1xf32>
    %203 = arith.addf %199, %202 : vector<16x1xf32>
    %204 = math.rsqrt %203 : vector<16x1xf32>
    %205 = vector.broadcast %204 : vector<16x1xf32> to vector<16x32xf32>
    %206 = arith.mulf %201, %205 : vector<16x32xf32>
    %207 = vector.broadcast %187 : vector<1x32xf32> to vector<16x32xf32>
    %208 = arith.mulf %206, %207 : vector<16x32xf32>
    %209 = vector.broadcast %188 : vector<1x32xf32> to vector<16x32xf32>
    %210 = arith.addf %208, %209 : vector<16x32xf32>
    %211 = arith.truncf %210 : vector<16x32xf32> to vector<16x32xbf16>
    %212 = vector.extract_strided_slice %211 {offsets = [0, 0], sizes = [16, 8], strides = [1, 1]} : vector<16x32xbf16> to vector<16x8xbf16>
    %c0_87 = arith.constant 0 : index
    %c0_88 = arith.constant 0 : index
    %213 = vector.load %arg12[%c0_87, %c0_88] : memref<32x32xbf16, #tpu.memory_space<vmem>>, vector<8x32xbf16>
    %cst_89 = arith.constant dense<0.000000e+00> : vector<16x32xf32>
    %214 = tpu.matmul %212, %213, %cst_89 {dimension_numbers = #tpu.dot_dimension_numbers<[1], [0], [0], [1], [0, 0, 1, 1], [], []>} : vector<16x8xbf16>, vector<8x32xbf16>, vector<16x32xf32> -> vector<16x32xf32>
    %215 = arith.truncf %214 : vector<16x32xf32> to vector<16x32xbf16>
    %c0_90 = arith.constant 0 : index
    %c0_91 = arith.constant 0 : index
    %c0_92 = arith.constant 0 : index
    %216 = vector.load %arg15[%c0_90, %c0_91, %c0_92] : memref<1x64x32xbf16, #tpu.memory_space<vmem>>, vector<1x16x32xbf16>
    %217 = vector.shape_cast %216 : vector<1x16x32xbf16> to vector<16x32xbf16>
    %218 = vector.shape_cast %215 : vector<16x32xbf16> to vector<1x16x32xbf16>
    tpu.vector_store %arg15[%c0_90, %c0_91, %c0_92], %218 {strides = array<i32>} : memref<1x64x32xbf16, #tpu.memory_space<vmem>>, vector<1x16x32xbf16>,
    %219 = vector.extract_strided_slice %211 {offsets = [0, 8], sizes = [16, 8], strides = [1, 1]} : vector<16x32xbf16> to vector<16x8xbf16>
    %c8_93 = arith.constant 8 : index
    %c0_94 = arith.constant 0 : index
    %220 = vector.load %arg12[%c8_93, %c0_94] : memref<32x32xbf16, #tpu.memory_space<vmem>>, vector<8x32xbf16>
    %cst_95 = arith.constant dense<0.000000e+00> : vector<16x32xf32>
    %221 = tpu.matmul %219, %220, %cst_95 {dimension_numbers = #tpu.dot_dimension_numbers<[1], [0], [0], [1], [0, 0, 1, 1], [], []>} : vector<16x8xbf16>, vector<8x32xbf16>, vector<16x32xf32> -> vector<16x32xf32>
    %222 = arith.truncf %221 : vector<16x32xf32> to vector<16x32xbf16>
    %c0_96 = arith.constant 0 : index
    %c16_97 = arith.constant 16 : index
    %c0_98 = arith.constant 0 : index
    %223 = vector.load %arg15[%c0_96, %c16_97, %c0_98] : memref<1x64x32xbf16, #tpu.memory_space<vmem>>, vector<1x16x32xbf16>
    %224 = vector.shape_cast %223 : vector<1x16x32xbf16> to vector<16x32xbf16>
    %225 = vector.shape_cast %222 : vector<16x32xbf16> to vector<1x16x32xbf16>
    tpu.vector_store %arg15[%c0_96, %c16_97, %c0_98], %225 {strides = array<i32>} : memref<1x64x32xbf16, #tpu.memory_space<vmem>>, vector<1x16x32xbf16>,
    %226 = vector.extract_strided_slice %211 {offsets = [0, 16], sizes = [16, 8], strides = [1, 1]} : vector<16x32xbf16> to vector<16x8xbf16>
    %c16_99 = arith.constant 16 : index
    %c0_100 = arith.constant 0 : index
    %227 = vector.load %arg12[%c16_99, %c0_100] : memref<32x32xbf16, #tpu.memory_space<vmem>>, vector<8x32xbf16>
    %cst_101 = arith.constant dense<0.000000e+00> : vector<16x32xf32>
    %228 = tpu.matmul %226, %227, %cst_101 {dimension_numbers = #tpu.dot_dimension_numbers<[1], [0], [0], [1], [0, 0, 1, 1], [], []>} : vector<16x8xbf16>, vector<8x32xbf16>, vector<16x32xf32> -> vector<16x32xf32>
    %229 = arith.truncf %228 : vector<16x32xf32> to vector<16x32xbf16>
    %c0_102 = arith.constant 0 : index
    %c32 = arith.constant 32 : index
    %c0_103 = arith.constant 0 : index
    %230 = vector.load %arg15[%c0_102, %c32, %c0_103] : memref<1x64x32xbf16, #tpu.memory_space<vmem>>, vector<1x16x32xbf16>
    %231 = vector.shape_cast %230 : vector<1x16x32xbf16> to vector<16x32xbf16>
    %232 = vector.shape_cast %229 : vector<16x32xbf16> to vector<1x16x32xbf16>
    tpu.vector_store %arg15[%c0_102, %c32, %c0_103], %232 {strides = array<i32>} : memref<1x64x32xbf16, #tpu.memory_space<vmem>>, vector<1x16x32xbf16>,
    %233 = vector.extract_strided_slice %211 {offsets = [0, 24], sizes = [16, 8], strides = [1, 1]} : vector<16x32xbf16> to vector<16x8xbf16>
    %c24_104 = arith.constant 24 : index
    %c0_105 = arith.constant 0 : index
    %234 = vector.load %arg12[%c24_104, %c0_105] : memref<32x32xbf16, #tpu.memory_space<vmem>>, vector<8x32xbf16>
    %cst_106 = arith.constant dense<0.000000e+00> : vector<16x32xf32>
    %235 = tpu.matmul %233, %234, %cst_106 {dimension_numbers = #tpu.dot_dimension_numbers<[1], [0], [0], [1], [0, 0, 1, 1], [], []>} : vector<16x8xbf16>, vector<8x32xbf16>, vector<16x32xf32> -> vector<16x32xf32>
    %236 = arith.truncf %235 : vector<16x32xf32> to vector<16x32xbf16>
    %c0_107 = arith.constant 0 : index
    %c48 = arith.constant 48 : index
    %c0_108 = arith.constant 0 : index
    %237 = vector.load %arg15[%c0_107, %c48, %c0_108] : memref<1x64x32xbf16, #tpu.memory_space<vmem>>, vector<1x16x32xbf16>
    %238 = vector.shape_cast %237 : vector<1x16x32xbf16> to vector<16x32xbf16>
    %239 = vector.shape_cast %236 : vector<16x32xbf16> to vector<1x16x32xbf16>
    tpu.vector_store %arg15[%c0_107, %c48, %c0_108], %239 {strides = array<i32>} : memref<1x64x32xbf16, #tpu.memory_space<vmem>>, vector<1x16x32xbf16>,
    %240 = vector.extract_strided_slice %8 {offsets = [0, 128], sizes = [8, 16], strides = [1, 1]} : vector<8x384xf32> to vector<8x16xf32>
    %cst_109 = arith.constant dense<0xFF800000> : vector<8xf32>
    %241 = vector.multi_reduction <maximumf>, %240, %cst_109 [1] : vector<8x16xf32> to vector<8xf32>
    %242 = vector.shape_cast %241 : vector<8xf32> to vector<8x1xf32>
    %243 = vector.broadcast %242 : vector<8x1xf32> to vector<8x16xf32>
    %244 = arith.subf %240, %243 : vector<8x16xf32>
    %245 = math.exp %244 : vector<8x16xf32>
    %cst_110 = arith.constant dense<0.000000e+00> : vector<8xf32>
    %246 = vector.multi_reduction <add>, %245, %cst_110 [1] : vector<8x16xf32> to vector<8xf32>
    %247 = vector.shape_cast %246 : vector<8xf32> to vector<8x1xf32>
    %248 = vector.broadcast %247 : vector<8x1xf32> to vector<8x16xf32>
    %249 = arith.divf %245, %248 : vector<8x16xf32>
    %250 = arith.truncf %249 : vector<8x16xf32> to vector<8x16xbf16>
    %c0_111 = arith.constant 0 : index
    %c0_112 = arith.constant 0 : index
    %c0_113 = arith.constant 0 : index
    %251 = vector.load %arg14[%c0_111, %c0_112, %c0_113] : memref<1x8x64xbf16, #tpu.memory_space<vmem>>, vector<1x8x16xbf16>
    %252 = vector.shape_cast %251 : vector<1x8x16xbf16> to vector<8x16xbf16>
    %253 = vector.shape_cast %250 : vector<8x16xbf16> to vector<1x8x16xbf16>
    tpu.vector_store %arg14[%c0_111, %c0_112, %c0_113], %253 {strides = array<i32>} : memref<1x8x64xbf16, #tpu.memory_space<vmem>>, vector<1x8x16xbf16>,
    %254 = vector.extract_strided_slice %8 {offsets = [0, 144], sizes = [8, 16], strides = [1, 1]} : vector<8x384xf32> to vector<8x16xf32>
    %cst_114 = arith.constant dense<0xFF800000> : vector<8xf32>
    %255 = vector.multi_reduction <maximumf>, %254, %cst_114 [1] : vector<8x16xf32> to vector<8xf32>
    %256 = vector.shape_cast %255 : vector<8xf32> to vector<8x1xf32>
    %257 = vector.broadcast %256 : vector<8x1xf32> to vector<8x16xf32>
    %258 = arith.subf %254, %257 : vector<8x16xf32>
    %259 = math.exp %258 : vector<8x16xf32>
    %cst_115 = arith.constant dense<0.000000e+00> : vector<8xf32>
    %260 = vector.multi_reduction <add>, %259, %cst_115 [1] : vector<8x16xf32> to vector<8xf32>
    %261 = vector.shape_cast %260 : vector<8xf32> to vector<8x1xf32>
    %262 = vector.broadcast %261 : vector<8x1xf32> to vector<8x16xf32>
    %263 = arith.divf %259, %262 : vector<8x16xf32>
    %264 = arith.truncf %263 : vector<8x16xf32> to vector<8x16xbf16>
    %c0_116 = arith.constant 0 : index
    %c0_117 = arith.constant 0 : index
    %c16_118 = arith.constant 16 : index
    %265 = vector.load %arg14[%c0_116, %c0_117, %c16_118] : memref<1x8x64xbf16, #tpu.memory_space<vmem>>, vector<1x8x16xbf16>
    %266 = vector.shape_cast %265 : vector<1x8x16xbf16> to vector<8x16xbf16>
    %267 = vector.shape_cast %264 : vector<8x16xbf16> to vector<1x8x16xbf16>
    tpu.vector_store %arg14[%c0_116, %c0_117, %c16_118], %267 {strides = array<i32>} : memref<1x8x64xbf16, #tpu.memory_space<vmem>>, vector<1x8x16xbf16>,
    %268 = vector.extract_strided_slice %8 {offsets = [0, 160], sizes = [8, 16], strides = [1, 1]} : vector<8x384xf32> to vector<8x16xf32>
    %cst_119 = arith.constant dense<0xFF800000> : vector<8xf32>
    %269 = vector.multi_reduction <maximumf>, %268, %cst_119 [1] : vector<8x16xf32> to vector<8xf32>
    %270 = vector.shape_cast %269 : vector<8xf32> to vector<8x1xf32>
    %271 = vector.broadcast %270 : vector<8x1xf32> to vector<8x16xf32>
    %272 = arith.subf %268, %271 : vector<8x16xf32>
    %273 = math.exp %272 : vector<8x16xf32>
    %cst_120 = arith.constant dense<0.000000e+00> : vector<8xf32>
    %274 = vector.multi_reduction <add>, %273, %cst_120 [1] : vector<8x16xf32> to vector<8xf32>
    %275 = vector.shape_cast %274 : vector<8xf32> to vector<8x1xf32>
    %276 = vector.broadcast %275 : vector<8x1xf32> to vector<8x16xf32>
    %277 = arith.divf %273, %276 : vector<8x16xf32>
    %278 = arith.truncf %277 : vector<8x16xf32> to vector<8x16xbf16>
    %c0_121 = arith.constant 0 : index
    %c0_122 = arith.constant 0 : index
    %c32_123 = arith.constant 32 : index
    %279 = vector.load %arg14[%c0_121, %c0_122, %c32_123] : memref<1x8x64xbf16, #tpu.memory_space<vmem>>, vector<1x8x16xbf16>
    %280 = vector.shape_cast %279 : vector<1x8x16xbf16> to vector<8x16xbf16>
    %281 = vector.shape_cast %278 : vector<8x16xbf16> to vector<1x8x16xbf16>
    tpu.vector_store %arg14[%c0_121, %c0_122, %c32_123], %281 {strides = array<i32>} : memref<1x8x64xbf16, #tpu.memory_space<vmem>>, vector<1x8x16xbf16>,
    %282 = vector.extract_strided_slice %8 {offsets = [0, 176], sizes = [8, 16], strides = [1, 1]} : vector<8x384xf32> to vector<8x16xf32>
    %cst_124 = arith.constant dense<0xFF800000> : vector<8xf32>
    %283 = vector.multi_reduction <maximumf>, %282, %cst_124 [1] : vector<8x16xf32> to vector<8xf32>
    %284 = vector.shape_cast %283 : vector<8xf32> to vector<8x1xf32>
    %285 = vector.broadcast %284 : vector<8x1xf32> to vector<8x16xf32>
    %286 = arith.subf %282, %285 : vector<8x16xf32>
    %287 = math.exp %286 : vector<8x16xf32>
    %cst_125 = arith.constant dense<0.000000e+00> : vector<8xf32>
    %288 = vector.multi_reduction <add>, %287, %cst_125 [1] : vector<8x16xf32> to vector<8xf32>
    %289 = vector.shape_cast %288 : vector<8xf32> to vector<8x1xf32>
    %290 = vector.broadcast %289 : vector<8x1xf32> to vector<8x16xf32>
    %291 = arith.divf %287, %290 : vector<8x16xf32>
    %292 = arith.truncf %291 : vector<8x16xf32> to vector<8x16xbf16>
    %c0_126 = arith.constant 0 : index
    %c0_127 = arith.constant 0 : index
    %c48_128 = arith.constant 48 : index
    %293 = vector.load %arg14[%c0_126, %c0_127, %c48_128] : memref<1x8x64xbf16, #tpu.memory_space<vmem>>, vector<1x8x16xbf16>
    %294 = vector.shape_cast %293 : vector<1x8x16xbf16> to vector<8x16xbf16>
    %295 = vector.shape_cast %292 : vector<8x16xbf16> to vector<1x8x16xbf16>
    tpu.vector_store %arg14[%c0_126, %c0_127, %c48_128], %295 {strides = array<i32>} : memref<1x8x64xbf16, #tpu.memory_space<vmem>>, vector<1x8x16xbf16>,
    return
  }
  func.func @transform_0(%arg0: i32) -> (i32, i32, i32) {
    %c0_i32 = arith.constant 0 : i32
    %c0_i32_0 = arith.constant 0 : i32
    %c0_i32_1 = arith.constant 0 : i32
    return %arg0, %c0_i32, %c0_i32_0 : i32, i32, i32
  }
  func.func @transform_1(%arg0: i32) -> (i32, i32, i32) {
    %c0_i32 = arith.constant 0 : i32
    %c0_i32_0 = arith.constant 0 : i32
    %c0_i32_1 = arith.constant 0 : i32
    return %arg0, %c0_i32, %c0_i32_0 : i32, i32, i32
  }
  func.func @transform_2(%arg0: i32) -> (i32, i32, i32) {
    %c0_i32 = arith.constant 0 : i32
    %c0_i32_0 = arith.constant 0 : i32
    %c0_i32_1 = arith.constant 0 : i32
    return %arg0, %c0_i32, %c0_i32_0 : i32, i32, i32
  }
  func.func @transform_3(%arg0: i32) -> (i32, i32) {
    %c0_i32 = arith.constant 0 : i32
    %c0_i32_0 = arith.constant 0 : i32
    %c0_i32_1 = arith.constant 0 : i32
    return %c0_i32, %c0_i32_0 : i32, i32
  }
  func.func @transform_4(%arg0: i32) -> (i32, i32) {
    %c0_i32 = arith.constant 0 : i32
    %c0_i32_0 = arith.constant 0 : i32
    %c0_i32_1 = arith.constant 0 : i32
    return %c0_i32, %c0_i32_0 : i32, i32
  }
  func.func @transform_5(%arg0: i32) -> (i32, i32) {
    %c0_i32 = arith.constant 0 : i32
    %c0_i32_0 = arith.constant 0 : i32
    %c0_i32_1 = arith.constant 0 : i32
    return %c0_i32, %c0_i32_0 : i32, i32
  }
  func.func @transform_6(%arg0: i32) -> (i32, i32) {
    %c0_i32 = arith.constant 0 : i32
    %c0_i32_0 = arith.constant 0 : i32
    %c0_i32_1 = arith.constant 0 : i32
    return %c0_i32, %c0_i32_0 : i32, i32
  }
  func.func @transform_7(%arg0: i32) -> (i32, i32) {
    %c0_i32 = arith.constant 0 : i32
    %c0_i32_0 = arith.constant 0 : i32
    %c0_i32_1 = arith.constant 0 : i32
    return %c0_i32, %c0_i32_0 : i32, i32
  }
  func.func @transform_8(%arg0: i32) -> (i32, i32) {
    %c0_i32 = arith.constant 0 : i32
    %c0_i32_0 = arith.constant 0 : i32
    %c0_i32_1 = arith.constant 0 : i32
    return %c0_i32, %c0_i32_0 : i32, i32
  }
  func.func @transform_9(%arg0: i32) -> (i32, i32) {
    %c0_i32 = arith.constant 0 : i32
    %c0_i32_0 = arith.constant 0 : i32
    %c0_i32_1 = arith.constant 0 : i32
    return %c0_i32, %c0_i32_0 : i32, i32
  }
  func.func @transform_10(%arg0: i32) -> (i32, i32) {
    %c0_i32 = arith.constant 0 : i32
    %c0_i32_0 = arith.constant 0 : i32
    %c0_i32_1 = arith.constant 0 : i32
    return %c0_i32, %c0_i32_0 : i32, i32
  }
  func.func @transform_11(%arg0: i32) -> (i32, i32) {
    %c0_i32 = arith.constant 0 : i32
    %c0_i32_0 = arith.constant 0 : i32
    %c0_i32_1 = arith.constant 0 : i32
    return %c0_i32, %c0_i32_0 : i32, i32
  }
  func.func @transform_12(%arg0: i32) -> (i32, i32, i32) {
    %c0_i32 = arith.constant 0 : i32
    %c0_i32_0 = arith.constant 0 : i32
    %c0_i32_1 = arith.constant 0 : i32
    return %arg0, %c0_i32, %c0_i32_0 : i32, i32, i32
  }
  func.func @transform_13(%arg0: i32) -> (i32, i32, i32) {
    %c0_i32 = arith.constant 0 : i32
    %c0_i32_0 = arith.constant 0 : i32
    %c0_i32_1 = arith.constant 0 : i32
    return %arg0, %c0_i32, %c0_i32_0 : i32, i32, i32
  }
  func.func @transform_14(%arg0: i32) -> (i32, i32, i32) {
    %c0_i32 = arith.constant 0 : i32
    %c0_i32_0 = arith.constant 0 : i32
    %c0_i32_1 = arith.constant 0 : i32
    return %arg0, %c0_i32, %c0_i32_0 : i32, i32, i32
  }
}

module attributes {stable_mosaic.version = 11 : i64} {
  func.func @_out_proj_kernel(%arg0: i32, %arg1: memref<16x32xbf16, #tpu.memory_space<vmem>>, %arg2: memref<32x128xbf16, #tpu.memory_space<vmem>>, %arg3: memref<1x128xf32, #tpu.memory_space<vmem>>, %arg4: memref<16x128xf32, #tpu.memory_space<vmem>>) attributes {dimension_semantics = [#tpu.dimension_semantics<parallel>], iteration_bounds = array<i64: 1>, scalar_prefetch = 0 : i64, scratch_operands = 0 : i64, tpu.core_type = #tpu.core_type<tc>, window_params = [{transform_indices = @transform_0, window_bounds = array<i64: 16, 32>}, {pipeline_mode = #tpu.pipeline_mode<synchronous>, transform_indices = @transform_1, window_bounds = array<i64: 32, 128>}, {pipeline_mode = #tpu.pipeline_mode<synchronous>, transform_indices = @transform_2, window_bounds = array<i64: 1, 128>}, {transform_indices = @transform_3, window_bounds = array<i64: 16, 128>}]} {
    %c0 = arith.constant 0 : index
    %c0_0 = arith.constant 0 : index
    %0 = vector.load %arg1[%c0, %c0_0] : memref<16x32xbf16, #tpu.memory_space<vmem>>, vector<16x32xbf16>
    %1 = arith.extf %0 : vector<16x32xbf16> to vector<16x32xf32>
    %cst = arith.constant 5.000000e-01 : f32
    %2 = vector.broadcast %cst : f32 to vector<16x32xf32>
    %3 = arith.mulf %2, %1 : vector<16x32xf32>
    %cst_1 = arith.constant 0.707106769 : f32
    %4 = vector.broadcast %cst_1 : f32 to vector<16x32xf32>
    %5 = arith.mulf %1, %4 : vector<16x32xf32>
    %6 = math.erf %5 : vector<16x32xf32>
    %cst_2 = arith.constant 1.000000e+00 : f32
    %7 = vector.broadcast %cst_2 : f32 to vector<16x32xf32>
    %8 = arith.addf %7, %6 : vector<16x32xf32>
    %9 = arith.mulf %3, %8 : vector<16x32xf32>
    %10 = arith.truncf %9 : vector<16x32xf32> to vector<16x32xbf16>
    %c0_3 = arith.constant 0 : index
    %c0_4 = arith.constant 0 : index
    %11 = vector.load %arg2[%c0_3, %c0_4] : memref<32x128xbf16, #tpu.memory_space<vmem>>, vector<32x128xbf16>
    %cst_5 = arith.constant dense<0.000000e+00> : vector<16x128xf32>
    %12 = tpu.matmul %10, %11, %cst_5 {dimension_numbers = #tpu.dot_dimension_numbers<[1], [0], [0], [1], [0, 0, 1, 1], [], []>} : vector<16x32xbf16>, vector<32x128xbf16>, vector<16x128xf32> -> vector<16x128xf32>
    %c0_6 = arith.constant 0 : index
    %c0_7 = arith.constant 0 : index
    %13 = vector.load %arg3[%c0_6, %c0_7] : memref<1x128xf32, #tpu.memory_space<vmem>>, vector<1x128xf32>
    %14 = vector.broadcast %13 : vector<1x128xf32> to vector<16x128xf32>
    %15 = arith.addf %12, %14 : vector<16x128xf32>
    %c0_8 = arith.constant 0 : index
    %c0_9 = arith.constant 0 : index
    %16 = vector.load %arg4[%c0_8, %c0_9] : memref<16x128xf32, #tpu.memory_space<vmem>>, vector<16x128xf32>
    tpu.vector_store %arg4[%c0_8, %c0_9], %15 {strides = array<i32>} : memref<16x128xf32, #tpu.memory_space<vmem>>, vector<16x128xf32>,
    return
  }
  func.func @transform_0(%arg0: i32) -> (i32, i32) {
    %c0_i32 = arith.constant 0 : i32
    %c0_i32_0 = arith.constant 0 : i32
    return %arg0, %c0_i32 : i32, i32
  }
  func.func @transform_1(%arg0: i32) -> (i32, i32) {
    %c0_i32 = arith.constant 0 : i32
    %c0_i32_0 = arith.constant 0 : i32
    %c0_i32_1 = arith.constant 0 : i32
    return %c0_i32, %c0_i32_0 : i32, i32
  }
  func.func @transform_2(%arg0: i32) -> (i32, i32) {
    %c0_i32 = arith.constant 0 : i32
    %c0_i32_0 = arith.constant 0 : i32
    %c0_i32_1 = arith.constant 0 : i32
    return %c0_i32, %c0_i32_0 : i32, i32
  }
  func.func @transform_3(%arg0: i32) -> (i32, i32) {
    %c0_i32 = arith.constant 0 : i32
    %c0_i32_0 = arith.constant 0 : i32
    return %arg0, %c0_i32 : i32, i32
  }
}

</mosaic_0001>

<llo_original>
// kernel: ts_transformer_forward.6
$region0: #{ts_transformer_forward.6}
  #allocation0 [shape = 'u32[]', space=smem, size = 0x4, offset = 0x4, fixed_abs, tag = 'smem constant byte address 0x4 - core index']
  #allocation1 [shape = 'u32[144,128]{1,0:T(1,128)}', space=vmem, size = 0x12000, scoped, tag = 'internal scratch']
  %s0 = inlined_call_operand.vmem [shape: f32[2,8,4], index: 0, kind: input, shape index: {}]
  %s1 = inlined_call_operand.vmem [shape: f32[8,32], index: 1, kind: input, shape index: {}]
  %s2 = inlined_call_operand.vmem [shape: bf16[4,32], index: 2, kind: input, shape index: {}]
  %s3 = inlined_call_operand.vmem [shape: f32[1,32], index: 3, kind: input, shape index: {}]
  %s4 = inlined_call_operand.vmem [shape: bf16[2,8,32], index: 4, kind: output, shape index: {}]
  %s5 = sld [smem:[#allocation0]]
  $region49: #{ts_transformer_forward.6} parent=0
    _
  %s7 = ssub.s32 1, %s5
  %s8 = scalar_select 0, %s7, %s5
  loop: start=0, step=1, limit=4
  $region2: #{ts_transformer_forward.6} parent=0 // loop_pre_header
    _
  $region3: #{ts_transformer_forward.6} parent=0 // loop_header
    %s10 = sphi 0, %s14
    %p11 = scmp.ge.s32.totalorder %s10, 4
    %s20 = sphi 0, %s22
    %s23 = sphi 0, %s20
    %s24 = sphi 0, %s23
    %s40 = sphi 0, %s24
    %s44 = sphi 0, %s44
    %s46 = sphi 0, %s44
    %s47 = sphi 0, %s46
    %s61 = sphi 0, %s47
    %s65 = sphi 0, %s65
    %s67 = sphi 0, %s65
    %s68 = sphi 0, %s67
    %s82 = sphi 0, %s68
    %s86 = sphi 0, %s86
    %s88 = sphi 0, %s86
    %s89 = sphi 0, %s88
    %s103 = sphi 0, %s89
    %s109 = sphi 0, %s111
    %s112 = sphi 0, %s109
    %s113 = sphi 0, %s112
    %s129 = sphi 0, %s113
  $region4: #{ts_transformer_forward.6} parent=0 // loop_header_branch
    %13 = sbr.rel (%p11) target = $region8
  $region5: #{ts_transformer_forward.6} parent=0 // loop_body
    %s15 = ssub.s32 %s10, 1
    %s16 = ssub.s32 %s10, 2
    %s17 = sadd.s32 %s10, 1
    %s18 = ssub.s32 %s10, %s17
    %p19 = scmp.eq.s32.totalorder %s18, 0
    %s21 = sadd.s32 %s20, 1
    %s22 = scalar_select %p19, %s20, %s21
    %p25 = pneg %p19
    %p26 = scmp.eq.s32.totalorder %s10, 1
    %p27 = por %p25, %p26
    %p28 = scmp.ne.s32.totalorder %s20, %s23
    %p29 = scmp.eq.s32.totalorder %s10, 0
    %p30 = por %p28, %p29
    %p31 = scmp.ne.s32.totalorder %s20, %s23
    %p32 = scmp.eq.s32.totalorder %s15, 1
    %p33 = por %p31, %p32
    %p34 = scmp.ne.s32.totalorder %s23, %s24
    %p35 = scmp.eq.s32.totalorder %s15, 0
    %p36 = por %p34, %p35
    %p37 = scmp.ne.s32.totalorder %s23, %s24
    %p38 = scmp.eq.s32.totalorder %s16, 1
    %p39 = por %p37, %p38
    %p41 = scmp.ne.s32.totalorder %s24, %s40
    %p42 = scmp.eq.s32.totalorder %s16, 0
    %p43 = por %p41, %p42
    %s45 = sadd.s32 %s44, 1
    %p48 = scmp.eq.s32.totalorder %s10, 1
    %p49 = scmp.ne.s32.totalorder %s44, %s46
    %p50 = scmp.eq.s32.totalorder %s10, 0
    %p51 = por %p49, %p50
    %p52 = scmp.ne.s32.totalorder %s44, %s46
    %p53 = scmp.eq.s32.totalorder %s15, 1
    %p54 = por %p52, %p53
    %p55 = scmp.ne.s32.totalorder %s46, %s47
    %p56 = scmp.eq.s32.totalorder %s15, 0
    %p57 = por %p55, %p56
    %p58 = scmp.ne.s32.totalorder %s46, %s47
    %p59 = scmp.eq.s32.totalorder %s16, 1
    %p60 = por %p58, %p59
    %p62 = scmp.ne.s32.totalorder %s47, %s61
    %p63 = scmp.eq.s32.totalorder %s16, 0
    %p64 = por %p62, %p63
    %s66 = sadd.s32 %s65, 1
    %p69 = scmp.eq.s32.totalorder %s10, 1
    %p70 = scmp.ne.s32.totalorder %s65, %s67
    %p71 = scmp.eq.s32.totalorder %s10, 0
    %p72 = por %p70, %p71
    %p73 = scmp.ne.s32.totalorder %s65, %s67
    %p74 = scmp.eq.s32.totalorder %s15, 1
    %p75 = por %p73, %p74
    %p76 = scmp.ne.s32.totalorder %s67, %s68
    %p77 = scmp.eq.s32.totalorder %s15, 0
    %p78 = por %p76, %p77
    %p79 = scmp.ne.s32.totalorder %s67, %s68
    %p80 = scmp.eq.s32.totalorder %s16, 1
    %p81 = por %p79, %p80
    %p83 = scmp.ne.s32.totalorder %s68, %s82
    %p84 = scmp.eq.s32.totalorder %s16, 0
    %p85 = por %p83, %p84
    %s87 = sadd.s32 %s86, 1
    %p90 = scmp.eq.s32.totalorder %s10, 1
    %p91 = scmp.ne.s32.totalorder %s86, %s88
    %p92 = scmp.eq.s32.totalorder %s10, 0
    %p93 = por %p91, %p92
    %p94 = scmp.ne.s32.totalorder %s86, %s88
    %p95 = scmp.eq.s32.totalorder %s15, 1
    %p96 = por %p94, %p95
    %p97 = scmp.ne.s32.totalorder %s88, %s89
    %p98 = scmp.eq.s32.totalorder %s15, 0
    %p99 = por %p97, %p98
    %p100 = scmp.ne.s32.totalorder %s88, %s89
    %p101 = scmp.eq.s32.totalorder %s16, 1
    %p102 = por %p100, %p101
    %p104 = scmp.ne.s32.totalorder %s89, %s103
    %p105 = scmp.eq.s32.totalorder %s16, 0
    %p106 = por %p104, %p105
    %s107 = ssub.s32 %s10, %s17
    %p108 = scmp.eq.s32.totalorder %s107, 0
    %s110 = sadd.s32 %s109, 1
    %s111 = scalar_select %p108, %s109, %s110
    %p114 = pneg %p108
    %p115 = scmp.eq.s32.totalorder %s10, 1
    %p116 = por %p114, %p115
    %p117 = scmp.ne.s32.totalorder %s109, %s112
    %p118 = scmp.eq.s32.totalorder %s10, 0
    %p119 = por %p117, %p118
    %p120 = scmp.ne.s32.totalorder %s109, %s112
    %p121 = scmp.eq.s32.totalorder %s15, 1
    %p122 = por %p120, %p121
    %p123 = scmp.ne.s32.totalorder %s112, %s113
    %p124 = scmp.eq.s32.totalorder %s15, 0
    %p125 = por %p123, %p124
    %p126 = scmp.ne.s32.totalorder %s112, %s113
    %p127 = scmp.eq.s32.totalorder %s16, 1
    %p128 = por %p126, %p127
    %p130 = scmp.ne.s32.totalorder %s113, %s129
    %p131 = scmp.eq.s32.totalorder %s16, 0
    %p132 = por %p130, %p131
    %p133 = scmp.le.s32.totalorder 1, %s10
    %p134 = scmp.lt.s32.totalorder %s10, 3
    %p135 = pnand %p133, %p134
    %p136 = pneg %p135
    // Predicated region
    $region9: #{ts_transformer_forward.6} parent=5 // pred_check
      _
    $region10: #{ts_transformer_forward.6} parent=5 // pred_check_branch
      %138 = sbr.rel (%p135) target = $region12
    $region11: #{ts_transformer_forward.6} parent=5 // pred_region
      %s139 = ssub.s32 %s10, 1
      // Predicated region
      $region13: #{ts_transformer_forward.6} parent=11 // pred_check
        %p140 = pneg %p57
      $region14: #{ts_transformer_forward.6} parent=11 // pred_check_branch
        %142 = sbr.rel (%p140) target = $region16
      $region15: #{ts_transformer_forward.6} parent=11 // pred_region
        _
      $region16: #{ts_transformer_forward.6} parent=11 // pred_fallthru
        _
      // Predicated region
      $region17: #{ts_transformer_forward.6} parent=11 // pred_check
        %p143 = pneg %p78
      $region18: #{ts_transformer_forward.6} parent=11 // pred_check_branch
        %145 = sbr.rel (%p143) target = $region20
      $region19: #{ts_transformer_forward.6} parent=11 // pred_region
        _
      $region20: #{ts_transformer_forward.6} parent=11 // pred_fallthru
        _
      // Predicated region
      $region21: #{ts_transformer_forward.6} parent=11 // pred_check
        %p146 = pneg %p99
      $region22: #{ts_transformer_forward.6} parent=11 // pred_check_branch
        %148 = sbr.rel (%p146) target = $region24
      $region23: #{ts_transformer_forward.6} parent=11 // pred_region
        _
      $region24: #{ts_transformer_forward.6} parent=11 // pred_fallthru
        _
    $region12: #{ts_transformer_forward.6} parent=5 // pred_fallthru
      _
    %p149 = scmp.lt.s32.totalorder %s10, 2
    // Predicated region
    $region25: #{ts_transformer_forward.6} parent=5 // pred_check
      %p150 = pneg %p149
    $region26: #{ts_transformer_forward.6} parent=5 // pred_check_branch
      %152 = sbr.rel (%p150) target = $region28
    $region27: #{ts_transformer_forward.6} parent=5 // pred_region
      // Predicated region
      $region29: #{ts_transformer_forward.6} parent=27 // pred_check
        %p153 = pneg %p30
      $region30: #{ts_transformer_forward.6} parent=27 // pred_check_branch
        %155 = sbr.rel (%p153) target = $region32
      $region31: #{ts_transformer_forward.6} parent=27 // pred_region
        %p156 = scmp.lt.s32.totalorder %s10, 1
        %s157 = scalar_select %p156, %s10, 1
        %s158 = smul.addr %s157, 8
        %s159 = scalar_lea.vmem %s0, %s158
      $region32: #{ts_transformer_forward.6} parent=27 // pred_fallthru
        _
    $region28: #{ts_transformer_forward.6} parent=5 // pred_fallthru
      _
    %p160 = scmp.le.s32.totalorder 1, %s10
    %p161 = scmp.lt.s32.totalorder %s10, 3
    %p162 = pnand %p160, %p161
    %p163 = pneg %p162
    // Predicated region
    $region33: #{ts_transformer_forward.6} parent=5 // pred_check
      _
    $region34: #{ts_transformer_forward.6} parent=5 // pred_check_branch
      %165 = sbr.rel (%p162) target = $region36
    $region35: #{ts_transformer_forward.6} parent=5 // pred_region
      %s166 = ssub.s32 %s10, 1
      %p167 = scmp.lt.s32.totalorder %s15, 1
      %s168 = scalar_select %p167, %s15, 1
      %s169 = smul.addr %s168, 8
      %s170 = scalar_lea.vmem %s0, %s169
      %p171 = pneg %p36
      %p172 = pneg %p33
      %p173 = pneg %p57
      %p174 = pneg %p54
      %p175 = pneg %p78
      %p176 = pneg %p75
      %p177 = pneg %p99
      %p178 = pneg %p96
      %p179 = pneg %p125
      %p180 = pneg %p122
      %p181 = scmp.lt.s32.totalorder %s15, 1
      %s182 = scalar_select %p181, %s15, 1
      %s183 = smul.addr %s182, 4
      %s184 = scalar_lea.vmem %s4, %s183
      %p185 = scmp.lt.s32.totalorder %s15, 1
      %s186 = scalar_select %p185, %s15, 1
      %s187 = smul.addr %s186, 8
      %s188 = scalar_lea.vmem %s0, %s187
      %p189 = scmp.lt.s32.totalorder %s15, 1
      %s190 = scalar_select %p189, %s15, 1
      %s191 = smul.addr %s190, 4
      %s192 = scalar_lea.vmem %s4, %s191
      %v194 = vld [vmem:[%s188] sm:$0xff]
      %v195 = vpack.c.bf16 %v194, %v194
      %v196 = vld [vmem:[%s2] sm:$0x3]
      %v197 = vld [vmem:[%s3] sm:$0x1]
      %v199 = vlaneseq
      %v200 = vshrl.u32 %v199, 7
      %v201 = vsub.s32 0, %v200
      %v202 = vrot.slane %v197, %v201
      %vm204 = vcmask 31744
      %v206 = vsel %vm204, %v195, 0
      %vm208 = vcmask 1041408
      %v210 = vsel %vm208, %v196, 0
      %212 = vmatprep.subr.bf16.mxu0 0
      %213 = vmatpush1.bf16.msra.mxu0 0
      %214 = vmatprep.subr.bf16.mxu0 0
      %215 = vmatpush1.bf16.msra.mxu0 0
      %216 = vmatprep.subr.bf16.mxu0 0
      %217 = vmatpush1.bf16.msra.mxu0 0
      %218 = vmatprep.subr.bf16.mxu0 0
      %219 = vmatpush1.bf16.msra.mxu0 0
      %220 = vmatprep.subr.bf16.mxu0 0
      %221 = vmatpush1.bf16.msra.mxu0 0
      %222 = vmatprep.subr.bf16.mxu0 0
      %223 = vmatpush1.bf16.msra.mxu0 0
      %224 = vmatprep.subr.bf16.mxu0 0
      %225 = vmatpush1.bf16.msra.mxu0 0
      %226 = vmatprep.subr.bf16.mxu0 0
      %227 = vmatpush1.bf16.msra.mxu0 %v210
      %228 = vmatprep.subr.bf16.mxu0 0
      %229 = vmatpush2.bf16.msra.mxu0 0
      %230 = vmatprep.subr.bf16.mxu0 0
      %231 = vmatpush2.bf16.msra.mxu0 0
      %232 = vmatprep.subr.bf16.mxu0 0
      %233 = vmatpush2.bf16.msra.mxu0 0
      %234 = vmatprep.subr.bf16.mxu0 0
      %235 = vmatpush2.bf16.msra.mxu0 0
      %236 = vmatprep.subr.bf16.mxu0 0
      %237 = vmatpush2.bf16.msra.mxu0 0
      %238 = vmatprep.subr.bf16.mxu0 0
      %239 = vmatpush2.bf16.msra.mxu0 0
      %240 = vmatprep.subr.bf16.mxu0 0
      %241 = vmatpush2.bf16.msra.mxu0 0
      %242 = vmatprep.subr.bf16.mxu0 0
      %243 = vmatpush2.bf16.msra.mxu0 0
      %244 = vmatprep.mubr.bf16.mxu0 0
      %245 = vmatmul.mubr.bf16.gmra.mxu0 %v206
      %v246 = vpop.f32.mrf.mxu0
      %v247 = vadd.f32 %v202, %v246
      %v248 = vpop.f32.mrf.mxu0
      %v249 = vpop.f32.mrf.mxu0
      %v250 = vpop.f32.mrf.mxu0
      %251 = vdwg.mxu0
      %v252 = vmul.f32 %v247, 5.656854
      %v253 = vld [vmem:[%s1] sm:$0xff]
      %v254 = vadd.f32 %v252, %v253
      %v255 = vpack.c.bf16 %v254, %v254
      %vm256 = vcmask 257024
      %257 = vst.msk [vmem:[%s192] sm:$0xf] %vm256, %v255
      %p258 = scmp.lt.s32.totalorder %s15, 1
      %s259 = scalar_select %p258, %s15, 1
      %s260 = smul.addr %s259, 4
      %s261 = scalar_lea.vmem %s4, %s260
      // Predicated region
      $region37: #{ts_transformer_forward.6} parent=35 // pred_check
        %p262 = pneg %p122
      $region38: #{ts_transformer_forward.6} parent=35 // pred_check_branch
        %264 = sbr.rel (%p262) target = $region40
      $region39: #{ts_transformer_forward.6} parent=35 // pred_region
        _
      $region40: #{ts_transformer_forward.6} parent=35 // pred_fallthru
        _
    $region36: #{ts_transformer_forward.6} parent=5 // pred_fallthru
      _
    %p265 = scmp.le.s32.totalorder 2, %s10
    // Predicated region
    $region41: #{ts_transformer_forward.6} parent=5 // pred_check
      %p266 = pneg %p265
    $region42: #{ts_transformer_forward.6} parent=5 // pred_check_branch
      %268 = sbr.rel (%p266) target = $region44
    $region43: #{ts_transformer_forward.6} parent=5 // pred_region
      %s269 = ssub.s32 %s10, 2
      // Predicated region
      $region45: #{ts_transformer_forward.6} parent=43 // pred_check
        %p270 = pneg %p128
      $region46: #{ts_transformer_forward.6} parent=43 // pred_check_branch
        %272 = sbr.rel (%p270) target = $region48
      $region47: #{ts_transformer_forward.6} parent=43 // pred_region
        %p273 = scmp.lt.s32.totalorder %s16, 1
        %s274 = scalar_select %p273, %s16, 1
        %s275 = smul.addr %s274, 4
        %s276 = scalar_lea.vmem %s4, %s275
      $region48: #{ts_transformer_forward.6} parent=43 // pred_fallthru
        _
    $region44: #{ts_transformer_forward.6} parent=5 // pred_fallthru
      _
  $region6: #{ts_transformer_forward.6} parent=0 // loop_footer
    %s14 = sadd.s32 1, %s10
  $region7: #{ts_transformer_forward.6} parent=0 // loop_footer_branch
    %9 = sbr.rel target = $region3
  $region8: #{ts_transformer_forward.6} parent=0 // loop_exit
    _

// kernel: ts_transformer_forward.8
$region0: #{ts_transformer_forward.8}
  #allocation0 [shape = 'u32[]', space=smem, size = 0x4, offset = 0x4, fixed_abs, tag = 'smem constant byte address 0x4 - core index']
  #allocation1 [shape = 'u32[144,128]{1,0:T(1,128)}', space=vmem, size = 0x12000, scoped, tag = 'internal scratch']
  %s0 = inlined_call_operand.vmem [shape: bf16[2,8,32], index: 0, kind: input, shape index: {}]
  %s1 = inlined_call_operand.vmem [shape: bf16[2,8,64], index: 1, kind: input, shape index: {}]
  %s2 = inlined_call_operand.vmem [shape: bf16[2,64,32], index: 2, kind: input, shape index: {}]
  %s3 = inlined_call_operand.vmem [shape: f32[1,32], index: 3, kind: input, shape index: {}]
  %s4 = inlined_call_operand.vmem [shape: f32[1,32], index: 4, kind: input, shape index: {}]
  %s5 = inlined_call_operand.vmem [shape: f32[1,32], index: 5, kind: input, shape index: {}]
  %s6 = inlined_call_operand.vmem [shape: bf16[32,64], index: 6, kind: input, shape index: {}]
  %s7 = inlined_call_operand.vmem [shape: f32[1,64], index: 7, kind: input, shape index: {}]
  %s8 = inlined_call_operand.vmem [shape: bf16[64,32], index: 8, kind: input, shape index: {}]
  %s9 = inlined_call_operand.vmem [shape: f32[1,32], index: 9, kind: input, shape index: {}]
  %s10 = inlined_call_operand.vmem [shape: f32[1,32], index: 10, kind: input, shape index: {}]
  %s11 = inlined_call_operand.vmem [shape: f32[1,32], index: 11, kind: input, shape index: {}]
  %s12 = inlined_call_operand.vmem [shape: bf16[2,8,32], index: 12, kind: output, shape index: {}]
  %s13 = sld [smem:[#allocation0]]
  $region81: #{ts_transformer_forward.8} parent=0
    _
  %s15 = ssub.s32 1, %s13
  %s16 = scalar_select 0, %s15, %s13
  loop: start=0, step=1, limit=4
  $region2: #{ts_transformer_forward.8} parent=0 // loop_pre_header
    _
  $region3: #{ts_transformer_forward.8} parent=0 // loop_header
    %s18 = sphi 0, %s22
    %p19 = scmp.ge.s32.totalorder %s18, 4
    %s25 = sphi 0, %s37
    %s26 = sphi 0, %s33
    %s27 = sphi 0, %s25
    %s28 = sphi 0, %s26
    %s29 = sphi 0, %s27
    %s30 = sphi 0, %s28
    %s42 = sphi 0, %s44
    %s45 = sphi 0, %s42
    %s46 = sphi 0, %s45
    %s62 = sphi 0, %s46
    %s70 = sphi 0, %s72
    %s73 = sphi 0, %s70
    %s74 = sphi 0, %s73
    %s90 = sphi 0, %s74
    %s96 = sphi 0, %s98
    %s99 = sphi 0, %s96
    %s100 = sphi 0, %s99
    %s116 = sphi 0, %s100
    %s120 = sphi 0, %s120
    %s122 = sphi 0, %s120
    %s123 = sphi 0, %s122
    %s137 = sphi 0, %s123
    %s141 = sphi 0, %s141
    %s143 = sphi 0, %s141
    %s144 = sphi 0, %s143
    %s158 = sphi 0, %s144
    %s162 = sphi 0, %s162
    %s164 = sphi 0, %s162
    %s165 = sphi 0, %s164
    %s179 = sphi 0, %s165
    %s183 = sphi 0, %s183
    %s185 = sphi 0, %s183
    %s186 = sphi 0, %s185
    %s200 = sphi 0, %s186
    %s204 = sphi 0, %s204
    %s206 = sphi 0, %s204
    %s207 = sphi 0, %s206
    %s221 = sphi 0, %s207
    %s225 = sphi 0, %s225
    %s227 = sphi 0, %s225
    %s228 = sphi 0, %s227
    %s242 = sphi 0, %s228
    %s246 = sphi 0, %s246
    %s248 = sphi 0, %s246
    %s249 = sphi 0, %s248
    %s263 = sphi 0, %s249
    %s267 = sphi 0, %s267
    %s269 = sphi 0, %s267
    %s270 = sphi 0, %s269
    %s284 = sphi 0, %s270
    %s288 = sphi 0, %s288
    %s290 = sphi 0, %s288
    %s291 = sphi 0, %s290
    %s305 = sphi 0, %s291
    %s313 = sphi 0, %s315
    %s316 = sphi 0, %s313
    %s317 = sphi 0, %s316
    %s333 = sphi 0, %s317
  $region4: #{ts_transformer_forward.8} parent=0 // loop_header_branch
    %21 = sbr.rel (%p19) target = $region8
  $region5: #{ts_transformer_forward.8} parent=0 // loop_body
    %s23 = ssub.s32 %s18, 1
    %s24 = ssub.s32 %s18, 2
    %s31 = sadd.s32 1, %s26
    %p32 = scmp.ge.s32.totalorder %s31, 1
    %s33 = scalar_select %p32, 0, %s31
    %s34 = sadd.s32 1, %s25
    %s35 = scalar_select %p32, %s34, %s25
    %p36 = scmp.ge.s32.totalorder %s35, 2
    %s37 = scalar_select %p36, 0, %s35
    %s38 = ssub.s32 %s25, %s37
    %s39 = ssub.s32 %s26, %s33
    %s40 = sor.u32 %s38, %s39
    %p41 = scmp.eq.s32.totalorder %s40, 0
    %s43 = sadd.s32 %s42, 1
    %s44 = scalar_select %p41, %s42, %s43
    %p47 = pneg %p41
    %p48 = scmp.eq.s32.totalorder %s18, 1
    %p49 = por %p47, %p48
    %p50 = scmp.ne.s32.totalorder %s42, %s45
    %p51 = scmp.eq.s32.totalorder %s18, 0
    %p52 = por %p50, %p51
    %p53 = scmp.ne.s32.totalorder %s42, %s45
    %p54 = scmp.eq.s32.totalorder %s23, 1
    %p55 = por %p53, %p54
    %p56 = scmp.ne.s32.totalorder %s45, %s46
    %p57 = scmp.eq.s32.totalorder %s23, 0
    %p58 = por %p56, %p57
    %p59 = scmp.ne.s32.totalorder %s45, %s46
    %p60 = scmp.eq.s32.totalorder %s24, 1
    %p61 = por %p59, %p60
    %p63 = scmp.ne.s32.totalorder %s46, %s62
    %p64 = scmp.eq.s32.totalorder %s24, 0
    %p65 = por %p63, %p64
    %s66 = ssub.s32 %s25, %s37
    %s67 = ssub.s32 %s26, %s33
    %s68 = sor.u32 %s66, %s67
    %p69 = scmp.eq.s32.totalorder %s68, 0
    %s71 = sadd.s32 %s70, 1
    %s72 = scalar_select %p69, %s70, %s71
    %p75 = pneg %p69
    %p76 = scmp.eq.s32.totalorder %s18, 1
    %p77 = por %p75, %p76
    %p78 = scmp.ne.s32.totalorder %s70, %s73
    %p79 = scmp.eq.s32.totalorder %s18, 0
    %p80 = por %p78, %p79
    %p81 = scmp.ne.s32.totalorder %s70, %s73
    %p82 = scmp.eq.s32.totalorder %s23, 1
    %p83 = por %p81, %p82
    %p84 = scmp.ne.s32.totalorder %s73, %s74
    %p85 = scmp.eq.s32.totalorder %s23, 0
    %p86 = por %p84, %p85
    %p87 = scmp.ne.s32.totalorder %s73, %s74
    %p88 = scmp.eq.s32.totalorder %s24, 1
    %p89 = por %p87, %p88
    %p91 = scmp.ne.s32.totalorder %s74, %s90
    %p92 = scmp.eq.s32.totalorder %s24, 0
    %p93 = por %p91, %p92
    %s94 = ssub.s32 %s25, %s37
    %p95 = scmp.eq.s32.totalorder %s94, 0
    %s97 = sadd.s32 %s96, 1
    %s98 = scalar_select %p95, %s96, %s97
    %p101 = pneg %p95
    %p102 = scmp.eq.s32.totalorder %s18, 1
    %p103 = por %p101, %p102
    %p104 = scmp.ne.s32.totalorder %s96, %s99
    %p105 = scmp.eq.s32.totalorder %s18, 0
    %p106 = por %p104, %p105
    %p107 = scmp.ne.s32.totalorder %s96, %s99
    %p108 = scmp.eq.s32.totalorder %s23, 1
    %p109 = por %p107, %p108
    %p110 = scmp.ne.s32.totalorder %s99, %s100
    %p111 = scmp.eq.s32.totalorder %s23, 0
    %p112 = por %p110, %p111
    %p113 = scmp.ne.s32.totalorder %s99, %s100
    %p114 = scmp.eq.s32.totalorder %s24, 1
    %p115 = por %p113, %p114
    %p117 = scmp.ne.s32.totalorder %s100, %s116
    %p118 = scmp.eq.s32.totalorder %s24, 0
    %p119 = por %p117, %p118
    %s121 = sadd.s32 %s120, 1
    %p124 = scmp.eq.s32.totalorder %s18, 1
    %p125 = scmp.ne.s32.totalorder %s120, %s122
    %p126 = scmp.eq.s32.totalorder %s18, 0
    %p127 = por %p125, %p126
    %p128 = scmp.ne.s32.totalorder %s120, %s122
    %p129 = scmp.eq.s32.totalorder %s23, 1
    %p130 = por %p128, %p129
    %p131 = scmp.ne.s32.totalorder %s122, %s123
    %p132 = scmp.eq.s32.totalorder %s23, 0
    %p133 = por %p131, %p132
    %p134 = scmp.ne.s32.totalorder %s122, %s123
    %p135 = scmp.eq.s32.totalorder %s24, 1
    %p136 = por %p134, %p135
    %p138 = scmp.ne.s32.totalorder %s123, %s137
    %p139 = scmp.eq.s32.totalorder %s24, 0
    %p140 = por %p138, %p139
    %s142 = sadd.s32 %s141, 1
    %p145 = scmp.eq.s32.totalorder %s18, 1
    %p146 = scmp.ne.s32.totalorder %s141, %s143
    %p147 = scmp.eq.s32.totalorder %s18, 0
    %p148 = por %p146, %p147
    %p149 = scmp.ne.s32.totalorder %s141, %s143
    %p150 = scmp.eq.s32.totalorder %s23, 1
    %p151 = por %p149, %p150
    %p152 = scmp.ne.s32.totalorder %s143, %s144
    %p153 = scmp.eq.s32.totalorder %s23, 0
    %p154 = por %p152, %p153
    %p155 = scmp.ne.s32.totalorder %s143, %s144
    %p156 = scmp.eq.s32.totalorder %s24, 1
    %p157 = por %p155, %p156
    %p159 = scmp.ne.s32.totalorder %s144, %s158
    %p160 = scmp.eq.s32.totalorder %s24, 0
    %p161 = por %p159, %p160
    %s163 = sadd.s32 %s162, 1
    %p166 = scmp.eq.s32.totalorder %s18, 1
    %p167 = scmp.ne.s32.totalorder %s162, %s164
    %p168 = scmp.eq.s32.totalorder %s18, 0
    %p169 = por %p167, %p168
    %p170 = scmp.ne.s32.totalorder %s162, %s164
    %p171 = scmp.eq.s32.totalorder %s23, 1
    %p172 = por %p170, %p171
    %p173 = scmp.ne.s32.totalorder %s164, %s165
    %p174 = scmp.eq.s32.totalorder %s23, 0
    %p175 = por %p173, %p174
    %p176 = scmp.ne.s32.totalorder %s164, %s165
    %p177 = scmp.eq.s32.totalorder %s24, 1
    %p178 = por %p176, %p177
    %p180 = scmp.ne.s32.totalorder %s165, %s179
    %p181 = scmp.eq.s32.totalorder %s24, 0
    %p182 = por %p180, %p181
    %s184 = sadd.s32 %s183, 1
    %p187 = scmp.eq.s32.totalorder %s18, 1
    %p188 = scmp.ne.s32.totalorder %s183, %s185
    %p189 = scmp.eq.s32.totalorder %s18, 0
    %p190 = por %p188, %p189
    %p191 = scmp.ne.s32.totalorder %s183, %s185
    %p192 = scmp.eq.s32.totalorder %s23, 1
    %p193 = por %p191, %p192
    %p194 = scmp.ne.s32.totalorder %s185, %s186
    %p195 = scmp.eq.s32.totalorder %s23, 0
    %p196 = por %p194, %p195
    %p197 = scmp.ne.s32.totalorder %s185, %s186
    %p198 = scmp.eq.s32.totalorder %s24, 1
    %p199 = por %p197, %p198
    %p201 = scmp.ne.s32.totalorder %s186, %s200
    %p202 = scmp.eq.s32.totalorder %s24, 0
    %p203 = por %p201, %p202
    %s205 = sadd.s32 %s204, 1
    %p208 = scmp.eq.s32.totalorder %s18, 1
    %p209 = scmp.ne.s32.totalorder %s204, %s206
    %p210 = scmp.eq.s32.totalorder %s18, 0
    %p211 = por %p209, %p210
    %p212 = scmp.ne.s32.totalorder %s204, %s206
    %p213 = scmp.eq.s32.totalorder %s23, 1
    %p214 = por %p212, %p213
    %p215 = scmp.ne.s32.totalorder %s206, %s207
    %p216 = scmp.eq.s32.totalorder %s23, 0
    %p217 = por %p215, %p216
    %p218 = scmp.ne.s32.totalorder %s206, %s207
    %p219 = scmp.eq.s32.totalorder %s24, 1
    %p220 = por %p218, %p219
    %p222 = scmp.ne.s32.totalorder %s207, %s221
    %p223 = scmp.eq.s32.totalorder %s24, 0
    %p224 = por %p222, %p223
    %s226 = sadd.s32 %s225, 1
    %p229 = scmp.eq.s32.totalorder %s18, 1
    %p230 = scmp.ne.s32.totalorder %s225, %s227
    %p231 = scmp.eq.s32.totalorder %s18, 0
    %p232 = por %p230, %p231
    %p233 = scmp.ne.s32.totalorder %s225, %s227
    %p234 = scmp.eq.s32.totalorder %s23, 1
    %p235 = por %p233, %p234
    %p236 = scmp.ne.s32.totalorder %s227, %s228
    %p237 = scmp.eq.s32.totalorder %s23, 0
    %p238 = por %p236, %p237
    %p239 = scmp.ne.s32.totalorder %s227, %s228
    %p240 = scmp.eq.s32.totalorder %s24, 1
    %p241 = por %p239, %p240
    %p243 = scmp.ne.s32.totalorder %s228, %s242
    %p244 = scmp.eq.s32.totalorder %s24, 0
    %p245 = por %p243, %p244
    %s247 = sadd.s32 %s246, 1
    %p250 = scmp.eq.s32.totalorder %s18, 1
    %p251 = scmp.ne.s32.totalorder %s246, %s248
    %p252 = scmp.eq.s32.totalorder %s18, 0
    %p253 = por %p251, %p252
    %p254 = scmp.ne.s32.totalorder %s246, %s248
    %p255 = scmp.eq.s32.totalorder %s23, 1
    %p256 = por %p254, %p255
    %p257 = scmp.ne.s32.totalorder %s248, %s249
    %p258 = scmp.eq.s32.totalorder %s23, 0
    %p259 = por %p257, %p258
    %p260 = scmp.ne.s32.totalorder %s248, %s249
    %p261 = scmp.eq.s32.totalorder %s24, 1
    %p262 = por %p260, %p261
    %p264 = scmp.ne.s32.totalorder %s249, %s263
    %p265 = scmp.eq.s32.totalorder %s24, 0
    %p266 = por %p264, %p265
    %s268 = sadd.s32 %s267, 1
    %p271 = scmp.eq.s32.totalorder %s18, 1
    %p272 = scmp.ne.s32.totalorder %s267, %s269
    %p273 = scmp.eq.s32.totalorder %s18, 0
    %p274 = por %p272, %p273
    %p275 = scmp.ne.s32.totalorder %s267, %s269
    %p276 = scmp.eq.s32.totalorder %s23, 1
    %p277 = por %p275, %p276
    %p278 = scmp.ne.s32.totalorder %s269, %s270
    %p279 = scmp.eq.s32.totalorder %s23, 0
    %p280 = por %p278, %p279
    %p281 = scmp.ne.s32.totalorder %s269, %s270
    %p282 = scmp.eq.s32.totalorder %s24, 1
    %p283 = por %p281, %p282
    %p285 = scmp.ne.s32.totalorder %s270, %s284
    %p286 = scmp.eq.s32.totalorder %s24, 0
    %p287 = por %p285, %p286
    %s289 = sadd.s32 %s288, 1
    %p292 = scmp.eq.s32.totalorder %s18, 1
    %p293 = scmp.ne.s32.totalorder %s288, %s290
    %p294 = scmp.eq.s32.totalorder %s18, 0
    %p295 = por %p293, %p294
    %p296 = scmp.ne.s32.totalorder %s288, %s290
    %p297 = scmp.eq.s32.totalorder %s23, 1
    %p298 = por %p296, %p297
    %p299 = scmp.ne.s32.totalorder %s290, %s291
    %p300 = scmp.eq.s32.totalorder %s23, 0
    %p301 = por %p299, %p300
    %p302 = scmp.ne.s32.totalorder %s290, %s291
    %p303 = scmp.eq.s32.totalorder %s24, 1
    %p304 = por %p302, %p303
    %p306 = scmp.ne.s32.totalorder %s291, %s305
    %p307 = scmp.eq.s32.totalorder %s24, 0
    %p308 = por %p306, %p307
    %s309 = ssub.s32 %s25, %s37
    %s310 = ssub.s32 %s26, %s33
    %s311 = sor.u32 %s309, %s310
    %p312 = scmp.eq.s32.totalorder %s311, 0
    %s314 = sadd.s32 %s313, 1
    %s315 = scalar_select %p312, %s313, %s314
    %p318 = pneg %p312
    %p319 = scmp.eq.s32.totalorder %s18, 1
    %p320 = por %p318, %p319
    %p321 = scmp.ne.s32.totalorder %s313, %s316
    %p322 = scmp.eq.s32.totalorder %s18, 0
    %p323 = por %p321, %p322
    %p324 = scmp.ne.s32.totalorder %s313, %s316
    %p325 = scmp.eq.s32.totalorder %s23, 1
    %p326 = por %p324, %p325
    %p327 = scmp.ne.s32.totalorder %s316, %s317
    %p328 = scmp.eq.s32.totalorder %s23, 0
    %p329 = por %p327, %p328
    %p330 = scmp.ne.s32.totalorder %s316, %s317
    %p331 = scmp.eq.s32.totalorder %s24, 1
    %p332 = por %p330, %p331
    %p334 = scmp.ne.s32.totalorder %s317, %s333
    %p335 = scmp.eq.s32.totalorder %s24, 0
    %p336 = por %p334, %p335
    %p337 = scmp.le.s32.totalorder 1, %s18
    %p338 = scmp.lt.s32.totalorder %s18, 3
    %p339 = pnand %p337, %p338
    %p340 = pneg %p339
    // Predicated region
    $region9: #{ts_transformer_forward.8} parent=5 // pred_check
      _
    $region10: #{ts_transformer_forward.8} parent=5 // pred_check_branch
      %342 = sbr.rel (%p339) target = $region12
    $region11: #{ts_transformer_forward.8} parent=5 // pred_region
      %s343 = ssub.s32 %s18, 1
      // Predicated region
      $region13: #{ts_transformer_forward.8} parent=11 // pred_check
        %p344 = pneg %p133
      $region14: #{ts_transformer_forward.8} parent=11 // pred_check_branch
        %346 = sbr.rel (%p344) target = $region16
      $region15: #{ts_transformer_forward.8} parent=11 // pred_region
        _
      $region16: #{ts_transformer_forward.8} parent=11 // pred_fallthru
        _
      // Predicated region
      $region17: #{ts_transformer_forward.8} parent=11 // pred_check
        %p347 = pneg %p154
      $region18: #{ts_transformer_forward.8} parent=11 // pred_check_branch
        %349 = sbr.rel (%p347) target = $region20
      $region19: #{ts_transformer_forward.8} parent=11 // pred_region
        _
      $region20: #{ts_transformer_forward.8} parent=11 // pred_fallthru
        _
      // Predicated region
      $region21: #{ts_transformer_forward.8} parent=11 // pred_check
        %p350 = pneg %p175
      $region22: #{ts_transformer_forward.8} parent=11 // pred_check_branch
        %352 = sbr.rel (%p350) target = $region24
      $region23: #{ts_transformer_forward.8} parent=11 // pred_region
        _
      $region24: #{ts_transformer_forward.8} parent=11 // pred_fallthru
        _
      // Predicated region
      $region25: #{ts_transformer_forward.8} parent=11 // pred_check
        %p353 = pneg %p196
      $region26: #{ts_transformer_forward.8} parent=11 // pred_check_branch
        %355 = sbr.rel (%p353) target = $region28
      $region27: #{ts_transformer_forward.8} parent=11 // pred_region
        _
      $region28: #{ts_transformer_forward.8} parent=11 // pred_fallthru
        _
      // Predicated region
      $region29: #{ts_transformer_forward.8} parent=11 // pred_check
        %p356 = pneg %p217
      $region30: #{ts_transformer_forward.8} parent=11 // pred_check_branch
        %358 = sbr.rel (%p356) target = $region32
      $region31: #{ts_transformer_forward.8} parent=11 // pred_region
        _
      $region32: #{ts_transformer_forward.8} parent=11 // pred_fallthru
        _
      // Predicated region
      $region33: #{ts_transformer_forward.8} parent=11 // pred_check
        %p359 = pneg %p238
      $region34: #{ts_transformer_forward.8} parent=11 // pred_check_branch
        %361 = sbr.rel (%p359) target = $region36
      $region35: #{ts_transformer_forward.8} parent=11 // pred_region
        _
      $region36: #{ts_transformer_forward.8} parent=11 // pred_fallthru
        _
      // Predicated region
      $region37: #{ts_transformer_forward.8} parent=11 // pred_check
        %p362 = pneg %p259
      $region38: #{ts_transformer_forward.8} parent=11 // pred_check_branch
        %364 = sbr.rel (%p362) target = $region40
      $region39: #{ts_transformer_forward.8} parent=11 // pred_region
        _
      $region40: #{ts_transformer_forward.8} parent=11 // pred_fallthru
        _
      // Predicated region
      $region41: #{ts_transformer_forward.8} parent=11 // pred_check
        %p365 = pneg %p280
      $region42: #{ts_transformer_forward.8} parent=11 // pred_check_branch
        %367 = sbr.rel (%p365) target = $region44
      $region43: #{ts_transformer_forward.8} parent=11 // pred_region
        _
      $region44: #{ts_transformer_forward.8} parent=11 // pred_fallthru
        _
      // Predicated region
      $region45: #{ts_transformer_forward.8} parent=11 // pred_check
        %p368 = pneg %p301
      $region46: #{ts_transformer_forward.8} parent=11 // pred_check_branch
        %370 = sbr.rel (%p368) target = $region48
      $region47: #{ts_transformer_forward.8} parent=11 // pred_region
        _
      $region48: #{ts_transformer_forward.8} parent=11 // pred_fallthru
        _
    $region12: #{ts_transformer_forward.8} parent=5 // pred_fallthru
      _
    %p371 = scmp.lt.s32.totalorder %s18, 2
    // Predicated region
    $region49: #{ts_transformer_forward.8} parent=5 // pred_check
      %p372 = pneg %p371
    $region50: #{ts_transformer_forward.8} parent=5 // pred_check_branch
      %374 = sbr.rel (%p372) target = $region52
    $region51: #{ts_transformer_forward.8} parent=5 // pred_region
      // Predicated region
      $region53: #{ts_transformer_forward.8} parent=51 // pred_check
        %p375 = pneg %p52
      $region54: #{ts_transformer_forward.8} parent=51 // pred_check_branch
        %377 = sbr.rel (%p375) target = $region56
      $region55: #{ts_transformer_forward.8} parent=51 // pred_region
        %p378 = scmp.lt.s32.totalorder %s25, 1
        %s379 = scalar_select %p378, %s25, 1
        %p380 = scmp.lt.s32.totalorder %s26, 0
        %s381 = scalar_select %p380, %s26, 0
        %s382 = sadd.s32 %s381, %s379
        %s383 = smul.addr %s382, 4
        %s384 = scalar_lea.vmem %s0, %s383
      $region56: #{ts_transformer_forward.8} parent=51 // pred_fallthru
        _
      // Predicated region
      $region57: #{ts_transformer_forward.8} parent=51 // pred_check
        %p385 = pneg %p80
      $region58: #{ts_transformer_forward.8} parent=51 // pred_check_branch
        %387 = sbr.rel (%p385) target = $region60
      $region59: #{ts_transformer_forward.8} parent=51 // pred_region
        %p388 = scmp.lt.s32.totalorder %s25, 1
        %s389 = scalar_select %p388, %s25, 1
        %p390 = scmp.lt.s32.totalorder %s26, 0
        %s391 = scalar_select %p390, %s26, 0
        %s392 = sadd.s32 %s391, %s389
        %s393 = smul.addr %s392, 4
        %s394 = scalar_lea.vmem %s1, %s393
      $region60: #{ts_transformer_forward.8} parent=51 // pred_fallthru
        _
      // Predicated region
      $region61: #{ts_transformer_forward.8} parent=51 // pred_check
        %p395 = pneg %p106
      $region62: #{ts_transformer_forward.8} parent=51 // pred_check_branch
        %397 = sbr.rel (%p395) target = $region64
      $region63: #{ts_transformer_forward.8} parent=51 // pred_region
        %p398 = scmp.lt.s32.totalorder %s25, 1
        %s399 = scalar_select %p398, %s25, 1
        %s400 = smul.addr %s399, 8
        %s401 = smul.addr %s400, 4
        %s402 = scalar_lea.vmem %s2, %s401
      $region64: #{ts_transformer_forward.8} parent=51 // pred_fallthru
        _
    $region52: #{ts_transformer_forward.8} parent=5 // pred_fallthru
      _
    %p403 = scmp.le.s32.totalorder 1, %s18
    %p404 = scmp.lt.s32.totalorder %s18, 3
    %p405 = pnand %p403, %p404
    %p406 = pneg %p405
    // Predicated region
    $region65: #{ts_transformer_forward.8} parent=5 // pred_check
      _
    $region66: #{ts_transformer_forward.8} parent=5 // pred_check_branch
      %408 = sbr.rel (%p405) target = $region68
    $region67: #{ts_transformer_forward.8} parent=5 // pred_region
      %s409 = ssub.s32 %s18, 1
      %p410 = scmp.lt.s32.totalorder %s27, 1
      %s411 = scalar_select %p410, %s27, 1
      %p412 = scmp.lt.s32.totalorder %s28, 0
      %s413 = scalar_select %p412, %s28, 0
      %s414 = sadd.s32 %s413, %s411
      %s415 = smul.addr %s414, 4
      %s416 = scalar_lea.vmem %s0, %s415
      %p417 = pneg %p58
      %p418 = pneg %p55
      %p419 = scmp.lt.s32.totalorder %s27, 1
      %s420 = scalar_select %p419, %s27, 1
      %p421 = scmp.lt.s32.totalorder %s28, 0
      %s422 = scalar_select %p421, %s28, 0
      %s423 = sadd.s32 %s422, %s420
      %s424 = smul.addr %s423, 4
      %s425 = scalar_lea.vmem %s1, %s424
      %p426 = pneg %p86
      %p427 = pneg %p83
      %p428 = scmp.lt.s32.totalorder %s27, 1
      %s429 = scalar_select %p428, %s27, 1
      %s430 = smul.addr %s429, 8
      %s431 = smul.addr %s430, 4
      %s432 = scalar_lea.vmem %s2, %s431
      %p433 = pneg %p112
      %p434 = pneg %p109
      %p435 = pneg %p133
      %p436 = pneg %p130
      %p437 = pneg %p154
      %p438 = pneg %p151
      %p439 = pneg %p175
      %p440 = pneg %p172
      %p441 = pneg %p196
      %p442 = pneg %p193
      %p443 = pneg %p217
      %p444 = pneg %p214
      %p445 = pneg %p238
      %p446 = pneg %p235
      %p447 = pneg %p259
      %p448 = pneg %p256
      %p449 = pneg %p280
      %p450 = pneg %p277
      %p451 = pneg %p301
      %p452 = pneg %p298
      %p453 = pneg %p329
      %p454 = pneg %p326
      %p455 = scmp.lt.s32.totalorder %s27, 1
      %s456 = scalar_select %p455, %s27, 1
      %p457 = scmp.lt.s32.totalorder %s28, 0
      %s458 = scalar_select %p457, %s28, 0
      %s459 = sadd.s32 %s458, %s456
      %s460 = smul.addr %s459, 4
      %s461 = scalar_lea.vmem %s12, %s460
      %p462 = scmp.lt.s32.totalorder %s27, 1
      %s463 = scalar_select %p462, %s27, 1
      %p464 = scmp.lt.s32.totalorder %s28, 0
      %s465 = scalar_select %p464, %s28, 0
      %s466 = sadd.s32 %s465, %s463
      %s467 = smul.addr %s466, 4
      %s468 = scalar_lea.vmem %s0, %s467
      %p469 = scmp.lt.s32.totalorder %s27, 1
      %s470 = scalar_select %p469, %s27, 1
      %p471 = scmp.lt.s32.totalorder %s28, 0
      %s472 = scalar_select %p471, %s28, 0
      %s473 = sadd.s32 %s472, %s470
      %s474 = smul.addr %s473, 4
      %s475 = scalar_lea.vmem %s1, %s474
      %p476 = scmp.lt.s32.totalorder %s27, 1
      %s477 = scalar_select %p476, %s27, 1
      %s478 = smul.addr %s477, 8
      %s479 = smul.addr %s478, 4
      %s480 = scalar_lea.vmem %s2, %s479
      %p481 = scmp.lt.s32.totalorder %s27, 1
      %s482 = scalar_select %p481, %s27, 1
      %p483 = scmp.lt.s32.totalorder %s28, 0
      %s484 = scalar_select %p483, %s28, 0
      %s485 = sadd.s32 %s484, %s482
      %s486 = smul.addr %s485, 4
      %s487 = scalar_lea.vmem %s12, %s486
      %v489 = vld [vmem:[%s475] sm:$0xf]
      %v490 = vld [vmem:[%s480] sm:$0xf]
      %v491 = vld [vmem:[%s480 + $0x4] sm:$0xf]
      %v492 = vld [vmem:[%s480 + $0x8] sm:$0xf]
      %v493 = vld [vmem:[%s480 + $0xc] sm:$0xf]
      %v494 = vld [vmem:[%s480 + $0x10] sm:$0xf]
      %v495 = vld [vmem:[%s480 + $0x14] sm:$0xf]
      %v496 = vld [vmem:[%s480 + $0x18] sm:$0xf]
      %v497 = vld [vmem:[%s480 + $0x1c] sm:$0xf]
      %v498 = vld [vmem:[%s3] sm:$0x1]
      %v500 = vlaneseq
      %v501 = vshrl.u32 %v500, 7
      %v502 = vsub.s32 0, %v501
      %v503 = vrot.slane %v498, %v502
      %v513 = vunpack.c.l.b16 %v490
      %v514 = vunpack.c.l.b16 %v491
      %v515 = vunpack.c.l.b16 %v492
      %v516 = vunpack.c.l.b16 %v493
      %v517 = vunpack.c.l.b16 %v494
      %v518 = vunpack.c.l.b16 %v495
      %v519 = vunpack.c.l.b16 %v496
      %v520 = vunpack.c.l.b16 %v497
      %v521 = vpack.c.b16 %v514, %v513
      %v522 = vpack.c.b16 %v516, %v515
      %v523 = vpack.c.b16 %v518, %v517
      %v524 = vpack.c.b16 %v520, %v519
      %vm529 = vcmask 523264
      %v531 = vsel %vm529, %v489, 0
      %533 = vmatprep.subr.bf16.mxu0 0
      %534 = vmatpush1.bf16.msra.mxu0 0
      %535 = vmatprep.subr.bf16.mxu0 0
      %536 = vmatpush1.bf16.msra.mxu0 0
      %537 = vmatprep.subr.bf16.mxu0 0
      %538 = vmatpush1.bf16.msra.mxu0 0
      %539 = vmatprep.subr.bf16.mxu0 0
      %540 = vmatpush1.bf16.msra.mxu0 0
      %541 = vmatprep.subr.bf16.mxu0 0
      %542 = vmatpush1.bf16.msra.mxu0 %v524
      %543 = vmatprep.subr.bf16.mxu0 0
      %544 = vmatpush1.bf16.msra.mxu0 %v523
      %545 = vmatprep.subr.bf16.mxu0 0
      %546 = vmatpush1.bf16.msra.mxu0 %v522
      %547 = vmatprep.subr.bf16.mxu0 0
      %548 = vmatpush1.bf16.msra.mxu0 %v521
      %549 = vmatprep.subr.bf16.mxu0 0
      %550 = vmatpush2.bf16.msra.mxu0 0
      %551 = vmatprep.subr.bf16.mxu0 0
      %552 = vmatpush2.bf16.msra.mxu0 0
      %553 = vmatprep.subr.bf16.mxu0 0
      %554 = vmatpush2.bf16.msra.mxu0 0
      %555 = vmatprep.subr.bf16.mxu0 0
      %556 = vmatpush2.bf16.msra.mxu0 0
      %557 = vmatprep.subr.bf16.mxu0 0
      %558 = vmatpush2.bf16.msra.mxu0 0
      %559 = vmatprep.subr.bf16.mxu0 0
      %560 = vmatpush2.bf16.msra.mxu0 0
      %561 = vmatprep.subr.bf16.mxu0 0
      %562 = vmatpush2.bf16.msra.mxu0 0
      %563 = vmatprep.subr.bf16.mxu0 0
      %564 = vmatpush2.bf16.msra.mxu0 0
      %565 = vmatprep.mubr.bf16.mxu0 0
      %566 = vmatmul.mubr.bf16.gmra.mxu0 %v531
      %v567 = vpop.f32.mrf.mxu0
      %v568 = vadd.f32 %v503, %v567
      %v569 = vpop.f32.mrf.mxu0
      %v570 = vpop.f32.mrf.mxu0
      %v571 = vpop.f32.mrf.mxu0
      %572 = vdwg.mxu0
      %v573 = vld [vmem:[%s468] sm:$0xf]
      %v574 = vunpack.c.l.bf16 %v573
      %v575 = vadd.f32 %v574, %v568
      %v576 = vld [vmem:[%s4] sm:$0x1]
      %v577 = vld [vmem:[%s5] sm:$0x1]
      %vm578 = vcmask 261120
      %v579 = vsel %vm578, %v575, 0.0
      %580 = vadd.xlane.f32.xlu0 %v579
      %v581 = vpop.xlane.xlu0 %580
      %v582 = vrcp.pop 32.0
      %v583 = vmul.f32 %v581, %v582
      %v584 = vsub.f32 %v575, %v583
      %v585 = vmul.f32 %v584, %v584
      %v586 = vsel %vm578, %v585, 0.0
      %587 = vadd.xlane.f32.xlu0 %v586
      %v588 = vpop.xlane.xlu0 %587
      %v589 = vmul.f32 %v588, %v582
      %v590 = vadd.f32 %v589, 1e-05
      %v591 = vrsqrt.pop %v590
      %v592 = vmul.f32 %v584, %v591
      %v594 = vlaneseq
      %v595 = vshrl.u32 %v594, 7
      %v596 = vsub.s32 0, %v595
      %v597 = vrot.slane %v576, %v596
      %v599 = vmul.f32 %v592, %v597
      %v601 = vlaneseq
      %v602 = vshrl.u32 %v601, 7
      %v603 = vsub.s32 0, %v602
      %v604 = vrot.slane %v577, %v603
      %v606 = vadd.f32 %v599, %v604
      %v607 = vpack.c.bf16 %v606, %v606
      %v608 = vld [vmem:[%s6] sm:$0xf]
      %v609 = vld [vmem:[%s6 + $0x4] sm:$0xf]
      %v610 = vld [vmem:[%s6 + $0x8] sm:$0xf]
      %v611 = vld [vmem:[%s6 + $0xc] sm:$0xf]
      %v612 = vld [vmem:[%s7] sm:$0x1]
      %v614 = vlaneseq
      %v615 = vshrl.u32 %v614, 7
      %v616 = vsub.s32 0, %v615
      %v617 = vrot.slane %v612, %v616
      %v623 = vunpack.c.l.b16 %v608
      %v624 = vunpack.c.l.b16 %v609
      %v625 = vunpack.c.l.b16 %v610
      %v626 = vunpack.c.l.b16 %v611
      %v627 = vpack.c.b16 %v624, %v623
      %v628 = vpack.c.b16 %v626, %v625
      %v632 = vsel %vm578, %v607, 0
      %634 = vmatprep.subr.bf16.mxu0 0
      %635 = vmatpush1.bf16.msra.mxu0 0
      %636 = vmatprep.subr.bf16.mxu0 0
      %637 = vmatpush1.bf16.msra.mxu0 0
      %638 = vmatprep.subr.bf16.mxu0 0
      %639 = vmatpush1.bf16.msra.mxu0 0
      %640 = vmatprep.subr.bf16.mxu0 0
      %641 = vmatpush1.bf16.msra.mxu0 0
      %642 = vmatprep.subr.bf16.mxu0 0
      %643 = vmatpush1.bf16.msra.mxu0 0
      %644 = vmatprep.subr.bf16.mxu0 0
      %645 = vmatpush1.bf16.msra.mxu0 0
      %646 = vmatprep.subr.bf16.mxu0 0
      %647 = vmatpush1.bf16.msra.mxu0 %v628
      %648 = vmatprep.subr.bf16.mxu0 0
      %649 = vmatpush1.bf16.msra.mxu0 %v627
      %650 = vmatprep.subr.bf16.mxu0 0
      %651 = vmatpush2.bf16.msra.mxu0 0
      %652 = vmatprep.subr.bf16.mxu0 0
      %653 = vmatpush2.bf16.msra.mxu0 0
      %654 = vmatprep.subr.bf16.mxu0 0
      %655 = vmatpush2.bf16.msra.mxu0 0
      %656 = vmatprep.subr.bf16.mxu0 0
      %657 = vmatpush2.bf16.msra.mxu0 0
      %658 = vmatprep.subr.bf16.mxu0 0
      %659 = vmatpush2.bf16.msra.mxu0 0
      %660 = vmatprep.subr.bf16.mxu0 0
      %661 = vmatpush2.bf16.msra.mxu0 0
      %662 = vmatprep.subr.bf16.mxu0 0
      %663 = vmatpush2.bf16.msra.mxu0 0
      %664 = vmatprep.subr.bf16.mxu0 0
      %665 = vmatpush2.bf16.msra.mxu0 0
      %666 = vmatprep.mubr.bf16.mxu0 0
      %667 = vmatmul.mubr.bf16.gmra.mxu0 %v632
      %v668 = vpop.f32.mrf.mxu0
      %v669 = vadd.f32 %v617, %v668
      %v670 = vpop.f32.mrf.mxu0
      %v671 = vpop.f32.mrf.mxu0
      %v672 = vpop.f32.mrf.mxu0
      %673 = vdwg.mxu0
      %v674 = vmul.f32 %v669, 0.5
      %v675 = vmul.f32 %v669, 0.70710677
      %v676 = verf.f32.pop %v675
      %v677 = vadd.f32 %v676, 1.0
      %v678 = vmul.f32 %v674, %v677
      %v679 = vpack.c.bf16 %v678, %v678
      %v680 = vld [vmem:[%s8] sm:$0xf]
      %v681 = vld [vmem:[%s8 + $0x4] sm:$0xf]
      %v682 = vld [vmem:[%s8 + $0x8] sm:$0xf]
      %v683 = vld [vmem:[%s8 + $0xc] sm:$0xf]
      %v684 = vld [vmem:[%s8 + $0x10] sm:$0xf]
      %v685 = vld [vmem:[%s8 + $0x14] sm:$0xf]
      %v686 = vld [vmem:[%s8 + $0x18] sm:$0xf]
      %v687 = vld [vmem:[%s8 + $0x1c] sm:$0xf]
      %v688 = vld [vmem:[%s9] sm:$0x1]
      %v690 = vlaneseq
      %v691 = vshrl.u32 %v690, 7
      %v692 = vsub.s32 0, %v691
      %v693 = vrot.slane %v688, %v692
      %v703 = vunpack.c.l.b16 %v680
      %v704 = vunpack.c.l.b16 %v681
      %v705 = vunpack.c.l.b16 %v682
      %v706 = vunpack.c.l.b16 %v683
      %v707 = vunpack.c.l.b16 %v684
      %v708 = vunpack.c.l.b16 %v685
      %v709 = vunpack.c.l.b16 %v686
      %v710 = vunpack.c.l.b16 %v687
      %v711 = vpack.c.b16 %v704, %v703
      %v712 = vpack.c.b16 %v706, %v705
      %v713 = vpack.c.b16 %v708, %v707
      %v714 = vpack.c.b16 %v710, %v709
      %v720 = vsel %vm529, %v679, 0
      %722 = vmatprep.subr.bf16.mxu0 0
      %723 = vmatpush1.bf16.msra.mxu0 0
      %724 = vmatprep.subr.bf16.mxu0 0
      %725 = vmatpush1.bf16.msra.mxu0 0
      %726 = vmatprep.subr.bf16.mxu0 0
      %727 = vmatpush1.bf16.msra.mxu0 0
      %728 = vmatprep.subr.bf16.mxu0 0
      %729 = vmatpush1.bf16.msra.mxu0 0
      %730 = vmatprep.subr.bf16.mxu0 0
      %731 = vmatpush1.bf16.msra.mxu0 %v714
      %732 = vmatprep.subr.bf16.mxu0 0
      %733 = vmatpush1.bf16.msra.mxu0 %v713
      %734 = vmatprep.subr.bf16.mxu0 0
      %735 = vmatpush1.bf16.msra.mxu0 %v712
      %736 = vmatprep.subr.bf16.mxu0 0
      %737 = vmatpush1.bf16.msra.mxu0 %v711
      %738 = vmatprep.subr.bf16.mxu0 0
      %739 = vmatpush2.bf16.msra.mxu0 0
      %740 = vmatprep.subr.bf16.mxu0 0
      %741 = vmatpush2.bf16.msra.mxu0 0
      %742 = vmatprep.subr.bf16.mxu0 0
      %743 = vmatpush2.bf16.msra.mxu0 0
      %744 = vmatprep.subr.bf16.mxu0 0
      %745 = vmatpush2.bf16.msra.mxu0 0
      %746 = vmatprep.subr.bf16.mxu0 0
      %747 = vmatpush2.bf16.msra.mxu0 0
      %748 = vmatprep.subr.bf16.mxu0 0
      %749 = vmatpush2.bf16.msra.mxu0 0
      %750 = vmatprep.subr.bf16.mxu0 0
      %751 = vmatpush2.bf16.msra.mxu0 0
      %752 = vmatprep.subr.bf16.mxu0 0
      %753 = vmatpush2.bf16.msra.mxu0 0
      %754 = vmatprep.mubr.bf16.mxu0 0
      %755 = vmatmul.mubr.bf16.gmra.mxu0 %v720
      %v756 = vpop.f32.mrf.mxu0
      %v757 = vadd.f32 %v693, %v756
      %v758 = vpop.f32.mrf.mxu0
      %v759 = vpop.f32.mrf.mxu0
      %v760 = vpop.f32.mrf.mxu0
      %761 = vdwg.mxu0
      %v762 = vadd.f32 %v606, %v757
      %v763 = vld [vmem:[%s10] sm:$0x1]
      %v764 = vld [vmem:[%s11] sm:$0x1]
      %v765 = vsel %vm578, %v762, 0.0
      %766 = vadd.xlane.f32.xlu0 %v765
      %v767 = vpop.xlane.xlu0 %766
      %v768 = vmul.f32 %v767, %v582
      %v769 = vsub.f32 %v762, %v768
      %v770 = vmul.f32 %v769, %v769
      %v771 = vsel %vm578, %v770, 0.0
      %772 = vadd.xlane.f32.xlu0 %v771
      %v773 = vpop.xlane.xlu0 %772
      %v774 = vmul.f32 %v773, %v582
      %v775 = vadd.f32 %v774, 1e-05
      %v776 = vrsqrt.pop %v775
      %v777 = vmul.f32 %v769, %v776
      %v779 = vlaneseq
      %v780 = vshrl.u32 %v779, 7
      %v781 = vsub.s32 0, %v780
      %v782 = vrot.slane %v763, %v781
      %v784 = vmul.f32 %v777, %v782
      %v786 = vlaneseq
      %v787 = vshrl.u32 %v786, 7
      %v788 = vsub.s32 0, %v787
      %v789 = vrot.slane %v764, %v788
      %v791 = vadd.f32 %v784, %v789
      %v792 = vpack.c.bf16 %v791, %v791
      %vm793 = vcmask 257024
      %794 = vst.msk [vmem:[%s487] sm:$0xf] %vm793, %v792
      %p795 = scmp.lt.s32.totalorder %s27, 1
      %s796 = scalar_select %p795, %s27, 1
      %p797 = scmp.lt.s32.totalorder %s28, 0
      %s798 = scalar_select %p797, %s28, 0
      %s799 = sadd.s32 %s798, %s796
      %s800 = smul.addr %s799, 4
      %s801 = scalar_lea.vmem %s12, %s800
      // Predicated region
      $region69: #{ts_transformer_forward.8} parent=67 // pred_check
        %p802 = pneg %p326
      $region70: #{ts_transformer_forward.8} parent=67 // pred_check_branch
        %804 = sbr.rel (%p802) target = $region72
      $region71: #{ts_transformer_forward.8} parent=67 // pred_region
        _
      $region72: #{ts_transformer_forward.8} parent=67 // pred_fallthru
        _
    $region68: #{ts_transformer_forward.8} parent=5 // pred_fallthru
      _
    %p805 = scmp.le.s32.totalorder 2, %s18
    // Predicated region
    $region73: #{ts_transformer_forward.8} parent=5 // pred_check
      %p806 = pneg %p805
    $region74: #{ts_transformer_forward.8} parent=5 // pred_check_branch
      %808 = sbr.rel (%p806) target = $region76
    $region75: #{ts_transformer_forward.8} parent=5 // pred_region
      %s809 = ssub.s32 %s18, 2
      // Predicated region
      $region77: #{ts_transformer_forward.8} parent=75 // pred_check
        %p810 = pneg %p332
      $region78: #{ts_transformer_forward.8} parent=75 // pred_check_branch
        %812 = sbr.rel (%p810) target = $region80
      $region79: #{ts_transformer_forward.8} parent=75 // pred_region
        %p813 = scmp.lt.s32.totalorder %s29, 1
        %s814 = scalar_select %p813, %s29, 1
        %p815 = scmp.lt.s32.totalorder %s30, 0
        %s816 = scalar_select %p815, %s30, 0
        %s817 = sadd.s32 %s816, %s814
        %s818 = smul.addr %s817, 4
        %s819 = scalar_lea.vmem %s12, %s818
      $region80: #{ts_transformer_forward.8} parent=75 // pred_fallthru
        _
    $region76: #{ts_transformer_forward.8} parent=5 // pred_fallthru
      _
  $region6: #{ts_transformer_forward.8} parent=0 // loop_footer
    %s22 = sadd.s32 1, %s18
  $region7: #{ts_transformer_forward.8} parent=0 // loop_footer_branch
    %17 = sbr.rel target = $region3
  $region8: #{ts_transformer_forward.8} parent=0 // loop_exit
    _

// kernel: ts_transformer_forward.11
$region0: #{ts_transformer_forward.11}
  #allocation0 [shape = 'u32[]', space=smem, size = 0x4, offset = 0x4, fixed_abs, tag = 'smem constant byte address 0x4 - core index']
  #allocation1 [shape = 'u32[144,128]{1,0:T(1,128)}', space=vmem, size = 0x12000, scoped, tag = 'internal scratch']
  %s0 = inlined_call_operand.vmem [shape: bf16[16,32], index: 0, kind: input, shape index: {}]
  %s1 = inlined_call_operand.vmem [shape: bf16[32,128], index: 1, kind: input, shape index: {}]
  %s2 = inlined_call_operand.vmem [shape: f32[1,128], index: 2, kind: input, shape index: {}]
  %s3 = inlined_call_operand.vmem [shape: f32[16,128], index: 3, kind: output, shape index: {}]
  %s4 = sld [smem:[#allocation0]]
  $region22: #{ts_transformer_forward.11} parent=0
    _
  %s6 = ssub.s32 1, %s4
  %s7 = scalar_select 0, %s6, %s4
  // Predicated region
  $region2: #{ts_transformer_forward.11} parent=0 // pred_check
    _
  $region3: #{ts_transformer_forward.11} parent=0 // pred_check_branch
    %9 = sbr.rel (0) target = $region5
  $region4: #{ts_transformer_forward.11} parent=0 // pred_region
    _
  $region5: #{ts_transformer_forward.11} parent=0 // pred_fallthru
    _
  // Predicated region
  $region6: #{ts_transformer_forward.11} parent=0 // pred_check
    _
  $region7: #{ts_transformer_forward.11} parent=0 // pred_check_branch
    %11 = sbr.rel (0) target = $region9
  $region8: #{ts_transformer_forward.11} parent=0 // pred_region
    _
  $region9: #{ts_transformer_forward.11} parent=0 // pred_fallthru
    _
  // Predicated region
  $region10: #{ts_transformer_forward.11} parent=0 // pred_check
    _
  $region11: #{ts_transformer_forward.11} parent=0 // pred_check_branch
    %13 = sbr.rel (0) target = $region13
  $region12: #{ts_transformer_forward.11} parent=0 // pred_region
    _
  $region13: #{ts_transformer_forward.11} parent=0 // pred_fallthru
    _
  %v15 = vld [vmem:[%s0] sm:$0xf]
  %v16 = vld [vmem:[%s0 + $0x4] sm:$0xf]
  %v17 = vunpack.c.l.bf16 %v15
  %v18 = vunpack.c.l.bf16 %v16
  %v19 = vmul.f32 %v17, 0.5
  %v20 = vmul.f32 %v18, 0.5
  %v21 = vmul.f32 %v17, 0.70710677
  %v22 = vmul.f32 %v18, 0.70710677
  %v23 = verf.f32.pop %v21
  %v24 = verf.f32.pop %v22
  %v25 = vadd.f32 %v23, 1.0
  %v26 = vadd.f32 %v24, 1.0
  %v27 = vmul.f32 %v19, %v25
  %v28 = vmul.f32 %v20, %v26
  %v29 = vpack.c.bf16 %v28, %v27
  %v30 = vld [vmem:[%s1] sm:$0xf]
  %v31 = vld [vmem:[%s1 + $0x4] sm:$0xf]
  %v32 = vld [vmem:[%s1 + $0x8] sm:$0xf]
  %v33 = vld [vmem:[%s1 + $0xc] sm:$0xf]
  %v34 = vld [vmem:[%s2] sm:$0x1]
  %v36 = vlaneseq
  %v37 = vshrl.u32 %v36, 7
  %v38 = vsub.s32 0, %v37
  %v39 = vrot.slane %v34, %v38
  %v45 = vunpack.c.l.b16 %v30
  %v46 = vunpack.c.l.b16 %v31
  %v47 = vunpack.c.l.b16 %v32
  %v48 = vunpack.c.l.b16 %v33
  %v49 = vpack.c.b16 %v46, %v45
  %v50 = vpack.c.b16 %v48, %v47
  %vm53 = vcmask 261120
  %v55 = vsel %vm53, %v29, 0
  %57 = vmatprep.subr.bf16.mxu0 0
  %58 = vmatpush1.bf16.msra.mxu0 0
  %59 = vmatprep.subr.bf16.mxu0 0
  %60 = vmatpush1.bf16.msra.mxu0 0
  %61 = vmatprep.subr.bf16.mxu0 0
  %62 = vmatpush1.bf16.msra.mxu0 0
  %63 = vmatprep.subr.bf16.mxu0 0
  %64 = vmatpush1.bf16.msra.mxu0 0
  %65 = vmatprep.subr.bf16.mxu0 0
  %66 = vmatpush1.bf16.msra.mxu0 0
  %67 = vmatprep.subr.bf16.mxu0 0
  %68 = vmatpush1.bf16.msra.mxu0 0
  %69 = vmatprep.subr.bf16.mxu0 0
  %70 = vmatpush1.bf16.msra.mxu0 %v50
  %71 = vmatprep.subr.bf16.mxu0 0
  %72 = vmatpush1.bf16.msra.mxu0 %v49
  %73 = vmatprep.subr.bf16.mxu0 0
  %74 = vmatpush2.bf16.msra.mxu0 0
  %75 = vmatprep.subr.bf16.mxu0 0
  %76 = vmatpush2.bf16.msra.mxu0 0
  %77 = vmatprep.subr.bf16.mxu0 0
  %78 = vmatpush2.bf16.msra.mxu0 0
  %79 = vmatprep.subr.bf16.mxu0 0
  %80 = vmatpush2.bf16.msra.mxu0 0
  %81 = vmatprep.subr.bf16.mxu0 0
  %82 = vmatpush2.bf16.msra.mxu0 0
  %83 = vmatprep.subr.bf16.mxu0 0
  %84 = vmatpush2.bf16.msra.mxu0 0
  %85 = vmatprep.subr.bf16.mxu0 0
  %86 = vmatpush2.bf16.msra.mxu0 0
  %87 = vmatprep.subr.bf16.mxu0 0
  %88 = vmatpush2.bf16.msra.mxu0 0
  %89 = vmatprep.mubr.bf16.mxu0 0
  %90 = vmatmul.mubr.bf16.gmra.mxu0 %v55
  %v91 = vpop.f32.mrf.mxu0
  %v92 = vadd.f32 %v39, %v91
  %v93 = vpop.f32.mrf.mxu0
  %v94 = vpop.f32.mrf.mxu0
  %v95 = vadd.f32 %v39, %v94
  %v96 = vpop.f32.mrf.mxu0
  %97 = vdwg.mxu0
  %98 = vst [vmem:[%s3] sm:$0xff] %v92
  %99 = vst [vmem:[%s3 + $0x8] sm:$0xff] %v95
  // Predicated region
  $region14: #{ts_transformer_forward.11} parent=0 // pred_check
    _
  $region15: #{ts_transformer_forward.11} parent=0 // pred_check_branch
    %101 = sbr.rel (0) target = $region17
  $region16: #{ts_transformer_forward.11} parent=0 // pred_region
    _
  $region17: #{ts_transformer_forward.11} parent=0 // pred_fallthru
    _
  // Predicated region
  $region18: #{ts_transformer_forward.11} parent=0 // pred_check
    _
  $region19: #{ts_transformer_forward.11} parent=0 // pred_check_branch
    %103 = sbr.rel (0) target = $region21
  $region20: #{ts_transformer_forward.11} parent=0 // pred_region
    _
  $region21: #{ts_transformer_forward.11} parent=0 // pred_fallthru
    _

// kernel: ts_transformer_forward.7
$region0: #{ts_transformer_forward.7}
  #allocation0 [shape = 'u32[]', space=smem, size = 0x4, offset = 0x4, fixed_abs, tag = 'smem constant byte address 0x4 - core index']
  #allocation1 [shape = 'u32[144,128]{1,0:T(1,128)}', space=vmem, size = 0x12000, scoped, tag = 'internal scratch']
  #allocation2 [shape = 'f32[16,32]{1,0:T(8,128)}', space=vmem, size = 0x2000, scoped, tag = 'scratch operand']
  %s0 = inlined_call_operand.vmem [shape: bf16[2,8,32], index: 0, kind: input, shape index: {}]
  %s1 = inlined_call_operand.vmem [shape: bf16[16,32], index: 1, kind: input, shape index: {}]
  %s2 = inlined_call_operand.vmem [shape: f32[2,1,8], index: 2, kind: input, shape index: {}]
  %s3 = inlined_call_operand.vmem [shape: bf16[32,384], index: 3, kind: input, shape index: {}]
  %s4 = inlined_call_operand.vmem [shape: f32[1,384], index: 4, kind: input, shape index: {}]
  %s5 = inlined_call_operand.vmem [shape: bf16[32,24], index: 5, kind: input, shape index: {}]
  %s6 = inlined_call_operand.vmem [shape: f32[1,24], index: 6, kind: input, shape index: {}]
  %s7 = inlined_call_operand.vmem [shape: bf16[32,384], index: 7, kind: input, shape index: {}]
  %s8 = inlined_call_operand.vmem [shape: f32[1,384], index: 8, kind: input, shape index: {}]
  %s9 = inlined_call_operand.vmem [shape: f32[1,32], index: 9, kind: input, shape index: {}]
  %s10 = inlined_call_operand.vmem [shape: f32[1,32], index: 10, kind: input, shape index: {}]
  %s11 = inlined_call_operand.vmem [shape: bf16[32,32], index: 11, kind: input, shape index: {}]
  %s12 = inlined_call_operand.vmem [shape: bf16[2,16,32], index: 12, kind: output, shape index: {0}]
  %s13 = inlined_call_operand.vmem [shape: bf16[2,8,64], index: 13, kind: output, shape index: {1}]
  %s14 = inlined_call_operand.vmem [shape: bf16[2,64,32], index: 14, kind: output, shape index: {2}]
  %15 = xla_tuple %s12, %s13, %s14
  %s16 = sld [smem:[#allocation0]]
  $region97: #{ts_transformer_forward.7} parent=0
    _
  %s18 = ssub.s32 1, %s16
  %s19 = scalar_select 0, %s18, %s16
  loop: start=0, step=1, limit=4
  $region2: #{ts_transformer_forward.7} parent=0 // loop_pre_header
    _
  $region3: #{ts_transformer_forward.7} parent=0 // loop_header
    %s21 = sphi 0, %s25
    %p22 = scmp.ge.s32.totalorder %s21, 4
    %s31 = sphi 0, %s33
    %s34 = sphi 0, %s31
    %s35 = sphi 0, %s34
    %s51 = sphi 0, %s35
    %s55 = sphi 0, %s55
    %s57 = sphi 0, %s55
    %s58 = sphi 0, %s57
    %s72 = sphi 0, %s58
    %s78 = sphi 0, %s80
    %s81 = sphi 0, %s78
    %s82 = sphi 0, %s81
    %s98 = sphi 0, %s82
    %s102 = sphi 0, %s102
    %s104 = sphi 0, %s102
    %s105 = sphi 0, %s104
    %s119 = sphi 0, %s105
    %s123 = sphi 0, %s123
    %s125 = sphi 0, %s123
    %s126 = sphi 0, %s125
    %s140 = sphi 0, %s126
    %s144 = sphi 0, %s144
    %s146 = sphi 0, %s144
    %s147 = sphi 0, %s146
    %s161 = sphi 0, %s147
    %s165 = sphi 0, %s165
    %s167 = sphi 0, %s165
    %s168 = sphi 0, %s167
    %s182 = sphi 0, %s168
    %s186 = sphi 0, %s186
    %s188 = sphi 0, %s186
    %s189 = sphi 0, %s188
    %s203 = sphi 0, %s189
    %s207 = sphi 0, %s207
    %s209 = sphi 0, %s207
    %s210 = sphi 0, %s209
    %s224 = sphi 0, %s210
    %s228 = sphi 0, %s228
    %s230 = sphi 0, %s228
    %s231 = sphi 0, %s230
    %s245 = sphi 0, %s231
    %s249 = sphi 0, %s249
    %s251 = sphi 0, %s249
    %s252 = sphi 0, %s251
    %s266 = sphi 0, %s252
    %s270 = sphi 0, %s270
    %s272 = sphi 0, %s270
    %s273 = sphi 0, %s272
    %s287 = sphi 0, %s273
    %s293 = sphi 0, %s295
    %s296 = sphi 0, %s293
    %s297 = sphi 0, %s296
    %s313 = sphi 0, %s297
    %s319 = sphi 0, %s321
    %s322 = sphi 0, %s319
    %s323 = sphi 0, %s322
    %s339 = sphi 0, %s323
    %s345 = sphi 0, %s347
    %s348 = sphi 0, %s345
    %s349 = sphi 0, %s348
    %s365 = sphi 0, %s349
  $region4: #{ts_transformer_forward.7} parent=0 // loop_header_branch
    %24 = sbr.rel (%p22) target = $region8
  $region5: #{ts_transformer_forward.7} parent=0 // loop_body
    %s26 = ssub.s32 %s21, 1
    %s27 = ssub.s32 %s21, 2
    %s28 = sadd.s32 %s21, 1
    %s29 = ssub.s32 %s21, %s28
    %p30 = scmp.eq.s32.totalorder %s29, 0
    %s32 = sadd.s32 %s31, 1
    %s33 = scalar_select %p30, %s31, %s32
    %p36 = pneg %p30
    %p37 = scmp.eq.s32.totalorder %s21, 1
    %p38 = por %p36, %p37
    %p39 = scmp.ne.s32.totalorder %s31, %s34
    %p40 = scmp.eq.s32.totalorder %s21, 0
    %p41 = por %p39, %p40
    %p42 = scmp.ne.s32.totalorder %s31, %s34
    %p43 = scmp.eq.s32.totalorder %s26, 1
    %p44 = por %p42, %p43
    %p45 = scmp.ne.s32.totalorder %s34, %s35
    %p46 = scmp.eq.s32.totalorder %s26, 0
    %p47 = por %p45, %p46
    %p48 = scmp.ne.s32.totalorder %s34, %s35
    %p49 = scmp.eq.s32.totalorder %s27, 1
    %p50 = por %p48, %p49
    %p52 = scmp.ne.s32.totalorder %s35, %s51
    %p53 = scmp.eq.s32.totalorder %s27, 0
    %p54 = por %p52, %p53
    %s56 = sadd.s32 %s55, 1
    %p59 = scmp.eq.s32.totalorder %s21, 1
    %p60 = scmp.ne.s32.totalorder %s55, %s57
    %p61 = scmp.eq.s32.totalorder %s21, 0
    %p62 = por %p60, %p61
    %p63 = scmp.ne.s32.totalorder %s55, %s57
    %p64 = scmp.eq.s32.totalorder %s26, 1
    %p65 = por %p63, %p64
    %p66 = scmp.ne.s32.totalorder %s57, %s58
    %p67 = scmp.eq.s32.totalorder %s26, 0
    %p68 = por %p66, %p67
    %p69 = scmp.ne.s32.totalorder %s57, %s58
    %p70 = scmp.eq.s32.totalorder %s27, 1
    %p71 = por %p69, %p70
    %p73 = scmp.ne.s32.totalorder %s58, %s72
    %p74 = scmp.eq.s32.totalorder %s27, 0
    %p75 = por %p73, %p74
    %s76 = ssub.s32 %s21, %s28
    %p77 = scmp.eq.s32.totalorder %s76, 0
    %s79 = sadd.s32 %s78, 1
    %s80 = scalar_select %p77, %s78, %s79
    %p83 = pneg %p77
    %p84 = scmp.eq.s32.totalorder %s21, 1
    %p85 = por %p83, %p84
    %p86 = scmp.ne.s32.totalorder %s78, %s81
    %p87 = scmp.eq.s32.totalorder %s21, 0
    %p88 = por %p86, %p87
    %p89 = scmp.ne.s32.totalorder %s78, %s81
    %p90 = scmp.eq.s32.totalorder %s26, 1
    %p91 = por %p89, %p90
    %p92 = scmp.ne.s32.totalorder %s81, %s82
    %p93 = scmp.eq.s32.totalorder %s26, 0
    %p94 = por %p92, %p93
    %p95 = scmp.ne.s32.totalorder %s81, %s82
    %p96 = scmp.eq.s32.totalorder %s27, 1
    %p97 = por %p95, %p96
    %p99 = scmp.ne.s32.totalorder %s82, %s98
    %p100 = scmp.eq.s32.totalorder %s27, 0
    %p101 = por %p99, %p100
    %s103 = sadd.s32 %s102, 1
    %p106 = scmp.eq.s32.totalorder %s21, 1
    %p107 = scmp.ne.s32.totalorder %s102, %s104
    %p108 = scmp.eq.s32.totalorder %s21, 0
    %p109 = por %p107, %p108
    %p110 = scmp.ne.s32.totalorder %s102, %s104
    %p111 = scmp.eq.s32.totalorder %s26, 1
    %p112 = por %p110, %p111
    %p113 = scmp.ne.s32.totalorder %s104, %s105
    %p114 = scmp.eq.s32.totalorder %s26, 0
    %p115 = por %p113, %p114
    %p116 = scmp.ne.s32.totalorder %s104, %s105
    %p117 = scmp.eq.s32.totalorder %s27, 1
    %p118 = por %p116, %p117
    %p120 = scmp.ne.s32.totalorder %s105, %s119
    %p121 = scmp.eq.s32.totalorder %s27, 0
    %p122 = por %p120, %p121
    %s124 = sadd.s32 %s123, 1
    %p127 = scmp.eq.s32.totalorder %s21, 1
    %p128 = scmp.ne.s32.totalorder %s123, %s125
    %p129 = scmp.eq.s32.totalorder %s21, 0
    %p130 = por %p128, %p129
    %p131 = scmp.ne.s32.totalorder %s123, %s125
    %p132 = scmp.eq.s32.totalorder %s26, 1
    %p133 = por %p131, %p132
    %p134 = scmp.ne.s32.totalorder %s125, %s126
    %p135 = scmp.eq.s32.totalorder %s26, 0
    %p136 = por %p134, %p135
    %p137 = scmp.ne.s32.totalorder %s125, %s126
    %p138 = scmp.eq.s32.totalorder %s27, 1
    %p139 = por %p137, %p138
    %p141 = scmp.ne.s32.totalorder %s126, %s140
    %p142 = scmp.eq.s32.totalorder %s27, 0
    %p143 = por %p141, %p142
    %s145 = sadd.s32 %s144, 1
    %p148 = scmp.eq.s32.totalorder %s21, 1
    %p149 = scmp.ne.s32.totalorder %s144, %s146
    %p150 = scmp.eq.s32.totalorder %s21, 0
    %p151 = por %p149, %p150
    %p152 = scmp.ne.s32.totalorder %s144, %s146
    %p153 = scmp.eq.s32.totalorder %s26, 1
    %p154 = por %p152, %p153
    %p155 = scmp.ne.s32.totalorder %s146, %s147
    %p156 = scmp.eq.s32.totalorder %s26, 0
    %p157 = por %p155, %p156
    %p158 = scmp.ne.s32.totalorder %s146, %s147
    %p159 = scmp.eq.s32.totalorder %s27, 1
    %p160 = por %p158, %p159
    %p162 = scmp.ne.s32.totalorder %s147, %s161
    %p163 = scmp.eq.s32.totalorder %s27, 0
    %p164 = por %p162, %p163
    %s166 = sadd.s32 %s165, 1
    %p169 = scmp.eq.s32.totalorder %s21, 1
    %p170 = scmp.ne.s32.totalorder %s165, %s167
    %p171 = scmp.eq.s32.totalorder %s21, 0
    %p172 = por %p170, %p171
    %p173 = scmp.ne.s32.totalorder %s165, %s167
    %p174 = scmp.eq.s32.totalorder %s26, 1
    %p175 = por %p173, %p174
    %p176 = scmp.ne.s32.totalorder %s167, %s168
    %p177 = scmp.eq.s32.totalorder %s26, 0
    %p178 = por %p176, %p177
    %p179 = scmp.ne.s32.totalorder %s167, %s168
    %p180 = scmp.eq.s32.totalorder %s27, 1
    %p181 = por %p179, %p180
    %p183 = scmp.ne.s32.totalorder %s168, %s182
    %p184 = scmp.eq.s32.totalorder %s27, 0
    %p185 = por %p183, %p184
    %s187 = sadd.s32 %s186, 1
    %p190 = scmp.eq.s32.totalorder %s21, 1
    %p191 = scmp.ne.s32.totalorder %s186, %s188
    %p192 = scmp.eq.s32.totalorder %s21, 0
    %p193 = por %p191, %p192
    %p194 = scmp.ne.s32.totalorder %s186, %s188
    %p195 = scmp.eq.s32.totalorder %s26, 1
    %p196 = por %p194, %p195
    %p197 = scmp.ne.s32.totalorder %s188, %s189
    %p198 = scmp.eq.s32.totalorder %s26, 0
    %p199 = por %p197, %p198
    %p200 = scmp.ne.s32.totalorder %s188, %s189
    %p201 = scmp.eq.s32.totalorder %s27, 1
    %p202 = por %p200, %p201
    %p204 = scmp.ne.s32.totalorder %s189, %s203
    %p205 = scmp.eq.s32.totalorder %s27, 0
    %p206 = por %p204, %p205
    %s208 = sadd.s32 %s207, 1
    %p211 = scmp.eq.s32.totalorder %s21, 1
    %p212 = scmp.ne.s32.totalorder %s207, %s209
    %p213 = scmp.eq.s32.totalorder %s21, 0
    %p214 = por %p212, %p213
    %p215 = scmp.ne.s32.totalorder %s207, %s209
    %p216 = scmp.eq.s32.totalorder %s26, 1
    %p217 = por %p215, %p216
    %p218 = scmp.ne.s32.totalorder %s209, %s210
    %p219 = scmp.eq.s32.totalorder %s26, 0
    %p220 = por %p218, %p219
    %p221 = scmp.ne.s32.totalorder %s209, %s210
    %p222 = scmp.eq.s32.totalorder %s27, 1
    %p223 = por %p221, %p222
    %p225 = scmp.ne.s32.totalorder %s210, %s224
    %p226 = scmp.eq.s32.totalorder %s27, 0
    %p227 = por %p225, %p226
    %s229 = sadd.s32 %s228, 1
    %p232 = scmp.eq.s32.totalorder %s21, 1
    %p233 = scmp.ne.s32.totalorder %s228, %s230
    %p234 = scmp.eq.s32.totalorder %s21, 0
    %p235 = por %p233, %p234
    %p236 = scmp.ne.s32.totalorder %s228, %s230
    %p237 = scmp.eq.s32.totalorder %s26, 1
    %p238 = por %p236, %p237
    %p239 = scmp.ne.s32.totalorder %s230, %s231
    %p240 = scmp.eq.s32.totalorder %s26, 0
    %p241 = por %p239, %p240
    %p242 = scmp.ne.s32.totalorder %s230, %s231
    %p243 = scmp.eq.s32.totalorder %s27, 1
    %p244 = por %p242, %p243
    %p246 = scmp.ne.s32.totalorder %s231, %s245
    %p247 = scmp.eq.s32.totalorder %s27, 0
    %p248 = por %p246, %p247
    %s250 = sadd.s32 %s249, 1
    %p253 = scmp.eq.s32.totalorder %s21, 1
    %p254 = scmp.ne.s32.totalorder %s249, %s251
    %p255 = scmp.eq.s32.totalorder %s21, 0
    %p256 = por %p254, %p255
    %p257 = scmp.ne.s32.totalorder %s249, %s251
    %p258 = scmp.eq.s32.totalorder %s26, 1
    %p259 = por %p257, %p258
    %p260 = scmp.ne.s32.totalorder %s251, %s252
    %p261 = scmp.eq.s32.totalorder %s26, 0
    %p262 = por %p260, %p261
    %p263 = scmp.ne.s32.totalorder %s251, %s252
    %p264 = scmp.eq.s32.totalorder %s27, 1
    %p265 = por %p263, %p264
    %p267 = scmp.ne.s32.totalorder %s252, %s266
    %p268 = scmp.eq.s32.totalorder %s27, 0
    %p269 = por %p267, %p268
    %s271 = sadd.s32 %s270, 1
    %p274 = scmp.eq.s32.totalorder %s21, 1
    %p275 = scmp.ne.s32.totalorder %s270, %s272
    %p276 = scmp.eq.s32.totalorder %s21, 0
    %p277 = por %p275, %p276
    %p278 = scmp.ne.s32.totalorder %s270, %s272
    %p279 = scmp.eq.s32.totalorder %s26, 1
    %p280 = por %p278, %p279
    %p281 = scmp.ne.s32.totalorder %s272, %s273
    %p282 = scmp.eq.s32.totalorder %s26, 0
    %p283 = por %p281, %p282
    %p284 = scmp.ne.s32.totalorder %s272, %s273
    %p285 = scmp.eq.s32.totalorder %s27, 1
    %p286 = por %p284, %p285
    %p288 = scmp.ne.s32.totalorder %s273, %s287
    %p289 = scmp.eq.s32.totalorder %s27, 0
    %p290 = por %p288, %p289
    %s291 = ssub.s32 %s21, %s28
    %p292 = scmp.eq.s32.totalorder %s291, 0
    %s294 = sadd.s32 %s293, 1
    %s295 = scalar_select %p292, %s293, %s294
    %p298 = pneg %p292
    %p299 = scmp.eq.s32.totalorder %s21, 1
    %p300 = por %p298, %p299
    %p301 = scmp.ne.s32.totalorder %s293, %s296
    %p302 = scmp.eq.s32.totalorder %s21, 0
    %p303 = por %p301, %p302
    %p304 = scmp.ne.s32.totalorder %s293, %s296
    %p305 = scmp.eq.s32.totalorder %s26, 1
    %p306 = por %p304, %p305
    %p307 = scmp.ne.s32.totalorder %s296, %s297
    %p308 = scmp.eq.s32.totalorder %s26, 0
    %p309 = por %p307, %p308
    %p310 = scmp.ne.s32.totalorder %s296, %s297
    %p311 = scmp.eq.s32.totalorder %s27, 1
    %p312 = por %p310, %p311
    %p314 = scmp.ne.s32.totalorder %s297, %s313
    %p315 = scmp.eq.s32.totalorder %s27, 0
    %p316 = por %p314, %p315
    %s317 = ssub.s32 %s21, %s28
    %p318 = scmp.eq.s32.totalorder %s317, 0
    %s320 = sadd.s32 %s319, 1
    %s321 = scalar_select %p318, %s319, %s320
    %p324 = pneg %p318
    %p325 = scmp.eq.s32.totalorder %s21, 1
    %p326 = por %p324, %p325
    %p327 = scmp.ne.s32.totalorder %s319, %s322
    %p328 = scmp.eq.s32.totalorder %s21, 0
    %p329 = por %p327, %p328
    %p330 = scmp.ne.s32.totalorder %s319, %s322
    %p331 = scmp.eq.s32.totalorder %s26, 1
    %p332 = por %p330, %p331
    %p333 = scmp.ne.s32.totalorder %s322, %s323
    %p334 = scmp.eq.s32.totalorder %s26, 0
    %p335 = por %p333, %p334
    %p336 = scmp.ne.s32.totalorder %s322, %s323
    %p337 = scmp.eq.s32.totalorder %s27, 1
    %p338 = por %p336, %p337
    %p340 = scmp.ne.s32.totalorder %s323, %s339
    %p341 = scmp.eq.s32.totalorder %s27, 0
    %p342 = por %p340, %p341
    %s343 = ssub.s32 %s21, %s28
    %p344 = scmp.eq.s32.totalorder %s343, 0
    %s346 = sadd.s32 %s345, 1
    %s347 = scalar_select %p344, %s345, %s346
    %p350 = pneg %p344
    %p351 = scmp.eq.s32.totalorder %s21, 1
    %p352 = por %p350, %p351
    %p353 = scmp.ne.s32.totalorder %s345, %s348
    %p354 = scmp.eq.s32.totalorder %s21, 0
    %p355 = por %p353, %p354
    %p356 = scmp.ne.s32.totalorder %s345, %s348
    %p357 = scmp.eq.s32.totalorder %s26, 1
    %p358 = por %p356, %p357
    %p359 = scmp.ne.s32.totalorder %s348, %s349
    %p360 = scmp.eq.s32.totalorder %s26, 0
    %p361 = por %p359, %p360
    %p362 = scmp.ne.s32.totalorder %s348, %s349
    %p363 = scmp.eq.s32.totalorder %s27, 1
    %p364 = por %p362, %p363
    %p366 = scmp.ne.s32.totalorder %s349, %s365
    %p367 = scmp.eq.s32.totalorder %s27, 0
    %p368 = por %p366, %p367
    %p369 = scmp.le.s32.totalorder 1, %s21
    %p370 = scmp.lt.s32.totalorder %s21, 3
    %p371 = pnand %p369, %p370
    %p372 = pneg %p371
    // Predicated region
    $region9: #{ts_transformer_forward.7} parent=5 // pred_check
      _
    $region10: #{ts_transformer_forward.7} parent=5 // pred_check_branch
      %374 = sbr.rel (%p371) target = $region12
    $region11: #{ts_transformer_forward.7} parent=5 // pred_region
      %s375 = ssub.s32 %s21, 1
      // Predicated region
      $region13: #{ts_transformer_forward.7} parent=11 // pred_check
        %p376 = pneg %p68
      $region14: #{ts_transformer_forward.7} parent=11 // pred_check_branch
        %378 = sbr.rel (%p376) target = $region16
      $region15: #{ts_transformer_forward.7} parent=11 // pred_region
        _
      $region16: #{ts_transformer_forward.7} parent=11 // pred_fallthru
        _
      // Predicated region
      $region17: #{ts_transformer_forward.7} parent=11 // pred_check
        %p379 = pneg %p115
      $region18: #{ts_transformer_forward.7} parent=11 // pred_check_branch
        %381 = sbr.rel (%p379) target = $region20
      $region19: #{ts_transformer_forward.7} parent=11 // pred_region
        _
      $region20: #{ts_transformer_forward.7} parent=11 // pred_fallthru
        _
      // Predicated region
      $region21: #{ts_transformer_forward.7} parent=11 // pred_check
        %p382 = pneg %p136
      $region22: #{ts_transformer_forward.7} parent=11 // pred_check_branch
        %384 = sbr.rel (%p382) target = $region24
      $region23: #{ts_transformer_forward.7} parent=11 // pred_region
        _
      $region24: #{ts_transformer_forward.7} parent=11 // pred_fallthru
        _
      // Predicated region
      $region25: #{ts_transformer_forward.7} parent=11 // pred_check
        %p385 = pneg %p157
      $region26: #{ts_transformer_forward.7} parent=11 // pred_check_branch
        %387 = sbr.rel (%p385) target = $region28
      $region27: #{ts_transformer_forward.7} parent=11 // pred_region
        _
      $region28: #{ts_transformer_forward.7} parent=11 // pred_fallthru
        _
      // Predicated region
      $region29: #{ts_transformer_forward.7} parent=11 // pred_check
        %p388 = pneg %p178
      $region30: #{ts_transformer_forward.7} parent=11 // pred_check_branch
        %390 = sbr.rel (%p388) target = $region32
      $region31: #{ts_transformer_forward.7} parent=11 // pred_region
        _
      $region32: #{ts_transformer_forward.7} parent=11 // pred_fallthru
        _
      // Predicated region
      $region33: #{ts_transformer_forward.7} parent=11 // pred_check
        %p391 = pneg %p199
      $region34: #{ts_transformer_forward.7} parent=11 // pred_check_branch
        %393 = sbr.rel (%p391) target = $region36
      $region35: #{ts_transformer_forward.7} parent=11 // pred_region
        _
      $region36: #{ts_transformer_forward.7} parent=11 // pred_fallthru
        _
      // Predicated region
      $region37: #{ts_transformer_forward.7} parent=11 // pred_check
        %p394 = pneg %p220
      $region38: #{ts_transformer_forward.7} parent=11 // pred_check_branch
        %396 = sbr.rel (%p394) target = $region40
      $region39: #{ts_transformer_forward.7} parent=11 // pred_region
        _
      $region40: #{ts_transformer_forward.7} parent=11 // pred_fallthru
        _
      // Predicated region
      $region41: #{ts_transformer_forward.7} parent=11 // pred_check
        %p397 = pneg %p241
      $region42: #{ts_transformer_forward.7} parent=11 // pred_check_branch
        %399 = sbr.rel (%p397) target = $region44
      $region43: #{ts_transformer_forward.7} parent=11 // pred_region
        _
      $region44: #{ts_transformer_forward.7} parent=11 // pred_fallthru
        _
      // Predicated region
      $region45: #{ts_transformer_forward.7} parent=11 // pred_check
        %p400 = pneg %p262
      $region46: #{ts_transformer_forward.7} parent=11 // pred_check_branch
        %402 = sbr.rel (%p400) target = $region48
      $region47: #{ts_transformer_forward.7} parent=11 // pred_region
        _
      $region48: #{ts_transformer_forward.7} parent=11 // pred_fallthru
        _
      // Predicated region
      $region49: #{ts_transformer_forward.7} parent=11 // pred_check
        %p403 = pneg %p283
      $region50: #{ts_transformer_forward.7} parent=11 // pred_check_branch
        %405 = sbr.rel (%p403) target = $region52
      $region51: #{ts_transformer_forward.7} parent=11 // pred_region
        _
      $region52: #{ts_transformer_forward.7} parent=11 // pred_fallthru
        _
    $region12: #{ts_transformer_forward.7} parent=5 // pred_fallthru
      _
    %p406 = scmp.lt.s32.totalorder %s21, 2
    // Predicated region
    $region53: #{ts_transformer_forward.7} parent=5 // pred_check
      %p407 = pneg %p406
    $region54: #{ts_transformer_forward.7} parent=5 // pred_check_branch
      %409 = sbr.rel (%p407) target = $region56
    $region55: #{ts_transformer_forward.7} parent=5 // pred_region
      // Predicated region
      $region57: #{ts_transformer_forward.7} parent=55 // pred_check
        %p410 = pneg %p41
      $region58: #{ts_transformer_forward.7} parent=55 // pred_check_branch
        %412 = sbr.rel (%p410) target = $region60
      $region59: #{ts_transformer_forward.7} parent=55 // pred_region
        %p413 = scmp.lt.s32.totalorder %s21, 1
        %s414 = scalar_select %p413, %s21, 1
        %s415 = smul.addr %s414, 4
        %s416 = scalar_lea.vmem %s0, %s415
      $region60: #{ts_transformer_forward.7} parent=55 // pred_fallthru
        _
      // Predicated region
      $region61: #{ts_transformer_forward.7} parent=55 // pred_check
        %p417 = pneg %p88
      $region62: #{ts_transformer_forward.7} parent=55 // pred_check_branch
        %419 = sbr.rel (%p417) target = $region64
      $region63: #{ts_transformer_forward.7} parent=55 // pred_region
        %p420 = scmp.lt.s32.totalorder %s21, 1
        %s421 = scalar_select %p420, %s21, 1
        %s422 = scalar_lea.vmem %s2, %s421
      $region64: #{ts_transformer_forward.7} parent=55 // pred_fallthru
        _
    $region56: #{ts_transformer_forward.7} parent=5 // pred_fallthru
      _
    %p423 = scmp.le.s32.totalorder 1, %s21
    %p424 = scmp.lt.s32.totalorder %s21, 3
    %p425 = pnand %p423, %p424
    %p426 = pneg %p425
    // Predicated region
    $region65: #{ts_transformer_forward.7} parent=5 // pred_check
      _
    $region66: #{ts_transformer_forward.7} parent=5 // pred_check_branch
      %428 = sbr.rel (%p425) target = $region68
    $region67: #{ts_transformer_forward.7} parent=5 // pred_region
      %s429 = ssub.s32 %s21, 1
      %p430 = scmp.lt.s32.totalorder %s26, 1
      %s431 = scalar_select %p430, %s26, 1
      %s432 = smul.addr %s431, 4
      %s433 = scalar_lea.vmem %s0, %s432
      %p434 = pneg %p47
      %p435 = pneg %p44
      %p436 = pneg %p68
      %p437 = pneg %p65
      %p438 = scmp.lt.s32.totalorder %s26, 1
      %s439 = scalar_select %p438, %s26, 1
      %s440 = scalar_lea.vmem %s2, %s439
      %p441 = pneg %p94
      %p442 = pneg %p91
      %p443 = pneg %p115
      %p444 = pneg %p112
      %p445 = pneg %p136
      %p446 = pneg %p133
      %p447 = pneg %p157
      %p448 = pneg %p154
      %p449 = pneg %p178
      %p450 = pneg %p175
      %p451 = pneg %p199
      %p452 = pneg %p196
      %p453 = pneg %p220
      %p454 = pneg %p217
      %p455 = pneg %p241
      %p456 = pneg %p238
      %p457 = pneg %p262
      %p458 = pneg %p259
      %p459 = pneg %p283
      %p460 = pneg %p280
      %p461 = pneg %p309
      %p462 = pneg %p306
      %p463 = scmp.lt.s32.totalorder %s26, 1
      %s464 = scalar_select %p463, %s26, 1
      %s465 = smul.addr %s464, 2
      %s466 = smul.addr %s465, 4
      %s467 = scalar_lea.vmem %s12, %s466
      %p468 = pneg %p335
      %p469 = pneg %p332
      %p470 = scmp.lt.s32.totalorder %s26, 1
      %s471 = scalar_select %p470, %s26, 1
      %s472 = smul.addr %s471, 4
      %s473 = scalar_lea.vmem %s13, %s472
      %p474 = pneg %p361
      %p475 = pneg %p358
      %p476 = scmp.lt.s32.totalorder %s26, 1
      %s477 = scalar_select %p476, %s26, 1
      %s478 = smul.addr %s477, 8
      %s479 = smul.addr %s478, 4
      %s480 = scalar_lea.vmem %s14, %s479
      %p481 = scmp.lt.s32.totalorder %s26, 1
      %s482 = scalar_select %p481, %s26, 1
      %s483 = smul.addr %s482, 4
      %s484 = scalar_lea.vmem %s0, %s483
      %p485 = scmp.lt.s32.totalorder %s26, 1
      %s486 = scalar_select %p485, %s26, 1
      %s487 = scalar_lea.vmem %s2, %s486
      %p488 = scmp.lt.s32.totalorder %s26, 1
      %s489 = scalar_select %p488, %s26, 1
      %s490 = smul.addr %s489, 2
      %s491 = smul.addr %s490, 4
      %s492 = scalar_lea.vmem %s12, %s491
      %p493 = scmp.lt.s32.totalorder %s26, 1
      %s494 = scalar_select %p493, %s26, 1
      %s495 = smul.addr %s494, 4
      %s496 = scalar_lea.vmem %s13, %s495
      %p497 = scmp.lt.s32.totalorder %s26, 1
      %s498 = scalar_select %p497, %s26, 1
      %s499 = smul.addr %s498, 8
      %s500 = smul.addr %s499, 4
      %s501 = scalar_lea.vmem %s14, %s500
      %v503 = vld [vmem:[%s487] sm:$0x1]
      %v504 = vld [vmem:[%s484] sm:$0xf]
      %v505 = vld [vmem:[%s3] sm:$0xff]
      %v506 = vld [vmem:[%s3 + $0x8] sm:$0xf]
      %v507 = vld [vmem:[%s3 + $0xc] sm:$0xff]
      %v508 = vld [vmem:[%s3 + $0x14] sm:$0xf]
      %v509 = vld [vmem:[%s3 + $0x18] sm:$0xff]
      %v510 = vld [vmem:[%s3 + $0x20] sm:$0xf]
      %v511 = vld [vmem:[%s3 + $0x24] sm:$0xff]
      %v512 = vld [vmem:[%s3 + $0x2c] sm:$0xf]
      %v513 = vld [vmem:[%s4] sm:$0x7]
      %v515 = vlaneseq
      %v516 = vshrl.u32 %v515, 7
      %v517 = vsub.s32 0, %v516
      %v518 = vrot.slane %v513, %v517
      %v519 = vlaneseq
      %v520 = vshrl.u32 %v519, 7
      %v521 = vsub.s32 1, %v520
      %v522 = vrot.slane %v513, %v521
      %v523 = vlaneseq
      %v524 = vshrl.u32 %v523, 7
      %v525 = vsub.s32 2, %v524
      %v526 = vrot.slane %v513, %v525
      %v538 = vunpack.c.l.b16 %v505
      %v539 = vunpack.c.h.b16 %v505
      %v540 = vunpack.c.l.b16 %v506
      %v541 = vunpack.c.l.b16 %v507
      %v542 = vunpack.c.h.b16 %v507
      %v543 = vunpack.c.l.b16 %v508
      %v544 = vunpack.c.l.b16 %v509
      %v545 = vunpack.c.h.b16 %v509
      %v546 = vunpack.c.l.b16 %v510
      %v547 = vunpack.c.l.b16 %v511
      %v548 = vunpack.c.h.b16 %v511
      %v549 = vunpack.c.l.b16 %v512
      %v550 = vpack.c.b16 %v541, %v538
      %v551 = vpack.c.b16 %v542, %v539
      %v552 = vpack.c.b16 %v543, %v540
      %v553 = vpack.c.b16 %v547, %v544
      %v554 = vpack.c.b16 %v548, %v545
      %v555 = vpack.c.b16 %v549, %v546
      %vm562 = vcmask 261120
      %v564 = vsel %vm562, %v504, 0
      %566 = vmatprep.subr.bf16.mxu0 0
      %567 = vmatpush1.bf16.msra.mxu0 0
      %568 = vmatprep.subr.bf16.mxu0 0
      %569 = vmatpush1.bf16.msra.mxu0 0
      %570 = vmatprep.subr.bf16.mxu0 0
      %571 = vmatpush1.bf16.msra.mxu0 0
      %572 = vmatprep.subr.bf16.mxu0 0
      %573 = vmatpush1.bf16.msra.mxu0 0
      %574 = vmatprep.subr.bf16.mxu0 0
      %575 = vmatpush1.bf16.msra.mxu0 0
      %576 = vmatprep.subr.bf16.mxu0 0
      %577 = vmatpush1.bf16.msra.mxu0 0
      %578 = vmatprep.subr.bf16.mxu0 %v554
      %579 = vmatpush1.bf16.msra.mxu0 %v553
      %580 = vmatprep.subr.bf16.mxu0 %v551
      %581 = vmatpush1.bf16.msra.mxu0 %v550
      %582 = vmatprep.subr.bf16.mxu0 0
      %583 = vmatpush2.bf16.msra.mxu0 0
      %584 = vmatprep.subr.bf16.mxu0 0
      %585 = vmatpush2.bf16.msra.mxu0 0
      %586 = vmatprep.subr.bf16.mxu0 0
      %587 = vmatpush2.bf16.msra.mxu0 0
      %588 = vmatprep.subr.bf16.mxu0 0
      %589 = vmatpush2.bf16.msra.mxu0 0
      %590 = vmatprep.subr.bf16.mxu0 0
      %591 = vmatpush2.bf16.msra.mxu0 0
      %592 = vmatprep.subr.bf16.mxu0 0
      %593 = vmatpush2.bf16.msra.mxu0 0
      %594 = vmatprep.subr.bf16.mxu0 0
      %595 = vmatpush2.bf16.msra.mxu0 0
      %596 = vmatprep.subr.bf16.mxu0 0
      %597 = vmatpush2.bf16.msra.mxu0 0
      %598 = vmatprep.mubr.bf16.mxu0 0
      %599 = vmatmul.mubr.bf16.gmra.mxu0 %v564
      %v600 = vpop.f32.mrf.mxu0
      %v601 = vadd.f32 %v518, %v600
      %v602 = vpop.f32.mrf.mxu0
      %v603 = vadd.f32 %v522, %v602
      %v604 = vpop.f32.mrf.mxu0
      %v605 = vpop.f32.mrf.mxu0
      %606 = vdwg.mxu0
      %607 = vmatprep.subr.bf16.mxu0 0
      %608 = vmatpush1.bf16.msra.mxu0 0
      %609 = vmatprep.subr.bf16.mxu0 0
      %610 = vmatpush1.bf16.msra.mxu0 0
      %611 = vmatprep.subr.bf16.mxu0 0
      %612 = vmatpush1.bf16.msra.mxu0 0
      %613 = vmatprep.subr.bf16.mxu0 0
      %614 = vmatpush1.bf16.msra.mxu0 0
      %615 = vmatprep.subr.bf16.mxu0 0
      %616 = vmatpush1.bf16.msra.mxu0 0
      %617 = vmatprep.subr.bf16.mxu0 0
      %618 = vmatpush1.bf16.msra.mxu0 0
      %619 = vmatprep.subr.bf16.mxu0 0
      %620 = vmatpush1.bf16.msra.mxu0 %v555
      %621 = vmatprep.subr.bf16.mxu0 0
      %622 = vmatpush1.bf16.msra.mxu0 %v552
      %623 = vmatprep.subr.bf16.mxu0 0
      %624 = vmatpush2.bf16.msra.mxu0 0
      %625 = vmatprep.subr.bf16.mxu0 0
      %626 = vmatpush2.bf16.msra.mxu0 0
      %627 = vmatprep.subr.bf16.mxu0 0
      %628 = vmatpush2.bf16.msra.mxu0 0
      %629 = vmatprep.subr.bf16.mxu0 0
      %630 = vmatpush2.bf16.msra.mxu0 0
      %631 = vmatprep.subr.bf16.mxu0 0
      %632 = vmatpush2.bf16.msra.mxu0 0
      %633 = vmatprep.subr.bf16.mxu0 0
      %634 = vmatpush2.bf16.msra.mxu0 0
      %635 = vmatprep.subr.bf16.mxu0 0
      %636 = vmatpush2.bf16.msra.mxu0 0
      %637 = vmatprep.subr.bf16.mxu0 0
      %638 = vmatpush2.bf16.msra.mxu0 0
      %639 = vmatprep.mubr.bf16.mxu0 0
      %640 = vmatmul.mubr.bf16.gmra.mxu0 %v564
      %v641 = vpop.f32.mrf.mxu0
      %v642 = vadd.f32 %v526, %v641
      %v643 = vpop.f32.mrf.mxu0
      %v644 = vpop.f32.mrf.mxu0
      %v645 = vpop.f32.mrf.mxu0
      %646 = vdwg.mxu0
      %v647 = vpack.c.bf16 %v601, %v601
      %v648 = vpack.c.bf16 %v642, %v642
      %v649 = vld [vmem:[%s1] sm:$0xf]
      %v650 = vld [vmem:[%s1 + $0x4] sm:$0xf]
      %v651 = vld [vmem:[%s5] sm:$0xf]
      %v652 = vld [vmem:[%s5 + $0x4] sm:$0xf]
      %v653 = vld [vmem:[%s5 + $0x8] sm:$0xf]
      %v654 = vld [vmem:[%s5 + $0xc] sm:$0xf]
      %v655 = vld [vmem:[%s6] sm:$0x1]
      %v657 = vlaneseq
      %v658 = vshrl.u32 %v657, 7
      %v659 = vsub.s32 0, %v658
      %v660 = vrot.slane %v655, %v659
      %v664 = vunpack.c.l.b16 %v649
      %v665 = vunpack.c.l.b16 %v650
      %v666 = vpack.c.b16 %v665, %v664
      %v671 = vunpack.c.l.b16 %v651
      %v672 = vunpack.c.l.b16 %v652
      %v673 = vunpack.c.l.b16 %v653
      %v674 = vunpack.c.l.b16 %v654
      %v675 = vpack.c.b16 %v672, %v671
      %v676 = vpack.c.b16 %v674, %v673
      %v680 = vsel %vm562, %v666, 0
      %682 = vmatprep.subr.bf16.mxu0 0
      %683 = vmatpush1.bf16.msra.mxu0 0
      %684 = vmatprep.subr.bf16.mxu0 0
      %685 = vmatpush1.bf16.msra.mxu0 0
      %686 = vmatprep.subr.bf16.mxu0 0
      %687 = vmatpush1.bf16.msra.mxu0 0
      %688 = vmatprep.subr.bf16.mxu0 0
      %689 = vmatpush1.bf16.msra.mxu0 0
      %690 = vmatprep.subr.bf16.mxu0 0
      %691 = vmatpush1.bf16.msra.mxu0 0
      %692 = vmatprep.subr.bf16.mxu0 0
      %693 = vmatpush1.bf16.msra.mxu0 0
      %694 = vmatprep.subr.bf16.mxu0 0
      %695 = vmatpush1.bf16.msra.mxu0 %v676
      %696 = vmatprep.subr.bf16.mxu0 0
      %697 = vmatpush1.bf16.msra.mxu0 %v675
      %698 = vmatprep.subr.bf16.mxu0 0
      %699 = vmatpush2.bf16.msra.mxu0 0
      %700 = vmatprep.subr.bf16.mxu0 0
      %701 = vmatpush2.bf16.msra.mxu0 0
      %702 = vmatprep.subr.bf16.mxu0 0
      %703 = vmatpush2.bf16.msra.mxu0 0
      %704 = vmatprep.subr.bf16.mxu0 0
      %705 = vmatpush2.bf16.msra.mxu0 0
      %706 = vmatprep.subr.bf16.mxu0 0
      %707 = vmatpush2.bf16.msra.mxu0 0
      %708 = vmatprep.subr.bf16.mxu0 0
      %709 = vmatpush2.bf16.msra.mxu0 0
      %710 = vmatprep.subr.bf16.mxu0 0
      %711 = vmatpush2.bf16.msra.mxu0 0
      %712 = vmatprep.subr.bf16.mxu0 0
      %713 = vmatpush2.bf16.msra.mxu0 0
      %714 = vmatprep.mubr.bf16.mxu0 0
      %715 = vmatmul.mubr.bf16.gmra.mxu0 %v680
      %v716 = vpop.f32.mrf.mxu0
      %v717 = vadd.f32 %v660, %v716
      %v718 = vpop.f32.mrf.mxu0
      %v719 = vpop.f32.mrf.mxu0
      %v720 = vadd.f32 %v660, %v719
      %v721 = vpop.f32.mrf.mxu0
      %722 = vdwg.mxu0
      %v723 = vmul.f32 %v717, 0.4082483
      %v724 = vmul.f32 %v720, 0.4082483
      %v725 = vpack.c.bf16 %v724, %v723
      %v727 = vlaneseq
      %v728 = vshrl.u32 %v727, 7
      %v729 = vsub.s32 0, %v728
      %v730 = vrot.slane %v503, %v729
      %vm732 = vcmask 48128
      %v734 = vsel %vm732, %v725, 0
      %v737 = vsel %vm732, %v648, 0
      %739 = vmatprep.subr.bf16.mxu0 0
      %740 = vmatpush1.bf16.xpose.msra.mxu0 0
      %741 = vmatprep.subr.bf16.mxu0 0
      %742 = vmatpush1.bf16.xpose.msra.mxu0 0
      %743 = vmatprep.subr.bf16.mxu0 0
      %744 = vmatpush1.bf16.xpose.msra.mxu0 0
      %745 = vmatprep.subr.bf16.mxu0 0
      %746 = vmatpush1.bf16.xpose.msra.mxu0 0
      %747 = vmatprep.subr.bf16.mxu0 0
      %748 = vmatpush1.bf16.xpose.msra.mxu0 0
      %749 = vmatprep.subr.bf16.mxu0 0
      %750 = vmatpush1.bf16.xpose.msra.mxu0 0
      %751 = vmatprep.subr.bf16.mxu0 0
      %752 = vmatpush1.bf16.xpose.msra.mxu0 0
      %753 = vmatprep.subr.bf16.mxu0 0
      %754 = vmatpush1.bf16.xpose.msra.mxu0 %v737
      %755 = vmatprep.subr.bf16.mxu0 0
      %756 = vmatpush2.bf16.xpose.msra.mxu0 0
      %757 = vmatprep.subr.bf16.mxu0 0
      %758 = vmatpush2.bf16.xpose.msra.mxu0 0
      %759 = vmatprep.subr.bf16.mxu0 0
      %760 = vmatpush2.bf16.xpose.msra.mxu0 0
      %761 = vmatprep.subr.bf16.mxu0 0
      %762 = vmatpush2.bf16.xpose.msra.mxu0 0
      %763 = vmatprep.subr.bf16.mxu0 0
      %764 = vmatpush2.bf16.xpose.msra.mxu0 0
      %765 = vmatprep.subr.bf16.mxu0 0
      %766 = vmatpush2.bf16.xpose.msra.mxu0 0
      %767 = vmatprep.subr.bf16.mxu0 0
      %768 = vmatpush2.bf16.xpose.msra.mxu0 0
      %769 = vmatprep.subr.bf16.mxu0 0
      %770 = vmatpush2.bf16.xpose.msra.mxu0 0
      %771 = vmatprep.mubr.bf16.mxu0 0
      %772 = vmatmul.mubr.bf16.gmra.mxu0 %v734
      %v773 = vpop.f32.mrf.mxu0
      %v774 = vadd.f32 %v730, %v773
      %v775 = vpop.f32.mrf.mxu0
      %v776 = vpop.f32.mrf.mxu0
      %v777 = vadd.f32 %v730, %v776
      %v778 = vpop.f32.mrf.mxu0
      %779 = vdwg.mxu0
      %vm780 = vcmask 64512
      %v781 = vsel %vm780, %v774, -inf
      %782 = vmax.xlane.f32.xlu0 %v781
      %v783 = vpop.xlane.xlu0 %782
      %v784 = vsel %vm780, %v777, -inf
      %785 = vmax.xlane.f32.xlu0 %v784
      %v786 = vpop.xlane.xlu0 %785
      %v787 = vsub.f32 %v774, %v783
      %v788 = vsub.f32 %v777, %v786
      %v789 = vmul.f32 %v787, 1.442695
      %v790 = vpow.pop %v789
      %v791 = vmul.f32 %v788, 1.442695
      %v792 = vpow.pop %v791
      %v793 = vsel %vm780, %v790, 0.0
      %794 = vadd.xlane.f32.xlu0 %v793
      %v795 = vpop.xlane.xlu0 %794
      %v796 = vsel %vm780, %v792, 0.0
      %797 = vadd.xlane.f32.xlu0 %v796
      %v798 = vpop.xlane.xlu0 %797
      %v799 = vrcp.pop %v795
      %v800 = vmul.f32 %v790, %v799
      %v801 = vrcp.pop %v798
      %v802 = vmul.f32 %v792, %v801
      %v803 = vpack.c.bf16 %v802, %v800
      %v805 = vsel %vm780, %v803, 0
      %vm807 = vcmask 1043456
      %v809 = vsel %vm807, %v647, 0
      %811 = vmatprep.subr.bf16.mxu0 0
      %812 = vmatpush1.bf16.msra.mxu0 0
      %813 = vmatprep.subr.bf16.mxu0 0
      %814 = vmatpush1.bf16.msra.mxu0 0
      %815 = vmatprep.subr.bf16.mxu0 0
      %816 = vmatpush1.bf16.msra.mxu0 0
      %817 = vmatprep.subr.bf16.mxu0 0
      %818 = vmatpush1.bf16.msra.mxu0 0
      %819 = vmatprep.subr.bf16.mxu0 0
      %820 = vmatpush1.bf16.msra.mxu0 0
      %821 = vmatprep.subr.bf16.mxu0 0
      %822 = vmatpush1.bf16.msra.mxu0 0
      %823 = vmatprep.subr.bf16.mxu0 0
      %824 = vmatpush1.bf16.msra.mxu0 0
      %825 = vmatprep.subr.bf16.mxu0 0
      %826 = vmatpush1.bf16.msra.mxu0 %v809
      %827 = vmatprep.subr.bf16.mxu0 0
      %828 = vmatpush2.bf16.msra.mxu0 0
      %829 = vmatprep.subr.bf16.mxu0 0
      %830 = vmatpush2.bf16.msra.mxu0 0
      %831 = vmatprep.subr.bf16.mxu0 0
      %832 = vmatpush2.bf16.msra.mxu0 0
      %833 = vmatprep.subr.bf16.mxu0 0
      %834 = vmatpush2.bf16.msra.mxu0 0
      %835 = vmatprep.subr.bf16.mxu0 0
      %836 = vmatpush2.bf16.msra.mxu0 0
      %837 = vmatprep.subr.bf16.mxu0 0
      %838 = vmatpush2.bf16.msra.mxu0 0
      %839 = vmatprep.subr.bf16.mxu0 0
      %840 = vmatpush2.bf16.msra.mxu0 0
      %841 = vmatprep.subr.bf16.mxu0 0
      %842 = vmatpush2.bf16.msra.mxu0 0
      %843 = vmatprep.mubr.bf16.mxu0 0
      %844 = vmatmul.mubr.bf16.gmra.mxu0 %v805
      %v845 = vpop.f32.mrf.mxu0
      %v846 = vadd.f32 0.0, %v845
      %v847 = vpop.f32.mrf.mxu0
      %v848 = vpop.f32.mrf.mxu0
      %v849 = vadd.f32 0.0, %v848
      %v850 = vpop.f32.mrf.mxu0
      %851 = vdwg.mxu0
      %v852 = vpack.c.bf16 %v849, %v846
      %v854 = vunpack.c.l.b16 %v852
      %v855 = vunpack.c.h.b16 %v852
      %v856 = vpack.c.b16 %v854, %v854
      %v857 = vpack.c.b16 %v855, %v855
      %vm860 = vcmask 60416
      %861 = vst.msk [vmem:[%s492] sm:$0xf] %vm860, %v856
      %862 = vst.msk [vmem:[%s492 + $0x4] sm:$0xf] %vm860, %v857
      %864 = vrot.lane.b32.xlu0 %v725, 122
      %v865 = vpop.permute.xlu0 %864
      %867 = vrot.lane.b32.xlu0 %v648, 122
      %v868 = vpop.permute.xlu0 %867
      %v870 = vsel %vm732, %v865, 0
      %v873 = vsel %vm732, %v868, 0
      %875 = vmatprep.subr.bf16.mxu0 0
      %876 = vmatpush1.bf16.xpose.msra.mxu0 0
      %877 = vmatprep.subr.bf16.mxu0 0
      %878 = vmatpush1.bf16.xpose.msra.mxu0 0
      %879 = vmatprep.subr.bf16.mxu0 0
      %880 = vmatpush1.bf16.xpose.msra.mxu0 0
      %881 = vmatprep.subr.bf16.mxu0 0
      %882 = vmatpush1.bf16.xpose.msra.mxu0 0
      %883 = vmatprep.subr.bf16.mxu0 0
      %884 = vmatpush1.bf16.xpose.msra.mxu0 0
      %885 = vmatprep.subr.bf16.mxu0 0
      %886 = vmatpush1.bf16.xpose.msra.mxu0 0
      %887 = vmatprep.subr.bf16.mxu0 0
      %888 = vmatpush1.bf16.xpose.msra.mxu0 0
      %889 = vmatprep.subr.bf16.mxu0 0
      %890 = vmatpush1.bf16.xpose.msra.mxu0 %v873
      %891 = vmatprep.subr.bf16.mxu0 0
      %892 = vmatpush2.bf16.xpose.msra.mxu0 0
      %893 = vmatprep.subr.bf16.mxu0 0
      %894 = vmatpush2.bf16.xpose.msra.mxu0 0
      %895 = vmatprep.subr.bf16.mxu0 0
      %896 = vmatpush2.bf16.xpose.msra.mxu0 0
      %897 = vmatprep.subr.bf16.mxu0 0
      %898 = vmatpush2.bf16.xpose.msra.mxu0 0
      %899 = vmatprep.subr.bf16.mxu0 0
      %900 = vmatpush2.bf16.xpose.msra.mxu0 0
      %901 = vmatprep.subr.bf16.mxu0 0
      %902 = vmatpush2.bf16.xpose.msra.mxu0 0
      %903 = vmatprep.subr.bf16.mxu0 0
      %904 = vmatpush2.bf16.xpose.msra.mxu0 0
      %905 = vmatprep.subr.bf16.mxu0 0
      %906 = vmatpush2.bf16.xpose.msra.mxu0 0
      %907 = vmatprep.mubr.bf16.mxu0 0
      %908 = vmatmul.mubr.bf16.gmra.mxu0 %v870
      %v909 = vpop.f32.mrf.mxu0
      %v910 = vadd.f32 %v730, %v909
      %v911 = vpop.f32.mrf.mxu0
      %v912 = vpop.f32.mrf.mxu0
      %v913 = vadd.f32 %v730, %v912
      %v914 = vpop.f32.mrf.mxu0
      %915 = vdwg.mxu0
      %v916 = vsel %vm780, %v910, -inf
      %917 = vmax.xlane.f32.xlu0 %v916
      %v918 = vpop.xlane.xlu0 %917
      %v919 = vsel %vm780, %v913, -inf
      %920 = vmax.xlane.f32.xlu0 %v919
      %v921 = vpop.xlane.xlu0 %920
      %v922 = vsub.f32 %v910, %v918
      %v923 = vsub.f32 %v913, %v921
      %v924 = vmul.f32 %v922, 1.442695
      %v925 = vpow.pop %v924
      %v926 = vmul.f32 %v923, 1.442695
      %v927 = vpow.pop %v926
      %v928 = vsel %vm780, %v925, 0.0
      %929 = vadd.xlane.f32.xlu0 %v928
      %v930 = vpop.xlane.xlu0 %929
      %v931 = vsel %vm780, %v927, 0.0
      %932 = vadd.xlane.f32.xlu0 %v931
      %v933 = vpop.xlane.xlu0 %932
      %v934 = vrcp.pop %v930
      %v935 = vmul.f32 %v925, %v934
      %v936 = vrcp.pop %v933
      %v937 = vmul.f32 %v927, %v936
      %v938 = vpack.c.bf16 %v937, %v935
      %940 = vrot.lane.b32.xlu0 %v647, 120
      %v941 = vpop.permute.xlu0 %940
      %v943 = vsel %vm780, %v938, 0
      %v946 = vsel %vm807, %v941, 0
      %948 = vmatprep.subr.bf16.mxu0 0
      %949 = vmatpush1.bf16.msra.mxu0 0
      %950 = vmatprep.subr.bf16.mxu0 0
      %951 = vmatpush1.bf16.msra.mxu0 0
      %952 = vmatprep.subr.bf16.mxu0 0
      %953 = vmatpush1.bf16.msra.mxu0 0
      %954 = vmatprep.subr.bf16.mxu0 0
      %955 = vmatpush1.bf16.msra.mxu0 0
      %956 = vmatprep.subr.bf16.mxu0 0
      %957 = vmatpush1.bf16.msra.mxu0 0
      %958 = vmatprep.subr.bf16.mxu0 0
      %959 = vmatpush1.bf16.msra.mxu0 0
      %960 = vmatprep.subr.bf16.mxu0 0
      %961 = vmatpush1.bf16.msra.mxu0 0
      %962 = vmatprep.subr.bf16.mxu0 0
      %963 = vmatpush1.bf16.msra.mxu0 %v946
      %964 = vmatprep.subr.bf16.mxu0 0
      %965 = vmatpush2.bf16.msra.mxu0 0
      %966 = vmatprep.subr.bf16.mxu0 0
      %967 = vmatpush2.bf16.msra.mxu0 0
      %968 = vmatprep.subr.bf16.mxu0 0
      %969 = vmatpush2.bf16.msra.mxu0 0
      %970 = vmatprep.subr.bf16.mxu0 0
      %971 = vmatpush2.bf16.msra.mxu0 0
      %972 = vmatprep.subr.bf16.mxu0 0
      %973 = vmatpush2.bf16.msra.mxu0 0
      %974 = vmatprep.subr.bf16.mxu0 0
      %975 = vmatpush2.bf16.msra.mxu0 0
      %976 = vmatprep.subr.bf16.mxu0 0
      %977 = vmatpush2.bf16.msra.mxu0 0
      %978 = vmatprep.subr.bf16.mxu0 0
      %979 = vmatpush2.bf16.msra.mxu0 0
      %980 = vmatprep.mubr.bf16.mxu0 0
      %981 = vmatmul.mubr.bf16.gmra.mxu0 %v943
      %v982 = vpop.f32.mrf.mxu0
      %v983 = vadd.f32 0.0, %v982
      %v984 = vpop.f32.mrf.mxu0
      %v985 = vpop.f32.mrf.mxu0
      %v986 = vadd.f32 0.0, %v985
      %v987 = vpop.f32.mrf.mxu0
      %988 = vdwg.mxu0
      %v989 = vpack.c.bf16 %v986, %v983
      %v991 = vunpack.c.l.b16 %v989
      %v992 = vunpack.c.h.b16 %v989
      %v993 = vpack.c.b16 %v991, %v991
      %v994 = vpack.c.b16 %v992, %v992
      %995 = vrot.lane.b32.xlu0 %v993, 8
      %v996 = vpop.permute.xlu0 %995
      %997 = vrot.lane.b32.xlu0 %v994, 8
      %v998 = vpop.permute.xlu0 %997
      %vm1001 = vcmask 126016
      %1002 = vst.msk [vmem:[%s492] sm:$0xf] %vm1001, %v996
      %1003 = vst.msk [vmem:[%s492 + $0x4] sm:$0xf] %vm1001, %v998
      %1004 = vrot.lane.b32.xlu0 %v725, 116
      %v1005 = vpop.permute.xlu0 %1004
      %1006 = vrot.lane.b32.xlu0 %v648, 116
      %v1007 = vpop.permute.xlu0 %1006
      %v1009 = vsel %vm732, %v1005, 0
      %v1012 = vsel %vm732, %v1007, 0
      %1014 = vmatprep.subr.bf16.mxu0 0
      %1015 = vmatpush1.bf16.xpose.msra.mxu0 0
      %1016 = vmatprep.subr.bf16.mxu0 0
      %1017 = vmatpush1.bf16.xpose.msra.mxu0 0
      %1018 = vmatprep.subr.bf16.mxu0 0
      %1019 = vmatpush1.bf16.xpose.msra.mxu0 0
      %1020 = vmatprep.subr.bf16.mxu0 0
      %1021 = vmatpush1.bf16.xpose.msra.mxu0 0
      %1022 = vmatprep.subr.bf16.mxu0 0
      %1023 = vmatpush1.bf16.xpose.msra.mxu0 0
      %1024 = vmatprep.subr.bf16.mxu0 0
      %1025 = vmatpush1.bf16.xpose.msra.mxu0 0
      %1026 = vmatprep.subr.bf16.mxu0 0
      %1027 = vmatpush1.bf16.xpose.msra.mxu0 0
      %1028 = vmatprep.subr.bf16.mxu0 0
      %1029 = vmatpush1.bf16.xpose.msra.mxu0 %v1012
      %1030 = vmatprep.subr.bf16.mxu0 0
      %1031 = vmatpush2.bf16.xpose.msra.mxu0 0
      %1032 = vmatprep.subr.bf16.mxu0 0
      %1033 = vmatpush2.bf16.xpose.msra.mxu0 0
      %1034 = vmatprep.subr.bf16.mxu0 0
      %1035 = vmatpush2.bf16.xpose.msra.mxu0 0
      %1036 = vmatprep.subr.bf16.mxu0 0
      %1037 = vmatpush2.bf16.xpose.msra.mxu0 0
      %1038 = vmatprep.subr.bf16.mxu0 0
      %1039 = vmatpush2.bf16.xpose.msra.mxu0 0
      %1040 = vmatprep.subr.bf16.mxu0 0
      %1041 = vmatpush2.bf16.xpose.msra.mxu0 0
      %1042 = vmatprep.subr.bf16.mxu0 0
      %1043 = vmatpush2.bf16.xpose.msra.mxu0 0
      %1044 = vmatprep.subr.bf16.mxu0 0
      %1045 = vmatpush2.bf16.xpose.msra.mxu0 0
      %1046 = vmatprep.mubr.bf16.mxu0 0
      %1047 = vmatmul.mubr.bf16.gmra.mxu0 %v1009
      %v1048 = vpop.f32.mrf.mxu0
      %v1049 = vadd.f32 %v730, %v1048
      %v1050 = vpop.f32.mrf.mxu0
      %v1051 = vpop.f32.mrf.mxu0
      %v1052 = vadd.f32 %v730, %v1051
      %v1053 = vpop.f32.mrf.mxu0
      %1054 = vdwg.mxu0
      %v1055 = vsel %vm780, %v1049, -inf
      %1056 = vmax.xlane.f32.xlu0 %v1055
      %v1057 = vpop.xlane.xlu0 %1056
      %v1058 = vsel %vm780, %v1052, -inf
      %1059 = vmax.xlane.f32.xlu0 %v1058
      %v1060 = vpop.xlane.xlu0 %1059
      %v1061 = vsub.f32 %v1049, %v1057
      %v1062 = vsub.f32 %v1052, %v1060
      %v1063 = vmul.f32 %v1061, 1.442695
      %v1064 = vpow.pop %v1063
      %v1065 = vmul.f32 %v1062, 1.442695
      %v1066 = vpow.pop %v1065
      %v1067 = vsel %vm780, %v1064, 0.0
      %1068 = vadd.xlane.f32.xlu0 %v1067
      %v1069 = vpop.xlane.xlu0 %1068
      %v1070 = vsel %vm780, %v1066, 0.0
      %1071 = vadd.xlane.f32.xlu0 %v1070
      %v1072 = vpop.xlane.xlu0 %1071
      %v1073 = vrcp.pop %v1069
      %v1074 = vmul.f32 %v1064, %v1073
      %v1075 = vrcp.pop %v1072
      %v1076 = vmul.f32 %v1066, %v1075
      %v1077 = vpack.c.bf16 %v1076, %v1074
      %1078 = vrot.lane.b32.xlu0 %v647, 112
      %v1079 = vpop.permute.xlu0 %1078
      %v1081 = vsel %vm780, %v1077, 0
      %v1084 = vsel %vm807, %v1079, 0
      %1086 = vmatprep.subr.bf16.mxu0 0
      %1087 = vmatpush1.bf16.msra.mxu0 0
      %1088 = vmatprep.subr.bf16.mxu0 0
      %1089 = vmatpush1.bf16.msra.mxu0 0
      %1090 = vmatprep.subr.bf16.mxu0 0
      %1091 = vmatpush1.bf16.msra.mxu0 0
      %1092 = vmatprep.subr.bf16.mxu0 0
      %1093 = vmatpush1.bf16.msra.mxu0 0
      %1094 = vmatprep.subr.bf16.mxu0 0
      %1095 = vmatpush1.bf16.msra.mxu0 0
      %1096 = vmatprep.subr.bf16.mxu0 0
      %1097 = vmatpush1.bf16.msra.mxu0 0
      %1098 = vmatprep.subr.bf16.mxu0 0
      %1099 = vmatpush1.bf16.msra.mxu0 0
      %1100 = vmatprep.subr.bf16.mxu0 0
      %1101 = vmatpush1.bf16.msra.mxu0 %v1084
      %1102 = vmatprep.subr.bf16.mxu0 0
      %1103 = vmatpush2.bf16.msra.mxu0 0
      %1104 = vmatprep.subr.bf16.mxu0 0
      %1105 = vmatpush2.bf16.msra.mxu0 0
      %1106 = vmatprep.subr.bf16.mxu0 0
      %1107 = vmatpush2.bf16.msra.mxu0 0
      %1108 = vmatprep.subr.bf16.mxu0 0
      %1109 = vmatpush2.bf16.msra.mxu0 0
      %1110 = vmatprep.subr.bf16.mxu0 0
      %1111 = vmatpush2.bf16.msra.mxu0 0
      %1112 = vmatprep.subr.bf16.mxu0 0
      %1113 = vmatpush2.bf16.msra.mxu0 0
      %1114 = vmatprep.subr.bf16.mxu0 0
      %1115 = vmatpush2.bf16.msra.mxu0 0
      %1116 = vmatprep.subr.bf16.mxu0 0
      %1117 = vmatpush2.bf16.msra.mxu0 0
      %1118 = vmatprep.mubr.bf16.mxu0 0
      %1119 = vmatmul.mubr.bf16.gmra.mxu0 %v1081
      %v1120 = vpop.f32.mrf.mxu0
      %v1121 = vadd.f32 0.0, %v1120
      %v1122 = vpop.f32.mrf.mxu0
      %v1123 = vpop.f32.mrf.mxu0
      %v1124 = vadd.f32 0.0, %v1123
      %v1125 = vpop.f32.mrf.mxu0
      %1126 = vdwg.mxu0
      %v1127 = vpack.c.bf16 %v1124, %v1121
      %v1129 = vunpack.c.l.b16 %v1127
      %v1130 = vunpack.c.h.b16 %v1127
      %v1131 = vpack.c.b16 %v1129, %v1129
      %v1132 = vpack.c.b16 %v1130, %v1130
      %1133 = vrot.lane.b32.xlu0 %v1131, 16
      %v1134 = vpop.permute.xlu0 %1133
      %1135 = vrot.lane.b32.xlu0 %v1132, 16
      %v1136 = vpop.permute.xlu0 %1135
      %vm1139 = vcmask 191616
      %1140 = vst.msk [vmem:[%s492] sm:$0xf] %vm1139, %v1134
      %1141 = vst.msk [vmem:[%s492 + $0x4] sm:$0xf] %vm1139, %v1136
      %1142 = vrot.lane.b32.xlu0 %v725, 110
      %v1143 = vpop.permute.xlu0 %1142
      %1144 = vrot.lane.b32.xlu0 %v648, 110
      %v1145 = vpop.permute.xlu0 %1144
      %v1147 = vsel %vm732, %v1143, 0
      %v1150 = vsel %vm732, %v1145, 0
      %1152 = vmatprep.subr.bf16.mxu0 0
      %1153 = vmatpush1.bf16.xpose.msra.mxu0 0
      %1154 = vmatprep.subr.bf16.mxu0 0
      %1155 = vmatpush1.bf16.xpose.msra.mxu0 0
      %1156 = vmatprep.subr.bf16.mxu0 0
      %1157 = vmatpush1.bf16.xpose.msra.mxu0 0
      %1158 = vmatprep.subr.bf16.mxu0 0
      %1159 = vmatpush1.bf16.xpose.msra.mxu0 0
      %1160 = vmatprep.subr.bf16.mxu0 0
      %1161 = vmatpush1.bf16.xpose.msra.mxu0 0
      %1162 = vmatprep.subr.bf16.mxu0 0
      %1163 = vmatpush1.bf16.xpose.msra.mxu0 0
      %1164 = vmatprep.subr.bf16.mxu0 0
      %1165 = vmatpush1.bf16.xpose.msra.mxu0 0
      %1166 = vmatprep.subr.bf16.mxu0 0
      %1167 = vmatpush1.bf16.xpose.msra.mxu0 %v1150
      %1168 = vmatprep.subr.bf16.mxu0 0
      %1169 = vmatpush2.bf16.xpose.msra.mxu0 0
      %1170 = vmatprep.subr.bf16.mxu0 0
      %1171 = vmatpush2.bf16.xpose.msra.mxu0 0
      %1172 = vmatprep.subr.bf16.mxu0 0
      %1173 = vmatpush2.bf16.xpose.msra.mxu0 0
      %1174 = vmatprep.subr.bf16.mxu0 0
      %1175 = vmatpush2.bf16.xpose.msra.mxu0 0
      %1176 = vmatprep.subr.bf16.mxu0 0
      %1177 = vmatpush2.bf16.xpose.msra.mxu0 0
      %1178 = vmatprep.subr.bf16.mxu0 0
      %1179 = vmatpush2.bf16.xpose.msra.mxu0 0
      %1180 = vmatprep.subr.bf16.mxu0 0
      %1181 = vmatpush2.bf16.xpose.msra.mxu0 0
      %1182 = vmatprep.subr.bf16.mxu0 0
      %1183 = vmatpush2.bf16.xpose.msra.mxu0 0
      %1184 = vmatprep.mubr.bf16.mxu0 0
      %1185 = vmatmul.mubr.bf16.gmra.mxu0 %v1147
      %v1186 = vpop.f32.mrf.mxu0
      %v1187 = vadd.f32 %v730, %v1186
      %v1188 = vpop.f32.mrf.mxu0
      %v1189 = vpop.f32.mrf.mxu0
      %v1190 = vadd.f32 %v730, %v1189
      %v1191 = vpop.f32.mrf.mxu0
      %1192 = vdwg.mxu0
      %v1193 = vsel %vm780, %v1187, -inf
      %1194 = vmax.xlane.f32.xlu0 %v1193
      %v1195 = vpop.xlane.xlu0 %1194
      %v1196 = vsel %vm780, %v1190, -inf
      %1197 = vmax.xlane.f32.xlu0 %v1196
      %v1198 = vpop.xlane.xlu0 %1197
      %v1199 = vsub.f32 %v1187, %v1195
      %v1200 = vsub.f32 %v1190, %v1198
      %v1201 = vmul.f32 %v1199, 1.442695
      %v1202 = vpow.pop %v1201
      %v1203 = vmul.f32 %v1200, 1.442695
      %v1204 = vpow.pop %v1203
      %v1205 = vsel %vm780, %v1202, 0.0
      %1206 = vadd.xlane.f32.xlu0 %v1205
      %v1207 = vpop.xlane.xlu0 %1206
      %v1208 = vsel %vm780, %v1204, 0.0
      %1209 = vadd.xlane.f32.xlu0 %v1208
      %v1210 = vpop.xlane.xlu0 %1209
      %v1211 = vrcp.pop %v1207
      %v1212 = vmul.f32 %v1202, %v1211
      %v1213 = vrcp.pop %v1210
      %v1214 = vmul.f32 %v1204, %v1213
      %v1215 = vpack.c.bf16 %v1214, %v1212
      %1216 = vrot.lane.b32.xlu0 %v647, 104
      %v1217 = vpop.permute.xlu0 %1216
      %v1219 = vsel %vm780, %v1215, 0
      %v1222 = vsel %vm807, %v1217, 0
      %1224 = vmatprep.subr.bf16.mxu0 0
      %1225 = vmatpush1.bf16.msra.mxu0 0
      %1226 = vmatprep.subr.bf16.mxu0 0
      %1227 = vmatpush1.bf16.msra.mxu0 0
      %1228 = vmatprep.subr.bf16.mxu0 0
      %1229 = vmatpush1.bf16.msra.mxu0 0
      %1230 = vmatprep.subr.bf16.mxu0 0
      %1231 = vmatpush1.bf16.msra.mxu0 0
      %1232 = vmatprep.subr.bf16.mxu0 0
      %1233 = vmatpush1.bf16.msra.mxu0 0
      %1234 = vmatprep.subr.bf16.mxu0 0
      %1235 = vmatpush1.bf16.msra.mxu0 0
      %1236 = vmatprep.subr.bf16.mxu0 0
      %1237 = vmatpush1.bf16.msra.mxu0 0
      %1238 = vmatprep.subr.bf16.mxu0 0
      %1239 = vmatpush1.bf16.msra.mxu0 %v1222
      %1240 = vmatprep.subr.bf16.mxu0 0
      %1241 = vmatpush2.bf16.msra.mxu0 0
      %1242 = vmatprep.subr.bf16.mxu0 0
      %1243 = vmatpush2.bf16.msra.mxu0 0
      %1244 = vmatprep.subr.bf16.mxu0 0
      %1245 = vmatpush2.bf16.msra.mxu0 0
      %1246 = vmatprep.subr.bf16.mxu0 0
      %1247 = vmatpush2.bf16.msra.mxu0 0
      %1248 = vmatprep.subr.bf16.mxu0 0
      %1249 = vmatpush2.bf16.msra.mxu0 0
      %1250 = vmatprep.subr.bf16.mxu0 0
      %1251 = vmatpush2.bf16.msra.mxu0 0
      %1252 = vmatprep.subr.bf16.mxu0 0
      %1253 = vmatpush2.bf16.msra.mxu0 0
      %1254 = vmatprep.subr.bf16.mxu0 0
      %1255 = vmatpush2.bf16.msra.mxu0 0
      %1256 = vmatprep.mubr.bf16.mxu0 0
      %1257 = vmatmul.mubr.bf16.gmra.mxu0 %v1219
      %v1258 = vpop.f32.mrf.mxu0
      %v1259 = vadd.f32 0.0, %v1258
      %v1260 = vpop.f32.mrf.mxu0
      %v1261 = vpop.f32.mrf.mxu0
      %v1262 = vadd.f32 0.0, %v1261
      %v1263 = vpop.f32.mrf.mxu0
      %1264 = vdwg.mxu0
      %v1265 = vpack.c.bf16 %v1262, %v1259
      %v1267 = vunpack.c.l.b16 %v1265
      %v1268 = vunpack.c.h.b16 %v1265
      %v1269 = vpack.c.b16 %v1267, %v1267
      %v1270 = vpack.c.b16 %v1268, %v1268
      %1271 = vrot.lane.b32.xlu0 %v1269, 24
      %v1272 = vpop.permute.xlu0 %1271
      %1273 = vrot.lane.b32.xlu0 %v1270, 24
      %v1274 = vpop.permute.xlu0 %1273
      %vm1277 = vcmask 257216
      %1278 = vst.msk [vmem:[%s492] sm:$0xf] %vm1277, %v1272
      %1279 = vst.msk [vmem:[%s492 + $0x4] sm:$0xf] %vm1277, %v1274
      %v1280 = vld [vmem:[%s492] sm:$0xf]
      %v1281 = vld [vmem:[%s492 + $0x4] sm:$0xf]
      %v1282 = vld [vmem:[%s7] sm:$0xff]
      %v1283 = vld [vmem:[%s7 + $0x8] sm:$0xf]
      %v1284 = vld [vmem:[%s7 + $0xc] sm:$0xff]
      %v1285 = vld [vmem:[%s7 + $0x14] sm:$0xf]
      %v1286 = vld [vmem:[%s7 + $0x18] sm:$0xff]
      %v1287 = vld [vmem:[%s7 + $0x20] sm:$0xf]
      %v1288 = vld [vmem:[%s7 + $0x24] sm:$0xff]
      %v1289 = vld [vmem:[%s7 + $0x2c] sm:$0xf]
      %v1290 = vld [vmem:[%s8] sm:$0x7]
      %v1292 = vlaneseq
      %v1293 = vshrl.u32 %v1292, 7
      %v1294 = vsub.s32 0, %v1293
      %v1295 = vrot.slane %v1290, %v1294
      %v1296 = vlaneseq
      %v1297 = vshrl.u32 %v1296, 7
      %v1298 = vsub.s32 1, %v1297
      %v1299 = vrot.slane %v1290, %v1298
      %v1300 = vlaneseq
      %v1301 = vshrl.u32 %v1300, 7
      %v1302 = vsub.s32 2, %v1301
      %v1303 = vrot.slane %v1290, %v1302
      %v1309 = vunpack.c.l.b16 %v1280
      %v1310 = vunpack.c.l.b16 %v1281
      %v1311 = vpack.c.b16 %v1310, %v1309
      %v1320 = vunpack.c.l.b16 %v1282
      %v1321 = vunpack.c.h.b16 %v1282
      %v1322 = vunpack.c.l.b16 %v1283
      %v1323 = vunpack.c.l.b16 %v1284
      %v1324 = vunpack.c.h.b16 %v1284
      %v1325 = vunpack.c.l.b16 %v1285
      %v1326 = vunpack.c.l.b16 %v1286
      %v1327 = vunpack.c.h.b16 %v1286
      %v1328 = vunpack.c.l.b16 %v1287
      %v1329 = vunpack.c.l.b16 %v1288
      %v1330 = vunpack.c.h.b16 %v1288
      %v1331 = vunpack.c.l.b16 %v1289
      %v1332 = vpack.c.b16 %v1323, %v1320
      %v1333 = vpack.c.b16 %v1324, %v1321
      %v1334 = vpack.c.b16 %v1325, %v1322
      %v1335 = vpack.c.b16 %v1329, %v1326
      %v1336 = vpack.c.b16 %v1330, %v1327
      %v1337 = vpack.c.b16 %v1331, %v1328
      %v1345 = vsel %vm562, %v1311, 0
      %1347 = vmatprep.subr.bf16.mxu0 0
      %1348 = vmatpush1.bf16.msra.mxu0 0
      %1349 = vmatprep.subr.bf16.mxu0 0
      %1350 = vmatpush1.bf16.msra.mxu0 0
      %1351 = vmatprep.subr.bf16.mxu0 0
      %1352 = vmatpush1.bf16.msra.mxu0 0
      %1353 = vmatprep.subr.bf16.mxu0 0
      %1354 = vmatpush1.bf16.msra.mxu0 0
      %1355 = vmatprep.subr.bf16.mxu0 0
      %1356 = vmatpush1.bf16.msra.mxu0 0
      %1357 = vmatprep.subr.bf16.mxu0 0
      %1358 = vmatpush1.bf16.msra.mxu0 0
      %1359 = vmatprep.subr.bf16.mxu0 %v1336
      %1360 = vmatpush1.bf16.msra.mxu0 %v1335
      %1361 = vmatprep.subr.bf16.mxu0 %v1333
      %1362 = vmatpush1.bf16.msra.mxu0 %v1332
      %1363 = vmatprep.subr.bf16.mxu0 0
      %1364 = vmatpush2.bf16.msra.mxu0 0
      %1365 = vmatprep.subr.bf16.mxu0 0
      %1366 = vmatpush2.bf16.msra.mxu0 0
      %1367 = vmatprep.subr.bf16.mxu0 0
      %1368 = vmatpush2.bf16.msra.mxu0 0
      %1369 = vmatprep.subr.bf16.mxu0 0
      %1370 = vmatpush2.bf16.msra.mxu0 0
      %1371 = vmatprep.subr.bf16.mxu0 0
      %1372 = vmatpush2.bf16.msra.mxu0 0
      %1373 = vmatprep.subr.bf16.mxu0 0
      %1374 = vmatpush2.bf16.msra.mxu0 0
      %1375 = vmatprep.subr.bf16.mxu0 0
      %1376 = vmatpush2.bf16.msra.mxu0 0
      %1377 = vmatprep.subr.bf16.mxu0 0
      %1378 = vmatpush2.bf16.msra.mxu0 0
      %1379 = vmatprep.mubr.bf16.mxu0 0
      %1380 = vmatmul.mubr.bf16.gmra.mxu0 %v1345
      %v1381 = vpop.f32.mrf.mxu0
      %v1382 = vadd.f32 %v1295, %v1381
      %v1383 = vpop.f32.mrf.mxu0
      %v1384 = vadd.f32 %v1299, %v1383
      %v1385 = vpop.f32.mrf.mxu0
      %v1386 = vadd.f32 %v1295, %v1385
      %v1387 = vpop.f32.mrf.mxu0
      %v1388 = vadd.f32 %v1299, %v1387
      %1389 = vdwg.mxu0
      %1390 = vmatprep.subr.bf16.mxu0 0
      %1391 = vmatpush1.bf16.msra.mxu0 0
      %1392 = vmatprep.subr.bf16.mxu0 0
      %1393 = vmatpush1.bf16.msra.mxu0 0
      %1394 = vmatprep.subr.bf16.mxu0 0
      %1395 = vmatpush1.bf16.msra.mxu0 0
      %1396 = vmatprep.subr.bf16.mxu0 0
      %1397 = vmatpush1.bf16.msra.mxu0 0
      %1398 = vmatprep.subr.bf16.mxu0 0
      %1399 = vmatpush1.bf16.msra.mxu0 0
      %1400 = vmatprep.subr.bf16.mxu0 0
      %1401 = vmatpush1.bf16.msra.mxu0 0
      %1402 = vmatprep.subr.bf16.mxu0 0
      %1403 = vmatpush1.bf16.msra.mxu0 %v1337
      %1404 = vmatprep.subr.bf16.mxu0 0
      %1405 = vmatpush1.bf16.msra.mxu0 %v1334
      %1406 = vmatprep.subr.bf16.mxu0 0
      %1407 = vmatpush2.bf16.msra.mxu0 0
      %1408 = vmatprep.subr.bf16.mxu0 0
      %1409 = vmatpush2.bf16.msra.mxu0 0
      %1410 = vmatprep.subr.bf16.mxu0 0
      %1411 = vmatpush2.bf16.msra.mxu0 0
      %1412 = vmatprep.subr.bf16.mxu0 0
      %1413 = vmatpush2.bf16.msra.mxu0 0
      %1414 = vmatprep.subr.bf16.mxu0 0
      %1415 = vmatpush2.bf16.msra.mxu0 0
      %1416 = vmatprep.subr.bf16.mxu0 0
      %1417 = vmatpush2.bf16.msra.mxu0 0
      %1418 = vmatprep.subr.bf16.mxu0 0
      %1419 = vmatpush2.bf16.msra.mxu0 0
      %1420 = vmatprep.subr.bf16.mxu0 0
      %1421 = vmatpush2.bf16.msra.mxu0 0
      %1422 = vmatprep.mubr.bf16.mxu0 0
      %1423 = vmatmul.mubr.bf16.gmra.mxu0 %v1345
      %v1424 = vpop.f32.mrf.mxu0
      %v1425 = vadd.f32 %v1303, %v1424
      %v1426 = vpop.f32.mrf.mxu0
      %v1427 = vpop.f32.mrf.mxu0
      %v1428 = vadd.f32 %v1303, %v1427
      %v1429 = vpop.f32.mrf.mxu0
      %1430 = vdwg.mxu0
      %v1431 = vpack.c.bf16 %v1386, %v1382
      %v1432 = vmul.f32 %v1384, 0.4082483
      %v1433 = vmul.f32 %v1388, 0.4082483
      %v1434 = vpack.c.bf16 %v1433, %v1432
      %v1435 = vpack.c.bf16 %v1428, %v1425
      %v1437 = vsel %vm732, %v1434, 0
      %v1440 = vsel %vm732, %v1435, 0
      %1442 = vmatprep.subr.bf16.mxu0 0
      %1443 = vmatpush1.bf16.xpose.msra.mxu0 0
      %1444 = vmatprep.subr.bf16.mxu0 0
      %1445 = vmatpush1.bf16.xpose.msra.mxu0 0
      %1446 = vmatprep.subr.bf16.mxu0 0
      %1447 = vmatpush1.bf16.xpose.msra.mxu0 0
      %1448 = vmatprep.subr.bf16.mxu0 0
      %1449 = vmatpush1.bf16.xpose.msra.mxu0 0
      %1450 = vmatprep.subr.bf16.mxu0 0
      %1451 = vmatpush1.bf16.xpose.msra.mxu0 0
      %1452 = vmatprep.subr.bf16.mxu0 0
      %1453 = vmatpush1.bf16.xpose.msra.mxu0 0
      %1454 = vmatprep.subr.bf16.mxu0 0
      %1455 = vmatpush1.bf16.xpose.msra.mxu0 0
      %1456 = vmatprep.subr.bf16.mxu0 0
      %1457 = vmatpush1.bf16.xpose.msra.mxu0 %v1440
      %1458 = vmatprep.subr.bf16.mxu0 0
      %1459 = vmatpush2.bf16.xpose.msra.mxu0 0
      %1460 = vmatprep.subr.bf16.mxu0 0
      %1461 = vmatpush2.bf16.xpose.msra.mxu0 0
      %1462 = vmatprep.subr.bf16.mxu0 0
      %1463 = vmatpush2.bf16.xpose.msra.mxu0 0
      %1464 = vmatprep.subr.bf16.mxu0 0
      %1465 = vmatpush2.bf16.xpose.msra.mxu0 0
      %1466 = vmatprep.subr.bf16.mxu0 0
      %1467 = vmatpush2.bf16.xpose.msra.mxu0 0
      %1468 = vmatprep.subr.bf16.mxu0 0
      %1469 = vmatpush2.bf16.xpose.msra.mxu0 0
      %1470 = vmatprep.subr.bf16.mxu0 0
      %1471 = vmatpush2.bf16.xpose.msra.mxu0 0
      %1472 = vmatprep.subr.bf16.mxu0 0
      %1473 = vmatpush2.bf16.xpose.msra.mxu0 0
      %1474 = vmatprep.mubr.bf16.mxu0 0
      %1475 = vmatmul.mubr.bf16.gmra.mxu0 %v1437
      %v1476 = vpop.f32.mrf.mxu0
      %v1477 = vadd.f32 0.0, %v1476
      %v1478 = vpop.f32.mrf.mxu0
      %v1479 = vpop.f32.mrf.mxu0
      %v1480 = vadd.f32 0.0, %v1479
      %v1481 = vpop.f32.mrf.mxu0
      %1482 = vdwg.mxu0
      %vm1483 = vcmask 130048
      %v1484 = vsel %vm1483, %v1477, -inf
      %1485 = vmax.xlane.f32.xlu0 %v1484
      %v1486 = vpop.xlane.xlu0 %1485
      %v1487 = vsel %vm1483, %v1480, -inf
      %1488 = vmax.xlane.f32.xlu0 %v1487
      %v1489 = vpop.xlane.xlu0 %1488
      %v1490 = vsub.f32 %v1477, %v1486
      %v1491 = vsub.f32 %v1480, %v1489
      %v1492 = vmul.f32 %v1490, 1.442695
      %v1493 = vpow.pop %v1492
      %v1494 = vmul.f32 %v1491, 1.442695
      %v1495 = vpow.pop %v1494
      %v1496 = vsel %vm1483, %v1493, 0.0
      %1497 = vadd.xlane.f32.xlu0 %v1496
      %v1498 = vpop.xlane.xlu0 %1497
      %v1499 = vsel %vm1483, %v1495, 0.0
      %1500 = vadd.xlane.f32.xlu0 %v1499
      %v1501 = vpop.xlane.xlu0 %1500
      %v1502 = vrcp.pop %v1498
      %v1503 = vmul.f32 %v1493, %v1502
      %v1504 = vrcp.pop %v1501
      %v1505 = vmul.f32 %v1495, %v1504
      %v1506 = vpack.c.bf16 %v1505, %v1503
      %v1508 = vsel %vm1483, %v1506, 0
      %1510 = vmatprep.subr.bf16.mxu0 0
      %1511 = vmatpush1.bf16.msra.mxu0 0
      %1512 = vmatprep.subr.bf16.mxu0 0
      %1513 = vmatpush1.bf16.msra.mxu0 0
      %1514 = vmatprep.subr.bf16.mxu0 0
      %1515 = vmatpush1.bf16.msra.mxu0 0
      %1516 = vmatprep.subr.bf16.mxu0 0
      %1517 = vmatpush1.bf16.msra.mxu0 0
      %1518 = vmatprep.subr.bf16.mxu0 0
      %1519 = vmatpush1.bf16.msra.mxu0 0
      %1520 = vmatprep.subr.bf16.mxu0 0
      %1521 = vmatpush1.bf16.msra.mxu0 0
      %1522 = vmatprep.subr.bf16.mxu0 0
      %1523 = vmatpush1.bf16.msra.mxu0 0
      %1524 = vmatprep.subr.bf16.mxu0 0
      %1525 = vmatpush1.bf16.msra.mxu0 %v1431
      %1526 = vmatprep.subr.bf16.mxu0 0
      %1527 = vmatpush2.bf16.msra.mxu0 0
      %1528 = vmatprep.subr.bf16.mxu0 0
      %1529 = vmatpush2.bf16.msra.mxu0 0
      %1530 = vmatprep.subr.bf16.mxu0 0
      %1531 = vmatpush2.bf16.msra.mxu0 0
      %1532 = vmatprep.subr.bf16.mxu0 0
      %1533 = vmatpush2.bf16.msra.mxu0 0
      %1534 = vmatprep.subr.bf16.mxu0 0
      %1535 = vmatpush2.bf16.msra.mxu0 0
      %1536 = vmatprep.subr.bf16.mxu0 0
      %1537 = vmatpush2.bf16.msra.mxu0 0
      %1538 = vmatprep.subr.bf16.mxu0 0
      %1539 = vmatpush2.bf16.msra.mxu0 0
      %1540 = vmatprep.subr.bf16.mxu0 0
      %1541 = vmatpush2.bf16.msra.mxu0 0
      %1542 = vmatprep.mubr.bf16.mxu0 0
      %1543 = vmatmul.mubr.bf16.gmra.mxu0 %v1508
      %v1544 = vpop.f32.mrf.mxu0
      %v1545 = vadd.f32 0.0, %v1544
      %v1546 = vpop.f32.mrf.mxu0
      %v1547 = vpop.f32.mrf.mxu0
      %v1548 = vadd.f32 0.0, %v1547
      %v1549 = vpop.f32.mrf.mxu0
      %1550 = vdwg.mxu0
      %1551 = vst.msk [vmem:[#allocation2] sm:$0xff] %vm780, %v1545
      %1552 = vst.msk [vmem:[#allocation2 + $0x8] sm:$0xff] %vm780, %v1548
      %1554 = vrot.lane.b32.xlu0 %v1434, 122
      %v1555 = vpop.permute.xlu0 %1554
      %1557 = vrot.lane.b32.xlu0 %v1435, 122
      %v1558 = vpop.permute.xlu0 %1557
      %v1560 = vsel %vm732, %v1555, 0
      %v1563 = vsel %vm732, %v1558, 0
      %1565 = vmatprep.subr.bf16.mxu0 0
      %1566 = vmatpush1.bf16.xpose.msra.mxu0 0
      %1567 = vmatprep.subr.bf16.mxu0 0
      %1568 = vmatpush1.bf16.xpose.msra.mxu0 0
      %1569 = vmatprep.subr.bf16.mxu0 0
      %1570 = vmatpush1.bf16.xpose.msra.mxu0 0
      %1571 = vmatprep.subr.bf16.mxu0 0
      %1572 = vmatpush1.bf16.xpose.msra.mxu0 0
      %1573 = vmatprep.subr.bf16.mxu0 0
      %1574 = vmatpush1.bf16.xpose.msra.mxu0 0
      %1575 = vmatprep.subr.bf16.mxu0 0
      %1576 = vmatpush1.bf16.xpose.msra.mxu0 0
      %1577 = vmatprep.subr.bf16.mxu0 0
      %1578 = vmatpush1.bf16.xpose.msra.mxu0 0
      %1579 = vmatprep.subr.bf16.mxu0 0
      %1580 = vmatpush1.bf16.xpose.msra.mxu0 %v1563
      %1581 = vmatprep.subr.bf16.mxu0 0
      %1582 = vmatpush2.bf16.xpose.msra.mxu0 0
      %1583 = vmatprep.subr.bf16.mxu0 0
      %1584 = vmatpush2.bf16.xpose.msra.mxu0 0
      %1585 = vmatprep.subr.bf16.mxu0 0
      %1586 = vmatpush2.bf16.xpose.msra.mxu0 0
      %1587 = vmatprep.subr.bf16.mxu0 0
      %1588 = vmatpush2.bf16.xpose.msra.mxu0 0
      %1589 = vmatprep.subr.bf16.mxu0 0
      %1590 = vmatpush2.bf16.xpose.msra.mxu0 0
      %1591 = vmatprep.subr.bf16.mxu0 0
      %1592 = vmatpush2.bf16.xpose.msra.mxu0 0
      %1593 = vmatprep.subr.bf16.mxu0 0
      %1594 = vmatpush2.bf16.xpose.msra.mxu0 0
      %1595 = vmatprep.subr.bf16.mxu0 0
      %1596 = vmatpush2.bf16.xpose.msra.mxu0 0
      %1597 = vmatprep.mubr.bf16.mxu0 0
      %1598 = vmatmul.mubr.bf16.gmra.mxu0 %v1560
      %v1599 = vpop.f32.mrf.mxu0
      %v1600 = vadd.f32 0.0, %v1599
      %v1601 = vpop.f32.mrf.mxu0
      %v1602 = vpop.f32.mrf.mxu0
      %v1603 = vadd.f32 0.0, %v1602
      %v1604 = vpop.f32.mrf.mxu0
      %1605 = vdwg.mxu0
      %v1606 = vsel %vm1483, %v1600, -inf
      %1607 = vmax.xlane.f32.xlu0 %v1606
      %v1608 = vpop.xlane.xlu0 %1607
      %v1609 = vsel %vm1483, %v1603, -inf
      %1610 = vmax.xlane.f32.xlu0 %v1609
      %v1611 = vpop.xlane.xlu0 %1610
      %v1612 = vsub.f32 %v1600, %v1608
      %v1613 = vsub.f32 %v1603, %v1611
      %v1614 = vmul.f32 %v1612, 1.442695
      %v1615 = vpow.pop %v1614
      %v1616 = vmul.f32 %v1613, 1.442695
      %v1617 = vpow.pop %v1616
      %v1618 = vsel %vm1483, %v1615, 0.0
      %1619 = vadd.xlane.f32.xlu0 %v1618
      %v1620 = vpop.xlane.xlu0 %1619
      %v1621 = vsel %vm1483, %v1617, 0.0
      %1622 = vadd.xlane.f32.xlu0 %v1621
      %v1623 = vpop.xlane.xlu0 %1622
      %v1624 = vrcp.pop %v1620
      %v1625 = vmul.f32 %v1615, %v1624
      %v1626 = vrcp.pop %v1623
      %v1627 = vmul.f32 %v1617, %v1626
      %v1628 = vpack.c.bf16 %v1627, %v1625
      %1630 = vrot.lane.b32.xlu0 %v1431, 120
      %v1631 = vpop.permute.xlu0 %1630
      %v1634 = vsel %vm1483, %v1628, 0
      %1636 = vmatprep.subr.bf16.mxu0 0
      %1637 = vmatpush1.bf16.msra.mxu0 0
      %1638 = vmatprep.subr.bf16.mxu0 0
      %1639 = vmatpush1.bf16.msra.mxu0 0
      %1640 = vmatprep.subr.bf16.mxu0 0
      %1641 = vmatpush1.bf16.msra.mxu0 0
      %1642 = vmatprep.subr.bf16.mxu0 0
      %1643 = vmatpush1.bf16.msra.mxu0 0
      %1644 = vmatprep.subr.bf16.mxu0 0
      %1645 = vmatpush1.bf16.msra.mxu0 0
      %1646 = vmatprep.subr.bf16.mxu0 0
      %1647 = vmatpush1.bf16.msra.mxu0 0
      %1648 = vmatprep.subr.bf16.mxu0 0
      %1649 = vmatpush1.bf16.msra.mxu0 0
      %1650 = vmatprep.subr.bf16.mxu0 0
      %1651 = vmatpush1.bf16.msra.mxu0 %v1631
      %1652 = vmatprep.subr.bf16.mxu0 0
      %1653 = vmatpush2.bf16.msra.mxu0 0
      %1654 = vmatprep.subr.bf16.mxu0 0
      %1655 = vmatpush2.bf16.msra.mxu0 0
      %1656 = vmatprep.subr.bf16.mxu0 0
      %1657 = vmatpush2.bf16.msra.mxu0 0
      %1658 = vmatprep.subr.bf16.mxu0 0
      %1659 = vmatpush2.bf16.msra.mxu0 0
      %1660 = vmatprep.subr.bf16.mxu0 0
      %1661 = vmatpush2.bf16.msra.mxu0 0
      %1662 = vmatprep.subr.bf16.mxu0 0
      %1663 = vmatpush2.bf16.msra.mxu0 0
      %1664 = vmatprep.subr.bf16.mxu0 0
      %1665 = vmatpush2.bf16.msra.mxu0 0
      %1666 = vmatprep.subr.bf16.mxu0 0
      %1667 = vmatpush2.bf16.msra.mxu0 0
      %1668 = vmatprep.mubr.bf16.mxu0 0
      %1669 = vmatmul.mubr.bf16.gmra.mxu0 %v1634
      %v1670 = vpop.f32.mrf.mxu0
      %v1671 = vadd.f32 0.0, %v1670
      %v1672 = vpop.f32.mrf.mxu0
      %v1673 = vpop.f32.mrf.mxu0
      %v1674 = vadd.f32 0.0, %v1673
      %v1675 = vpop.f32.mrf.mxu0
      %1676 = vdwg.mxu0
      %1679 = vrot.lane.b32.xlu0 %v1671, 8
      %v1680 = vpop.permute.xlu0 %1679
      %1681 = vrot.lane.b32.xlu0 %v1674, 8
      %v1682 = vpop.permute.xlu0 %1681
      %vm1685 = vcmask 130112
      %1686 = vst.msk [vmem:[#allocation2] sm:$0xff] %vm1685, %v1680
      %1687 = vst.msk [vmem:[#allocation2 + $0x8] sm:$0xff] %vm1685, %v1682
      %1688 = vrot.lane.b32.xlu0 %v1434, 116
      %v1689 = vpop.permute.xlu0 %1688
      %1690 = vrot.lane.b32.xlu0 %v1435, 116
      %v1691 = vpop.permute.xlu0 %1690
      %v1693 = vsel %vm732, %v1689, 0
      %v1696 = vsel %vm732, %v1691, 0
      %1698 = vmatprep.subr.bf16.mxu0 0
      %1699 = vmatpush1.bf16.xpose.msra.mxu0 0
      %1700 = vmatprep.subr.bf16.mxu0 0
      %1701 = vmatpush1.bf16.xpose.msra.mxu0 0
      %1702 = vmatprep.subr.bf16.mxu0 0
      %1703 = vmatpush1.bf16.xpose.msra.mxu0 0
      %1704 = vmatprep.subr.bf16.mxu0 0
      %1705 = vmatpush1.bf16.xpose.msra.mxu0 0
      %1706 = vmatprep.subr.bf16.mxu0 0
      %1707 = vmatpush1.bf16.xpose.msra.mxu0 0
      %1708 = vmatprep.subr.bf16.mxu0 0
      %1709 = vmatpush1.bf16.xpose.msra.mxu0 0
      %1710 = vmatprep.subr.bf16.mxu0 0
      %1711 = vmatpush1.bf16.xpose.msra.mxu0 0
      %1712 = vmatprep.subr.bf16.mxu0 0
      %1713 = vmatpush1.bf16.xpose.msra.mxu0 %v1696
      %1714 = vmatprep.subr.bf16.mxu0 0
      %1715 = vmatpush2.bf16.xpose.msra.mxu0 0
      %1716 = vmatprep.subr.bf16.mxu0 0
      %1717 = vmatpush2.bf16.xpose.msra.mxu0 0
      %1718 = vmatprep.subr.bf16.mxu0 0
      %1719 = vmatpush2.bf16.xpose.msra.mxu0 0
      %1720 = vmatprep.subr.bf16.mxu0 0
      %1721 = vmatpush2.bf16.xpose.msra.mxu0 0
      %1722 = vmatprep.subr.bf16.mxu0 0
      %1723 = vmatpush2.bf16.xpose.msra.mxu0 0
      %1724 = vmatprep.subr.bf16.mxu0 0
      %1725 = vmatpush2.bf16.xpose.msra.mxu0 0
      %1726 = vmatprep.subr.bf16.mxu0 0
      %1727 = vmatpush2.bf16.xpose.msra.mxu0 0
      %1728 = vmatprep.subr.bf16.mxu0 0
      %1729 = vmatpush2.bf16.xpose.msra.mxu0 0
      %1730 = vmatprep.mubr.bf16.mxu0 0
      %1731 = vmatmul.mubr.bf16.gmra.mxu0 %v1693
      %v1732 = vpop.f32.mrf.mxu0
      %v1733 = vadd.f32 0.0, %v1732
      %v1734 = vpop.f32.mrf.mxu0
      %v1735 = vpop.f32.mrf.mxu0
      %v1736 = vadd.f32 0.0, %v1735
      %v1737 = vpop.f32.mrf.mxu0
      %1738 = vdwg.mxu0
      %v1739 = vsel %vm1483, %v1733, -inf
      %1740 = vmax.xlane.f32.xlu0 %v1739
      %v1741 = vpop.xlane.xlu0 %1740
      %v1742 = vsel %vm1483, %v1736, -inf
      %1743 = vmax.xlane.f32.xlu0 %v1742
      %v1744 = vpop.xlane.xlu0 %1743
      %v1745 = vsub.f32 %v1733, %v1741
      %v1746 = vsub.f32 %v1736, %v1744
      %v1747 = vmul.f32 %v1745, 1.442695
      %v1748 = vpow.pop %v1747
      %v1749 = vmul.f32 %v1746, 1.442695
      %v1750 = vpow.pop %v1749
      %v1751 = vsel %vm1483, %v1748, 0.0
      %1752 = vadd.xlane.f32.xlu0 %v1751
      %v1753 = vpop.xlane.xlu0 %1752
      %v1754 = vsel %vm1483, %v1750, 0.0
      %1755 = vadd.xlane.f32.xlu0 %v1754
      %v1756 = vpop.xlane.xlu0 %1755
      %v1757 = vrcp.pop %v1753
      %v1758 = vmul.f32 %v1748, %v1757
      %v1759 = vrcp.pop %v1756
      %v1760 = vmul.f32 %v1750, %v1759
      %v1761 = vpack.c.bf16 %v1760, %v1758
      %1762 = vrot.lane.b32.xlu0 %v1431, 112
      %v1763 = vpop.permute.xlu0 %1762
      %v1766 = vsel %vm1483, %v1761, 0
      %1768 = vmatprep.subr.bf16.mxu0 0
      %1769 = vmatpush1.bf16.msra.mxu0 0
      %1770 = vmatprep.subr.bf16.mxu0 0
      %1771 = vmatpush1.bf16.msra.mxu0 0
      %1772 = vmatprep.subr.bf16.mxu0 0
      %1773 = vmatpush1.bf16.msra.mxu0 0
      %1774 = vmatprep.subr.bf16.mxu0 0
      %1775 = vmatpush1.bf16.msra.mxu0 0
      %1776 = vmatprep.subr.bf16.mxu0 0
      %1777 = vmatpush1.bf16.msra.mxu0 0
      %1778 = vmatprep.subr.bf16.mxu0 0
      %1779 = vmatpush1.bf16.msra.mxu0 0
      %1780 = vmatprep.subr.bf16.mxu0 0
      %1781 = vmatpush1.bf16.msra.mxu0 0
      %1782 = vmatprep.subr.bf16.mxu0 0
      %1783 = vmatpush1.bf16.msra.mxu0 %v1763
      %1784 = vmatprep.subr.bf16.mxu0 0
      %1785 = vmatpush2.bf16.msra.mxu0 0
      %1786 = vmatprep.subr.bf16.mxu0 0
      %1787 = vmatpush2.bf16.msra.mxu0 0
      %1788 = vmatprep.subr.bf16.mxu0 0
      %1789 = vmatpush2.bf16.msra.mxu0 0
      %1790 = vmatprep.subr.bf16.mxu0 0
      %1791 = vmatpush2.bf16.msra.mxu0 0
      %1792 = vmatprep.subr.bf16.mxu0 0
      %1793 = vmatpush2.bf16.msra.mxu0 0
      %1794 = vmatprep.subr.bf16.mxu0 0
      %1795 = vmatpush2.bf16.msra.mxu0 0
      %1796 = vmatprep.subr.bf16.mxu0 0
      %1797 = vmatpush2.bf16.msra.mxu0 0
      %1798 = vmatprep.subr.bf16.mxu0 0
      %1799 = vmatpush2.bf16.msra.mxu0 0
      %1800 = vmatprep.mubr.bf16.mxu0 0
      %1801 = vmatmul.mubr.bf16.gmra.mxu0 %v1766
      %v1802 = vpop.f32.mrf.mxu0
      %v1803 = vadd.f32 0.0, %v1802
      %v1804 = vpop.f32.mrf.mxu0
      %v1805 = vpop.f32.mrf.mxu0
      %v1806 = vadd.f32 0.0, %v1805
      %v1807 = vpop.f32.mrf.mxu0
      %1808 = vdwg.mxu0
      %1811 = vrot.lane.b32.xlu0 %v1803, 16
      %v1812 = vpop.permute.xlu0 %1811
      %1813 = vrot.lane.b32.xlu0 %v1806, 16
      %v1814 = vpop.permute.xlu0 %1813
      %vm1817 = vcmask 195712
      %1818 = vst.msk [vmem:[#allocation2] sm:$0xff] %vm1817, %v1812
      %1819 = vst.msk [vmem:[#allocation2 + $0x8] sm:$0xff] %vm1817, %v1814
      %1820 = vrot.lane.b32.xlu0 %v1434, 110
      %v1821 = vpop.permute.xlu0 %1820
      %1822 = vrot.lane.b32.xlu0 %v1435, 110
      %v1823 = vpop.permute.xlu0 %1822
      %v1825 = vsel %vm732, %v1821, 0
      %v1828 = vsel %vm732, %v1823, 0
      %1830 = vmatprep.subr.bf16.mxu0 0
      %1831 = vmatpush1.bf16.xpose.msra.mxu0 0
      %1832 = vmatprep.subr.bf16.mxu0 0
      %1833 = vmatpush1.bf16.xpose.msra.mxu0 0
      %1834 = vmatprep.subr.bf16.mxu0 0
      %1835 = vmatpush1.bf16.xpose.msra.mxu0 0
      %1836 = vmatprep.subr.bf16.mxu0 0
      %1837 = vmatpush1.bf16.xpose.msra.mxu0 0
      %1838 = vmatprep.subr.bf16.mxu0 0
      %1839 = vmatpush1.bf16.xpose.msra.mxu0 0
      %1840 = vmatprep.subr.bf16.mxu0 0
      %1841 = vmatpush1.bf16.xpose.msra.mxu0 0
      %1842 = vmatprep.subr.bf16.mxu0 0
      %1843 = vmatpush1.bf16.xpose.msra.mxu0 0
      %1844 = vmatprep.subr.bf16.mxu0 0
      %1845 = vmatpush1.bf16.xpose.msra.mxu0 %v1828
      %1846 = vmatprep.subr.bf16.mxu0 0
      %1847 = vmatpush2.bf16.xpose.msra.mxu0 0
      %1848 = vmatprep.subr.bf16.mxu0 0
      %1849 = vmatpush2.bf16.xpose.msra.mxu0 0
      %1850 = vmatprep.subr.bf16.mxu0 0
      %1851 = vmatpush2.bf16.xpose.msra.mxu0 0
      %1852 = vmatprep.subr.bf16.mxu0 0
      %1853 = vmatpush2.bf16.xpose.msra.mxu0 0
      %1854 = vmatprep.subr.bf16.mxu0 0
      %1855 = vmatpush2.bf16.xpose.msra.mxu0 0
      %1856 = vmatprep.subr.bf16.mxu0 0
      %1857 = vmatpush2.bf16.xpose.msra.mxu0 0
      %1858 = vmatprep.subr.bf16.mxu0 0
      %1859 = vmatpush2.bf16.xpose.msra.mxu0 0
      %1860 = vmatprep.subr.bf16.mxu0 0
      %1861 = vmatpush2.bf16.xpose.msra.mxu0 0
      %1862 = vmatprep.mubr.bf16.mxu0 0
      %1863 = vmatmul.mubr.bf16.gmra.mxu0 %v1825
      %v1864 = vpop.f32.mrf.mxu0
      %v1865 = vadd.f32 0.0, %v1864
      %v1866 = vpop.f32.mrf.mxu0
      %v1867 = vpop.f32.mrf.mxu0
      %v1868 = vadd.f32 0.0, %v1867
      %v1869 = vpop.f32.mrf.mxu0
      %1870 = vdwg.mxu0
      %v1871 = vsel %vm1483, %v1865, -inf
      %1872 = vmax.xlane.f32.xlu0 %v1871
      %v1873 = vpop.xlane.xlu0 %1872
      %v1874 = vsel %vm1483, %v1868, -inf
      %1875 = vmax.xlane.f32.xlu0 %v1874
      %v1876 = vpop.xlane.xlu0 %1875
      %v1877 = vsub.f32 %v1865, %v1873
      %v1878 = vsub.f32 %v1868, %v1876
      %v1879 = vmul.f32 %v1877, 1.442695
      %v1880 = vpow.pop %v1879
      %v1881 = vmul.f32 %v1878, 1.442695
      %v1882 = vpow.pop %v1881
      %v1883 = vsel %vm1483, %v1880, 0.0
      %1884 = vadd.xlane.f32.xlu0 %v1883
      %v1885 = vpop.xlane.xlu0 %1884
      %v1886 = vsel %vm1483, %v1882, 0.0
      %1887 = vadd.xlane.f32.xlu0 %v1886
      %v1888 = vpop.xlane.xlu0 %1887
      %v1889 = vrcp.pop %v1885
      %v1890 = vmul.f32 %v1880, %v1889
      %v1891 = vrcp.pop %v1888
      %v1892 = vmul.f32 %v1882, %v1891
      %v1893 = vpack.c.bf16 %v1892, %v1890
      %1894 = vrot.lane.b32.xlu0 %v1431, 104
      %v1895 = vpop.permute.xlu0 %1894
      %v1898 = vsel %vm1483, %v1893, 0
      %1900 = vmatprep.subr.bf16.mxu0 0
      %1901 = vmatpush1.bf16.msra.mxu0 0
      %1902 = vmatprep.subr.bf16.mxu0 0
      %1903 = vmatpush1.bf16.msra.mxu0 0
      %1904 = vmatprep.subr.bf16.mxu0 0
      %1905 = vmatpush1.bf16.msra.mxu0 0
      %1906 = vmatprep.subr.bf16.mxu0 0
      %1907 = vmatpush1.bf16.msra.mxu0 0
      %1908 = vmatprep.subr.bf16.mxu0 0
      %1909 = vmatpush1.bf16.msra.mxu0 0
      %1910 = vmatprep.subr.bf16.mxu0 0
      %1911 = vmatpush1.bf16.msra.mxu0 0
      %1912 = vmatprep.subr.bf16.mxu0 0
      %1913 = vmatpush1.bf16.msra.mxu0 0
      %1914 = vmatprep.subr.bf16.mxu0 0
      %1915 = vmatpush1.bf16.msra.mxu0 %v1895
      %1916 = vmatprep.subr.bf16.mxu0 0
      %1917 = vmatpush2.bf16.msra.mxu0 0
      %1918 = vmatprep.subr.bf16.mxu0 0
      %1919 = vmatpush2.bf16.msra.mxu0 0
      %1920 = vmatprep.subr.bf16.mxu0 0
      %1921 = vmatpush2.bf16.msra.mxu0 0
      %1922 = vmatprep.subr.bf16.mxu0 0
      %1923 = vmatpush2.bf16.msra.mxu0 0
      %1924 = vmatprep.subr.bf16.mxu0 0
      %1925 = vmatpush2.bf16.msra.mxu0 0
      %1926 = vmatprep.subr.bf16.mxu0 0
      %1927 = vmatpush2.bf16.msra.mxu0 0
      %1928 = vmatprep.subr.bf16.mxu0 0
      %1929 = vmatpush2.bf16.msra.mxu0 0
      %1930 = vmatprep.subr.bf16.mxu0 0
      %1931 = vmatpush2.bf16.msra.mxu0 0
      %1932 = vmatprep.mubr.bf16.mxu0 0
      %1933 = vmatmul.mubr.bf16.gmra.mxu0 %v1898
      %v1934 = vpop.f32.mrf.mxu0
      %v1935 = vadd.f32 0.0, %v1934
      %v1936 = vpop.f32.mrf.mxu0
      %v1937 = vpop.f32.mrf.mxu0
      %v1938 = vadd.f32 0.0, %v1937
      %v1939 = vpop.f32.mrf.mxu0
      %1940 = vdwg.mxu0
      %1943 = vrot.lane.b32.xlu0 %v1935, 24
      %v1944 = vpop.permute.xlu0 %1943
      %1945 = vrot.lane.b32.xlu0 %v1938, 24
      %v1946 = vpop.permute.xlu0 %1945
      %vm1949 = vcmask 261312
      %1950 = vst.msk [vmem:[#allocation2] sm:$0xff] %vm1949, %v1944
      %1951 = vst.msk [vmem:[#allocation2 + $0x8] sm:$0xff] %vm1949, %v1946
      %v1952 = vld [vmem:[#allocation2] sm:$0xff]
      %v1953 = vld [vmem:[#allocation2 + $0x8] sm:$0xff]
      %v1954 = vld [vmem:[%s9] sm:$0x1]
      %v1955 = vld [vmem:[%s10] sm:$0x1]
      %v1956 = vsel %vm562, %v1952, 0.0
      %1957 = vadd.xlane.f32.xlu0 %v1956
      %v1958 = vpop.xlane.xlu0 %1957
      %v1959 = vsel %vm562, %v1953, 0.0
      %1960 = vadd.xlane.f32.xlu0 %v1959
      %v1961 = vpop.xlane.xlu0 %1960
      %v1962 = vrcp.pop 32.0
      %v1963 = vmul.f32 %v1958, %v1962
      %v1964 = vmul.f32 %v1961, %v1962
      %v1965 = vsub.f32 %v1952, %v1963
      %v1966 = vsub.f32 %v1953, %v1964
      %v1967 = vmul.f32 %v1965, %v1965
      %v1968 = vmul.f32 %v1966, %v1966
      %v1969 = vsel %vm562, %v1967, 0.0
      %1970 = vadd.xlane.f32.xlu0 %v1969
      %v1971 = vpop.xlane.xlu0 %1970
      %v1972 = vsel %vm562, %v1968, 0.0
      %1973 = vadd.xlane.f32.xlu0 %v1972
      %v1974 = vpop.xlane.xlu0 %1973
      %v1975 = vmul.f32 %v1971, %v1962
      %v1976 = vmul.f32 %v1974, %v1962
      %v1977 = vadd.f32 %v1975, 1e-05
      %v1978 = vadd.f32 %v1976, 1e-05
      %v1979 = vrsqrt.pop %v1977
      %v1980 = vrsqrt.pop %v1978
      %v1981 = vmul.f32 %v1965, %v1979
      %v1982 = vmul.f32 %v1966, %v1980
      %v1984 = vlaneseq
      %v1985 = vshrl.u32 %v1984, 7
      %v1986 = vsub.s32 0, %v1985
      %v1987 = vrot.slane %v1954, %v1986
      %v1989 = vmul.f32 %v1981, %v1987
      %v1990 = vmul.f32 %v1982, %v1987
      %v1992 = vlaneseq
      %v1993 = vshrl.u32 %v1992, 7
      %v1994 = vsub.s32 0, %v1993
      %v1995 = vrot.slane %v1955, %v1994
      %v1997 = vadd.f32 %v1989, %v1995
      %v1998 = vadd.f32 %v1990, %v1995
      %v1999 = vpack.c.bf16 %v1998, %v1997
      %v2000 = vld [vmem:[%s11] sm:$0xf]
      %v2002 = vsel %vm780, %v1999, 0
      %v2005 = vsel %vm807, %v2000, 0
      %2007 = vmatprep.subr.bf16.mxu0 0
      %2008 = vmatpush1.bf16.msra.mxu0 0
      %2009 = vmatprep.subr.bf16.mxu0 0
      %2010 = vmatpush1.bf16.msra.mxu0 0
      %2011 = vmatprep.subr.bf16.mxu0 0
      %2012 = vmatpush1.bf16.msra.mxu0 0
      %2013 = vmatprep.subr.bf16.mxu0 0
      %2014 = vmatpush1.bf16.msra.mxu0 0
      %2015 = vmatprep.subr.bf16.mxu0 0
      %2016 = vmatpush1.bf16.msra.mxu0 0
      %2017 = vmatprep.subr.bf16.mxu0 0
      %2018 = vmatpush1.bf16.msra.mxu0 0
      %2019 = vmatprep.subr.bf16.mxu0 0
      %2020 = vmatpush1.bf16.msra.mxu0 0
      %2021 = vmatprep.subr.bf16.mxu0 0
      %2022 = vmatpush1.bf16.msra.mxu0 %v2005
      %2023 = vmatprep.subr.bf16.mxu0 0
      %2024 = vmatpush2.bf16.msra.mxu0 0
      %2025 = vmatprep.subr.bf16.mxu0 0
      %2026 = vmatpush2.bf16.msra.mxu0 0
      %2027 = vmatprep.subr.bf16.mxu0 0
      %2028 = vmatpush2.bf16.msra.mxu0 0
      %2029 = vmatprep.subr.bf16.mxu0 0
      %2030 = vmatpush2.bf16.msra.mxu0 0
      %2031 = vmatprep.subr.bf16.mxu0 0
      %2032 = vmatpush2.bf16.msra.mxu0 0
      %2033 = vmatprep.subr.bf16.mxu0 0
      %2034 = vmatpush2.bf16.msra.mxu0 0
      %2035 = vmatprep.subr.bf16.mxu0 0
      %2036 = vmatpush2.bf16.msra.mxu0 0
      %2037 = vmatprep.subr.bf16.mxu0 0
      %2038 = vmatpush2.bf16.msra.mxu0 0
      %2039 = vmatprep.mubr.bf16.mxu0 0
      %2040 = vmatmul.mubr.bf16.gmra.mxu0 %v2002
      %v2041 = vpop.f32.mrf.mxu0
      %v2042 = vadd.f32 0.0, %v2041
      %v2043 = vpop.f32.mrf.mxu0
      %v2044 = vpop.f32.mrf.mxu0
      %v2045 = vadd.f32 0.0, %v2044
      %v2046 = vpop.f32.mrf.mxu0
      %2047 = vdwg.mxu0
      %v2048 = vpack.c.bf16 %v2045, %v2042
      %v2050 = vunpack.c.l.b16 %v2048
      %v2051 = vunpack.c.h.b16 %v2048
      %v2052 = vpack.c.b16 %v2050, %v2050
      %v2053 = vpack.c.b16 %v2051, %v2051
      %vm2056 = vcmask 257024
      %2057 = vst.msk [vmem:[%s501] sm:$0xf] %vm2056, %v2052
      %2058 = vst.msk [vmem:[%s501 + $0x4] sm:$0xf] %vm2056, %v2053
      %v2059 = vld [vmem:[%s11 + $0x4] sm:$0xf]
      %2061 = vrot.lane.b32.xlu0 %v1999, 120
      %v2062 = vpop.permute.xlu0 %2061
      %v2064 = vsel %vm780, %v2062, 0
      %v2067 = vsel %vm807, %v2059, 0
      %2069 = vmatprep.subr.bf16.mxu0 0
      %2070 = vmatpush1.bf16.msra.mxu0 0
      %2071 = vmatprep.subr.bf16.mxu0 0
      %2072 = vmatpush1.bf16.msra.mxu0 0
      %2073 = vmatprep.subr.bf16.mxu0 0
      %2074 = vmatpush1.bf16.msra.mxu0 0
      %2075 = vmatprep.subr.bf16.mxu0 0
      %2076 = vmatpush1.bf16.msra.mxu0 0
      %2077 = vmatprep.subr.bf16.mxu0 0
      %2078 = vmatpush1.bf16.msra.mxu0 0
      %2079 = vmatprep.subr.bf16.mxu0 0
      %2080 = vmatpush1.bf16.msra.mxu0 0
      %2081 = vmatprep.subr.bf16.mxu0 0
      %2082 = vmatpush1.bf16.msra.mxu0 0
      %2083 = vmatprep.subr.bf16.mxu0 0
      %2084 = vmatpush1.bf16.msra.mxu0 %v2067
      %2085 = vmatprep.subr.bf16.mxu0 0
      %2086 = vmatpush2.bf16.msra.mxu0 0
      %2087 = vmatprep.subr.bf16.mxu0 0
      %2088 = vmatpush2.bf16.msra.mxu0 0
      %2089 = vmatprep.subr.bf16.mxu0 0
      %2090 = vmatpush2.bf16.msra.mxu0 0
      %2091 = vmatprep.subr.bf16.mxu0 0
      %2092 = vmatpush2.bf16.msra.mxu0 0
      %2093 = vmatprep.subr.bf16.mxu0 0
      %2094 = vmatpush2.bf16.msra.mxu0 0
      %2095 = vmatprep.subr.bf16.mxu0 0
      %2096 = vmatpush2.bf16.msra.mxu0 0
      %2097 = vmatprep.subr.bf16.mxu0 0
      %2098 = vmatpush2.bf16.msra.mxu0 0
      %2099 = vmatprep.subr.bf16.mxu0 0
      %2100 = vmatpush2.bf16.msra.mxu0 0
      %2101 = vmatprep.mubr.bf16.mxu0 0
      %2102 = vmatmul.mubr.bf16.gmra.mxu0 %v2064
      %v2103 = vpop.f32.mrf.mxu0
      %v2104 = vadd.f32 0.0, %v2103
      %v2105 = vpop.f32.mrf.mxu0
      %v2106 = vpop.f32.mrf.mxu0
      %v2107 = vadd.f32 0.0, %v2106
      %v2108 = vpop.f32.mrf.mxu0
      %2109 = vdwg.mxu0
      %v2110 = vpack.c.bf16 %v2107, %v2104
      %v2112 = vunpack.c.l.b16 %v2110
      %v2113 = vunpack.c.h.b16 %v2110
      %v2114 = vpack.c.b16 %v2112, %v2112
      %v2115 = vpack.c.b16 %v2113, %v2113
      %2118 = vst.msk [vmem:[%s501 + $0x8] sm:$0xf] %vm2056, %v2114
      %2119 = vst.msk [vmem:[%s501 + $0xc] sm:$0xf] %vm2056, %v2115
      %v2120 = vld [vmem:[%s11 + $0x8] sm:$0xf]
      %2121 = vrot.lane.b32.xlu0 %v1999, 112
      %v2122 = vpop.permute.xlu0 %2121
      %v2124 = vsel %vm780, %v2122, 0
      %v2127 = vsel %vm807, %v2120, 0
      %2129 = vmatprep.subr.bf16.mxu0 0
      %2130 = vmatpush1.bf16.msra.mxu0 0
      %2131 = vmatprep.subr.bf16.mxu0 0
      %2132 = vmatpush1.bf16.msra.mxu0 0
      %2133 = vmatprep.subr.bf16.mxu0 0
      %2134 = vmatpush1.bf16.msra.mxu0 0
      %2135 = vmatprep.subr.bf16.mxu0 0
      %2136 = vmatpush1.bf16.msra.mxu0 0
      %2137 = vmatprep.subr.bf16.mxu0 0
      %2138 = vmatpush1.bf16.msra.mxu0 0
      %2139 = vmatprep.subr.bf16.mxu0 0
      %2140 = vmatpush1.bf16.msra.mxu0 0
      %2141 = vmatprep.subr.bf16.mxu0 0
      %2142 = vmatpush1.bf16.msra.mxu0 0
      %2143 = vmatprep.subr.bf16.mxu0 0
      %2144 = vmatpush1.bf16.msra.mxu0 %v2127
      %2145 = vmatprep.subr.bf16.mxu0 0
      %2146 = vmatpush2.bf16.msra.mxu0 0
      %2147 = vmatprep.subr.bf16.mxu0 0
      %2148 = vmatpush2.bf16.msra.mxu0 0
      %2149 = vmatprep.subr.bf16.mxu0 0
      %2150 = vmatpush2.bf16.msra.mxu0 0
      %2151 = vmatprep.subr.bf16.mxu0 0
      %2152 = vmatpush2.bf16.msra.mxu0 0
      %2153 = vmatprep.subr.bf16.mxu0 0
      %2154 = vmatpush2.bf16.msra.mxu0 0
      %2155 = vmatprep.subr.bf16.mxu0 0
      %2156 = vmatpush2.bf16.msra.mxu0 0
      %2157 = vmatprep.subr.bf16.mxu0 0
      %2158 = vmatpush2.bf16.msra.mxu0 0
      %2159 = vmatprep.subr.bf16.mxu0 0
      %2160 = vmatpush2.bf16.msra.mxu0 0
      %2161 = vmatprep.mubr.bf16.mxu0 0
      %2162 = vmatmul.mubr.bf16.gmra.mxu0 %v2124
      %v2163 = vpop.f32.mrf.mxu0
      %v2164 = vadd.f32 0.0, %v2163
      %v2165 = vpop.f32.mrf.mxu0
      %v2166 = vpop.f32.mrf.mxu0
      %v2167 = vadd.f32 0.0, %v2166
      %v2168 = vpop.f32.mrf.mxu0
      %2169 = vdwg.mxu0
      %v2170 = vpack.c.bf16 %v2167, %v2164
      %v2172 = vunpack.c.l.b16 %v2170
      %v2173 = vunpack.c.h.b16 %v2170
      %v2174 = vpack.c.b16 %v2172, %v2172
      %v2175 = vpack.c.b16 %v2173, %v2173
      %2178 = vst.msk [vmem:[%s501 + $0x10] sm:$0xf] %vm2056, %v2174
      %2179 = vst.msk [vmem:[%s501 + $0x14] sm:$0xf] %vm2056, %v2175
      %v2180 = vld [vmem:[%s11 + $0xc] sm:$0xf]
      %2181 = vrot.lane.b32.xlu0 %v1999, 104
      %v2182 = vpop.permute.xlu0 %2181
      %v2184 = vsel %vm780, %v2182, 0
      %v2187 = vsel %vm807, %v2180, 0
      %2189 = vmatprep.subr.bf16.mxu0 0
      %2190 = vmatpush1.bf16.msra.mxu0 0
      %2191 = vmatprep.subr.bf16.mxu0 0
      %2192 = vmatpush1.bf16.msra.mxu0 0
      %2193 = vmatprep.subr.bf16.mxu0 0
      %2194 = vmatpush1.bf16.msra.mxu0 0
      %2195 = vmatprep.subr.bf16.mxu0 0
      %2196 = vmatpush1.bf16.msra.mxu0 0
      %2197 = vmatprep.subr.bf16.mxu0 0
      %2198 = vmatpush1.bf16.msra.mxu0 0
      %2199 = vmatprep.subr.bf16.mxu0 0
      %2200 = vmatpush1.bf16.msra.mxu0 0
      %2201 = vmatprep.subr.bf16.mxu0 0
      %2202 = vmatpush1.bf16.msra.mxu0 0
      %2203 = vmatprep.subr.bf16.mxu0 0
      %2204 = vmatpush1.bf16.msra.mxu0 %v2187
      %2205 = vmatprep.subr.bf16.mxu0 0
      %2206 = vmatpush2.bf16.msra.mxu0 0
      %2207 = vmatprep.subr.bf16.mxu0 0
      %2208 = vmatpush2.bf16.msra.mxu0 0
      %2209 = vmatprep.subr.bf16.mxu0 0
      %2210 = vmatpush2.bf16.msra.mxu0 0
      %2211 = vmatprep.subr.bf16.mxu0 0
      %2212 = vmatpush2.bf16.msra.mxu0 0
      %2213 = vmatprep.subr.bf16.mxu0 0
      %2214 = vmatpush2.bf16.msra.mxu0 0
      %2215 = vmatprep.subr.bf16.mxu0 0
      %2216 = vmatpush2.bf16.msra.mxu0 0
      %2217 = vmatprep.subr.bf16.mxu0 0
      %2218 = vmatpush2.bf16.msra.mxu0 0
      %2219 = vmatprep.subr.bf16.mxu0 0
      %2220 = vmatpush2.bf16.msra.mxu0 0
      %2221 = vmatprep.mubr.bf16.mxu0 0
      %2222 = vmatmul.mubr.bf16.gmra.mxu0 %v2184
      %v2223 = vpop.f32.mrf.mxu0
      %v2224 = vadd.f32 0.0, %v2223
      %v2225 = vpop.f32.mrf.mxu0
      %v2226 = vpop.f32.mrf.mxu0
      %v2227 = vadd.f32 0.0, %v2226
      %v2228 = vpop.f32.mrf.mxu0
      %2229 = vdwg.mxu0
      %v2230 = vpack.c.bf16 %v2227, %v2224
      %v2232 = vunpack.c.l.b16 %v2230
      %v2233 = vunpack.c.h.b16 %v2230
      %v2234 = vpack.c.b16 %v2232, %v2232
      %v2235 = vpack.c.b16 %v2233, %v2233
      %2238 = vst.msk [vmem:[%s501 + $0x18] sm:$0xf] %vm2056, %v2234
      %2239 = vst.msk [vmem:[%s501 + $0x1c] sm:$0xf] %vm2056, %v2235
      %v2240 = vsel %vm1483, %v603, -inf
      %2241 = vmax.xlane.f32.xlu0 %v2240
      %v2242 = vpop.xlane.xlu0 %2241
      %v2243 = vsub.f32 %v603, %v2242
      %v2244 = vmul.f32 %v2243, 1.442695
      %v2245 = vpow.pop %v2244
      %v2246 = vsel %vm1483, %v2245, 0.0
      %2247 = vadd.xlane.f32.xlu0 %v2246
      %v2248 = vpop.xlane.xlu0 %2247
      %v2249 = vrcp.pop %v2248
      %v2250 = vmul.f32 %v2245, %v2249
      %v2251 = vpack.c.bf16 %v2250, %v2250
      %vm2252 = vcmask 125952
      %2253 = vst.msk [vmem:[%s496] sm:$0xf] %vm2252, %v2251
      %vm2254 = vcmask 261248
      %v2255 = vsel %vm2254, %v603, -inf
      %2256 = vmax.xlane.f32.xlu0 %v2255
      %v2257 = vpop.xlane.xlu0 %2256
      %v2258 = vsub.f32 %v603, %v2257
      %v2259 = vmul.f32 %v2258, 1.442695
      %v2260 = vpow.pop %v2259
      %2262 = vrot.lane.b32.xlu0 %v2260, 112
      %v2263 = vpop.permute.xlu0 %2262
      %v2265 = vsel %vm1483, %v2263, 0.0
      %2266 = vadd.xlane.f32.xlu0 %v2265
      %v2267 = vpop.xlane.xlu0 %2266
      %v2268 = vrcp.pop %v2267
      %v2269 = vmul.f32 %v2260, %v2268
      %v2270 = vpack.c.bf16 %v2269, %v2269
      %vm2271 = vcmask 257152
      %2272 = vst.msk [vmem:[%s496] sm:$0xf] %vm2271, %v2270
      %vm2273 = vcmask 392448
      %v2274 = vsel %vm2273, %v603, -inf
      %2275 = vmax.xlane.f32.xlu0 %v2274
      %v2276 = vpop.xlane.xlu0 %2275
      %v2277 = vsub.f32 %v603, %v2276
      %v2278 = vmul.f32 %v2277, 1.442695
      %v2279 = vpow.pop %v2278
      %2281 = vrot.lane.b32.xlu0 %v2279, 96
      %v2282 = vpop.permute.xlu0 %2281
      %v2284 = vsel %vm1483, %v2282, 0.0
      %2285 = vadd.xlane.f32.xlu0 %v2284
      %v2286 = vpop.xlane.xlu0 %2285
      %v2287 = vrcp.pop %v2286
      %v2288 = vmul.f32 %v2279, %v2287
      %v2289 = vpack.c.bf16 %v2288, %v2288
      %vm2290 = vcmask 388352
      %2291 = vst.msk [vmem:[%s496] sm:$0xf] %vm2290, %v2289
      %vm2292 = vcmask 523648
      %v2293 = vsel %vm2292, %v603, -inf
      %2294 = vmax.xlane.f32.xlu0 %v2293
      %v2295 = vpop.xlane.xlu0 %2294
      %v2296 = vsub.f32 %v603, %v2295
      %v2297 = vmul.f32 %v2296, 1.442695
      %v2298 = vpow.pop %v2297
      %2300 = vrot.lane.b32.xlu0 %v2298, 80
      %v2301 = vpop.permute.xlu0 %2300
      %v2303 = vsel %vm1483, %v2301, 0.0
      %2304 = vadd.xlane.f32.xlu0 %v2303
      %v2305 = vpop.xlane.xlu0 %2304
      %v2306 = vrcp.pop %v2305
      %v2307 = vmul.f32 %v2298, %v2306
      %v2308 = vpack.c.bf16 %v2307, %v2307
      %vm2309 = vcmask 519552
      %2310 = vst.msk [vmem:[%s496] sm:$0xf] %vm2309, %v2308
      %p2311 = scmp.lt.s32.totalorder %s26, 1
      %s2312 = scalar_select %p2311, %s26, 1
      %s2313 = smul.addr %s2312, 2
      %s2314 = smul.addr %s2313, 4
      %s2315 = scalar_lea.vmem %s12, %s2314
      %p2316 = scmp.lt.s32.totalorder %s26, 1
      %s2317 = scalar_select %p2316, %s26, 1
      %s2318 = smul.addr %s2317, 4
      %s2319 = scalar_lea.vmem %s13, %s2318
      %p2320 = scmp.lt.s32.totalorder %s26, 1
      %s2321 = scalar_select %p2320, %s26, 1
      %s2322 = smul.addr %s2321, 8
      %s2323 = smul.addr %s2322, 4
      %s2324 = scalar_lea.vmem %s14, %s2323
      // Predicated region
      $region69: #{ts_transformer_forward.7} parent=67 // pred_check
        %p2325 = pneg %p306
      $region70: #{ts_transformer_forward.7} parent=67 // pred_check_branch
        %2327 = sbr.rel (%p2325) target = $region72
      $region71: #{ts_transformer_forward.7} parent=67 // pred_region
        _
      $region72: #{ts_transformer_forward.7} parent=67 // pred_fallthru
        _
      // Predicated region
      $region73: #{ts_transformer_forward.7} parent=67 // pred_check
        %p2328 = pneg %p332
      $region74: #{ts_transformer_forward.7} parent=67 // pred_check_branch
        %2330 = sbr.rel (%p2328) target = $region76
      $region75: #{ts_transformer_forward.7} parent=67 // pred_region
        _
      $region76: #{ts_transformer_forward.7} parent=67 // pred_fallthru
        _
      // Predicated region
      $region77: #{ts_transformer_forward.7} parent=67 // pred_check
        %p2331 = pneg %p358
      $region78: #{ts_transformer_forward.7} parent=67 // pred_check_branch
        %2333 = sbr.rel (%p2331) target = $region80
      $region79: #{ts_transformer_forward.7} parent=67 // pred_region
        _
      $region80: #{ts_transformer_forward.7} parent=67 // pred_fallthru
        _
    $region68: #{ts_transformer_forward.7} parent=5 // pred_fallthru
      _
    %p2334 = scmp.le.s32.totalorder 2, %s21
    // Predicated region
    $region81: #{ts_transformer_forward.7} parent=5 // pred_check
      %p2335 = pneg %p2334
    $region82: #{ts_transformer_forward.7} parent=5 // pred_check_branch
      %2337 = sbr.rel (%p2335) target = $region84
    $region83: #{ts_transformer_forward.7} parent=5 // pred_region
      %s2338 = ssub.s32 %s21, 2
      // Predicated region
      $region85: #{ts_transformer_forward.7} parent=83 // pred_check
        %p2339 = pneg %p312
      $region86: #{ts_transformer_forward.7} parent=83 // pred_check_branch
        %2341 = sbr.rel (%p2339) target = $region88
      $region87: #{ts_transformer_forward.7} parent=83 // pred_region
        %p2342 = scmp.lt.s32.totalorder %s27, 1
        %s2343 = scalar_select %p2342, %s27, 1
        %s2344 = smul.addr %s2343, 2
        %s2345 = smul.addr %s2344, 4
        %s2346 = scalar_lea.vmem %s12, %s2345
      $region88: #{ts_transformer_forward.7} parent=83 // pred_fallthru
        _
      // Predicated region
      $region89: #{ts_transformer_forward.7} parent=83 // pred_check
        %p2347 = pneg %p338
      $region90: #{ts_transformer_forward.7} parent=83 // pred_check_branch
        %2349 = sbr.rel (%p2347) target = $region92
      $region91: #{ts_transformer_forward.7} parent=83 // pred_region
        %p2350 = scmp.lt.s32.totalorder %s27, 1
        %s2351 = scalar_select %p2350, %s27, 1
        %s2352 = smul.addr %s2351, 4
        %s2353 = scalar_lea.vmem %s13, %s2352
      $region92: #{ts_transformer_forward.7} parent=83 // pred_fallthru
        _
      // Predicated region
      $region93: #{ts_transformer_forward.7} parent=83 // pred_check
        %p2354 = pneg %p364
      $region94: #{ts_transformer_forward.7} parent=83 // pred_check_branch
        %2356 = sbr.rel (%p2354) target = $region96
      $region95: #{ts_transformer_forward.7} parent=83 // pred_region
        %p2357 = scmp.lt.s32.totalorder %s27, 1
        %s2358 = scalar_select %p2357, %s27, 1
        %s2359 = smul.addr %s2358, 8
        %s2360 = smul.addr %s2359, 4
        %s2361 = scalar_lea.vmem %s14, %s2360
      $region96: #{ts_transformer_forward.7} parent=83 // pred_fallthru
        _
    $region84: #{ts_transformer_forward.7} parent=5 // pred_fallthru
      _
  $region6: #{ts_transformer_forward.7} parent=0 // loop_footer
    %s25 = sadd.s32 1, %s21
  $region7: #{ts_transformer_forward.7} parent=0 // loop_footer_branch
    %20 = sbr.rel target = $region3
  $region8: #{ts_transformer_forward.7} parent=0 // loop_exit
    _

// kernel: ts_transformer_forward.9
$region0: #{ts_transformer_forward.9}
  #allocation0 [shape = 'u32[]', space=smem, size = 0x4, offset = 0x4, fixed_abs, tag = 'smem constant byte address 0x4 - core index']
  #allocation1 [shape = 'u32[144,128]{1,0:T(1,128)}', space=vmem, size = 0x12000, scoped, tag = 'internal scratch']
  #allocation2 [shape = 'f32[16,32]{1,0:T(8,128)}', space=vmem, size = 0x2000, scoped, tag = 'scratch operand']
  %s0 = inlined_call_operand.vmem [shape: bf16[2,8,32], index: 0, kind: input, shape index: {}]
  %s1 = inlined_call_operand.vmem [shape: bf16[2,16,32], index: 1, kind: input, shape index: {}]
  %s2 = inlined_call_operand.vmem [shape: f32[2,1,8], index: 2, kind: input, shape index: {}]
  %s3 = inlined_call_operand.vmem [shape: bf16[32,384], index: 3, kind: input, shape index: {}]
  %s4 = inlined_call_operand.vmem [shape: f32[1,384], index: 4, kind: input, shape index: {}]
  %s5 = inlined_call_operand.vmem [shape: bf16[32,24], index: 5, kind: input, shape index: {}]
  %s6 = inlined_call_operand.vmem [shape: f32[1,24], index: 6, kind: input, shape index: {}]
  %s7 = inlined_call_operand.vmem [shape: bf16[32,384], index: 7, kind: input, shape index: {}]
  %s8 = inlined_call_operand.vmem [shape: f32[1,384], index: 8, kind: input, shape index: {}]
  %s9 = inlined_call_operand.vmem [shape: f32[1,32], index: 9, kind: input, shape index: {}]
  %s10 = inlined_call_operand.vmem [shape: f32[1,32], index: 10, kind: input, shape index: {}]
  %s11 = inlined_call_operand.vmem [shape: bf16[32,32], index: 11, kind: input, shape index: {}]
  %s12 = inlined_call_operand.hbm [shape: bf16[2,16,32], index: 12, kind: output, shape index: {0}]
  %s13 = inlined_call_operand.vmem [shape: bf16[2,8,64], index: 13, kind: output, shape index: {1}]
  %s14 = inlined_call_operand.vmem [shape: bf16[2,64,32], index: 14, kind: output, shape index: {2}]
  %15 = xla_tuple %s12, %s13, %s14
  %s16 = sld [smem:[#allocation0]]
  $region97: #{ts_transformer_forward.9} parent=0
    _
  %s18 = ssub.s32 1, %s16
  %s19 = scalar_select 0, %s18, %s16
  $region1: #{ts_transformer_forward.9} parent=0
    #allocation3 [shape = 'u8[8192]{0}', space=vmem, size = 0x2000, scoped, tag = 'output window, operand 0']
    #allocation4 [shape = 's32[2]{0}', space=sflag, size = 0x8, scoped, tag = 'scoped memory for ts_transformer_forward.9']
    %20 = vsyncpa [#allocation4], 0
    %s21 = scalar_lea.sflag [#allocation4], 1
    %22 = vsyncpa %s21, 0
    loop: start=0, step=1, limit=4
    $region2: #{ts_transformer_forward.9} parent=1 // loop_pre_header
      _
    $region3: #{ts_transformer_forward.9} parent=1 // loop_header
      %s24 = sphi 0, %s28
      %p25 = scmp.ge.s32.totalorder %s24, 4
      %s34 = sphi 0, %s36
      %s37 = sphi 0, %s34
      %s38 = sphi 0, %s37
      %s54 = sphi 0, %s38
      %s60 = sphi 0, %s62
      %s63 = sphi 0, %s60
      %s64 = sphi 0, %s63
      %s80 = sphi 0, %s64
      %s86 = sphi 0, %s88
      %s89 = sphi 0, %s86
      %s90 = sphi 0, %s89
      %s106 = sphi 0, %s90
      %s110 = sphi 0, %s110
      %s112 = sphi 0, %s110
      %s113 = sphi 0, %s112
      %s127 = sphi 0, %s113
      %s131 = sphi 0, %s131
      %s133 = sphi 0, %s131
      %s134 = sphi 0, %s133
      %s148 = sphi 0, %s134
      %s152 = sphi 0, %s152
      %s154 = sphi 0, %s152
      %s155 = sphi 0, %s154
      %s169 = sphi 0, %s155
      %s173 = sphi 0, %s173
      %s175 = sphi 0, %s173
      %s176 = sphi 0, %s175
      %s190 = sphi 0, %s176
      %s194 = sphi 0, %s194
      %s196 = sphi 0, %s194
      %s197 = sphi 0, %s196
      %s211 = sphi 0, %s197
      %s215 = sphi 0, %s215
      %s217 = sphi 0, %s215
      %s218 = sphi 0, %s217
      %s232 = sphi 0, %s218
      %s236 = sphi 0, %s236
      %s238 = sphi 0, %s236
      %s239 = sphi 0, %s238
      %s253 = sphi 0, %s239
      %s257 = sphi 0, %s257
      %s259 = sphi 0, %s257
      %s260 = sphi 0, %s259
      %s274 = sphi 0, %s260
      %s278 = sphi 0, %s278
      %s280 = sphi 0, %s278
      %s281 = sphi 0, %s280
      %s295 = sphi 0, %s281
      %s301 = sphi 0, %s303
      %s304 = sphi 0, %s301
      %s305 = sphi 0, %s304
      %s321 = sphi 0, %s305
      %s327 = sphi 0, %s329
      %s330 = sphi 0, %s327
      %s331 = sphi 0, %s330
      %s347 = sphi 0, %s331
      %s353 = sphi 0, %s355
      %s356 = sphi 0, %s353
      %s357 = sphi 0, %s356
      %s373 = sphi 0, %s357
    $region4: #{ts_transformer_forward.9} parent=1 // loop_header_branch
      %27 = sbr.rel (%p25) target = $region8
    $region5: #{ts_transformer_forward.9} parent=1 // loop_body
      %s29 = ssub.s32 %s24, 1
      %s30 = ssub.s32 %s24, 2
      %s31 = sadd.s32 %s24, 1
      %s32 = ssub.s32 %s24, %s31
      %p33 = scmp.eq.s32.totalorder %s32, 0
      %s35 = sadd.s32 %s34, 1
      %s36 = scalar_select %p33, %s34, %s35
      %p39 = pneg %p33
      %p40 = scmp.eq.s32.totalorder %s24, 1
      %p41 = por %p39, %p40
      %p42 = scmp.ne.s32.totalorder %s34, %s37
      %p43 = scmp.eq.s32.totalorder %s24, 0
      %p44 = por %p42, %p43
      %p45 = scmp.ne.s32.totalorder %s34, %s37
      %p46 = scmp.eq.s32.totalorder %s29, 1
      %p47 = por %p45, %p46
      %p48 = scmp.ne.s32.totalorder %s37, %s38
      %p49 = scmp.eq.s32.totalorder %s29, 0
      %p50 = por %p48, %p49
      %p51 = scmp.ne.s32.totalorder %s37, %s38
      %p52 = scmp.eq.s32.totalorder %s30, 1
      %p53 = por %p51, %p52
      %p55 = scmp.ne.s32.totalorder %s38, %s54
      %p56 = scmp.eq.s32.totalorder %s30, 0
      %p57 = por %p55, %p56
      %s58 = ssub.s32 %s24, %s31
      %p59 = scmp.eq.s32.totalorder %s58, 0
      %s61 = sadd.s32 %s60, 1
      %s62 = scalar_select %p59, %s60, %s61
      %p65 = pneg %p59
      %p66 = scmp.eq.s32.totalorder %s24, 1
      %p67 = por %p65, %p66
      %p68 = scmp.ne.s32.totalorder %s60, %s63
      %p69 = scmp.eq.s32.totalorder %s24, 0
      %p70 = por %p68, %p69
      %p71 = scmp.ne.s32.totalorder %s60, %s63
      %p72 = scmp.eq.s32.totalorder %s29, 1
      %p73 = por %p71, %p72
      %p74 = scmp.ne.s32.totalorder %s63, %s64
      %p75 = scmp.eq.s32.totalorder %s29, 0
      %p76 = por %p74, %p75
      %p77 = scmp.ne.s32.totalorder %s63, %s64
      %p78 = scmp.eq.s32.totalorder %s30, 1
      %p79 = por %p77, %p78
      %p81 = scmp.ne.s32.totalorder %s64, %s80
      %p82 = scmp.eq.s32.totalorder %s30, 0
      %p83 = por %p81, %p82
      %s84 = ssub.s32 %s24, %s31
      %p85 = scmp.eq.s32.totalorder %s84, 0
      %s87 = sadd.s32 %s86, 1
      %s88 = scalar_select %p85, %s86, %s87
      %p91 = pneg %p85
      %p92 = scmp.eq.s32.totalorder %s24, 1
      %p93 = por %p91, %p92
      %p94 = scmp.ne.s32.totalorder %s86, %s89
      %p95 = scmp.eq.s32.totalorder %s24, 0
      %p96 = por %p94, %p95
      %p97 = scmp.ne.s32.totalorder %s86, %s89
      %p98 = scmp.eq.s32.totalorder %s29, 1
      %p99 = por %p97, %p98
      %p100 = scmp.ne.s32.totalorder %s89, %s90
      %p101 = scmp.eq.s32.totalorder %s29, 0
      %p102 = por %p100, %p101
      %p103 = scmp.ne.s32.totalorder %s89, %s90
      %p104 = scmp.eq.s32.totalorder %s30, 1
      %p105 = por %p103, %p104
      %p107 = scmp.ne.s32.totalorder %s90, %s106
      %p108 = scmp.eq.s32.totalorder %s30, 0
      %p109 = por %p107, %p108
      %s111 = sadd.s32 %s110, 1
      %p114 = scmp.eq.s32.totalorder %s24, 1
      %p115 = scmp.ne.s32.totalorder %s110, %s112
      %p116 = scmp.eq.s32.totalorder %s24, 0
      %p117 = por %p115, %p116
      %p118 = scmp.ne.s32.totalorder %s110, %s112
      %p119 = scmp.eq.s32.totalorder %s29, 1
      %p120 = por %p118, %p119
      %p121 = scmp.ne.s32.totalorder %s112, %s113
      %p122 = scmp.eq.s32.totalorder %s29, 0
      %p123 = por %p121, %p122
      %p124 = scmp.ne.s32.totalorder %s112, %s113
      %p125 = scmp.eq.s32.totalorder %s30, 1
      %p126 = por %p124, %p125
      %p128 = scmp.ne.s32.totalorder %s113, %s127
      %p129 = scmp.eq.s32.totalorder %s30, 0
      %p130 = por %p128, %p129
      %s132 = sadd.s32 %s131, 1
      %p135 = scmp.eq.s32.totalorder %s24, 1
      %p136 = scmp.ne.s32.totalorder %s131, %s133
      %p137 = scmp.eq.s32.totalorder %s24, 0
      %p138 = por %p136, %p137
      %p139 = scmp.ne.s32.totalorder %s131, %s133
      %p140 = scmp.eq.s32.totalorder %s29, 1
      %p141 = por %p139, %p140
      %p142 = scmp.ne.s32.totalorder %s133, %s134
      %p143 = scmp.eq.s32.totalorder %s29, 0
      %p144 = por %p142, %p143
      %p145 = scmp.ne.s32.totalorder %s133, %s134
      %p146 = scmp.eq.s32.totalorder %s30, 1
      %p147 = por %p145, %p146
      %p149 = scmp.ne.s32.totalorder %s134, %s148
      %p150 = scmp.eq.s32.totalorder %s30, 0
      %p151 = por %p149, %p150
      %s153 = sadd.s32 %s152, 1
      %p156 = scmp.eq.s32.totalorder %s24, 1
      %p157 = scmp.ne.s32.totalorder %s152, %s154
      %p158 = scmp.eq.s32.totalorder %s24, 0
      %p159 = por %p157, %p158
      %p160 = scmp.ne.s32.totalorder %s152, %s154
      %p161 = scmp.eq.s32.totalorder %s29, 1
      %p162 = por %p160, %p161
      %p163 = scmp.ne.s32.totalorder %s154, %s155
      %p164 = scmp.eq.s32.totalorder %s29, 0
      %p165 = por %p163, %p164
      %p166 = scmp.ne.s32.totalorder %s154, %s155
      %p167 = scmp.eq.s32.totalorder %s30, 1
      %p168 = por %p166, %p167
      %p170 = scmp.ne.s32.totalorder %s155, %s169
      %p171 = scmp.eq.s32.totalorder %s30, 0
      %p172 = por %p170, %p171
      %s174 = sadd.s32 %s173, 1
      %p177 = scmp.eq.s32.totalorder %s24, 1
      %p178 = scmp.ne.s32.totalorder %s173, %s175
      %p179 = scmp.eq.s32.totalorder %s24, 0
      %p180 = por %p178, %p179
      %p181 = scmp.ne.s32.totalorder %s173, %s175
      %p182 = scmp.eq.s32.totalorder %s29, 1
      %p183 = por %p181, %p182
      %p184 = scmp.ne.s32.totalorder %s175, %s176
      %p185 = scmp.eq.s32.totalorder %s29, 0
      %p186 = por %p184, %p185
      %p187 = scmp.ne.s32.totalorder %s175, %s176
      %p188 = scmp.eq.s32.totalorder %s30, 1
      %p189 = por %p187, %p188
      %p191 = scmp.ne.s32.totalorder %s176, %s190
      %p192 = scmp.eq.s32.totalorder %s30, 0
      %p193 = por %p191, %p192
      %s195 = sadd.s32 %s194, 1
      %p198 = scmp.eq.s32.totalorder %s24, 1
      %p199 = scmp.ne.s32.totalorder %s194, %s196
      %p200 = scmp.eq.s32.totalorder %s24, 0
      %p201 = por %p199, %p200
      %p202 = scmp.ne.s32.totalorder %s194, %s196
      %p203 = scmp.eq.s32.totalorder %s29, 1
      %p204 = por %p202, %p203
      %p205 = scmp.ne.s32.totalorder %s196, %s197
      %p206 = scmp.eq.s32.totalorder %s29, 0
      %p207 = por %p205, %p206
      %p208 = scmp.ne.s32.totalorder %s196, %s197
      %p209 = scmp.eq.s32.totalorder %s30, 1
      %p210 = por %p208, %p209
      %p212 = scmp.ne.s32.totalorder %s197, %s211
      %p213 = scmp.eq.s32.totalorder %s30, 0
      %p214 = por %p212, %p213
      %s216 = sadd.s32 %s215, 1
      %p219 = scmp.eq.s32.totalorder %s24, 1
      %p220 = scmp.ne.s32.totalorder %s215, %s217
      %p221 = scmp.eq.s32.totalorder %s24, 0
      %p222 = por %p220, %p221
      %p223 = scmp.ne.s32.totalorder %s215, %s217
      %p224 = scmp.eq.s32.totalorder %s29, 1
      %p225 = por %p223, %p224
      %p226 = scmp.ne.s32.totalorder %s217, %s218
      %p227 = scmp.eq.s32.totalorder %s29, 0
      %p228 = por %p226, %p227
      %p229 = scmp.ne.s32.totalorder %s217, %s218
      %p230 = scmp.eq.s32.totalorder %s30, 1
      %p231 = por %p229, %p230
      %p233 = scmp.ne.s32.totalorder %s218, %s232
      %p234 = scmp.eq.s32.totalorder %s30, 0
      %p235 = por %p233, %p234
      %s237 = sadd.s32 %s236, 1
      %p240 = scmp.eq.s32.totalorder %s24, 1
      %p241 = scmp.ne.s32.totalorder %s236, %s238
      %p242 = scmp.eq.s32.totalorder %s24, 0
      %p243 = por %p241, %p242
      %p244 = scmp.ne.s32.totalorder %s236, %s238
      %p245 = scmp.eq.s32.totalorder %s29, 1
      %p246 = por %p244, %p245
      %p247 = scmp.ne.s32.totalorder %s238, %s239
      %p248 = scmp.eq.s32.totalorder %s29, 0
      %p249 = por %p247, %p248
      %p250 = scmp.ne.s32.totalorder %s238, %s239
      %p251 = scmp.eq.s32.totalorder %s30, 1
      %p252 = por %p250, %p251
      %p254 = scmp.ne.s32.totalorder %s239, %s253
      %p255 = scmp.eq.s32.totalorder %s30, 0
      %p256 = por %p254, %p255
      %s258 = sadd.s32 %s257, 1
      %p261 = scmp.eq.s32.totalorder %s24, 1
      %p262 = scmp.ne.s32.totalorder %s257, %s259
      %p263 = scmp.eq.s32.totalorder %s24, 0
      %p264 = por %p262, %p263
      %p265 = scmp.ne.s32.totalorder %s257, %s259
      %p266 = scmp.eq.s32.totalorder %s29, 1
      %p267 = por %p265, %p266
      %p268 = scmp.ne.s32.totalorder %s259, %s260
      %p269 = scmp.eq.s32.totalorder %s29, 0
      %p270 = por %p268, %p269
      %p271 = scmp.ne.s32.totalorder %s259, %s260
      %p272 = scmp.eq.s32.totalorder %s30, 1
      %p273 = por %p271, %p272
      %p275 = scmp.ne.s32.totalorder %s260, %s274
      %p276 = scmp.eq.s32.totalorder %s30, 0
      %p277 = por %p275, %p276
      %s279 = sadd.s32 %s278, 1
      %p282 = scmp.eq.s32.totalorder %s24, 1
      %p283 = scmp.ne.s32.totalorder %s278, %s280
      %p284 = scmp.eq.s32.totalorder %s24, 0
      %p285 = por %p283, %p284
      %p286 = scmp.ne.s32.totalorder %s278, %s280
      %p287 = scmp.eq.s32.totalorder %s29, 1
      %p288 = por %p286, %p287
      %p289 = scmp.ne.s32.totalorder %s280, %s281
      %p290 = scmp.eq.s32.totalorder %s29, 0
      %p291 = por %p289, %p290
      %p292 = scmp.ne.s32.totalorder %s280, %s281
      %p293 = scmp.eq.s32.totalorder %s30, 1
      %p294 = por %p292, %p293
      %p296 = scmp.ne.s32.totalorder %s281, %s295
      %p297 = scmp.eq.s32.totalorder %s30, 0
      %p298 = por %p296, %p297
      %s299 = ssub.s32 %s24, %s31
      %p300 = scmp.eq.s32.totalorder %s299, 0
      %s302 = sadd.s32 %s301, 1
      %s303 = scalar_select %p300, %s301, %s302
      %p306 = pneg %p300
      %p307 = scmp.eq.s32.totalorder %s24, 1
      %p308 = por %p306, %p307
      %p309 = scmp.ne.s32.totalorder %s301, %s304
      %p310 = scmp.eq.s32.totalorder %s24, 0
      %p311 = por %p309, %p310
      %p312 = scmp.ne.s32.totalorder %s301, %s304
      %p313 = scmp.eq.s32.totalorder %s29, 1
      %p314 = por %p312, %p313
      %p315 = scmp.ne.s32.totalorder %s304, %s305
      %p316 = scmp.eq.s32.totalorder %s29, 0
      %p317 = por %p315, %p316
      %p318 = scmp.ne.s32.totalorder %s304, %s305
      %p319 = scmp.eq.s32.totalorder %s30, 1
      %p320 = por %p318, %p319
      %p322 = scmp.ne.s32.totalorder %s305, %s321
      %p323 = scmp.eq.s32.totalorder %s30, 0
      %p324 = por %p322, %p323
      %s325 = ssub.s32 %s24, %s31
      %p326 = scmp.eq.s32.totalorder %s325, 0
      %s328 = sadd.s32 %s327, 1
      %s329 = scalar_select %p326, %s327, %s328
      %p332 = pneg %p326
      %p333 = scmp.eq.s32.totalorder %s24, 1
      %p334 = por %p332, %p333
      %p335 = scmp.ne.s32.totalorder %s327, %s330
      %p336 = scmp.eq.s32.totalorder %s24, 0
      %p337 = por %p335, %p336
      %p338 = scmp.ne.s32.totalorder %s327, %s330
      %p339 = scmp.eq.s32.totalorder %s29, 1
      %p340 = por %p338, %p339
      %p341 = scmp.ne.s32.totalorder %s330, %s331
      %p342 = scmp.eq.s32.totalorder %s29, 0
      %p343 = por %p341, %p342
      %p344 = scmp.ne.s32.totalorder %s330, %s331
      %p345 = scmp.eq.s32.totalorder %s30, 1
      %p346 = por %p344, %p345
      %p348 = scmp.ne.s32.totalorder %s331, %s347
      %p349 = scmp.eq.s32.totalorder %s30, 0
      %p350 = por %p348, %p349
      %s351 = ssub.s32 %s24, %s31
      %p352 = scmp.eq.s32.totalorder %s351, 0
      %s354 = sadd.s32 %s353, 1
      %s355 = scalar_select %p352, %s353, %s354
      %p358 = pneg %p352
      %p359 = scmp.eq.s32.totalorder %s24, 1
      %p360 = por %p358, %p359
      %p361 = scmp.ne.s32.totalorder %s353, %s356
      %p362 = scmp.eq.s32.totalorder %s24, 0
      %p363 = por %p361, %p362
      %p364 = scmp.ne.s32.totalorder %s353, %s356
      %p365 = scmp.eq.s32.totalorder %s29, 1
      %p366 = por %p364, %p365
      %p367 = scmp.ne.s32.totalorder %s356, %s357
      %p368 = scmp.eq.s32.totalorder %s29, 0
      %p369 = por %p367, %p368
      %p370 = scmp.ne.s32.totalorder %s356, %s357
      %p371 = scmp.eq.s32.totalorder %s30, 1
      %p372 = por %p370, %p371
      %p374 = scmp.ne.s32.totalorder %s357, %s373
      %p375 = scmp.eq.s32.totalorder %s30, 0
      %p376 = por %p374, %p375
      %p377 = scmp.le.s32.totalorder 1, %s24
      %p378 = scmp.lt.s32.totalorder %s24, 3
      %p379 = pnand %p377, %p378
      %p380 = pneg %p379
      // Predicated region
      $region9: #{ts_transformer_forward.9} parent=5 // pred_check
        _
      $region10: #{ts_transformer_forward.9} parent=5 // pred_check_branch
        %382 = sbr.rel (%p379) target = $region12
      $region11: #{ts_transformer_forward.9} parent=5 // pred_region
        %s383 = ssub.s32 %s24, 1
        // Predicated region
        $region13: #{ts_transformer_forward.9} parent=11 // pred_check
          %p384 = pneg %p123
        $region14: #{ts_transformer_forward.9} parent=11 // pred_check_branch
          %386 = sbr.rel (%p384) target = $region16
        $region15: #{ts_transformer_forward.9} parent=11 // pred_region
          _
        $region16: #{ts_transformer_forward.9} parent=11 // pred_fallthru
          _
        // Predicated region
        $region17: #{ts_transformer_forward.9} parent=11 // pred_check
          %p387 = pneg %p144
        $region18: #{ts_transformer_forward.9} parent=11 // pred_check_branch
          %389 = sbr.rel (%p387) target = $region20
        $region19: #{ts_transformer_forward.9} parent=11 // pred_region
          _
        $region20: #{ts_transformer_forward.9} parent=11 // pred_fallthru
          _
        // Predicated region
        $region21: #{ts_transformer_forward.9} parent=11 // pred_check
          %p390 = pneg %p165
        $region22: #{ts_transformer_forward.9} parent=11 // pred_check_branch
          %392 = sbr.rel (%p390) target = $region24
        $region23: #{ts_transformer_forward.9} parent=11 // pred_region
          _
        $region24: #{ts_transformer_forward.9} parent=11 // pred_fallthru
          _
        // Predicated region
        $region25: #{ts_transformer_forward.9} parent=11 // pred_check
          %p393 = pneg %p186
        $region26: #{ts_transformer_forward.9} parent=11 // pred_check_branch
          %395 = sbr.rel (%p393) target = $region28
        $region27: #{ts_transformer_forward.9} parent=11 // pred_region
          _
        $region28: #{ts_transformer_forward.9} parent=11 // pred_fallthru
          _
        // Predicated region
        $region29: #{ts_transformer_forward.9} parent=11 // pred_check
          %p396 = pneg %p207
        $region30: #{ts_transformer_forward.9} parent=11 // pred_check_branch
          %398 = sbr.rel (%p396) target = $region32
        $region31: #{ts_transformer_forward.9} parent=11 // pred_region
          _
        $region32: #{ts_transformer_forward.9} parent=11 // pred_fallthru
          _
        // Predicated region
        $region33: #{ts_transformer_forward.9} parent=11 // pred_check
          %p399 = pneg %p228
        $region34: #{ts_transformer_forward.9} parent=11 // pred_check_branch
          %401 = sbr.rel (%p399) target = $region36
        $region35: #{ts_transformer_forward.9} parent=11 // pred_region
          _
        $region36: #{ts_transformer_forward.9} parent=11 // pred_fallthru
          _
        // Predicated region
        $region37: #{ts_transformer_forward.9} parent=11 // pred_check
          %p402 = pneg %p249
        $region38: #{ts_transformer_forward.9} parent=11 // pred_check_branch
          %404 = sbr.rel (%p402) target = $region40
        $region39: #{ts_transformer_forward.9} parent=11 // pred_region
          _
        $region40: #{ts_transformer_forward.9} parent=11 // pred_fallthru
          _
        // Predicated region
        $region41: #{ts_transformer_forward.9} parent=11 // pred_check
          %p405 = pneg %p270
        $region42: #{ts_transformer_forward.9} parent=11 // pred_check_branch
          %407 = sbr.rel (%p405) target = $region44
        $region43: #{ts_transformer_forward.9} parent=11 // pred_region
          _
        $region44: #{ts_transformer_forward.9} parent=11 // pred_fallthru
          _
        // Predicated region
        $region45: #{ts_transformer_forward.9} parent=11 // pred_check
          %p408 = pneg %p291
        $region46: #{ts_transformer_forward.9} parent=11 // pred_check_branch
          %410 = sbr.rel (%p408) target = $region48
        $region47: #{ts_transformer_forward.9} parent=11 // pred_region
          _
        $region48: #{ts_transformer_forward.9} parent=11 // pred_fallthru
          _
      $region12: #{ts_transformer_forward.9} parent=5 // pred_fallthru
        _
      %p411 = scmp.lt.s32.totalorder %s24, 2
      // Predicated region
      $region49: #{ts_transformer_forward.9} parent=5 // pred_check
        %p412 = pneg %p411
      $region50: #{ts_transformer_forward.9} parent=5 // pred_check_branch
        %414 = sbr.rel (%p412) target = $region52
      $region51: #{ts_transformer_forward.9} parent=5 // pred_region
        // Predicated region
        $region53: #{ts_transformer_forward.9} parent=51 // pred_check
          %p415 = pneg %p44
        $region54: #{ts_transformer_forward.9} parent=51 // pred_check_branch
          %417 = sbr.rel (%p415) target = $region56
        $region55: #{ts_transformer_forward.9} parent=51 // pred_region
          %p418 = scmp.lt.s32.totalorder %s24, 1
          %s419 = scalar_select %p418, %s24, 1
          %s420 = smul.addr %s419, 4
          %s421 = scalar_lea.vmem %s0, %s420
        $region56: #{ts_transformer_forward.9} parent=51 // pred_fallthru
          _
        // Predicated region
        $region57: #{ts_transformer_forward.9} parent=51 // pred_check
          %p422 = pneg %p70
        $region58: #{ts_transformer_forward.9} parent=51 // pred_check_branch
          %424 = sbr.rel (%p422) target = $region60
        $region59: #{ts_transformer_forward.9} parent=51 // pred_region
          %p425 = scmp.lt.s32.totalorder %s24, 1
          %s426 = scalar_select %p425, %s24, 1
          %s427 = smul.addr %s426, 2
          %s428 = smul.addr %s427, 4
          %s429 = scalar_lea.vmem %s1, %s428
        $region60: #{ts_transformer_forward.9} parent=51 // pred_fallthru
          _
        // Predicated region
        $region61: #{ts_transformer_forward.9} parent=51 // pred_check
          %p430 = pneg %p96
        $region62: #{ts_transformer_forward.9} parent=51 // pred_check_branch
          %432 = sbr.rel (%p430) target = $region64
        $region63: #{ts_transformer_forward.9} parent=51 // pred_region
          %p433 = scmp.lt.s32.totalorder %s24, 1
          %s434 = scalar_select %p433, %s24, 1
          %s435 = scalar_lea.vmem %s2, %s434
        $region64: #{ts_transformer_forward.9} parent=51 // pred_fallthru
          _
      $region52: #{ts_transformer_forward.9} parent=5 // pred_fallthru
        _
      %p436 = scmp.le.s32.totalorder 1, %s24
      %p437 = scmp.lt.s32.totalorder %s24, 3
      %p438 = pnand %p436, %p437
      %p439 = pneg %p438
      // Predicated region
      $region65: #{ts_transformer_forward.9} parent=5 // pred_check
        _
      $region66: #{ts_transformer_forward.9} parent=5 // pred_check_branch
        %441 = sbr.rel (%p438) target = $region68
      $region67: #{ts_transformer_forward.9} parent=5 // pred_region
        %s442 = ssub.s32 %s24, 1
        %p443 = scmp.lt.s32.totalorder %s29, 1
        %s444 = scalar_select %p443, %s29, 1
        %s445 = smul.addr %s444, 4
        %s446 = scalar_lea.vmem %s0, %s445
        %p447 = pneg %p50
        %p448 = pneg %p47
        %p449 = scmp.lt.s32.totalorder %s29, 1
        %s450 = scalar_select %p449, %s29, 1
        %s451 = smul.addr %s450, 2
        %s452 = smul.addr %s451, 4
        %s453 = scalar_lea.vmem %s1, %s452
        %p454 = pneg %p76
        %p455 = pneg %p73
        %p456 = scmp.lt.s32.totalorder %s29, 1
        %s457 = scalar_select %p456, %s29, 1
        %s458 = scalar_lea.vmem %s2, %s457
        %p459 = pneg %p102
        %p460 = pneg %p99
        %p461 = pneg %p123
        %p462 = pneg %p120
        %p463 = pneg %p144
        %p464 = pneg %p141
        %p465 = pneg %p165
        %p466 = pneg %p162
        %p467 = pneg %p186
        %p468 = pneg %p183
        %p469 = pneg %p207
        %p470 = pneg %p204
        %p471 = pneg %p228
        %p472 = pneg %p225
        %p473 = pneg %p249
        %p474 = pneg %p246
        %p475 = pneg %p270
        %p476 = pneg %p267
        %p477 = pneg %p291
        %p478 = pneg %p288
        %p479 = pneg %p317
        %p480 = pneg %p314
        %s481 = sand.u32 %s304, 1
        %s482 = scalar_lea.sflag [#allocation4], %s481
        %s483 = sand.u32 %s304, 1
        %s484 = smul.addr %s483, 8
        %s485 = scalar_lea.vmem [#allocation3], %s484
        %p486 = pneg %p343
        %p487 = pneg %p340
        %p488 = scmp.lt.s32.totalorder %s29, 1
        %s489 = scalar_select %p488, %s29, 1
        %s490 = smul.addr %s489, 4
        %s491 = scalar_lea.vmem %s13, %s490
        %p492 = pneg %p369
        %p493 = pneg %p366
        %p494 = scmp.lt.s32.totalorder %s29, 1
        %s495 = scalar_select %p494, %s29, 1
        %s496 = smul.addr %s495, 8
        %s497 = smul.addr %s496, 4
        %s498 = scalar_lea.vmem %s14, %s497
        %p499 = scmp.lt.s32.totalorder %s29, 1
        %s500 = scalar_select %p499, %s29, 1
        %s501 = smul.addr %s500, 4
        %s502 = scalar_lea.vmem %s0, %s501
        %p503 = scmp.lt.s32.totalorder %s29, 1
        %s504 = scalar_select %p503, %s29, 1
        %s505 = smul.addr %s504, 2
        %s506 = smul.addr %s505, 4
        %s507 = scalar_lea.vmem %s1, %s506
        %p508 = scmp.lt.s32.totalorder %s29, 1
        %s509 = scalar_select %p508, %s29, 1
        %s510 = scalar_lea.vmem %s2, %s509
        %p511 = scmp.lt.s32.totalorder %s29, 1
        %s512 = scalar_select %p511, %s29, 1
        %s513 = smul.addr %s512, 4
        %s514 = scalar_lea.vmem %s13, %s513
        %p515 = scmp.lt.s32.totalorder %s29, 1
        %s516 = scalar_select %p515, %s29, 1
        %s517 = smul.addr %s516, 8
        %s518 = smul.addr %s517, 4
        %s519 = scalar_lea.vmem %s14, %s518
        %v521 = vld [vmem:[%s510] sm:$0x1]
        %v522 = vld [vmem:[%s502] sm:$0xf]
        %v523 = vld [vmem:[%s3] sm:$0xff]
        %v524 = vld [vmem:[%s3 + $0x8] sm:$0xf]
        %v525 = vld [vmem:[%s3 + $0xc] sm:$0xff]
        %v526 = vld [vmem:[%s3 + $0x14] sm:$0xf]
        %v527 = vld [vmem:[%s3 + $0x18] sm:$0xff]
        %v528 = vld [vmem:[%s3 + $0x20] sm:$0xf]
        %v529 = vld [vmem:[%s3 + $0x24] sm:$0xff]
        %v530 = vld [vmem:[%s3 + $0x2c] sm:$0xf]
        %v531 = vld [vmem:[%s4] sm:$0x7]
        %v533 = vlaneseq
        %v534 = vshrl.u32 %v533, 7
        %v535 = vsub.s32 0, %v534
        %v536 = vrot.slane %v531, %v535
        %v537 = vlaneseq
        %v538 = vshrl.u32 %v537, 7
        %v539 = vsub.s32 1, %v538
        %v540 = vrot.slane %v531, %v539
        %v541 = vlaneseq
        %v542 = vshrl.u32 %v541, 7
        %v543 = vsub.s32 2, %v542
        %v544 = vrot.slane %v531, %v543
        %v556 = vunpack.c.l.b16 %v523
        %v557 = vunpack.c.h.b16 %v523
        %v558 = vunpack.c.l.b16 %v524
        %v559 = vunpack.c.l.b16 %v525
        %v560 = vunpack.c.h.b16 %v525
        %v561 = vunpack.c.l.b16 %v526
        %v562 = vunpack.c.l.b16 %v527
        %v563 = vunpack.c.h.b16 %v527
        %v564 = vunpack.c.l.b16 %v528
        %v565 = vunpack.c.l.b16 %v529
        %v566 = vunpack.c.h.b16 %v529
        %v567 = vunpack.c.l.b16 %v530
        %v568 = vpack.c.b16 %v559, %v556
        %v569 = vpack.c.b16 %v560, %v557
        %v570 = vpack.c.b16 %v561, %v558
        %v571 = vpack.c.b16 %v565, %v562
        %v572 = vpack.c.b16 %v566, %v563
        %v573 = vpack.c.b16 %v567, %v564
        %vm580 = vcmask 261120
        %v582 = vsel %vm580, %v522, 0
        %584 = vmatprep.subr.bf16.mxu0 0
        %585 = vmatpush1.bf16.msra.mxu0 0
        %586 = vmatprep.subr.bf16.mxu0 0
        %587 = vmatpush1.bf16.msra.mxu0 0
        %588 = vmatprep.subr.bf16.mxu0 0
        %589 = vmatpush1.bf16.msra.mxu0 0
        %590 = vmatprep.subr.bf16.mxu0 0
        %591 = vmatpush1.bf16.msra.mxu0 0
        %592 = vmatprep.subr.bf16.mxu0 0
        %593 = vmatpush1.bf16.msra.mxu0 0
        %594 = vmatprep.subr.bf16.mxu0 0
        %595 = vmatpush1.bf16.msra.mxu0 0
        %596 = vmatprep.subr.bf16.mxu0 %v572
        %597 = vmatpush1.bf16.msra.mxu0 %v571
        %598 = vmatprep.subr.bf16.mxu0 %v569
        %599 = vmatpush1.bf16.msra.mxu0 %v568
        %600 = vmatprep.subr.bf16.mxu0 0
        %601 = vmatpush2.bf16.msra.mxu0 0
        %602 = vmatprep.subr.bf16.mxu0 0
        %603 = vmatpush2.bf16.msra.mxu0 0
        %604 = vmatprep.subr.bf16.mxu0 0
        %605 = vmatpush2.bf16.msra.mxu0 0
        %606 = vmatprep.subr.bf16.mxu0 0
        %607 = vmatpush2.bf16.msra.mxu0 0
        %608 = vmatprep.subr.bf16.mxu0 0
        %609 = vmatpush2.bf16.msra.mxu0 0
        %610 = vmatprep.subr.bf16.mxu0 0
        %611 = vmatpush2.bf16.msra.mxu0 0
        %612 = vmatprep.subr.bf16.mxu0 0
        %613 = vmatpush2.bf16.msra.mxu0 0
        %614 = vmatprep.subr.bf16.mxu0 0
        %615 = vmatpush2.bf16.msra.mxu0 0
        %616 = vmatprep.mubr.bf16.mxu0 0
        %617 = vmatmul.mubr.bf16.gmra.mxu0 %v582
        %v618 = vpop.f32.mrf.mxu0
        %v619 = vadd.f32 %v536, %v618
        %v620 = vpop.f32.mrf.mxu0
        %v621 = vadd.f32 %v540, %v620
        %v622 = vpop.f32.mrf.mxu0
        %v623 = vpop.f32.mrf.mxu0
        %624 = vdwg.mxu0
        %625 = vmatprep.subr.bf16.mxu0 0
        %626 = vmatpush1.bf16.msra.mxu0 0
        %627 = vmatprep.subr.bf16.mxu0 0
        %628 = vmatpush1.bf16.msra.mxu0 0
        %629 = vmatprep.subr.bf16.mxu0 0
        %630 = vmatpush1.bf16.msra.mxu0 0
        %631 = vmatprep.subr.bf16.mxu0 0
        %632 = vmatpush1.bf16.msra.mxu0 0
        %633 = vmatprep.subr.bf16.mxu0 0
        %634 = vmatpush1.bf16.msra.mxu0 0
        %635 = vmatprep.subr.bf16.mxu0 0
        %636 = vmatpush1.bf16.msra.mxu0 0
        %637 = vmatprep.subr.bf16.mxu0 0
        %638 = vmatpush1.bf16.msra.mxu0 %v573
        %639 = vmatprep.subr.bf16.mxu0 0
        %640 = vmatpush1.bf16.msra.mxu0 %v570
        %641 = vmatprep.subr.bf16.mxu0 0
        %642 = vmatpush2.bf16.msra.mxu0 0
        %643 = vmatprep.subr.bf16.mxu0 0
        %644 = vmatpush2.bf16.msra.mxu0 0
        %645 = vmatprep.subr.bf16.mxu0 0
        %646 = vmatpush2.bf16.msra.mxu0 0
        %647 = vmatprep.subr.bf16.mxu0 0
        %648 = vmatpush2.bf16.msra.mxu0 0
        %649 = vmatprep.subr.bf16.mxu0 0
        %650 = vmatpush2.bf16.msra.mxu0 0
        %651 = vmatprep.subr.bf16.mxu0 0
        %652 = vmatpush2.bf16.msra.mxu0 0
        %653 = vmatprep.subr.bf16.mxu0 0
        %654 = vmatpush2.bf16.msra.mxu0 0
        %655 = vmatprep.subr.bf16.mxu0 0
        %656 = vmatpush2.bf16.msra.mxu0 0
        %657 = vmatprep.mubr.bf16.mxu0 0
        %658 = vmatmul.mubr.bf16.gmra.mxu0 %v582
        %v659 = vpop.f32.mrf.mxu0
        %v660 = vadd.f32 %v544, %v659
        %v661 = vpop.f32.mrf.mxu0
        %v662 = vpop.f32.mrf.mxu0
        %v663 = vpop.f32.mrf.mxu0
        %664 = vdwg.mxu0
        %v665 = vpack.c.bf16 %v619, %v619
        %v666 = vpack.c.bf16 %v660, %v660
        %v667 = vld [vmem:[%s507] sm:$0xf]
        %v668 = vld [vmem:[%s507 + $0x4] sm:$0xf]
        %v669 = vld [vmem:[%s5] sm:$0xf]
        %v670 = vld [vmem:[%s5 + $0x4] sm:$0xf]
        %v671 = vld [vmem:[%s5 + $0x8] sm:$0xf]
        %v672 = vld [vmem:[%s5 + $0xc] sm:$0xf]
        %v673 = vld [vmem:[%s6] sm:$0x1]
        %v675 = vlaneseq
        %v676 = vshrl.u32 %v675, 7
        %v677 = vsub.s32 0, %v676
        %v678 = vrot.slane %v673, %v677
        %v682 = vunpack.c.l.b16 %v667
        %v683 = vunpack.c.l.b16 %v668
        %v684 = vpack.c.b16 %v683, %v682
        %v689 = vunpack.c.l.b16 %v669
        %v690 = vunpack.c.l.b16 %v670
        %v691 = vunpack.c.l.b16 %v671
        %v692 = vunpack.c.l.b16 %v672
        %v693 = vpack.c.b16 %v690, %v689
        %v694 = vpack.c.b16 %v692, %v691
        %v698 = vsel %vm580, %v684, 0
        %700 = vmatprep.subr.bf16.mxu0 0
        %701 = vmatpush1.bf16.msra.mxu0 0
        %702 = vmatprep.subr.bf16.mxu0 0
        %703 = vmatpush1.bf16.msra.mxu0 0
        %704 = vmatprep.subr.bf16.mxu0 0
        %705 = vmatpush1.bf16.msra.mxu0 0
        %706 = vmatprep.subr.bf16.mxu0 0
        %707 = vmatpush1.bf16.msra.mxu0 0
        %708 = vmatprep.subr.bf16.mxu0 0
        %709 = vmatpush1.bf16.msra.mxu0 0
        %710 = vmatprep.subr.bf16.mxu0 0
        %711 = vmatpush1.bf16.msra.mxu0 0
        %712 = vmatprep.subr.bf16.mxu0 0
        %713 = vmatpush1.bf16.msra.mxu0 %v694
        %714 = vmatprep.subr.bf16.mxu0 0
        %715 = vmatpush1.bf16.msra.mxu0 %v693
        %716 = vmatprep.subr.bf16.mxu0 0
        %717 = vmatpush2.bf16.msra.mxu0 0
        %718 = vmatprep.subr.bf16.mxu0 0
        %719 = vmatpush2.bf16.msra.mxu0 0
        %720 = vmatprep.subr.bf16.mxu0 0
        %721 = vmatpush2.bf16.msra.mxu0 0
        %722 = vmatprep.subr.bf16.mxu0 0
        %723 = vmatpush2.bf16.msra.mxu0 0
        %724 = vmatprep.subr.bf16.mxu0 0
        %725 = vmatpush2.bf16.msra.mxu0 0
        %726 = vmatprep.subr.bf16.mxu0 0
        %727 = vmatpush2.bf16.msra.mxu0 0
        %728 = vmatprep.subr.bf16.mxu0 0
        %729 = vmatpush2.bf16.msra.mxu0 0
        %730 = vmatprep.subr.bf16.mxu0 0
        %731 = vmatpush2.bf16.msra.mxu0 0
        %732 = vmatprep.mubr.bf16.mxu0 0
        %733 = vmatmul.mubr.bf16.gmra.mxu0 %v698
        %v734 = vpop.f32.mrf.mxu0
        %v735 = vadd.f32 %v678, %v734
        %v736 = vpop.f32.mrf.mxu0
        %v737 = vpop.f32.mrf.mxu0
        %v738 = vadd.f32 %v678, %v737
        %v739 = vpop.f32.mrf.mxu0
        %740 = vdwg.mxu0
        %v741 = vmul.f32 %v735, 0.4082483
        %v742 = vmul.f32 %v738, 0.4082483
        %v743 = vpack.c.bf16 %v742, %v741
        %v745 = vlaneseq
        %v746 = vshrl.u32 %v745, 7
        %v747 = vsub.s32 0, %v746
        %v748 = vrot.slane %v521, %v747
        %vm750 = vcmask 48128
        %v752 = vsel %vm750, %v743, 0
        %v755 = vsel %vm750, %v666, 0
        %757 = vmatprep.subr.bf16.mxu0 0
        %758 = vmatpush1.bf16.xpose.msra.mxu0 0
        %759 = vmatprep.subr.bf16.mxu0 0
        %760 = vmatpush1.bf16.xpose.msra.mxu0 0
        %761 = vmatprep.subr.bf16.mxu0 0
        %762 = vmatpush1.bf16.xpose.msra.mxu0 0
        %763 = vmatprep.subr.bf16.mxu0 0
        %764 = vmatpush1.bf16.xpose.msra.mxu0 0
        %765 = vmatprep.subr.bf16.mxu0 0
        %766 = vmatpush1.bf16.xpose.msra.mxu0 0
        %767 = vmatprep.subr.bf16.mxu0 0
        %768 = vmatpush1.bf16.xpose.msra.mxu0 0
        %769 = vmatprep.subr.bf16.mxu0 0
        %770 = vmatpush1.bf16.xpose.msra.mxu0 0
        %771 = vmatprep.subr.bf16.mxu0 0
        %772 = vmatpush1.bf16.xpose.msra.mxu0 %v755
        %773 = vmatprep.subr.bf16.mxu0 0
        %774 = vmatpush2.bf16.xpose.msra.mxu0 0
        %775 = vmatprep.subr.bf16.mxu0 0
        %776 = vmatpush2.bf16.xpose.msra.mxu0 0
        %777 = vmatprep.subr.bf16.mxu0 0
        %778 = vmatpush2.bf16.xpose.msra.mxu0 0
        %779 = vmatprep.subr.bf16.mxu0 0
        %780 = vmatpush2.bf16.xpose.msra.mxu0 0
        %781 = vmatprep.subr.bf16.mxu0 0
        %782 = vmatpush2.bf16.xpose.msra.mxu0 0
        %783 = vmatprep.subr.bf16.mxu0 0
        %784 = vmatpush2.bf16.xpose.msra.mxu0 0
        %785 = vmatprep.subr.bf16.mxu0 0
        %786 = vmatpush2.bf16.xpose.msra.mxu0 0
        %787 = vmatprep.subr.bf16.mxu0 0
        %788 = vmatpush2.bf16.xpose.msra.mxu0 0
        %789 = vmatprep.mubr.bf16.mxu0 0
        %790 = vmatmul.mubr.bf16.gmra.mxu0 %v752
        %v791 = vpop.f32.mrf.mxu0
        %v792 = vadd.f32 %v748, %v791
        %v793 = vpop.f32.mrf.mxu0
        %v794 = vpop.f32.mrf.mxu0
        %v795 = vadd.f32 %v748, %v794
        %v796 = vpop.f32.mrf.mxu0
        %797 = vdwg.mxu0
        %vm798 = vcmask 64512
        %v799 = vsel %vm798, %v792, -inf
        %800 = vmax.xlane.f32.xlu0 %v799
        %v801 = vpop.xlane.xlu0 %800
        %v802 = vsel %vm798, %v795, -inf
        %803 = vmax.xlane.f32.xlu0 %v802
        %v804 = vpop.xlane.xlu0 %803
        %v805 = vsub.f32 %v792, %v801
        %v806 = vsub.f32 %v795, %v804
        %v807 = vmul.f32 %v805, 1.442695
        %v808 = vpow.pop %v807
        %v809 = vmul.f32 %v806, 1.442695
        %v810 = vpow.pop %v809
        %v811 = vsel %vm798, %v808, 0.0
        %812 = vadd.xlane.f32.xlu0 %v811
        %v813 = vpop.xlane.xlu0 %812
        %v814 = vsel %vm798, %v810, 0.0
        %815 = vadd.xlane.f32.xlu0 %v814
        %v816 = vpop.xlane.xlu0 %815
        %v817 = vrcp.pop %v813
        %v818 = vmul.f32 %v808, %v817
        %v819 = vrcp.pop %v816
        %v820 = vmul.f32 %v810, %v819
        %v821 = vpack.c.bf16 %v820, %v818
        %v823 = vsel %vm798, %v821, 0
        %vm825 = vcmask 1043456
        %v827 = vsel %vm825, %v665, 0
        %829 = vmatprep.subr.bf16.mxu0 0
        %830 = vmatpush1.bf16.msra.mxu0 0
        %831 = vmatprep.subr.bf16.mxu0 0
        %832 = vmatpush1.bf16.msra.mxu0 0
        %833 = vmatprep.subr.bf16.mxu0 0
        %834 = vmatpush1.bf16.msra.mxu0 0
        %835 = vmatprep.subr.bf16.mxu0 0
        %836 = vmatpush1.bf16.msra.mxu0 0
        %837 = vmatprep.subr.bf16.mxu0 0
        %838 = vmatpush1.bf16.msra.mxu0 0
        %839 = vmatprep.subr.bf16.mxu0 0
        %840 = vmatpush1.bf16.msra.mxu0 0
        %841 = vmatprep.subr.bf16.mxu0 0
        %842 = vmatpush1.bf16.msra.mxu0 0
        %843 = vmatprep.subr.bf16.mxu0 0
        %844 = vmatpush1.bf16.msra.mxu0 %v827
        %845 = vmatprep.subr.bf16.mxu0 0
        %846 = vmatpush2.bf16.msra.mxu0 0
        %847 = vmatprep.subr.bf16.mxu0 0
        %848 = vmatpush2.bf16.msra.mxu0 0
        %849 = vmatprep.subr.bf16.mxu0 0
        %850 = vmatpush2.bf16.msra.mxu0 0
        %851 = vmatprep.subr.bf16.mxu0 0
        %852 = vmatpush2.bf16.msra.mxu0 0
        %853 = vmatprep.subr.bf16.mxu0 0
        %854 = vmatpush2.bf16.msra.mxu0 0
        %855 = vmatprep.subr.bf16.mxu0 0
        %856 = vmatpush2.bf16.msra.mxu0 0
        %857 = vmatprep.subr.bf16.mxu0 0
        %858 = vmatpush2.bf16.msra.mxu0 0
        %859 = vmatprep.subr.bf16.mxu0 0
        %860 = vmatpush2.bf16.msra.mxu0 0
        %861 = vmatprep.mubr.bf16.mxu0 0
        %862 = vmatmul.mubr.bf16.gmra.mxu0 %v823
        %v863 = vpop.f32.mrf.mxu0
        %v864 = vadd.f32 0.0, %v863
        %v865 = vpop.f32.mrf.mxu0
        %v866 = vpop.f32.mrf.mxu0
        %v867 = vadd.f32 0.0, %v866
        %v868 = vpop.f32.mrf.mxu0
        %869 = vdwg.mxu0
        %v870 = vpack.c.bf16 %v867, %v864
        %v872 = vunpack.c.l.b16 %v870
        %v873 = vunpack.c.h.b16 %v870
        %v874 = vpack.c.b16 %v872, %v872
        %v875 = vpack.c.b16 %v873, %v873
        %vm878 = vcmask 60416
        %879 = vst.msk [vmem:[%s485] sm:$0xf] %vm878, %v874
        %880 = vst.msk [vmem:[%s485 + $0x4] sm:$0xf] %vm878, %v875
        %882 = vrot.lane.b32.xlu0 %v743, 122
        %v883 = vpop.permute.xlu0 %882
        %885 = vrot.lane.b32.xlu0 %v666, 122
        %v886 = vpop.permute.xlu0 %885
        %v888 = vsel %vm750, %v883, 0
        %v891 = vsel %vm750, %v886, 0
        %893 = vmatprep.subr.bf16.mxu0 0
        %894 = vmatpush1.bf16.xpose.msra.mxu0 0
        %895 = vmatprep.subr.bf16.mxu0 0
        %896 = vmatpush1.bf16.xpose.msra.mxu0 0
        %897 = vmatprep.subr.bf16.mxu0 0
        %898 = vmatpush1.bf16.xpose.msra.mxu0 0
        %899 = vmatprep.subr.bf16.mxu0 0
        %900 = vmatpush1.bf16.xpose.msra.mxu0 0
        %901 = vmatprep.subr.bf16.mxu0 0
        %902 = vmatpush1.bf16.xpose.msra.mxu0 0
        %903 = vmatprep.subr.bf16.mxu0 0
        %904 = vmatpush1.bf16.xpose.msra.mxu0 0
        %905 = vmatprep.subr.bf16.mxu0 0
        %906 = vmatpush1.bf16.xpose.msra.mxu0 0
        %907 = vmatprep.subr.bf16.mxu0 0
        %908 = vmatpush1.bf16.xpose.msra.mxu0 %v891
        %909 = vmatprep.subr.bf16.mxu0 0
        %910 = vmatpush2.bf16.xpose.msra.mxu0 0
        %911 = vmatprep.subr.bf16.mxu0 0
        %912 = vmatpush2.bf16.xpose.msra.mxu0 0
        %913 = vmatprep.subr.bf16.mxu0 0
        %914 = vmatpush2.bf16.xpose.msra.mxu0 0
        %915 = vmatprep.subr.bf16.mxu0 0
        %916 = vmatpush2.bf16.xpose.msra.mxu0 0
        %917 = vmatprep.subr.bf16.mxu0 0
        %918 = vmatpush2.bf16.xpose.msra.mxu0 0
        %919 = vmatprep.subr.bf16.mxu0 0
        %920 = vmatpush2.bf16.xpose.msra.mxu0 0
        %921 = vmatprep.subr.bf16.mxu0 0
        %922 = vmatpush2.bf16.xpose.msra.mxu0 0
        %923 = vmatprep.subr.bf16.mxu0 0
        %924 = vmatpush2.bf16.xpose.msra.mxu0 0
        %925 = vmatprep.mubr.bf16.mxu0 0
        %926 = vmatmul.mubr.bf16.gmra.mxu0 %v888
        %v927 = vpop.f32.mrf.mxu0
        %v928 = vadd.f32 %v748, %v927
        %v929 = vpop.f32.mrf.mxu0
        %v930 = vpop.f32.mrf.mxu0
        %v931 = vadd.f32 %v748, %v930
        %v932 = vpop.f32.mrf.mxu0
        %933 = vdwg.mxu0
        %v934 = vsel %vm798, %v928, -inf
        %935 = vmax.xlane.f32.xlu0 %v934
        %v936 = vpop.xlane.xlu0 %935
        %v937 = vsel %vm798, %v931, -inf
        %938 = vmax.xlane.f32.xlu0 %v937
        %v939 = vpop.xlane.xlu0 %938
        %v940 = vsub.f32 %v928, %v936
        %v941 = vsub.f32 %v931, %v939
        %v942 = vmul.f32 %v940, 1.442695
        %v943 = vpow.pop %v942
        %v944 = vmul.f32 %v941, 1.442695
        %v945 = vpow.pop %v944
        %v946 = vsel %vm798, %v943, 0.0
        %947 = vadd.xlane.f32.xlu0 %v946
        %v948 = vpop.xlane.xlu0 %947
        %v949 = vsel %vm798, %v945, 0.0
        %950 = vadd.xlane.f32.xlu0 %v949
        %v951 = vpop.xlane.xlu0 %950
        %v952 = vrcp.pop %v948
        %v953 = vmul.f32 %v943, %v952
        %v954 = vrcp.pop %v951
        %v955 = vmul.f32 %v945, %v954
        %v956 = vpack.c.bf16 %v955, %v953
        %958 = vrot.lane.b32.xlu0 %v665, 120
        %v959 = vpop.permute.xlu0 %958
        %v961 = vsel %vm798, %v956, 0
        %v964 = vsel %vm825, %v959, 0
        %966 = vmatprep.subr.bf16.mxu0 0
        %967 = vmatpush1.bf16.msra.mxu0 0
        %968 = vmatprep.subr.bf16.mxu0 0
        %969 = vmatpush1.bf16.msra.mxu0 0
        %970 = vmatprep.subr.bf16.mxu0 0
        %971 = vmatpush1.bf16.msra.mxu0 0
        %972 = vmatprep.subr.bf16.mxu0 0
        %973 = vmatpush1.bf16.msra.mxu0 0
        %974 = vmatprep.subr.bf16.mxu0 0
        %975 = vmatpush1.bf16.msra.mxu0 0
        %976 = vmatprep.subr.bf16.mxu0 0
        %977 = vmatpush1.bf16.msra.mxu0 0
        %978 = vmatprep.subr.bf16.mxu0 0
        %979 = vmatpush1.bf16.msra.mxu0 0
        %980 = vmatprep.subr.bf16.mxu0 0
        %981 = vmatpush1.bf16.msra.mxu0 %v964
        %982 = vmatprep.subr.bf16.mxu0 0
        %983 = vmatpush2.bf16.msra.mxu0 0
        %984 = vmatprep.subr.bf16.mxu0 0
        %985 = vmatpush2.bf16.msra.mxu0 0
        %986 = vmatprep.subr.bf16.mxu0 0
        %987 = vmatpush2.bf16.msra.mxu0 0
        %988 = vmatprep.subr.bf16.mxu0 0
        %989 = vmatpush2.bf16.msra.mxu0 0
        %990 = vmatprep.subr.bf16.mxu0 0
        %991 = vmatpush2.bf16.msra.mxu0 0
        %992 = vmatprep.subr.bf16.mxu0 0
        %993 = vmatpush2.bf16.msra.mxu0 0
        %994 = vmatprep.subr.bf16.mxu0 0
        %995 = vmatpush2.bf16.msra.mxu0 0
        %996 = vmatprep.subr.bf16.mxu0 0
        %997 = vmatpush2.bf16.msra.mxu0 0
        %998 = vmatprep.mubr.bf16.mxu0 0
        %999 = vmatmul.mubr.bf16.gmra.mxu0 %v961
        %v1000 = vpop.f32.mrf.mxu0
        %v1001 = vadd.f32 0.0, %v1000
        %v1002 = vpop.f32.mrf.mxu0
        %v1003 = vpop.f32.mrf.mxu0
        %v1004 = vadd.f32 0.0, %v1003
        %v1005 = vpop.f32.mrf.mxu0
        %1006 = vdwg.mxu0
        %v1007 = vpack.c.bf16 %v1004, %v1001
        %v1009 = vunpack.c.l.b16 %v1007
        %v1010 = vunpack.c.h.b16 %v1007
        %v1011 = vpack.c.b16 %v1009, %v1009
        %v1012 = vpack.c.b16 %v1010, %v1010
        %1013 = vrot.lane.b32.xlu0 %v1011, 8
        %v1014 = vpop.permute.xlu0 %1013
        %1015 = vrot.lane.b32.xlu0 %v1012, 8
        %v1016 = vpop.permute.xlu0 %1015
        %vm1019 = vcmask 126016
        %1020 = vst.msk [vmem:[%s485] sm:$0xf] %vm1019, %v1014
        %1021 = vst.msk [vmem:[%s485 + $0x4] sm:$0xf] %vm1019, %v1016
        %1022 = vrot.lane.b32.xlu0 %v743, 116
        %v1023 = vpop.permute.xlu0 %1022
        %1024 = vrot.lane.b32.xlu0 %v666, 116
        %v1025 = vpop.permute.xlu0 %1024
        %v1027 = vsel %vm750, %v1023, 0
        %v1030 = vsel %vm750, %v1025, 0
        %1032 = vmatprep.subr.bf16.mxu0 0
        %1033 = vmatpush1.bf16.xpose.msra.mxu0 0
        %1034 = vmatprep.subr.bf16.mxu0 0
        %1035 = vmatpush1.bf16.xpose.msra.mxu0 0
        %1036 = vmatprep.subr.bf16.mxu0 0
        %1037 = vmatpush1.bf16.xpose.msra.mxu0 0
        %1038 = vmatprep.subr.bf16.mxu0 0
        %1039 = vmatpush1.bf16.xpose.msra.mxu0 0
        %1040 = vmatprep.subr.bf16.mxu0 0
        %1041 = vmatpush1.bf16.xpose.msra.mxu0 0
        %1042 = vmatprep.subr.bf16.mxu0 0
        %1043 = vmatpush1.bf16.xpose.msra.mxu0 0
        %1044 = vmatprep.subr.bf16.mxu0 0
        %1045 = vmatpush1.bf16.xpose.msra.mxu0 0
        %1046 = vmatprep.subr.bf16.mxu0 0
        %1047 = vmatpush1.bf16.xpose.msra.mxu0 %v1030
        %1048 = vmatprep.subr.bf16.mxu0 0
        %1049 = vmatpush2.bf16.xpose.msra.mxu0 0
        %1050 = vmatprep.subr.bf16.mxu0 0
        %1051 = vmatpush2.bf16.xpose.msra.mxu0 0
        %1052 = vmatprep.subr.bf16.mxu0 0
        %1053 = vmatpush2.bf16.xpose.msra.mxu0 0
        %1054 = vmatprep.subr.bf16.mxu0 0
        %1055 = vmatpush2.bf16.xpose.msra.mxu0 0
        %1056 = vmatprep.subr.bf16.mxu0 0
        %1057 = vmatpush2.bf16.xpose.msra.mxu0 0
        %1058 = vmatprep.subr.bf16.mxu0 0
        %1059 = vmatpush2.bf16.xpose.msra.mxu0 0
        %1060 = vmatprep.subr.bf16.mxu0 0
        %1061 = vmatpush2.bf16.xpose.msra.mxu0 0
        %1062 = vmatprep.subr.bf16.mxu0 0
        %1063 = vmatpush2.bf16.xpose.msra.mxu0 0
        %1064 = vmatprep.mubr.bf16.mxu0 0
        %1065 = vmatmul.mubr.bf16.gmra.mxu0 %v1027
        %v1066 = vpop.f32.mrf.mxu0
        %v1067 = vadd.f32 %v748, %v1066
        %v1068 = vpop.f32.mrf.mxu0
        %v1069 = vpop.f32.mrf.mxu0
        %v1070 = vadd.f32 %v748, %v1069
        %v1071 = vpop.f32.mrf.mxu0
        %1072 = vdwg.mxu0
        %v1073 = vsel %vm798, %v1067, -inf
        %1074 = vmax.xlane.f32.xlu0 %v1073
        %v1075 = vpop.xlane.xlu0 %1074
        %v1076 = vsel %vm798, %v1070, -inf
        %1077 = vmax.xlane.f32.xlu0 %v1076
        %v1078 = vpop.xlane.xlu0 %1077
        %v1079 = vsub.f32 %v1067, %v1075
        %v1080 = vsub.f32 %v1070, %v1078
        %v1081 = vmul.f32 %v1079, 1.442695
        %v1082 = vpow.pop %v1081
        %v1083 = vmul.f32 %v1080, 1.442695
        %v1084 = vpow.pop %v1083
        %v1085 = vsel %vm798, %v1082, 0.0
        %1086 = vadd.xlane.f32.xlu0 %v1085
        %v1087 = vpop.xlane.xlu0 %1086
        %v1088 = vsel %vm798, %v1084, 0.0
        %1089 = vadd.xlane.f32.xlu0 %v1088
        %v1090 = vpop.xlane.xlu0 %1089
        %v1091 = vrcp.pop %v1087
        %v1092 = vmul.f32 %v1082, %v1091
        %v1093 = vrcp.pop %v1090
        %v1094 = vmul.f32 %v1084, %v1093
        %v1095 = vpack.c.bf16 %v1094, %v1092
        %1096 = vrot.lane.b32.xlu0 %v665, 112
        %v1097 = vpop.permute.xlu0 %1096
        %v1099 = vsel %vm798, %v1095, 0
        %v1102 = vsel %vm825, %v1097, 0
        %1104 = vmatprep.subr.bf16.mxu0 0
        %1105 = vmatpush1.bf16.msra.mxu0 0
        %1106 = vmatprep.subr.bf16.mxu0 0
        %1107 = vmatpush1.bf16.msra.mxu0 0
        %1108 = vmatprep.subr.bf16.mxu0 0
        %1109 = vmatpush1.bf16.msra.mxu0 0
        %1110 = vmatprep.subr.bf16.mxu0 0
        %1111 = vmatpush1.bf16.msra.mxu0 0
        %1112 = vmatprep.subr.bf16.mxu0 0
        %1113 = vmatpush1.bf16.msra.mxu0 0
        %1114 = vmatprep.subr.bf16.mxu0 0
        %1115 = vmatpush1.bf16.msra.mxu0 0
        %1116 = vmatprep.subr.bf16.mxu0 0
        %1117 = vmatpush1.bf16.msra.mxu0 0
        %1118 = vmatprep.subr.bf16.mxu0 0
        %1119 = vmatpush1.bf16.msra.mxu0 %v1102
        %1120 = vmatprep.subr.bf16.mxu0 0
        %1121 = vmatpush2.bf16.msra.mxu0 0
        %1122 = vmatprep.subr.bf16.mxu0 0
        %1123 = vmatpush2.bf16.msra.mxu0 0
        %1124 = vmatprep.subr.bf16.mxu0 0
        %1125 = vmatpush2.bf16.msra.mxu0 0
        %1126 = vmatprep.subr.bf16.mxu0 0
        %1127 = vmatpush2.bf16.msra.mxu0 0
        %1128 = vmatprep.subr.bf16.mxu0 0
        %1129 = vmatpush2.bf16.msra.mxu0 0
        %1130 = vmatprep.subr.bf16.mxu0 0
        %1131 = vmatpush2.bf16.msra.mxu0 0
        %1132 = vmatprep.subr.bf16.mxu0 0
        %1133 = vmatpush2.bf16.msra.mxu0 0
        %1134 = vmatprep.subr.bf16.mxu0 0
        %1135 = vmatpush2.bf16.msra.mxu0 0
        %1136 = vmatprep.mubr.bf16.mxu0 0
        %1137 = vmatmul.mubr.bf16.gmra.mxu0 %v1099
        %v1138 = vpop.f32.mrf.mxu0
        %v1139 = vadd.f32 0.0, %v1138
        %v1140 = vpop.f32.mrf.mxu0
        %v1141 = vpop.f32.mrf.mxu0
        %v1142 = vadd.f32 0.0, %v1141
        %v1143 = vpop.f32.mrf.mxu0
        %1144 = vdwg.mxu0
        %v1145 = vpack.c.bf16 %v1142, %v1139
        %v1147 = vunpack.c.l.b16 %v1145
        %v1148 = vunpack.c.h.b16 %v1145
        %v1149 = vpack.c.b16 %v1147, %v1147
        %v1150 = vpack.c.b16 %v1148, %v1148
        %1151 = vrot.lane.b32.xlu0 %v1149, 16
        %v1152 = vpop.permute.xlu0 %1151
        %1153 = vrot.lane.b32.xlu0 %v1150, 16
        %v1154 = vpop.permute.xlu0 %1153
        %vm1157 = vcmask 191616
        %1158 = vst.msk [vmem:[%s485] sm:$0xf] %vm1157, %v1152
        %1159 = vst.msk [vmem:[%s485 + $0x4] sm:$0xf] %vm1157, %v1154
        %1160 = vrot.lane.b32.xlu0 %v743, 110
        %v1161 = vpop.permute.xlu0 %1160
        %1162 = vrot.lane.b32.xlu0 %v666, 110
        %v1163 = vpop.permute.xlu0 %1162
        %v1165 = vsel %vm750, %v1161, 0
        %v1168 = vsel %vm750, %v1163, 0
        %1170 = vmatprep.subr.bf16.mxu0 0
        %1171 = vmatpush1.bf16.xpose.msra.mxu0 0
        %1172 = vmatprep.subr.bf16.mxu0 0
        %1173 = vmatpush1.bf16.xpose.msra.mxu0 0
        %1174 = vmatprep.subr.bf16.mxu0 0
        %1175 = vmatpush1.bf16.xpose.msra.mxu0 0
        %1176 = vmatprep.subr.bf16.mxu0 0
        %1177 = vmatpush1.bf16.xpose.msra.mxu0 0
        %1178 = vmatprep.subr.bf16.mxu0 0
        %1179 = vmatpush1.bf16.xpose.msra.mxu0 0
        %1180 = vmatprep.subr.bf16.mxu0 0
        %1181 = vmatpush1.bf16.xpose.msra.mxu0 0
        %1182 = vmatprep.subr.bf16.mxu0 0
        %1183 = vmatpush1.bf16.xpose.msra.mxu0 0
        %1184 = vmatprep.subr.bf16.mxu0 0
        %1185 = vmatpush1.bf16.xpose.msra.mxu0 %v1168
        %1186 = vmatprep.subr.bf16.mxu0 0
        %1187 = vmatpush2.bf16.xpose.msra.mxu0 0
        %1188 = vmatprep.subr.bf16.mxu0 0
        %1189 = vmatpush2.bf16.xpose.msra.mxu0 0
        %1190 = vmatprep.subr.bf16.mxu0 0
        %1191 = vmatpush2.bf16.xpose.msra.mxu0 0
        %1192 = vmatprep.subr.bf16.mxu0 0
        %1193 = vmatpush2.bf16.xpose.msra.mxu0 0
        %1194 = vmatprep.subr.bf16.mxu0 0
        %1195 = vmatpush2.bf16.xpose.msra.mxu0 0
        %1196 = vmatprep.subr.bf16.mxu0 0
        %1197 = vmatpush2.bf16.xpose.msra.mxu0 0
        %1198 = vmatprep.subr.bf16.mxu0 0
        %1199 = vmatpush2.bf16.xpose.msra.mxu0 0
        %1200 = vmatprep.subr.bf16.mxu0 0
        %1201 = vmatpush2.bf16.xpose.msra.mxu0 0
        %1202 = vmatprep.mubr.bf16.mxu0 0
        %1203 = vmatmul.mubr.bf16.gmra.mxu0 %v1165
        %v1204 = vpop.f32.mrf.mxu0
        %v1205 = vadd.f32 %v748, %v1204
        %v1206 = vpop.f32.mrf.mxu0
        %v1207 = vpop.f32.mrf.mxu0
        %v1208 = vadd.f32 %v748, %v1207
        %v1209 = vpop.f32.mrf.mxu0
        %1210 = vdwg.mxu0
        %v1211 = vsel %vm798, %v1205, -inf
        %1212 = vmax.xlane.f32.xlu0 %v1211
        %v1213 = vpop.xlane.xlu0 %1212
        %v1214 = vsel %vm798, %v1208, -inf
        %1215 = vmax.xlane.f32.xlu0 %v1214
        %v1216 = vpop.xlane.xlu0 %1215
        %v1217 = vsub.f32 %v1205, %v1213
        %v1218 = vsub.f32 %v1208, %v1216
        %v1219 = vmul.f32 %v1217, 1.442695
        %v1220 = vpow.pop %v1219
        %v1221 = vmul.f32 %v1218, 1.442695
        %v1222 = vpow.pop %v1221
        %v1223 = vsel %vm798, %v1220, 0.0
        %1224 = vadd.xlane.f32.xlu0 %v1223
        %v1225 = vpop.xlane.xlu0 %1224
        %v1226 = vsel %vm798, %v1222, 0.0
        %1227 = vadd.xlane.f32.xlu0 %v1226
        %v1228 = vpop.xlane.xlu0 %1227
        %v1229 = vrcp.pop %v1225
        %v1230 = vmul.f32 %v1220, %v1229
        %v1231 = vrcp.pop %v1228
        %v1232 = vmul.f32 %v1222, %v1231
        %v1233 = vpack.c.bf16 %v1232, %v1230
        %1234 = vrot.lane.b32.xlu0 %v665, 104
        %v1235 = vpop.permute.xlu0 %1234
        %v1237 = vsel %vm798, %v1233, 0
        %v1240 = vsel %vm825, %v1235, 0
        %1242 = vmatprep.subr.bf16.mxu0 0
        %1243 = vmatpush1.bf16.msra.mxu0 0
        %1244 = vmatprep.subr.bf16.mxu0 0
        %1245 = vmatpush1.bf16.msra.mxu0 0
        %1246 = vmatprep.subr.bf16.mxu0 0
        %1247 = vmatpush1.bf16.msra.mxu0 0
        %1248 = vmatprep.subr.bf16.mxu0 0
        %1249 = vmatpush1.bf16.msra.mxu0 0
        %1250 = vmatprep.subr.bf16.mxu0 0
        %1251 = vmatpush1.bf16.msra.mxu0 0
        %1252 = vmatprep.subr.bf16.mxu0 0
        %1253 = vmatpush1.bf16.msra.mxu0 0
        %1254 = vmatprep.subr.bf16.mxu0 0
        %1255 = vmatpush1.bf16.msra.mxu0 0
        %1256 = vmatprep.subr.bf16.mxu0 0
        %1257 = vmatpush1.bf16.msra.mxu0 %v1240
        %1258 = vmatprep.subr.bf16.mxu0 0
        %1259 = vmatpush2.bf16.msra.mxu0 0
        %1260 = vmatprep.subr.bf16.mxu0 0
        %1261 = vmatpush2.bf16.msra.mxu0 0
        %1262 = vmatprep.subr.bf16.mxu0 0
        %1263 = vmatpush2.bf16.msra.mxu0 0
        %1264 = vmatprep.subr.bf16.mxu0 0
        %1265 = vmatpush2.bf16.msra.mxu0 0
        %1266 = vmatprep.subr.bf16.mxu0 0
        %1267 = vmatpush2.bf16.msra.mxu0 0
        %1268 = vmatprep.subr.bf16.mxu0 0
        %1269 = vmatpush2.bf16.msra.mxu0 0
        %1270 = vmatprep.subr.bf16.mxu0 0
        %1271 = vmatpush2.bf16.msra.mxu0 0
        %1272 = vmatprep.subr.bf16.mxu0 0
        %1273 = vmatpush2.bf16.msra.mxu0 0
        %1274 = vmatprep.mubr.bf16.mxu0 0
        %1275 = vmatmul.mubr.bf16.gmra.mxu0 %v1237
        %v1276 = vpop.f32.mrf.mxu0
        %v1277 = vadd.f32 0.0, %v1276
        %v1278 = vpop.f32.mrf.mxu0
        %v1279 = vpop.f32.mrf.mxu0
        %v1280 = vadd.f32 0.0, %v1279
        %v1281 = vpop.f32.mrf.mxu0
        %1282 = vdwg.mxu0
        %v1283 = vpack.c.bf16 %v1280, %v1277
        %v1285 = vunpack.c.l.b16 %v1283
        %v1286 = vunpack.c.h.b16 %v1283
        %v1287 = vpack.c.b16 %v1285, %v1285
        %v1288 = vpack.c.b16 %v1286, %v1286
        %1289 = vrot.lane.b32.xlu0 %v1287, 24
        %v1290 = vpop.permute.xlu0 %1289
        %1291 = vrot.lane.b32.xlu0 %v1288, 24
        %v1292 = vpop.permute.xlu0 %1291
        %vm1295 = vcmask 257216
        %1296 = vst.msk [vmem:[%s485] sm:$0xf] %vm1295, %v1290
        %1297 = vst.msk [vmem:[%s485 + $0x4] sm:$0xf] %vm1295, %v1292
        %v1298 = vld [vmem:[%s485] sm:$0xf]
        %v1299 = vld [vmem:[%s485 + $0x4] sm:$0xf]
        %v1300 = vld [vmem:[%s7] sm:$0xff]
        %v1301 = vld [vmem:[%s7 + $0x8] sm:$0xf]
        %v1302 = vld [vmem:[%s7 + $0xc] sm:$0xff]
        %v1303 = vld [vmem:[%s7 + $0x14] sm:$0xf]
        %v1304 = vld [vmem:[%s7 + $0x18] sm:$0xff]
        %v1305 = vld [vmem:[%s7 + $0x20] sm:$0xf]
        %v1306 = vld [vmem:[%s7 + $0x24] sm:$0xff]
        %v1307 = vld [vmem:[%s7 + $0x2c] sm:$0xf]
        %v1308 = vld [vmem:[%s8] sm:$0x7]
        %v1310 = vlaneseq
        %v1311 = vshrl.u32 %v1310, 7
        %v1312 = vsub.s32 0, %v1311
        %v1313 = vrot.slane %v1308, %v1312
        %v1314 = vlaneseq
        %v1315 = vshrl.u32 %v1314, 7
        %v1316 = vsub.s32 1, %v1315
        %v1317 = vrot.slane %v1308, %v1316
        %v1318 = vlaneseq
        %v1319 = vshrl.u32 %v1318, 7
        %v1320 = vsub.s32 2, %v1319
        %v1321 = vrot.slane %v1308, %v1320
        %v1327 = vunpack.c.l.b16 %v1298
        %v1328 = vunpack.c.l.b16 %v1299
        %v1329 = vpack.c.b16 %v1328, %v1327
        %v1338 = vunpack.c.l.b16 %v1300
        %v1339 = vunpack.c.h.b16 %v1300
        %v1340 = vunpack.c.l.b16 %v1301
        %v1341 = vunpack.c.l.b16 %v1302
        %v1342 = vunpack.c.h.b16 %v1302
        %v1343 = vunpack.c.l.b16 %v1303
        %v1344 = vunpack.c.l.b16 %v1304
        %v1345 = vunpack.c.h.b16 %v1304
        %v1346 = vunpack.c.l.b16 %v1305
        %v1347 = vunpack.c.l.b16 %v1306
        %v1348 = vunpack.c.h.b16 %v1306
        %v1349 = vunpack.c.l.b16 %v1307
        %v1350 = vpack.c.b16 %v1341, %v1338
        %v1351 = vpack.c.b16 %v1342, %v1339
        %v1352 = vpack.c.b16 %v1343, %v1340
        %v1353 = vpack.c.b16 %v1347, %v1344
        %v1354 = vpack.c.b16 %v1348, %v1345
        %v1355 = vpack.c.b16 %v1349, %v1346
        %v1363 = vsel %vm580, %v1329, 0
        %1365 = vmatprep.subr.bf16.mxu0 0
        %1366 = vmatpush1.bf16.msra.mxu0 0
        %1367 = vmatprep.subr.bf16.mxu0 0
        %1368 = vmatpush1.bf16.msra.mxu0 0
        %1369 = vmatprep.subr.bf16.mxu0 0
        %1370 = vmatpush1.bf16.msra.mxu0 0
        %1371 = vmatprep.subr.bf16.mxu0 0
        %1372 = vmatpush1.bf16.msra.mxu0 0
        %1373 = vmatprep.subr.bf16.mxu0 0
        %1374 = vmatpush1.bf16.msra.mxu0 0
        %1375 = vmatprep.subr.bf16.mxu0 0
        %1376 = vmatpush1.bf16.msra.mxu0 0
        %1377 = vmatprep.subr.bf16.mxu0 %v1354
        %1378 = vmatpush1.bf16.msra.mxu0 %v1353
        %1379 = vmatprep.subr.bf16.mxu0 %v1351
        %1380 = vmatpush1.bf16.msra.mxu0 %v1350
        %1381 = vmatprep.subr.bf16.mxu0 0
        %1382 = vmatpush2.bf16.msra.mxu0 0
        %1383 = vmatprep.subr.bf16.mxu0 0
        %1384 = vmatpush2.bf16.msra.mxu0 0
        %1385 = vmatprep.subr.bf16.mxu0 0
        %1386 = vmatpush2.bf16.msra.mxu0 0
        %1387 = vmatprep.subr.bf16.mxu0 0
        %1388 = vmatpush2.bf16.msra.mxu0 0
        %1389 = vmatprep.subr.bf16.mxu0 0
        %1390 = vmatpush2.bf16.msra.mxu0 0
        %1391 = vmatprep.subr.bf16.mxu0 0
        %1392 = vmatpush2.bf16.msra.mxu0 0
        %1393 = vmatprep.subr.bf16.mxu0 0
        %1394 = vmatpush2.bf16.msra.mxu0 0
        %1395 = vmatprep.subr.bf16.mxu0 0
        %1396 = vmatpush2.bf16.msra.mxu0 0
        %1397 = vmatprep.mubr.bf16.mxu0 0
        %1398 = vmatmul.mubr.bf16.gmra.mxu0 %v1363
        %v1399 = vpop.f32.mrf.mxu0
        %v1400 = vadd.f32 %v1313, %v1399
        %v1401 = vpop.f32.mrf.mxu0
        %v1402 = vadd.f32 %v1317, %v1401
        %v1403 = vpop.f32.mrf.mxu0
        %v1404 = vadd.f32 %v1313, %v1403
        %v1405 = vpop.f32.mrf.mxu0
        %v1406 = vadd.f32 %v1317, %v1405
        %1407 = vdwg.mxu0
        %1408 = vmatprep.subr.bf16.mxu0 0
        %1409 = vmatpush1.bf16.msra.mxu0 0
        %1410 = vmatprep.subr.bf16.mxu0 0
        %1411 = vmatpush1.bf16.msra.mxu0 0
        %1412 = vmatprep.subr.bf16.mxu0 0
        %1413 = vmatpush1.bf16.msra.mxu0 0
        %1414 = vmatprep.subr.bf16.mxu0 0
        %1415 = vmatpush1.bf16.msra.mxu0 0
        %1416 = vmatprep.subr.bf16.mxu0 0
        %1417 = vmatpush1.bf16.msra.mxu0 0
        %1418 = vmatprep.subr.bf16.mxu0 0
        %1419 = vmatpush1.bf16.msra.mxu0 0
        %1420 = vmatprep.subr.bf16.mxu0 0
        %1421 = vmatpush1.bf16.msra.mxu0 %v1355
        %1422 = vmatprep.subr.bf16.mxu0 0
        %1423 = vmatpush1.bf16.msra.mxu0 %v1352
        %1424 = vmatprep.subr.bf16.mxu0 0
        %1425 = vmatpush2.bf16.msra.mxu0 0
        %1426 = vmatprep.subr.bf16.mxu0 0
        %1427 = vmatpush2.bf16.msra.mxu0 0
        %1428 = vmatprep.subr.bf16.mxu0 0
        %1429 = vmatpush2.bf16.msra.mxu0 0
        %1430 = vmatprep.subr.bf16.mxu0 0
        %1431 = vmatpush2.bf16.msra.mxu0 0
        %1432 = vmatprep.subr.bf16.mxu0 0
        %1433 = vmatpush2.bf16.msra.mxu0 0
        %1434 = vmatprep.subr.bf16.mxu0 0
        %1435 = vmatpush2.bf16.msra.mxu0 0
        %1436 = vmatprep.subr.bf16.mxu0 0
        %1437 = vmatpush2.bf16.msra.mxu0 0
        %1438 = vmatprep.subr.bf16.mxu0 0
        %1439 = vmatpush2.bf16.msra.mxu0 0
        %1440 = vmatprep.mubr.bf16.mxu0 0
        %1441 = vmatmul.mubr.bf16.gmra.mxu0 %v1363
        %v1442 = vpop.f32.mrf.mxu0
        %v1443 = vadd.f32 %v1321, %v1442
        %v1444 = vpop.f32.mrf.mxu0
        %v1445 = vpop.f32.mrf.mxu0
        %v1446 = vadd.f32 %v1321, %v1445
        %v1447 = vpop.f32.mrf.mxu0
        %1448 = vdwg.mxu0
        %v1449 = vpack.c.bf16 %v1404, %v1400
        %v1450 = vmul.f32 %v1402, 0.4082483
        %v1451 = vmul.f32 %v1406, 0.4082483
        %v1452 = vpack.c.bf16 %v1451, %v1450
        %v1453 = vpack.c.bf16 %v1446, %v1443
        %v1455 = vsel %vm750, %v1452, 0
        %v1458 = vsel %vm750, %v1453, 0
        %1460 = vmatprep.subr.bf16.mxu0 0
        %1461 = vmatpush1.bf16.xpose.msra.mxu0 0
        %1462 = vmatprep.subr.bf16.mxu0 0
        %1463 = vmatpush1.bf16.xpose.msra.mxu0 0
        %1464 = vmatprep.subr.bf16.mxu0 0
        %1465 = vmatpush1.bf16.xpose.msra.mxu0 0
        %1466 = vmatprep.subr.bf16.mxu0 0
        %1467 = vmatpush1.bf16.xpose.msra.mxu0 0
        %1468 = vmatprep.subr.bf16.mxu0 0
        %1469 = vmatpush1.bf16.xpose.msra.mxu0 0
        %1470 = vmatprep.subr.bf16.mxu0 0
        %1471 = vmatpush1.bf16.xpose.msra.mxu0 0
        %1472 = vmatprep.subr.bf16.mxu0 0
        %1473 = vmatpush1.bf16.xpose.msra.mxu0 0
        %1474 = vmatprep.subr.bf16.mxu0 0
        %1475 = vmatpush1.bf16.xpose.msra.mxu0 %v1458
        %1476 = vmatprep.subr.bf16.mxu0 0
        %1477 = vmatpush2.bf16.xpose.msra.mxu0 0
        %1478 = vmatprep.subr.bf16.mxu0 0
        %1479 = vmatpush2.bf16.xpose.msra.mxu0 0
        %1480 = vmatprep.subr.bf16.mxu0 0
        %1481 = vmatpush2.bf16.xpose.msra.mxu0 0
        %1482 = vmatprep.subr.bf16.mxu0 0
        %1483 = vmatpush2.bf16.xpose.msra.mxu0 0
        %1484 = vmatprep.subr.bf16.mxu0 0
        %1485 = vmatpush2.bf16.xpose.msra.mxu0 0
        %1486 = vmatprep.subr.bf16.mxu0 0
        %1487 = vmatpush2.bf16.xpose.msra.mxu0 0
        %1488 = vmatprep.subr.bf16.mxu0 0
        %1489 = vmatpush2.bf16.xpose.msra.mxu0 0
        %1490 = vmatprep.subr.bf16.mxu0 0
        %1491 = vmatpush2.bf16.xpose.msra.mxu0 0
        %1492 = vmatprep.mubr.bf16.mxu0 0
        %1493 = vmatmul.mubr.bf16.gmra.mxu0 %v1455
        %v1494 = vpop.f32.mrf.mxu0
        %v1495 = vadd.f32 0.0, %v1494
        %v1496 = vpop.f32.mrf.mxu0
        %v1497 = vpop.f32.mrf.mxu0
        %v1498 = vadd.f32 0.0, %v1497
        %v1499 = vpop.f32.mrf.mxu0
        %1500 = vdwg.mxu0
        %vm1501 = vcmask 130048
        %v1502 = vsel %vm1501, %v1495, -inf
        %1503 = vmax.xlane.f32.xlu0 %v1502
        %v1504 = vpop.xlane.xlu0 %1503
        %v1505 = vsel %vm1501, %v1498, -inf
        %1506 = vmax.xlane.f32.xlu0 %v1505
        %v1507 = vpop.xlane.xlu0 %1506
        %v1508 = vsub.f32 %v1495, %v1504
        %v1509 = vsub.f32 %v1498, %v1507
        %v1510 = vmul.f32 %v1508, 1.442695
        %v1511 = vpow.pop %v1510
        %v1512 = vmul.f32 %v1509, 1.442695
        %v1513 = vpow.pop %v1512
        %v1514 = vsel %vm1501, %v1511, 0.0
        %1515 = vadd.xlane.f32.xlu0 %v1514
        %v1516 = vpop.xlane.xlu0 %1515
        %v1517 = vsel %vm1501, %v1513, 0.0
        %1518 = vadd.xlane.f32.xlu0 %v1517
        %v1519 = vpop.xlane.xlu0 %1518
        %v1520 = vrcp.pop %v1516
        %v1521 = vmul.f32 %v1511, %v1520
        %v1522 = vrcp.pop %v1519
        %v1523 = vmul.f32 %v1513, %v1522
        %v1524 = vpack.c.bf16 %v1523, %v1521
        %v1526 = vsel %vm1501, %v1524, 0
        %1528 = vmatprep.subr.bf16.mxu0 0
        %1529 = vmatpush1.bf16.msra.mxu0 0
        %1530 = vmatprep.subr.bf16.mxu0 0
        %1531 = vmatpush1.bf16.msra.mxu0 0
        %1532 = vmatprep.subr.bf16.mxu0 0
        %1533 = vmatpush1.bf16.msra.mxu0 0
        %1534 = vmatprep.subr.bf16.mxu0 0
        %1535 = vmatpush1.bf16.msra.mxu0 0
        %1536 = vmatprep.subr.bf16.mxu0 0
        %1537 = vmatpush1.bf16.msra.mxu0 0
        %1538 = vmatprep.subr.bf16.mxu0 0
        %1539 = vmatpush1.bf16.msra.mxu0 0
        %1540 = vmatprep.subr.bf16.mxu0 0
        %1541 = vmatpush1.bf16.msra.mxu0 0
        %1542 = vmatprep.subr.bf16.mxu0 0
        %1543 = vmatpush1.bf16.msra.mxu0 %v1449
        %1544 = vmatprep.subr.bf16.mxu0 0
        %1545 = vmatpush2.bf16.msra.mxu0 0
        %1546 = vmatprep.subr.bf16.mxu0 0
        %1547 = vmatpush2.bf16.msra.mxu0 0
        %1548 = vmatprep.subr.bf16.mxu0 0
        %1549 = vmatpush2.bf16.msra.mxu0 0
        %1550 = vmatprep.subr.bf16.mxu0 0
        %1551 = vmatpush2.bf16.msra.mxu0 0
        %1552 = vmatprep.subr.bf16.mxu0 0
        %1553 = vmatpush2.bf16.msra.mxu0 0
        %1554 = vmatprep.subr.bf16.mxu0 0
        %1555 = vmatpush2.bf16.msra.mxu0 0
        %1556 = vmatprep.subr.bf16.mxu0 0
        %1557 = vmatpush2.bf16.msra.mxu0 0
        %1558 = vmatprep.subr.bf16.mxu0 0
        %1559 = vmatpush2.bf16.msra.mxu0 0
        %1560 = vmatprep.mubr.bf16.mxu0 0
        %1561 = vmatmul.mubr.bf16.gmra.mxu0 %v1526
        %v1562 = vpop.f32.mrf.mxu0
        %v1563 = vadd.f32 0.0, %v1562
        %v1564 = vpop.f32.mrf.mxu0
        %v1565 = vpop.f32.mrf.mxu0
        %v1566 = vadd.f32 0.0, %v1565
        %v1567 = vpop.f32.mrf.mxu0
        %1568 = vdwg.mxu0
        %1569 = vst.msk [vmem:[#allocation2] sm:$0xff] %vm798, %v1563
        %1570 = vst.msk [vmem:[#allocation2 + $0x8] sm:$0xff] %vm798, %v1566
        %1572 = vrot.lane.b32.xlu0 %v1452, 122
        %v1573 = vpop.permute.xlu0 %1572
        %1575 = vrot.lane.b32.xlu0 %v1453, 122
        %v1576 = vpop.permute.xlu0 %1575
        %v1578 = vsel %vm750, %v1573, 0
        %v1581 = vsel %vm750, %v1576, 0
        %1583 = vmatprep.subr.bf16.mxu0 0
        %1584 = vmatpush1.bf16.xpose.msra.mxu0 0
        %1585 = vmatprep.subr.bf16.mxu0 0
        %1586 = vmatpush1.bf16.xpose.msra.mxu0 0
        %1587 = vmatprep.subr.bf16.mxu0 0
        %1588 = vmatpush1.bf16.xpose.msra.mxu0 0
        %1589 = vmatprep.subr.bf16.mxu0 0
        %1590 = vmatpush1.bf16.xpose.msra.mxu0 0
        %1591 = vmatprep.subr.bf16.mxu0 0
        %1592 = vmatpush1.bf16.xpose.msra.mxu0 0
        %1593 = vmatprep.subr.bf16.mxu0 0
        %1594 = vmatpush1.bf16.xpose.msra.mxu0 0
        %1595 = vmatprep.subr.bf16.mxu0 0
        %1596 = vmatpush1.bf16.xpose.msra.mxu0 0
        %1597 = vmatprep.subr.bf16.mxu0 0
        %1598 = vmatpush1.bf16.xpose.msra.mxu0 %v1581
        %1599 = vmatprep.subr.bf16.mxu0 0
        %1600 = vmatpush2.bf16.xpose.msra.mxu0 0
        %1601 = vmatprep.subr.bf16.mxu0 0
        %1602 = vmatpush2.bf16.xpose.msra.mxu0 0
        %1603 = vmatprep.subr.bf16.mxu0 0
        %1604 = vmatpush2.bf16.xpose.msra.mxu0 0
        %1605 = vmatprep.subr.bf16.mxu0 0
        %1606 = vmatpush2.bf16.xpose.msra.mxu0 0
        %1607 = vmatprep.subr.bf16.mxu0 0
        %1608 = vmatpush2.bf16.xpose.msra.mxu0 0
        %1609 = vmatprep.subr.bf16.mxu0 0
        %1610 = vmatpush2.bf16.xpose.msra.mxu0 0
        %1611 = vmatprep.subr.bf16.mxu0 0
        %1612 = vmatpush2.bf16.xpose.msra.mxu0 0
        %1613 = vmatprep.subr.bf16.mxu0 0
        %1614 = vmatpush2.bf16.xpose.msra.mxu0 0
        %1615 = vmatprep.mubr.bf16.mxu0 0
        %1616 = vmatmul.mubr.bf16.gmra.mxu0 %v1578
        %v1617 = vpop.f32.mrf.mxu0
        %v1618 = vadd.f32 0.0, %v1617
        %v1619 = vpop.f32.mrf.mxu0
        %v1620 = vpop.f32.mrf.mxu0
        %v1621 = vadd.f32 0.0, %v1620
        %v1622 = vpop.f32.mrf.mxu0
        %1623 = vdwg.mxu0
        %v1624 = vsel %vm1501, %v1618, -inf
        %1625 = vmax.xlane.f32.xlu0 %v1624
        %v1626 = vpop.xlane.xlu0 %1625
        %v1627 = vsel %vm1501, %v1621, -inf
        %1628 = vmax.xlane.f32.xlu0 %v1627
        %v1629 = vpop.xlane.xlu0 %1628
        %v1630 = vsub.f32 %v1618, %v1626
        %v1631 = vsub.f32 %v1621, %v1629
        %v1632 = vmul.f32 %v1630, 1.442695
        %v1633 = vpow.pop %v1632
        %v1634 = vmul.f32 %v1631, 1.442695
        %v1635 = vpow.pop %v1634
        %v1636 = vsel %vm1501, %v1633, 0.0
        %1637 = vadd.xlane.f32.xlu0 %v1636
        %v1638 = vpop.xlane.xlu0 %1637
        %v1639 = vsel %vm1501, %v1635, 0.0
        %1640 = vadd.xlane.f32.xlu0 %v1639
        %v1641 = vpop.xlane.xlu0 %1640
        %v1642 = vrcp.pop %v1638
        %v1643 = vmul.f32 %v1633, %v1642
        %v1644 = vrcp.pop %v1641
        %v1645 = vmul.f32 %v1635, %v1644
        %v1646 = vpack.c.bf16 %v1645, %v1643
        %1648 = vrot.lane.b32.xlu0 %v1449, 120
        %v1649 = vpop.permute.xlu0 %1648
        %v1652 = vsel %vm1501, %v1646, 0
        %1654 = vmatprep.subr.bf16.mxu0 0
        %1655 = vmatpush1.bf16.msra.mxu0 0
        %1656 = vmatprep.subr.bf16.mxu0 0
        %1657 = vmatpush1.bf16.msra.mxu0 0
        %1658 = vmatprep.subr.bf16.mxu0 0
        %1659 = vmatpush1.bf16.msra.mxu0 0
        %1660 = vmatprep.subr.bf16.mxu0 0
        %1661 = vmatpush1.bf16.msra.mxu0 0
        %1662 = vmatprep.subr.bf16.mxu0 0
        %1663 = vmatpush1.bf16.msra.mxu0 0
        %1664 = vmatprep.subr.bf16.mxu0 0
        %1665 = vmatpush1.bf16.msra.mxu0 0
        %1666 = vmatprep.subr.bf16.mxu0 0
        %1667 = vmatpush1.bf16.msra.mxu0 0
        %1668 = vmatprep.subr.bf16.mxu0 0
        %1669 = vmatpush1.bf16.msra.mxu0 %v1649
        %1670 = vmatprep.subr.bf16.mxu0 0
        %1671 = vmatpush2.bf16.msra.mxu0 0
        %1672 = vmatprep.subr.bf16.mxu0 0
        %1673 = vmatpush2.bf16.msra.mxu0 0
        %1674 = vmatprep.subr.bf16.mxu0 0
        %1675 = vmatpush2.bf16.msra.mxu0 0
        %1676 = vmatprep.subr.bf16.mxu0 0
        %1677 = vmatpush2.bf16.msra.mxu0 0
        %1678 = vmatprep.subr.bf16.mxu0 0
        %1679 = vmatpush2.bf16.msra.mxu0 0
        %1680 = vmatprep.subr.bf16.mxu0 0
        %1681 = vmatpush2.bf16.msra.mxu0 0
        %1682 = vmatprep.subr.bf16.mxu0 0
        %1683 = vmatpush2.bf16.msra.mxu0 0
        %1684 = vmatprep.subr.bf16.mxu0 0
        %1685 = vmatpush2.bf16.msra.mxu0 0
        %1686 = vmatprep.mubr.bf16.mxu0 0
        %1687 = vmatmul.mubr.bf16.gmra.mxu0 %v1652
        %v1688 = vpop.f32.mrf.mxu0
        %v1689 = vadd.f32 0.0, %v1688
        %v1690 = vpop.f32.mrf.mxu0
        %v1691 = vpop.f32.mrf.mxu0
        %v1692 = vadd.f32 0.0, %v1691
        %v1693 = vpop.f32.mrf.mxu0
        %1694 = vdwg.mxu0
        %1697 = vrot.lane.b32.xlu0 %v1689, 8
        %v1698 = vpop.permute.xlu0 %1697
        %1699 = vrot.lane.b32.xlu0 %v1692, 8
        %v1700 = vpop.permute.xlu0 %1699
        %vm1703 = vcmask 130112
        %1704 = vst.msk [vmem:[#allocation2] sm:$0xff] %vm1703, %v1698
        %1705 = vst.msk [vmem:[#allocation2 + $0x8] sm:$0xff] %vm1703, %v1700
        %1706 = vrot.lane.b32.xlu0 %v1452, 116
        %v1707 = vpop.permute.xlu0 %1706
        %1708 = vrot.lane.b32.xlu0 %v1453, 116
        %v1709 = vpop.permute.xlu0 %1708
        %v1711 = vsel %vm750, %v1707, 0
        %v1714 = vsel %vm750, %v1709, 0
        %1716 = vmatprep.subr.bf16.mxu0 0
        %1717 = vmatpush1.bf16.xpose.msra.mxu0 0
        %1718 = vmatprep.subr.bf16.mxu0 0
        %1719 = vmatpush1.bf16.xpose.msra.mxu0 0
        %1720 = vmatprep.subr.bf16.mxu0 0
        %1721 = vmatpush1.bf16.xpose.msra.mxu0 0
        %1722 = vmatprep.subr.bf16.mxu0 0
        %1723 = vmatpush1.bf16.xpose.msra.mxu0 0
        %1724 = vmatprep.subr.bf16.mxu0 0
        %1725 = vmatpush1.bf16.xpose.msra.mxu0 0
        %1726 = vmatprep.subr.bf16.mxu0 0
        %1727 = vmatpush1.bf16.xpose.msra.mxu0 0
        %1728 = vmatprep.subr.bf16.mxu0 0
        %1729 = vmatpush1.bf16.xpose.msra.mxu0 0
        %1730 = vmatprep.subr.bf16.mxu0 0
        %1731 = vmatpush1.bf16.xpose.msra.mxu0 %v1714
        %1732 = vmatprep.subr.bf16.mxu0 0
        %1733 = vmatpush2.bf16.xpose.msra.mxu0 0
        %1734 = vmatprep.subr.bf16.mxu0 0
        %1735 = vmatpush2.bf16.xpose.msra.mxu0 0
        %1736 = vmatprep.subr.bf16.mxu0 0
        %1737 = vmatpush2.bf16.xpose.msra.mxu0 0
        %1738 = vmatprep.subr.bf16.mxu0 0
        %1739 = vmatpush2.bf16.xpose.msra.mxu0 0
        %1740 = vmatprep.subr.bf16.mxu0 0
        %1741 = vmatpush2.bf16.xpose.msra.mxu0 0
        %1742 = vmatprep.subr.bf16.mxu0 0
        %1743 = vmatpush2.bf16.xpose.msra.mxu0 0
        %1744 = vmatprep.subr.bf16.mxu0 0
        %1745 = vmatpush2.bf16.xpose.msra.mxu0 0
        %1746 = vmatprep.subr.bf16.mxu0 0
        %1747 = vmatpush2.bf16.xpose.msra.mxu0 0
        %1748 = vmatprep.mubr.bf16.mxu0 0
        %1749 = vmatmul.mubr.bf16.gmra.mxu0 %v1711
        %v1750 = vpop.f32.mrf.mxu0
        %v1751 = vadd.f32 0.0, %v1750
        %v1752 = vpop.f32.mrf.mxu0
        %v1753 = vpop.f32.mrf.mxu0
        %v1754 = vadd.f32 0.0, %v1753
        %v1755 = vpop.f32.mrf.mxu0
        %1756 = vdwg.mxu0
        %v1757 = vsel %vm1501, %v1751, -inf
        %1758 = vmax.xlane.f32.xlu0 %v1757
        %v1759 = vpop.xlane.xlu0 %1758
        %v1760 = vsel %vm1501, %v1754, -inf
        %1761 = vmax.xlane.f32.xlu0 %v1760
        %v1762 = vpop.xlane.xlu0 %1761
        %v1763 = vsub.f32 %v1751, %v1759
        %v1764 = vsub.f32 %v1754, %v1762
        %v1765 = vmul.f32 %v1763, 1.442695
        %v1766 = vpow.pop %v1765
        %v1767 = vmul.f32 %v1764, 1.442695
        %v1768 = vpow.pop %v1767
        %v1769 = vsel %vm1501, %v1766, 0.0
        %1770 = vadd.xlane.f32.xlu0 %v1769
        %v1771 = vpop.xlane.xlu0 %1770
        %v1772 = vsel %vm1501, %v1768, 0.0
        %1773 = vadd.xlane.f32.xlu0 %v1772
        %v1774 = vpop.xlane.xlu0 %1773
        %v1775 = vrcp.pop %v1771
        %v1776 = vmul.f32 %v1766, %v1775
        %v1777 = vrcp.pop %v1774
        %v1778 = vmul.f32 %v1768, %v1777
        %v1779 = vpack.c.bf16 %v1778, %v1776
        %1780 = vrot.lane.b32.xlu0 %v1449, 112
        %v1781 = vpop.permute.xlu0 %1780
        %v1784 = vsel %vm1501, %v1779, 0
        %1786 = vmatprep.subr.bf16.mxu0 0
        %1787 = vmatpush1.bf16.msra.mxu0 0
        %1788 = vmatprep.subr.bf16.mxu0 0
        %1789 = vmatpush1.bf16.msra.mxu0 0
        %1790 = vmatprep.subr.bf16.mxu0 0
        %1791 = vmatpush1.bf16.msra.mxu0 0
        %1792 = vmatprep.subr.bf16.mxu0 0
        %1793 = vmatpush1.bf16.msra.mxu0 0
        %1794 = vmatprep.subr.bf16.mxu0 0
        %1795 = vmatpush1.bf16.msra.mxu0 0
        %1796 = vmatprep.subr.bf16.mxu0 0
        %1797 = vmatpush1.bf16.msra.mxu0 0
        %1798 = vmatprep.subr.bf16.mxu0 0
        %1799 = vmatpush1.bf16.msra.mxu0 0
        %1800 = vmatprep.subr.bf16.mxu0 0
        %1801 = vmatpush1.bf16.msra.mxu0 %v1781
        %1802 = vmatprep.subr.bf16.mxu0 0
        %1803 = vmatpush2.bf16.msra.mxu0 0
        %1804 = vmatprep.subr.bf16.mxu0 0
        %1805 = vmatpush2.bf16.msra.mxu0 0
        %1806 = vmatprep.subr.bf16.mxu0 0
        %1807 = vmatpush2.bf16.msra.mxu0 0
        %1808 = vmatprep.subr.bf16.mxu0 0
        %1809 = vmatpush2.bf16.msra.mxu0 0
        %1810 = vmatprep.subr.bf16.mxu0 0
        %1811 = vmatpush2.bf16.msra.mxu0 0
        %1812 = vmatprep.subr.bf16.mxu0 0
        %1813 = vmatpush2.bf16.msra.mxu0 0
        %1814 = vmatprep.subr.bf16.mxu0 0
        %1815 = vmatpush2.bf16.msra.mxu0 0
        %1816 = vmatprep.subr.bf16.mxu0 0
        %1817 = vmatpush2.bf16.msra.mxu0 0
        %1818 = vmatprep.mubr.bf16.mxu0 0
        %1819 = vmatmul.mubr.bf16.gmra.mxu0 %v1784
        %v1820 = vpop.f32.mrf.mxu0
        %v1821 = vadd.f32 0.0, %v1820
        %v1822 = vpop.f32.mrf.mxu0
        %v1823 = vpop.f32.mrf.mxu0
        %v1824 = vadd.f32 0.0, %v1823
        %v1825 = vpop.f32.mrf.mxu0
        %1826 = vdwg.mxu0
        %1829 = vrot.lane.b32.xlu0 %v1821, 16
        %v1830 = vpop.permute.xlu0 %1829
        %1831 = vrot.lane.b32.xlu0 %v1824, 16
        %v1832 = vpop.permute.xlu0 %1831
        %vm1835 = vcmask 195712
        %1836 = vst.msk [vmem:[#allocation2] sm:$0xff] %vm1835, %v1830
        %1837 = vst.msk [vmem:[#allocation2 + $0x8] sm:$0xff] %vm1835, %v1832
        %1838 = vrot.lane.b32.xlu0 %v1452, 110
        %v1839 = vpop.permute.xlu0 %1838
        %1840 = vrot.lane.b32.xlu0 %v1453, 110
        %v1841 = vpop.permute.xlu0 %1840
        %v1843 = vsel %vm750, %v1839, 0
        %v1846 = vsel %vm750, %v1841, 0
        %1848 = vmatprep.subr.bf16.mxu0 0
        %1849 = vmatpush1.bf16.xpose.msra.mxu0 0
        %1850 = vmatprep.subr.bf16.mxu0 0
        %1851 = vmatpush1.bf16.xpose.msra.mxu0 0
        %1852 = vmatprep.subr.bf16.mxu0 0
        %1853 = vmatpush1.bf16.xpose.msra.mxu0 0
        %1854 = vmatprep.subr.bf16.mxu0 0
        %1855 = vmatpush1.bf16.xpose.msra.mxu0 0
        %1856 = vmatprep.subr.bf16.mxu0 0
        %1857 = vmatpush1.bf16.xpose.msra.mxu0 0
        %1858 = vmatprep.subr.bf16.mxu0 0
        %1859 = vmatpush1.bf16.xpose.msra.mxu0 0
        %1860 = vmatprep.subr.bf16.mxu0 0
        %1861 = vmatpush1.bf16.xpose.msra.mxu0 0
        %1862 = vmatprep.subr.bf16.mxu0 0
        %1863 = vmatpush1.bf16.xpose.msra.mxu0 %v1846
        %1864 = vmatprep.subr.bf16.mxu0 0
        %1865 = vmatpush2.bf16.xpose.msra.mxu0 0
        %1866 = vmatprep.subr.bf16.mxu0 0
        %1867 = vmatpush2.bf16.xpose.msra.mxu0 0
        %1868 = vmatprep.subr.bf16.mxu0 0
        %1869 = vmatpush2.bf16.xpose.msra.mxu0 0
        %1870 = vmatprep.subr.bf16.mxu0 0
        %1871 = vmatpush2.bf16.xpose.msra.mxu0 0
        %1872 = vmatprep.subr.bf16.mxu0 0
        %1873 = vmatpush2.bf16.xpose.msra.mxu0 0
        %1874 = vmatprep.subr.bf16.mxu0 0
        %1875 = vmatpush2.bf16.xpose.msra.mxu0 0
        %1876 = vmatprep.subr.bf16.mxu0 0
        %1877 = vmatpush2.bf16.xpose.msra.mxu0 0
        %1878 = vmatprep.subr.bf16.mxu0 0
        %1879 = vmatpush2.bf16.xpose.msra.mxu0 0
        %1880 = vmatprep.mubr.bf16.mxu0 0
        %1881 = vmatmul.mubr.bf16.gmra.mxu0 %v1843
        %v1882 = vpop.f32.mrf.mxu0
        %v1883 = vadd.f32 0.0, %v1882
        %v1884 = vpop.f32.mrf.mxu0
        %v1885 = vpop.f32.mrf.mxu0
        %v1886 = vadd.f32 0.0, %v1885
        %v1887 = vpop.f32.mrf.mxu0
        %1888 = vdwg.mxu0
        %v1889 = vsel %vm1501, %v1883, -inf
        %1890 = vmax.xlane.f32.xlu0 %v1889
        %v1891 = vpop.xlane.xlu0 %1890
        %v1892 = vsel %vm1501, %v1886, -inf
        %1893 = vmax.xlane.f32.xlu0 %v1892
        %v1894 = vpop.xlane.xlu0 %1893
        %v1895 = vsub.f32 %v1883, %v1891
        %v1896 = vsub.f32 %v1886, %v1894
        %v1897 = vmul.f32 %v1895, 1.442695
        %v1898 = vpow.pop %v1897
        %v1899 = vmul.f32 %v1896, 1.442695
        %v1900 = vpow.pop %v1899
        %v1901 = vsel %vm1501, %v1898, 0.0
        %1902 = vadd.xlane.f32.xlu0 %v1901
        %v1903 = vpop.xlane.xlu0 %1902
        %v1904 = vsel %vm1501, %v1900, 0.0
        %1905 = vadd.xlane.f32.xlu0 %v1904
        %v1906 = vpop.xlane.xlu0 %1905
        %v1907 = vrcp.pop %v1903
        %v1908 = vmul.f32 %v1898, %v1907
        %v1909 = vrcp.pop %v1906
        %v1910 = vmul.f32 %v1900, %v1909
        %v1911 = vpack.c.bf16 %v1910, %v1908
        %1912 = vrot.lane.b32.xlu0 %v1449, 104
        %v1913 = vpop.permute.xlu0 %1912
        %v1916 = vsel %vm1501, %v1911, 0
        %1918 = vmatprep.subr.bf16.mxu0 0
        %1919 = vmatpush1.bf16.msra.mxu0 0
        %1920 = vmatprep.subr.bf16.mxu0 0
        %1921 = vmatpush1.bf16.msra.mxu0 0
        %1922 = vmatprep.subr.bf16.mxu0 0
        %1923 = vmatpush1.bf16.msra.mxu0 0
        %1924 = vmatprep.subr.bf16.mxu0 0
        %1925 = vmatpush1.bf16.msra.mxu0 0
        %1926 = vmatprep.subr.bf16.mxu0 0
        %1927 = vmatpush1.bf16.msra.mxu0 0
        %1928 = vmatprep.subr.bf16.mxu0 0
        %1929 = vmatpush1.bf16.msra.mxu0 0
        %1930 = vmatprep.subr.bf16.mxu0 0
        %1931 = vmatpush1.bf16.msra.mxu0 0
        %1932 = vmatprep.subr.bf16.mxu0 0
        %1933 = vmatpush1.bf16.msra.mxu0 %v1913
        %1934 = vmatprep.subr.bf16.mxu0 0
        %1935 = vmatpush2.bf16.msra.mxu0 0
        %1936 = vmatprep.subr.bf16.mxu0 0
        %1937 = vmatpush2.bf16.msra.mxu0 0
        %1938 = vmatprep.subr.bf16.mxu0 0
        %1939 = vmatpush2.bf16.msra.mxu0 0
        %1940 = vmatprep.subr.bf16.mxu0 0
        %1941 = vmatpush2.bf16.msra.mxu0 0
        %1942 = vmatprep.subr.bf16.mxu0 0
        %1943 = vmatpush2.bf16.msra.mxu0 0
        %1944 = vmatprep.subr.bf16.mxu0 0
        %1945 = vmatpush2.bf16.msra.mxu0 0
        %1946 = vmatprep.subr.bf16.mxu0 0
        %1947 = vmatpush2.bf16.msra.mxu0 0
        %1948 = vmatprep.subr.bf16.mxu0 0
        %1949 = vmatpush2.bf16.msra.mxu0 0
        %1950 = vmatprep.mubr.bf16.mxu0 0
        %1951 = vmatmul.mubr.bf16.gmra.mxu0 %v1916
        %v1952 = vpop.f32.mrf.mxu0
        %v1953 = vadd.f32 0.0, %v1952
        %v1954 = vpop.f32.mrf.mxu0
        %v1955 = vpop.f32.mrf.mxu0
        %v1956 = vadd.f32 0.0, %v1955
        %v1957 = vpop.f32.mrf.mxu0
        %1958 = vdwg.mxu0
        %1961 = vrot.lane.b32.xlu0 %v1953, 24
        %v1962 = vpop.permute.xlu0 %1961
        %1963 = vrot.lane.b32.xlu0 %v1956, 24
        %v1964 = vpop.permute.xlu0 %1963
        %vm1967 = vcmask 261312
        %1968 = vst.msk [vmem:[#allocation2] sm:$0xff] %vm1967, %v1962
        %1969 = vst.msk [vmem:[#allocation2 + $0x8] sm:$0xff] %vm1967, %v1964
        %v1970 = vld [vmem:[#allocation2] sm:$0xff]
        %v1971 = vld [vmem:[#allocation2 + $0x8] sm:$0xff]
        %v1972 = vld [vmem:[%s9] sm:$0x1]
        %v1973 = vld [vmem:[%s10] sm:$0x1]
        %v1974 = vsel %vm580, %v1970, 0.0
        %1975 = vadd.xlane.f32.xlu0 %v1974
        %v1976 = vpop.xlane.xlu0 %1975
        %v1977 = vsel %vm580, %v1971, 0.0
        %1978 = vadd.xlane.f32.xlu0 %v1977
        %v1979 = vpop.xlane.xlu0 %1978
        %v1980 = vrcp.pop 32.0
        %v1981 = vmul.f32 %v1976, %v1980
        %v1982 = vmul.f32 %v1979, %v1980
        %v1983 = vsub.f32 %v1970, %v1981
        %v1984 = vsub.f32 %v1971, %v1982
        %v1985 = vmul.f32 %v1983, %v1983
        %v1986 = vmul.f32 %v1984, %v1984
        %v1987 = vsel %vm580, %v1985, 0.0
        %1988 = vadd.xlane.f32.xlu0 %v1987
        %v1989 = vpop.xlane.xlu0 %1988
        %v1990 = vsel %vm580, %v1986, 0.0
        %1991 = vadd.xlane.f32.xlu0 %v1990
        %v1992 = vpop.xlane.xlu0 %1991
        %v1993 = vmul.f32 %v1989, %v1980
        %v1994 = vmul.f32 %v1992, %v1980
        %v1995 = vadd.f32 %v1993, 1e-05
        %v1996 = vadd.f32 %v1994, 1e-05
        %v1997 = vrsqrt.pop %v1995
        %v1998 = vrsqrt.pop %v1996
        %v1999 = vmul.f32 %v1983, %v1997
        %v2000 = vmul.f32 %v1984, %v1998
        %v2002 = vlaneseq
        %v2003 = vshrl.u32 %v2002, 7
        %v2004 = vsub.s32 0, %v2003
        %v2005 = vrot.slane %v1972, %v2004
        %v2007 = vmul.f32 %v1999, %v2005
        %v2008 = vmul.f32 %v2000, %v2005
        %v2010 = vlaneseq
        %v2011 = vshrl.u32 %v2010, 7
        %v2012 = vsub.s32 0, %v2011
        %v2013 = vrot.slane %v1973, %v2012
        %v2015 = vadd.f32 %v2007, %v2013
        %v2016 = vadd.f32 %v2008, %v2013
        %v2017 = vpack.c.bf16 %v2016, %v2015
        %v2018 = vld [vmem:[%s11] sm:$0xf]
        %v2020 = vsel %vm798, %v2017, 0
        %v2023 = vsel %vm825, %v2018, 0
        %2025 = vmatprep.subr.bf16.mxu0 0
        %2026 = vmatpush1.bf16.msra.mxu0 0
        %2027 = vmatprep.subr.bf16.mxu0 0
        %2028 = vmatpush1.bf16.msra.mxu0 0
        %2029 = vmatprep.subr.bf16.mxu0 0
        %2030 = vmatpush1.bf16.msra.mxu0 0
        %2031 = vmatprep.subr.bf16.mxu0 0
        %2032 = vmatpush1.bf16.msra.mxu0 0
        %2033 = vmatprep.subr.bf16.mxu0 0
        %2034 = vmatpush1.bf16.msra.mxu0 0
        %2035 = vmatprep.subr.bf16.mxu0 0
        %2036 = vmatpush1.bf16.msra.mxu0 0
        %2037 = vmatprep.subr.bf16.mxu0 0
        %2038 = vmatpush1.bf16.msra.mxu0 0
        %2039 = vmatprep.subr.bf16.mxu0 0
        %2040 = vmatpush1.bf16.msra.mxu0 %v2023
        %2041 = vmatprep.subr.bf16.mxu0 0
        %2042 = vmatpush2.bf16.msra.mxu0 0
        %2043 = vmatprep.subr.bf16.mxu0 0
        %2044 = vmatpush2.bf16.msra.mxu0 0
        %2045 = vmatprep.subr.bf16.mxu0 0
        %2046 = vmatpush2.bf16.msra.mxu0 0
        %2047 = vmatprep.subr.bf16.mxu0 0
        %2048 = vmatpush2.bf16.msra.mxu0 0
        %2049 = vmatprep.subr.bf16.mxu0 0
        %2050 = vmatpush2.bf16.msra.mxu0 0
        %2051 = vmatprep.subr.bf16.mxu0 0
        %2052 = vmatpush2.bf16.msra.mxu0 0
        %2053 = vmatprep.subr.bf16.mxu0 0
        %2054 = vmatpush2.bf16.msra.mxu0 0
        %2055 = vmatprep.subr.bf16.mxu0 0
        %2056 = vmatpush2.bf16.msra.mxu0 0
        %2057 = vmatprep.mubr.bf16.mxu0 0
        %2058 = vmatmul.mubr.bf16.gmra.mxu0 %v2020
        %v2059 = vpop.f32.mrf.mxu0
        %v2060 = vadd.f32 0.0, %v2059
        %v2061 = vpop.f32.mrf.mxu0
        %v2062 = vpop.f32.mrf.mxu0
        %v2063 = vadd.f32 0.0, %v2062
        %v2064 = vpop.f32.mrf.mxu0
        %2065 = vdwg.mxu0
        %v2066 = vpack.c.bf16 %v2063, %v2060
        %v2068 = vunpack.c.l.b16 %v2066
        %v2069 = vunpack.c.h.b16 %v2066
        %v2070 = vpack.c.b16 %v2068, %v2068
        %v2071 = vpack.c.b16 %v2069, %v2069
        %vm2074 = vcmask 257024
        %2075 = vst.msk [vmem:[%s519] sm:$0xf] %vm2074, %v2070
        %2076 = vst.msk [vmem:[%s519 + $0x4] sm:$0xf] %vm2074, %v2071
        %v2077 = vld [vmem:[%s11 + $0x4] sm:$0xf]
        %2079 = vrot.lane.b32.xlu0 %v2017, 120
        %v2080 = vpop.permute.xlu0 %2079
        %v2082 = vsel %vm798, %v2080, 0
        %v2085 = vsel %vm825, %v2077, 0
        %2087 = vmatprep.subr.bf16.mxu0 0
        %2088 = vmatpush1.bf16.msra.mxu0 0
        %2089 = vmatprep.subr.bf16.mxu0 0
        %2090 = vmatpush1.bf16.msra.mxu0 0
        %2091 = vmatprep.subr.bf16.mxu0 0
        %2092 = vmatpush1.bf16.msra.mxu0 0
        %2093 = vmatprep.subr.bf16.mxu0 0
        %2094 = vmatpush1.bf16.msra.mxu0 0
        %2095 = vmatprep.subr.bf16.mxu0 0
        %2096 = vmatpush1.bf16.msra.mxu0 0
        %2097 = vmatprep.subr.bf16.mxu0 0
        %2098 = vmatpush1.bf16.msra.mxu0 0
        %2099 = vmatprep.subr.bf16.mxu0 0
        %2100 = vmatpush1.bf16.msra.mxu0 0
        %2101 = vmatprep.subr.bf16.mxu0 0
        %2102 = vmatpush1.bf16.msra.mxu0 %v2085
        %2103 = vmatprep.subr.bf16.mxu0 0
        %2104 = vmatpush2.bf16.msra.mxu0 0
        %2105 = vmatprep.subr.bf16.mxu0 0
        %2106 = vmatpush2.bf16.msra.mxu0 0
        %2107 = vmatprep.subr.bf16.mxu0 0
        %2108 = vmatpush2.bf16.msra.mxu0 0
        %2109 = vmatprep.subr.bf16.mxu0 0
        %2110 = vmatpush2.bf16.msra.mxu0 0
        %2111 = vmatprep.subr.bf16.mxu0 0
        %2112 = vmatpush2.bf16.msra.mxu0 0
        %2113 = vmatprep.subr.bf16.mxu0 0
        %2114 = vmatpush2.bf16.msra.mxu0 0
        %2115 = vmatprep.subr.bf16.mxu0 0
        %2116 = vmatpush2.bf16.msra.mxu0 0
        %2117 = vmatprep.subr.bf16.mxu0 0
        %2118 = vmatpush2.bf16.msra.mxu0 0
        %2119 = vmatprep.mubr.bf16.mxu0 0
        %2120 = vmatmul.mubr.bf16.gmra.mxu0 %v2082
        %v2121 = vpop.f32.mrf.mxu0
        %v2122 = vadd.f32 0.0, %v2121
        %v2123 = vpop.f32.mrf.mxu0
        %v2124 = vpop.f32.mrf.mxu0
        %v2125 = vadd.f32 0.0, %v2124
        %v2126 = vpop.f32.mrf.mxu0
        %2127 = vdwg.mxu0
        %v2128 = vpack.c.bf16 %v2125, %v2122
        %v2130 = vunpack.c.l.b16 %v2128
        %v2131 = vunpack.c.h.b16 %v2128
        %v2132 = vpack.c.b16 %v2130, %v2130
        %v2133 = vpack.c.b16 %v2131, %v2131
        %2136 = vst.msk [vmem:[%s519 + $0x8] sm:$0xf] %vm2074, %v2132
        %2137 = vst.msk [vmem:[%s519 + $0xc] sm:$0xf] %vm2074, %v2133
        %v2138 = vld [vmem:[%s11 + $0x8] sm:$0xf]
        %2139 = vrot.lane.b32.xlu0 %v2017, 112
        %v2140 = vpop.permute.xlu0 %2139
        %v2142 = vsel %vm798, %v2140, 0
        %v2145 = vsel %vm825, %v2138, 0
        %2147 = vmatprep.subr.bf16.mxu0 0
        %2148 = vmatpush1.bf16.msra.mxu0 0
        %2149 = vmatprep.subr.bf16.mxu0 0
        %2150 = vmatpush1.bf16.msra.mxu0 0
        %2151 = vmatprep.subr.bf16.mxu0 0
        %2152 = vmatpush1.bf16.msra.mxu0 0
        %2153 = vmatprep.subr.bf16.mxu0 0
        %2154 = vmatpush1.bf16.msra.mxu0 0
        %2155 = vmatprep.subr.bf16.mxu0 0
        %2156 = vmatpush1.bf16.msra.mxu0 0
        %2157 = vmatprep.subr.bf16.mxu0 0
        %2158 = vmatpush1.bf16.msra.mxu0 0
        %2159 = vmatprep.subr.bf16.mxu0 0
        %2160 = vmatpush1.bf16.msra.mxu0 0
        %2161 = vmatprep.subr.bf16.mxu0 0
        %2162 = vmatpush1.bf16.msra.mxu0 %v2145
        %2163 = vmatprep.subr.bf16.mxu0 0
        %2164 = vmatpush2.bf16.msra.mxu0 0
        %2165 = vmatprep.subr.bf16.mxu0 0
        %2166 = vmatpush2.bf16.msra.mxu0 0
        %2167 = vmatprep.subr.bf16.mxu0 0
        %2168 = vmatpush2.bf16.msra.mxu0 0
        %2169 = vmatprep.subr.bf16.mxu0 0
        %2170 = vmatpush2.bf16.msra.mxu0 0
        %2171 = vmatprep.subr.bf16.mxu0 0
        %2172 = vmatpush2.bf16.msra.mxu0 0
        %2173 = vmatprep.subr.bf16.mxu0 0
        %2174 = vmatpush2.bf16.msra.mxu0 0
        %2175 = vmatprep.subr.bf16.mxu0 0
        %2176 = vmatpush2.bf16.msra.mxu0 0
        %2177 = vmatprep.subr.bf16.mxu0 0
        %2178 = vmatpush2.bf16.msra.mxu0 0
        %2179 = vmatprep.mubr.bf16.mxu0 0
        %2180 = vmatmul.mubr.bf16.gmra.mxu0 %v2142
        %v2181 = vpop.f32.mrf.mxu0
        %v2182 = vadd.f32 0.0, %v2181
        %v2183 = vpop.f32.mrf.mxu0
        %v2184 = vpop.f32.mrf.mxu0
        %v2185 = vadd.f32 0.0, %v2184
        %v2186 = vpop.f32.mrf.mxu0
        %2187 = vdwg.mxu0
        %v2188 = vpack.c.bf16 %v2185, %v2182
        %v2190 = vunpack.c.l.b16 %v2188
        %v2191 = vunpack.c.h.b16 %v2188
        %v2192 = vpack.c.b16 %v2190, %v2190
        %v2193 = vpack.c.b16 %v2191, %v2191
        %2196 = vst.msk [vmem:[%s519 + $0x10] sm:$0xf] %vm2074, %v2192
        %2197 = vst.msk [vmem:[%s519 + $0x14] sm:$0xf] %vm2074, %v2193
        %v2198 = vld [vmem:[%s11 + $0xc] sm:$0xf]
        %2199 = vrot.lane.b32.xlu0 %v2017, 104
        %v2200 = vpop.permute.xlu0 %2199
        %v2202 = vsel %vm798, %v2200, 0
        %v2205 = vsel %vm825, %v2198, 0
        %2207 = vmatprep.subr.bf16.mxu0 0
        %2208 = vmatpush1.bf16.msra.mxu0 0
        %2209 = vmatprep.subr.bf16.mxu0 0
        %2210 = vmatpush1.bf16.msra.mxu0 0
        %2211 = vmatprep.subr.bf16.mxu0 0
        %2212 = vmatpush1.bf16.msra.mxu0 0
        %2213 = vmatprep.subr.bf16.mxu0 0
        %2214 = vmatpush1.bf16.msra.mxu0 0
        %2215 = vmatprep.subr.bf16.mxu0 0
        %2216 = vmatpush1.bf16.msra.mxu0 0
        %2217 = vmatprep.subr.bf16.mxu0 0
        %2218 = vmatpush1.bf16.msra.mxu0 0
        %2219 = vmatprep.subr.bf16.mxu0 0
        %2220 = vmatpush1.bf16.msra.mxu0 0
        %2221 = vmatprep.subr.bf16.mxu0 0
        %2222 = vmatpush1.bf16.msra.mxu0 %v2205
        %2223 = vmatprep.subr.bf16.mxu0 0
        %2224 = vmatpush2.bf16.msra.mxu0 0
        %2225 = vmatprep.subr.bf16.mxu0 0
        %2226 = vmatpush2.bf16.msra.mxu0 0
        %2227 = vmatprep.subr.bf16.mxu0 0
        %2228 = vmatpush2.bf16.msra.mxu0 0
        %2229 = vmatprep.subr.bf16.mxu0 0
        %2230 = vmatpush2.bf16.msra.mxu0 0
        %2231 = vmatprep.subr.bf16.mxu0 0
        %2232 = vmatpush2.bf16.msra.mxu0 0
        %2233 = vmatprep.subr.bf16.mxu0 0
        %2234 = vmatpush2.bf16.msra.mxu0 0
        %2235 = vmatprep.subr.bf16.mxu0 0
        %2236 = vmatpush2.bf16.msra.mxu0 0
        %2237 = vmatprep.subr.bf16.mxu0 0
        %2238 = vmatpush2.bf16.msra.mxu0 0
        %2239 = vmatprep.mubr.bf16.mxu0 0
        %2240 = vmatmul.mubr.bf16.gmra.mxu0 %v2202
        %v2241 = vpop.f32.mrf.mxu0
        %v2242 = vadd.f32 0.0, %v2241
        %v2243 = vpop.f32.mrf.mxu0
        %v2244 = vpop.f32.mrf.mxu0
        %v2245 = vadd.f32 0.0, %v2244
        %v2246 = vpop.f32.mrf.mxu0
        %2247 = vdwg.mxu0
        %v2248 = vpack.c.bf16 %v2245, %v2242
        %v2250 = vunpack.c.l.b16 %v2248
        %v2251 = vunpack.c.h.b16 %v2248
        %v2252 = vpack.c.b16 %v2250, %v2250
        %v2253 = vpack.c.b16 %v2251, %v2251
        %2256 = vst.msk [vmem:[%s519 + $0x18] sm:$0xf] %vm2074, %v2252
        %2257 = vst.msk [vmem:[%s519 + $0x1c] sm:$0xf] %vm2074, %v2253
        %v2258 = vsel %vm1501, %v621, -inf
        %2259 = vmax.xlane.f32.xlu0 %v2258
        %v2260 = vpop.xlane.xlu0 %2259
        %v2261 = vsub.f32 %v621, %v2260
        %v2262 = vmul.f32 %v2261, 1.442695
        %v2263 = vpow.pop %v2262
        %v2264 = vsel %vm1501, %v2263, 0.0
        %2265 = vadd.xlane.f32.xlu0 %v2264
        %v2266 = vpop.xlane.xlu0 %2265
        %v2267 = vrcp.pop %v2266
        %v2268 = vmul.f32 %v2263, %v2267
        %v2269 = vpack.c.bf16 %v2268, %v2268
        %vm2270 = vcmask 125952
        %2271 = vst.msk [vmem:[%s514] sm:$0xf] %vm2270, %v2269
        %vm2272 = vcmask 261248
        %v2273 = vsel %vm2272, %v621, -inf
        %2274 = vmax.xlane.f32.xlu0 %v2273
        %v2275 = vpop.xlane.xlu0 %2274
        %v2276 = vsub.f32 %v621, %v2275
        %v2277 = vmul.f32 %v2276, 1.442695
        %v2278 = vpow.pop %v2277
        %2280 = vrot.lane.b32.xlu0 %v2278, 112
        %v2281 = vpop.permute.xlu0 %2280
        %v2283 = vsel %vm1501, %v2281, 0.0
        %2284 = vadd.xlane.f32.xlu0 %v2283
        %v2285 = vpop.xlane.xlu0 %2284
        %v2286 = vrcp.pop %v2285
        %v2287 = vmul.f32 %v2278, %v2286
        %v2288 = vpack.c.bf16 %v2287, %v2287
        %vm2289 = vcmask 257152
        %2290 = vst.msk [vmem:[%s514] sm:$0xf] %vm2289, %v2288
        %vm2291 = vcmask 392448
        %v2292 = vsel %vm2291, %v621, -inf
        %2293 = vmax.xlane.f32.xlu0 %v2292
        %v2294 = vpop.xlane.xlu0 %2293
        %v2295 = vsub.f32 %v621, %v2294
        %v2296 = vmul.f32 %v2295, 1.442695
        %v2297 = vpow.pop %v2296
        %2299 = vrot.lane.b32.xlu0 %v2297, 96
        %v2300 = vpop.permute.xlu0 %2299
        %v2302 = vsel %vm1501, %v2300, 0.0
        %2303 = vadd.xlane.f32.xlu0 %v2302
        %v2304 = vpop.xlane.xlu0 %2303
        %v2305 = vrcp.pop %v2304
        %v2306 = vmul.f32 %v2297, %v2305
        %v2307 = vpack.c.bf16 %v2306, %v2306
        %vm2308 = vcmask 388352
        %2309 = vst.msk [vmem:[%s514] sm:$0xf] %vm2308, %v2307
        %vm2310 = vcmask 523648
        %v2311 = vsel %vm2310, %v621, -inf
        %2312 = vmax.xlane.f32.xlu0 %v2311
        %v2313 = vpop.xlane.xlu0 %2312
        %v2314 = vsub.f32 %v621, %v2313
        %v2315 = vmul.f32 %v2314, 1.442695
        %v2316 = vpow.pop %v2315
        %2318 = vrot.lane.b32.xlu0 %v2316, 80
        %v2319 = vpop.permute.xlu0 %2318
        %v2321 = vsel %vm1501, %v2319, 0.0
        %2322 = vadd.xlane.f32.xlu0 %v2321
        %v2323 = vpop.xlane.xlu0 %2322
        %v2324 = vrcp.pop %v2323
        %v2325 = vmul.f32 %v2316, %v2324
        %v2326 = vpack.c.bf16 %v2325, %v2325
        %vm2327 = vcmask 519552
        %2328 = vst.msk [vmem:[%s514] sm:$0xf] %vm2327, %v2326
        %s2329 = sand.u32 %s304, 1
        %s2330 = scalar_lea.sflag [#allocation4], %s2329
        %s2331 = sand.u32 %s304, 1
        %s2332 = smul.addr %s2331, 8
        %s2333 = scalar_lea.vmem [#allocation3], %s2332
        %p2334 = scmp.lt.s32.totalorder %s29, 1
        %s2335 = scalar_select %p2334, %s29, 1
        %s2336 = smul.addr %s2335, 4
        %s2337 = scalar_lea.vmem %s13, %s2336
        %p2338 = scmp.lt.s32.totalorder %s29, 1
        %s2339 = scalar_select %p2338, %s29, 1
        %s2340 = smul.addr %s2339, 8
        %s2341 = smul.addr %s2340, 4
        %s2342 = scalar_lea.vmem %s14, %s2341
        // Predicated region
        $region69: #{ts_transformer_forward.9} parent=67 // pred_check
          %p2343 = pneg %p314
        $region70: #{ts_transformer_forward.9} parent=67 // pred_check_branch
          %2345 = sbr.rel (%p2343) target = $region72
        $region71: #{ts_transformer_forward.9} parent=67 // pred_region
          %s2347 = ssub.s32 128, 128
          %2348 = vsyncadd %s2330, %s2347
          %s2349 = smul.addr %s29, 2
          %s2350 = smul.addr %s2349, 64
          %s2351 = scalar_lea.hbm %s12, %s2350
          %s2352 = sshll.u32 %s2333, 4
          %s2353 = int_to_ptr.vmem [resolvable:$true] %s2352
          %2358 = dma.vmem_to_hbm [thread:$0]  %s2353, 128, %s2351, %s2330, 64, 64, 4
        $region72: #{ts_transformer_forward.9} parent=67 // pred_fallthru
          _
        // Predicated region
        $region73: #{ts_transformer_forward.9} parent=67 // pred_check
          %p2359 = pneg %p340
        $region74: #{ts_transformer_forward.9} parent=67 // pred_check_branch
          %2361 = sbr.rel (%p2359) target = $region76
        $region75: #{ts_transformer_forward.9} parent=67 // pred_region
          _
        $region76: #{ts_transformer_forward.9} parent=67 // pred_fallthru
          _
        // Predicated region
        $region77: #{ts_transformer_forward.9} parent=67 // pred_check
          %p2362 = pneg %p366
        $region78: #{ts_transformer_forward.9} parent=67 // pred_check_branch
          %2364 = sbr.rel (%p2362) target = $region80
        $region79: #{ts_transformer_forward.9} parent=67 // pred_region
          _
        $region80: #{ts_transformer_forward.9} parent=67 // pred_fallthru
          _
      $region68: #{ts_transformer_forward.9} parent=5 // pred_fallthru
        _
      %p2365 = scmp.le.s32.totalorder 2, %s24
      // Predicated region
      $region81: #{ts_transformer_forward.9} parent=5 // pred_check
        %p2366 = pneg %p2365
      $region82: #{ts_transformer_forward.9} parent=5 // pred_check_branch
        %2368 = sbr.rel (%p2366) target = $region84
      $region83: #{ts_transformer_forward.9} parent=5 // pred_region
        %s2369 = ssub.s32 %s24, 2
        // Predicated region
        $region85: #{ts_transformer_forward.9} parent=83 // pred_check
          %p2370 = pneg %p320
        $region86: #{ts_transformer_forward.9} parent=83 // pred_check_branch
          %2372 = sbr.rel (%p2370) target = $region88
        $region87: #{ts_transformer_forward.9} parent=83 // pred_region
          %s2373 = sand.u32 %s305, 1
          %s2374 = scalar_lea.sflag [#allocation4], %s2373
          %s2375 = sand.u32 %s305, 1
          %s2376 = smul.addr %s2375, 8
          %s2377 = scalar_lea.vmem [#allocation3], %s2376
          %2378 = dma.done %s2374, 128
        $region88: #{ts_transformer_forward.9} parent=83 // pred_fallthru
          _
        // Predicated region
        $region89: #{ts_transformer_forward.9} parent=83 // pred_check
          %p2379 = pneg %p346
        $region90: #{ts_transformer_forward.9} parent=83 // pred_check_branch
          %2381 = sbr.rel (%p2379) target = $region92
        $region91: #{ts_transformer_forward.9} parent=83 // pred_region
          %p2382 = scmp.lt.s32.totalorder %s30, 1
          %s2383 = scalar_select %p2382, %s30, 1
          %s2384 = smul.addr %s2383, 4
          %s2385 = scalar_lea.vmem %s13, %s2384
        $region92: #{ts_transformer_forward.9} parent=83 // pred_fallthru
          _
        // Predicated region
        $region93: #{ts_transformer_forward.9} parent=83 // pred_check
          %p2386 = pneg %p372
        $region94: #{ts_transformer_forward.9} parent=83 // pred_check_branch
          %2388 = sbr.rel (%p2386) target = $region96
        $region95: #{ts_transformer_forward.9} parent=83 // pred_region
          %p2389 = scmp.lt.s32.totalorder %s30, 1
          %s2390 = scalar_select %p2389, %s30, 1
          %s2391 = smul.addr %s2390, 8
          %s2392 = smul.addr %s2391, 4
          %s2393 = scalar_lea.vmem %s14, %s2392
        $region96: #{ts_transformer_forward.9} parent=83 // pred_fallthru
          _
      $region84: #{ts_transformer_forward.9} parent=5 // pred_fallthru
        _
    $region6: #{ts_transformer_forward.9} parent=1 // loop_footer
      %s28 = sadd.s32 1, %s24
    $region7: #{ts_transformer_forward.9} parent=1 // loop_footer_branch
      %23 = sbr.rel target = $region3
    $region8: #{ts_transformer_forward.9} parent=1 // loop_exit
      _
    %2394 = vsyncpa [#allocation4], 1
    %s2395 = scalar_lea.sflag [#allocation4], 1
    %2396 = vsyncpa %s2395, 1

</llo_original>
